<compile_context>
chip_gen: v6e
topology: v6e:2x2x1
jax: 0.10.0
libtpu: 0.0.40
codegen_flags: <defaults>
</compile_context>

<pallas_src>
import jax
import jax.numpy as jnp
from jax.experimental import pallas as pl
from jax.experimental.pallas import tpu as pltpu

EPS = 1e-5

# Lane-padded feature sizes (multiples of 128).
IN_Z_PAD = 128     # latent 100 -> 128
IN_Y_PAD = 128     # one-hot 10 -> 128
H1 = 256
H2 = 512
H3 = 1024
OUT = 784
OUT_PAD = 896      # 784 -> 896


def _bn_relu(h, gamma, beta):
    # BatchNorm1d (training mode: batch stats, biased variance) + ReLU, in f32.
    mu = jnp.mean(h, axis=0, keepdims=True)
    var = jnp.mean((h - mu) * (h - mu), axis=0, keepdims=True)
    hn = (h - mu) * jax.lax.rsqrt(var + EPS)
    return jnp.maximum(hn * gamma + beta, 0.0)


def generator_kernel(
    x_ref, t_ref,
    w11_ref, b11_ref, w12_ref, b12_ref, g1_ref, be1_ref,
    w2a_ref, w2b_ref, b2_ref, g2_ref, be2_ref,
    w3_ref, b3_ref, g3_ref, be3_ref,
    w4_ref, b4_ref,
    out_ref,
):
    x = x_ref[...]          # (B, 128) bf16
    t = t_ref[...]          # (B, 128) bf16

    # fc_layer_1_1 -> bn_layer_1 -> relu   (bf16 MXU, f32 accumulate)
    z = jnp.dot(x, w11_ref[...], preferred_element_type=jnp.float32) + b11_ref[...]
    z = _bn_relu(z, g1_ref[...], be1_ref[...])               # (B, 256) f32

    # fc_layer_1_2 -> bn_layer_1 -> relu
    y = jnp.dot(t, w12_ref[...], preferred_element_type=jnp.float32) + b12_ref[...]
    y = _bn_relu(y, g1_ref[...], be1_ref[...])               # (B, 256) f32

    # cat([z, y], 1) @ w2  ==  z @ w2[:256] + y @ w2[256:]  (no lane concat)
    h = (jnp.dot(z.astype(jnp.bfloat16), w2a_ref[...],
                 preferred_element_type=jnp.float32)
         + jnp.dot(y.astype(jnp.bfloat16), w2b_ref[...],
                   preferred_element_type=jnp.float32)
         + b2_ref[...])
    h = _bn_relu(h, g2_ref[...], be2_ref[...])               # (B, 512) f32

    # fc_layer_3 -> bn_layer_3 -> relu
    h = jnp.dot(h.astype(jnp.bfloat16), w3_ref[...],
                preferred_element_type=jnp.float32) + b3_ref[...]
    h = _bn_relu(h, g3_ref[...], be3_ref[...])               # (B, 1024) f32

    # fc_layer_4 -> sigmoid (N padded to 896; extra lanes sliced in wrapper)
    o = jnp.dot(h.astype(jnp.bfloat16), w4_ref[...],
                preferred_element_type=jnp.float32) + b4_ref[...]
    out_ref[...] = jax.nn.sigmoid(o)                         # (B, 896) f32


def _pad_cols(a, n):
    pad = n - a.shape[-1]
    return a if pad == 0 else jnp.pad(a, ((0, 0), (0, pad)))


def _pad_rows(a, n):
    pad = n - a.shape[0]
    return a if pad == 0 else jnp.pad(a, ((0, pad), (0, 0)))


def prepare_params(params):
    """Pad + split + cast the f32 params once for the kernel."""
    (w11, b11, w12, b12, g1, be1,
     w2, b2, g2, be2,
     w3, b3, g3, be3,
     w4, b4) = params
    bf = jnp.bfloat16
    w11p = _pad_rows(w11, IN_Z_PAD).astype(bf)               # (128, 256)
    w12p = _pad_rows(w12, IN_Y_PAD).astype(bf)               # (128, 256)
    w2a = w2[:H1].astype(bf)                                 # (256, 512)
    w2b = w2[H1:].astype(bf)                                 # (256, 512)
    w3p = w3.astype(bf)                                      # (512, 1024)
    w4p = _pad_cols(w4, OUT_PAD).astype(bf)                  # (1024, 896)
    b4p = _pad_cols(b4, OUT_PAD)                             # (1, 896) f32
    return (w11p, b11, w12p, b12, g1, be1,
            w2a, w2b, b2, g2, be2,
            w3p, b3, g3, be3,
            w4p, b4p)


@jax.jit
def generator_forward(x, t, kparams):
    (w11, b11, w12, b12, g1, be1,
     w2a, w2b, b2, g2, be2,
     w3, b3, g3, be3,
     w4, b4) = kparams
    B = x.shape[0]
    xp = _pad_cols(x, IN_Z_PAD).astype(jnp.bfloat16)         # (B, 128)
    tp = _pad_cols(t, IN_Y_PAD).astype(jnp.bfloat16)         # (B, 128)

    args = (xp, tp, w11, b11, w12, b12, g1, be1,
            w2a, w2b, b2, g2, be2, w3, b3, g3, be3, w4, b4)
    vmem = pl.BlockSpec(memory_space=pltpu.MemorySpace.VMEM)

    out_pad = pl.pallas_call(
        generator_kernel,
        out_shape=jax.ShapeDtypeStruct((B, OUT_PAD), jnp.float32),
        in_specs=[vmem] * len(args),
        out_specs=vmem,
        compiler_params=pltpu.CompilerParams(vmem_limit_bytes=32 << 20),
    )(*args)
    return out_pad[:, :OUT]


def init_params(key):
    """Deterministic synthetic parameters matching the PyTorch module shapes.

    nn.Linear(in, out) weight is (out, in) in PyTorch; we store the transpose
    (in, out).  Biases / BN affine params are stored as (1, out) rows.
    """
    def linear(k, fan_in, fan_out):
        k1, k2 = jax.random.split(k)
        bound = 1.0 / jnp.sqrt(fan_in)
        w = jax.random.uniform(k1, (fan_in, fan_out), jnp.float32, -bound, bound)
        b = jax.random.uniform(k2, (1, fan_out), jnp.float32, -bound, bound)
        return w, b

    def bn(k, n):
        k1, k2 = jax.random.split(k)
        gamma = 1.0 + 0.1 * jax.random.normal(k1, (1, n), jnp.float32)
        beta = 0.1 * jax.random.normal(k2, (1, n), jnp.float32)
        return gamma, beta

    ks = jax.random.split(key, 8)
    w11, b11 = linear(ks[0], 100, 256)
    w12, b12 = linear(ks[1], 10, 256)
    g1, be1 = bn(ks[2], 256)
    w2, b2 = linear(ks[3], 512, 512)
    g2, be2 = bn(ks[4], 512)
    w3, b3 = linear(ks[5], 512, 1024)
    g3, be3 = bn(ks[6], 1024)
    w4, b4 = linear(ks[7], 1024, 784)
    return (w11, b11, w12, b12, g1, be1,
            w2, b2, g2, be2,
            w3, b3, g3, be3,
            w4, b4)


def reference_forward(x, t, params):
    """Pure-JAX f32 reference mirroring the PyTorch forward (training-mode BN)."""
    (w11, b11, w12, b12, g1, be1,
     w2, b2, g2, be2,
     w3, b3, g3, be3,
     w4, b4) = params

    def bn_relu(h, g, b):
        mu = jnp.mean(h, axis=0, keepdims=True)
        var = jnp.mean((h - mu) ** 2, axis=0, keepdims=True)
        return jnp.maximum((h - mu) / jnp.sqrt(var + EPS) * g + b, 0.0)

    z = bn_relu(x @ w11 + b11, g1, be1)
    y = bn_relu(t @ w12 + b12, g1, be1)
    h = jnp.concatenate([z, y], axis=1)
    h = bn_relu(h @ w2 + b2, g2, be2)
    h = bn_relu(h @ w3 + b3, g3, be3)
    return jax.nn.sigmoid(h @ w4 + b4)


if __name__ == "__main__":
    key = jax.random.PRNGKey(0)
    k_params, k_x, k_t = jax.random.split(key, 3)

    B = 8
    params = init_params(k_params)
    kparams = prepare_params(params)

    x = jax.random.normal(k_x, (B, 100), jnp.float32)          # latent noise
    labels = jax.random.randint(k_t, (B,), 0, 10)
    t = jax.nn.one_hot(labels, 10, dtype=jnp.float32)          # one-hot target

    out = generator_forward(x, t, kparams)
    out = jax.block_until_ready(out)

    ref = reference_forward(x, t, params)
    assert out.shape == (B, 784), out.shape
    # bf16 matmuls inside the kernel vs f32 reference -> relaxed tolerance.
    max_err = float(jnp.max(jnp.abs(out - ref)))
    assert max_err < 2e-2, max_err

    print("KERNEL_OK")
</pallas_src>

<mosaic_0001>
module attributes {stable_mosaic.version = 11 : i64} {
  func.func @generator_kernel(%arg0: memref<8x128xbf16, #tpu.memory_space<vmem>>, %arg1: memref<8x128xbf16, #tpu.memory_space<vmem>>, %arg2: memref<128x256xbf16, #tpu.memory_space<vmem>>, %arg3: memref<1x256xf32, #tpu.memory_space<vmem>>, %arg4: memref<128x256xbf16, #tpu.memory_space<vmem>>, %arg5: memref<1x256xf32, #tpu.memory_space<vmem>>, %arg6: memref<1x256xf32, #tpu.memory_space<vmem>>, %arg7: memref<1x256xf32, #tpu.memory_space<vmem>>, %arg8: memref<256x512xbf16, #tpu.memory_space<vmem>>, %arg9: memref<256x512xbf16, #tpu.memory_space<vmem>>, %arg10: memref<1x512xf32, #tpu.memory_space<vmem>>, %arg11: memref<1x512xf32, #tpu.memory_space<vmem>>, %arg12: memref<1x512xf32, #tpu.memory_space<vmem>>, %arg13: memref<512x1024xbf16, #tpu.memory_space<vmem>>, %arg14: memref<1x1024xf32, #tpu.memory_space<vmem>>, %arg15: memref<1x1024xf32, #tpu.memory_space<vmem>>, %arg16: memref<1x1024xf32, #tpu.memory_space<vmem>>, %arg17: memref<1024x896xbf16, #tpu.memory_space<vmem>>, %arg18: memref<1x896xf32, #tpu.memory_space<vmem>>, %arg19: memref<8x896xf32, #tpu.memory_space<vmem>>) attributes {dimension_semantics = [], scalar_prefetch = 0 : i64, scratch_operands = 0 : i64, tpu.core_type = #tpu.core_type<tc>} {
    %c0 = arith.constant 0 : index
    %c0_0 = arith.constant 0 : index
    %0 = vector.load %arg0[%c0, %c0_0] : memref<8x128xbf16, #tpu.memory_space<vmem>>, vector<8x128xbf16>
    %c0_1 = arith.constant 0 : index
    %c0_2 = arith.constant 0 : index
    %1 = vector.load %arg1[%c0_1, %c0_2] : memref<8x128xbf16, #tpu.memory_space<vmem>>, vector<8x128xbf16>
    %c0_3 = arith.constant 0 : index
    %c0_4 = arith.constant 0 : index
    %2 = vector.load %arg2[%c0_3, %c0_4] : memref<128x256xbf16, #tpu.memory_space<vmem>>, vector<128x256xbf16>
    %cst = arith.constant dense<0.000000e+00> : vector<8x256xf32>
    %3 = tpu.matmul %0, %2, %cst {dimension_numbers = #tpu.dot_dimension_numbers<[1], [0], [0], [1], [0, 0, 1, 1], [], []>} : vector<8x128xbf16>, vector<128x256xbf16>, vector<8x256xf32> -> vector<8x256xf32>
    %c0_5 = arith.constant 0 : index
    %c0_6 = arith.constant 0 : index
    %4 = vector.load %arg3[%c0_5, %c0_6] : memref<1x256xf32, #tpu.memory_space<vmem>>, vector<1x256xf32>
    %5 = vector.broadcast %4 : vector<1x256xf32> to vector<8x256xf32>
    %6 = arith.addf %3, %5 : vector<8x256xf32>
    %c0_7 = arith.constant 0 : index
    %c0_8 = arith.constant 0 : index
    %7 = vector.load %arg6[%c0_7, %c0_8] : memref<1x256xf32, #tpu.memory_space<vmem>>, vector<1x256xf32>
    %c0_9 = arith.constant 0 : index
    %c0_10 = arith.constant 0 : index
    %8 = vector.load %arg7[%c0_9, %c0_10] : memref<1x256xf32, #tpu.memory_space<vmem>>, vector<1x256xf32>
    %cst_11 = arith.constant dense<0.000000e+00> : vector<256xf32>
    %9 = vector.multi_reduction <add>, %6, %cst_11 [0] : vector<8x256xf32> to vector<256xf32>
    %10 = vector.shape_cast %9 : vector<256xf32> to vector<1x256xf32>
    %cst_12 = arith.constant 8.000000e+00 : f32
    %11 = vector.broadcast %cst_12 : f32 to vector<1x256xf32>
    %12 = arith.divf %10, %11 : vector<1x256xf32>
    %13 = vector.broadcast %12 : vector<1x256xf32> to vector<8x256xf32>
    %14 = arith.subf %6, %13 : vector<8x256xf32>
    %15 = vector.broadcast %12 : vector<1x256xf32> to vector<8x256xf32>
    %16 = arith.subf %6, %15 : vector<8x256xf32>
    %17 = arith.mulf %14, %16 : vector<8x256xf32>
    %cst_13 = arith.constant dense<0.000000e+00> : vector<256xf32>
    %18 = vector.multi_reduction <add>, %17, %cst_13 [0] : vector<8x256xf32> to vector<256xf32>
    %19 = vector.shape_cast %18 : vector<256xf32> to vector<1x256xf32>
    %cst_14 = arith.constant 8.000000e+00 : f32
    %20 = vector.broadcast %cst_14 : f32 to vector<1x256xf32>
    %21 = arith.divf %19, %20 : vector<1x256xf32>
    %22 = vector.broadcast %12 : vector<1x256xf32> to vector<8x256xf32>
    %23 = arith.subf %6, %22 : vector<8x256xf32>
    %cst_15 = arith.constant 9.99999974E-6 : f32
    %24 = vector.broadcast %cst_15 : f32 to vector<1x256xf32>
    %25 = arith.addf %21, %24 : vector<1x256xf32>
    %26 = math.rsqrt %25 : vector<1x256xf32>
    %27 = vector.broadcast %26 : vector<1x256xf32> to vector<8x256xf32>
    %28 = arith.mulf %23, %27 : vector<8x256xf32>
    %29 = vector.broadcast %7 : vector<1x256xf32> to vector<8x256xf32>
    %30 = arith.mulf %28, %29 : vector<8x256xf32>
    %31 = vector.broadcast %8 : vector<1x256xf32> to vector<8x256xf32>
    %32 = arith.addf %30, %31 : vector<8x256xf32>
    %cst_16 = arith.constant 0.000000e+00 : f32
    %33 = vector.broadcast %cst_16 : f32 to vector<8x256xf32>
    %34 = arith.maximumf %32, %33 : vector<8x256xf32>
    %c0_17 = arith.constant 0 : index
    %c0_18 = arith.constant 0 : index
    %35 = vector.load %arg4[%c0_17, %c0_18] : memref<128x256xbf16, #tpu.memory_space<vmem>>, vector<128x256xbf16>
    %cst_19 = arith.constant dense<0.000000e+00> : vector<8x256xf32>
    %36 = tpu.matmul %1, %35, %cst_19 {dimension_numbers = #tpu.dot_dimension_numbers<[1], [0], [0], [1], [0, 0, 1, 1], [], []>} : vector<8x128xbf16>, vector<128x256xbf16>, vector<8x256xf32> -> vector<8x256xf32>
    %c0_20 = arith.constant 0 : index
    %c0_21 = arith.constant 0 : index
    %37 = vector.load %arg5[%c0_20, %c0_21] : memref<1x256xf32, #tpu.memory_space<vmem>>, vector<1x256xf32>
    %38 = vector.broadcast %37 : vector<1x256xf32> to vector<8x256xf32>
    %39 = arith.addf %36, %38 : vector<8x256xf32>
    %c0_22 = arith.constant 0 : index
    %c0_23 = arith.constant 0 : index
    %40 = vector.load %arg6[%c0_22, %c0_23] : memref<1x256xf32, #tpu.memory_space<vmem>>, vector<1x256xf32>
    %c0_24 = arith.constant 0 : index
    %c0_25 = arith.constant 0 : index
    %41 = vector.load %arg7[%c0_24, %c0_25] : memref<1x256xf32, #tpu.memory_space<vmem>>, vector<1x256xf32>
    %cst_26 = arith.constant dense<0.000000e+00> : vector<256xf32>
    %42 = vector.multi_reduction <add>, %39, %cst_26 [0] : vector<8x256xf32> to vector<256xf32>
    %43 = vector.shape_cast %42 : vector<256xf32> to vector<1x256xf32>
    %cst_27 = arith.constant 8.000000e+00 : f32
    %44 = vector.broadcast %cst_27 : f32 to vector<1x256xf32>
    %45 = arith.divf %43, %44 : vector<1x256xf32>
    %46 = vector.broadcast %45 : vector<1x256xf32> to vector<8x256xf32>
    %47 = arith.subf %39, %46 : vector<8x256xf32>
    %48 = vector.broadcast %45 : vector<1x256xf32> to vector<8x256xf32>
    %49 = arith.subf %39, %48 : vector<8x256xf32>
    %50 = arith.mulf %47, %49 : vector<8x256xf32>
    %cst_28 = arith.constant dense<0.000000e+00> : vector<256xf32>
    %51 = vector.multi_reduction <add>, %50, %cst_28 [0] : vector<8x256xf32> to vector<256xf32>
    %52 = vector.shape_cast %51 : vector<256xf32> to vector<1x256xf32>
    %cst_29 = arith.constant 8.000000e+00 : f32
    %53 = vector.broadcast %cst_29 : f32 to vector<1x256xf32>
    %54 = arith.divf %52, %53 : vector<1x256xf32>
    %55 = vector.broadcast %45 : vector<1x256xf32> to vector<8x256xf32>
    %56 = arith.subf %39, %55 : vector<8x256xf32>
    %cst_30 = arith.constant 9.99999974E-6 : f32
    %57 = vector.broadcast %cst_30 : f32 to vector<1x256xf32>
    %58 = arith.addf %54, %57 : vector<1x256xf32>
    %59 = math.rsqrt %58 : vector<1x256xf32>
    %60 = vector.broadcast %59 : vector<1x256xf32> to vector<8x256xf32>
    %61 = arith.mulf %56, %60 : vector<8x256xf32>
    %62 = vector.broadcast %40 : vector<1x256xf32> to vector<8x256xf32>
    %63 = arith.mulf %61, %62 : vector<8x256xf32>
    %64 = vector.broadcast %41 : vector<1x256xf32> to vector<8x256xf32>
    %65 = arith.addf %63, %64 : vector<8x256xf32>
    %cst_31 = arith.constant 0.000000e+00 : f32
    %66 = vector.broadcast %cst_31 : f32 to vector<8x256xf32>
    %67 = arith.maximumf %65, %66 : vector<8x256xf32>
    %68 = arith.truncf %34 : vector<8x256xf32> to vector<8x256xbf16>
    %c0_32 = arith.constant 0 : index
    %c0_33 = arith.constant 0 : index
    %69 = vector.load %arg8[%c0_32, %c0_33] : memref<256x512xbf16, #tpu.memory_space<vmem>>, vector<256x512xbf16>
    %cst_34 = arith.constant dense<0.000000e+00> : vector<8x512xf32>
    %70 = tpu.matmul %68, %69, %cst_34 {dimension_numbers = #tpu.dot_dimension_numbers<[1], [0], [0], [1], [0, 0, 1, 1], [], []>} : vector<8x256xbf16>, vector<256x512xbf16>, vector<8x512xf32> -> vector<8x512xf32>
    %71 = arith.truncf %67 : vector<8x256xf32> to vector<8x256xbf16>
    %c0_35 = arith.constant 0 : index
    %c0_36 = arith.constant 0 : index
    %72 = vector.load %arg9[%c0_35, %c0_36] : memref<256x512xbf16, #tpu.memory_space<vmem>>, vector<256x512xbf16>
    %cst_37 = arith.constant dense<0.000000e+00> : vector<8x512xf32>
    %73 = tpu.matmul %71, %72, %cst_37 {dimension_numbers = #tpu.dot_dimension_numbers<[1], [0], [0], [1], [0, 0, 1, 1], [], []>} : vector<8x256xbf16>, vector<256x512xbf16>, vector<8x512xf32> -> vector<8x512xf32>
    %74 = arith.addf %70, %73 : vector<8x512xf32>
    %c0_38 = arith.constant 0 : index
    %c0_39 = arith.constant 0 : index
    %75 = vector.load %arg10[%c0_38, %c0_39] : memref<1x512xf32, #tpu.memory_space<vmem>>, vector<1x512xf32>
    %76 = vector.broadcast %75 : vector<1x512xf32> to vector<8x512xf32>
    %77 = arith.addf %74, %76 : vector<8x512xf32>
    %c0_40 = arith.constant 0 : index
    %c0_41 = arith.constant 0 : index
    %78 = vector.load %arg11[%c0_40, %c0_41] : memref<1x512xf32, #tpu.memory_space<vmem>>, vector<1x512xf32>
    %c0_42 = arith.constant 0 : index
    %c0_43 = arith.constant 0 : index
    %79 = vector.load %arg12[%c0_42, %c0_43] : memref<1x512xf32, #tpu.memory_space<vmem>>, vector<1x512xf32>
    %cst_44 = arith.constant dense<0.000000e+00> : vector<512xf32>
    %80 = vector.multi_reduction <add>, %77, %cst_44 [0] : vector<8x512xf32> to vector<512xf32>
    %81 = vector.shape_cast %80 : vector<512xf32> to vector<1x512xf32>
    %cst_45 = arith.constant 8.000000e+00 : f32
    %82 = vector.broadcast %cst_45 : f32 to vector<1x512xf32>
    %83 = arith.divf %81, %82 : vector<1x512xf32>
    %84 = vector.broadcast %83 : vector<1x512xf32> to vector<8x512xf32>
    %85 = arith.subf %77, %84 : vector<8x512xf32>
    %86 = vector.broadcast %83 : vector<1x512xf32> to vector<8x512xf32>
    %87 = arith.subf %77, %86 : vector<8x512xf32>
    %88 = arith.mulf %85, %87 : vector<8x512xf32>
    %cst_46 = arith.constant dense<0.000000e+00> : vector<512xf32>
    %89 = vector.multi_reduction <add>, %88, %cst_46 [0] : vector<8x512xf32> to vector<512xf32>
    %90 = vector.shape_cast %89 : vector<512xf32> to vector<1x512xf32>
    %cst_47 = arith.constant 8.000000e+00 : f32
    %91 = vector.broadcast %cst_47 : f32 to vector<1x512xf32>
    %92 = arith.divf %90, %91 : vector<1x512xf32>
    %93 = vector.broadcast %83 : vector<1x512xf32> to vector<8x512xf32>
    %94 = arith.subf %77, %93 : vector<8x512xf32>
    %cst_48 = arith.constant 9.99999974E-6 : f32
    %95 = vector.broadcast %cst_48 : f32 to vector<1x512xf32>
    %96 = arith.addf %92, %95 : vector<1x512xf32>
    %97 = math.rsqrt %96 : vector<1x512xf32>
    %98 = vector.broadcast %97 : vector<1x512xf32> to vector<8x512xf32>
    %99 = arith.mulf %94, %98 : vector<8x512xf32>
    %100 = vector.broadcast %78 : vector<1x512xf32> to vector<8x512xf32>
    %101 = arith.mulf %99, %100 : vector<8x512xf32>
    %102 = vector.broadcast %79 : vector<1x512xf32> to vector<8x512xf32>
    %103 = arith.addf %101, %102 : vector<8x512xf32>
    %cst_49 = arith.constant 0.000000e+00 : f32
    %104 = vector.broadcast %cst_49 : f32 to vector<8x512xf32>
    %105 = arith.maximumf %103, %104 : vector<8x512xf32>
    %106 = arith.truncf %105 : vector<8x512xf32> to vector<8x512xbf16>
    %c0_50 = arith.constant 0 : index
    %c0_51 = arith.constant 0 : index
    %107 = vector.load %arg13[%c0_50, %c0_51] : memref<512x1024xbf16, #tpu.memory_space<vmem>>, vector<512x1024xbf16>
    %cst_52 = arith.constant dense<0.000000e+00> : vector<8x1024xf32>
    %108 = tpu.matmul %106, %107, %cst_52 {dimension_numbers = #tpu.dot_dimension_numbers<[1], [0], [0], [1], [0, 0, 1, 1], [], []>} : vector<8x512xbf16>, vector<512x1024xbf16>, vector<8x1024xf32> -> vector<8x1024xf32>
    %c0_53 = arith.constant 0 : index
    %c0_54 = arith.constant 0 : index
    %109 = vector.load %arg14[%c0_53, %c0_54] : memref<1x1024xf32, #tpu.memory_space<vmem>>, vector<1x1024xf32>
    %110 = vector.broadcast %109 : vector<1x1024xf32> to vector<8x1024xf32>
    %111 = arith.addf %108, %110 : vector<8x1024xf32>
    %c0_55 = arith.constant 0 : index
    %c0_56 = arith.constant 0 : index
    %112 = vector.load %arg15[%c0_55, %c0_56] : memref<1x1024xf32, #tpu.memory_space<vmem>>, vector<1x1024xf32>
    %c0_57 = arith.constant 0 : index
    %c0_58 = arith.constant 0 : index
    %113 = vector.load %arg16[%c0_57, %c0_58] : memref<1x1024xf32, #tpu.memory_space<vmem>>, vector<1x1024xf32>
    %cst_59 = arith.constant dense<0.000000e+00> : vector<1024xf32>
    %114 = vector.multi_reduction <add>, %111, %cst_59 [0] : vector<8x1024xf32> to vector<1024xf32>
    %115 = vector.shape_cast %114 : vector<1024xf32> to vector<1x1024xf32>
    %cst_60 = arith.constant 8.000000e+00 : f32
    %116 = vector.broadcast %cst_60 : f32 to vector<1x1024xf32>
    %117 = arith.divf %115, %116 : vector<1x1024xf32>
    %118 = vector.broadcast %117 : vector<1x1024xf32> to vector<8x1024xf32>
    %119 = arith.subf %111, %118 : vector<8x1024xf32>
    %120 = vector.broadcast %117 : vector<1x1024xf32> to vector<8x1024xf32>
    %121 = arith.subf %111, %120 : vector<8x1024xf32>
    %122 = arith.mulf %119, %121 : vector<8x1024xf32>
    %cst_61 = arith.constant dense<0.000000e+00> : vector<1024xf32>
    %123 = vector.multi_reduction <add>, %122, %cst_61 [0] : vector<8x1024xf32> to vector<1024xf32>
    %124 = vector.shape_cast %123 : vector<1024xf32> to vector<1x1024xf32>
    %cst_62 = arith.constant 8.000000e+00 : f32
    %125 = vector.broadcast %cst_62 : f32 to vector<1x1024xf32>
    %126 = arith.divf %124, %125 : vector<1x1024xf32>
    %127 = vector.broadcast %117 : vector<1x1024xf32> to vector<8x1024xf32>
    %128 = arith.subf %111, %127 : vector<8x1024xf32>
    %cst_63 = arith.constant 9.99999974E-6 : f32
    %129 = vector.broadcast %cst_63 : f32 to vector<1x1024xf32>
    %130 = arith.addf %126, %129 : vector<1x1024xf32>
    %131 = math.rsqrt %130 : vector<1x1024xf32>
    %132 = vector.broadcast %131 : vector<1x1024xf32> to vector<8x1024xf32>
    %133 = arith.mulf %128, %132 : vector<8x1024xf32>
    %134 = vector.broadcast %112 : vector<1x1024xf32> to vector<8x1024xf32>
    %135 = arith.mulf %133, %134 : vector<8x1024xf32>
    %136 = vector.broadcast %113 : vector<1x1024xf32> to vector<8x1024xf32>
    %137 = arith.addf %135, %136 : vector<8x1024xf32>
    %cst_64 = arith.constant 0.000000e+00 : f32
    %138 = vector.broadcast %cst_64 : f32 to vector<8x1024xf32>
    %139 = arith.maximumf %137, %138 : vector<8x1024xf32>
    %140 = arith.truncf %139 : vector<8x1024xf32> to vector<8x1024xbf16>
    %c0_65 = arith.constant 0 : index
    %c0_66 = arith.constant 0 : index
    %141 = vector.load %arg17[%c0_65, %c0_66] : memref<1024x896xbf16, #tpu.memory_space<vmem>>, vector<1024x896xbf16>
    %cst_67 = arith.constant dense<0.000000e+00> : vector<8x896xf32>
    %142 = tpu.matmul %140, %141, %cst_67 {dimension_numbers = #tpu.dot_dimension_numbers<[1], [0], [0], [1], [0, 0, 1, 1], [], []>} : vector<8x1024xbf16>, vector<1024x896xbf16>, vector<8x896xf32> -> vector<8x896xf32>
    %c0_68 = arith.constant 0 : index
    %c0_69 = arith.constant 0 : index
    %143 = vector.load %arg18[%c0_68, %c0_69] : memref<1x896xf32, #tpu.memory_space<vmem>>, vector<1x896xf32>
    %144 = vector.broadcast %143 : vector<1x896xf32> to vector<8x896xf32>
    %145 = arith.addf %142, %144 : vector<8x896xf32>
    %146 = arith.negf %145 : vector<8x896xf32>
    %147 = math.exp %146 : vector<8x896xf32>
    %cst_70 = arith.constant 1.000000e+00 : f32
    %148 = vector.broadcast %cst_70 : f32 to vector<8x896xf32>
    %149 = arith.addf %148, %147 : vector<8x896xf32>
    %150 = arith.divf %148, %149 : vector<8x896xf32>
    %c0_71 = arith.constant 0 : index
    %c0_72 = arith.constant 0 : index
    %151 = vector.load %arg19[%c0_71, %c0_72] : memref<8x896xf32, #tpu.memory_space<vmem>>, vector<8x896xf32>
    tpu.vector_store %arg19[%c0_71, %c0_72], %150 {strides = array<i32>} : memref<8x896xf32, #tpu.memory_space<vmem>>, vector<8x896xf32>,
    return
  }
}

</mosaic_0001>

<llo_original>
// kernel: generator_forward.1
$region0: #{generator_forward.1}
  #allocation0 [shape = 'u32[]', space=smem, size = 0x4, offset = 0x4, fixed_abs, tag = 'smem constant byte address 0x4 - core index']
  #allocation1 [shape = 'u32[144,128]{1,0:T(1,128)}', space=vmem, size = 0x12000, scoped, tag = 'internal scratch']
  %s0 = inlined_call_operand.vmem [shape: bf16[8,128], index: 0, kind: input, shape index: {}]
  %s1 = inlined_call_operand.vmem [shape: bf16[8,128], index: 1, kind: input, shape index: {}]
  %s2 = inlined_call_operand.hbm [shape: bf16[128,256], index: 2, kind: input, shape index: {}]
  %s3 = inlined_call_operand.hbm [shape: f32[1,256], index: 3, kind: input, shape index: {}]
  %s4 = inlined_call_operand.hbm [shape: bf16[128,256], index: 4, kind: input, shape index: {}]
  %s5 = inlined_call_operand.hbm [shape: f32[1,256], index: 5, kind: input, shape index: {}]
  %s6 = inlined_call_operand.hbm [shape: f32[1,256], index: 6, kind: input, shape index: {}]
  %s7 = inlined_call_operand.hbm [shape: f32[1,256], index: 7, kind: input, shape index: {}]
  %s8 = inlined_call_operand.hbm [shape: bf16[256,512], index: 8, kind: input, shape index: {}]
  %s9 = inlined_call_operand.hbm [shape: bf16[256,512], index: 9, kind: input, shape index: {}]
  %s10 = inlined_call_operand.hbm [shape: f32[1,512], index: 10, kind: input, shape index: {}]
  %s11 = inlined_call_operand.hbm [shape: f32[1,512], index: 11, kind: input, shape index: {}]
  %s12 = inlined_call_operand.hbm [shape: f32[1,512], index: 12, kind: input, shape index: {}]
  %s13 = inlined_call_operand.hbm [shape: bf16[512,1024], index: 13, kind: input, shape index: {}]
  %s14 = inlined_call_operand.hbm [shape: f32[1,1024], index: 14, kind: input, shape index: {}]
  %s15 = inlined_call_operand.hbm [shape: f32[1,1024], index: 15, kind: input, shape index: {}]
  %s16 = inlined_call_operand.hbm [shape: f32[1,1024], index: 16, kind: input, shape index: {}]
  %s17 = inlined_call_operand.hbm [shape: bf16[1024,896], index: 17, kind: input, shape index: {}]
  %s18 = inlined_call_operand.hbm [shape: f32[1,896], index: 18, kind: input, shape index: {}]
  %s19 = inlined_call_operand.hbm [shape: f32[8,896], index: 19, kind: output, shape index: {}]
  %s20 = sld [smem:[#allocation0]]
  $region154: #{generator_forward.1} parent=0
    _
  %s22 = ssub.s32 1, %s20
  %s23 = scalar_select 0, %s22, %s20
  $region1: #{generator_forward.1} parent=0
    #allocation2 [shape = 'u8[65536]{0}', space=vmem, size = 0x10000, scoped, tag = 'input window, operand 2, single buffered']
    #allocation3 [shape = 's32[1]{0}', space=sflag, size = 0x4, scoped, tag = 'scoped memory for generator_forward.1']
    #allocation4 [shape = 's32[1]{0}', space=sflag, size = 0x4, scoped, tag = 'scoped memory for generator_forward.1']
    #allocation5 [shape = 'u8[1024]{0}', space=vmem, size = 0x400, scoped, tag = 'input window, operand 3, single buffered']
    #allocation6 [shape = 's32[1]{0}', space=sflag, size = 0x4, scoped, tag = 'scoped memory for generator_forward.1']
    #allocation7 [shape = 'u8[65536]{0}', space=vmem, size = 0x10000, scoped, tag = 'input window, operand 4, single buffered']
    #allocation8 [shape = 'u8[1024]{0}', space=vmem, size = 0x400, scoped, tag = 'input window, operand 5, single buffered']
    #allocation9 [shape = 's32[1]{0}', space=sflag, size = 0x4, scoped, tag = 'scoped memory for generator_forward.1']
    #allocation10 [shape = 'u8[1024]{0}', space=vmem, size = 0x400, scoped, tag = 'input window, operand 6, single buffered']
    #allocation11 [shape = 'u8[1024]{0}', space=vmem, size = 0x400, scoped, tag = 'input window, operand 7, single buffered']
    #allocation12 [shape = 's32[1]{0}', space=sflag, size = 0x4, scoped, tag = 'scoped memory for generator_forward.1']
    #allocation13 [shape = 'u8[262144]{0}', space=vmem, size = 0x40000, scoped, tag = 'input window, operand 8, single buffered']
    #allocation14 [shape = 'u8[262144]{0}', space=vmem, size = 0x40000, scoped, tag = 'input window, operand 9, single buffered']
    #allocation15 [shape = 's32[1]{0}', space=sflag, size = 0x4, scoped, tag = 'scoped memory for generator_forward.1']
    #allocation16 [shape = 'u8[2048]{0}', space=vmem, size = 0x800, scoped, tag = 'input window, operand 10, single buffered']
    #allocation17 [shape = 'u8[2048]{0}', space=vmem, size = 0x800, scoped, tag = 'input window, operand 11, single buffered']
    #allocation18 [shape = 's32[1]{0}', space=sflag, size = 0x4, scoped, tag = 'scoped memory for generator_forward.1']
    #allocation19 [shape = 'u8[2048]{0}', space=vmem, size = 0x800, scoped, tag = 'input window, operand 12, single buffered']
    #allocation20 [shape = 'u8[1048576]{0}', space=vmem, size = 0x100000, scoped, tag = 'input window, operand 13, single buffered']
    #allocation21 [shape = 's32[1]{0}', space=sflag, size = 0x4, scoped, tag = 'scoped memory for generator_forward.1']
    #allocation22 [shape = 'u8[4096]{0}', space=vmem, size = 0x1000, scoped, tag = 'input window, operand 14, single buffered']
    #allocation23 [shape = 'u8[4096]{0}', space=vmem, size = 0x1000, scoped, tag = 'input window, operand 15, single buffered']
    #allocation24 [shape = 's32[1]{0}', space=sflag, size = 0x4, scoped, tag = 'scoped memory for generator_forward.1']
    #allocation25 [shape = 'u8[4096]{0}', space=vmem, size = 0x1000, scoped, tag = 'input window, operand 16, single buffered']
    #allocation26 [shape = 'u8[1835008]{0}', space=vmem, size = 0x1c0000, scoped, tag = 'input window, operand 17, single buffered']
    #allocation27 [shape = 's32[1]{0}', space=sflag, size = 0x4, scoped, tag = 'scoped memory for generator_forward.1']
    #allocation28 [shape = 'u8[3584]{0}', space=vmem, size = 0x1000, scoped, tag = 'input window, operand 18, single buffered']
    #allocation29 [shape = 'u8[28672]{0}', space=vmem, size = 0x7000, scoped, tag = 'output window, operand 0, single buffered']
    %24 = vsyncpa [#allocation3], 0
    %25 = vsyncpa [#allocation6], 0
    %26 = vsyncpa [#allocation9], 0
    %27 = vsyncpa [#allocation12], 0
    %28 = vsyncpa [#allocation15], 0
    %29 = vsyncpa [#allocation18], 0
    %30 = vsyncpa [#allocation21], 0
    %31 = vsyncpa [#allocation24], 0
    %32 = vsyncpa [#allocation27], 0
    %33 = vsyncpa [#allocation4], 0
    // Predicated region
    $region2: #{generator_forward.1} parent=1 // pred_check
      _
    $region3: #{generator_forward.1} parent=1 // pred_check_branch
      %35 = sbr.rel (0) target = $region5
    $region4: #{generator_forward.1} parent=1 // pred_region
      _
    $region5: #{generator_forward.1} parent=1 // pred_fallthru
      _
    // Predicated region
    $region6: #{generator_forward.1} parent=1 // pred_check
      _
    $region7: #{generator_forward.1} parent=1 // pred_check_branch
      %37 = sbr.rel (0) target = $region9
    $region8: #{generator_forward.1} parent=1 // pred_region
      _
    $region9: #{generator_forward.1} parent=1 // pred_fallthru
      _
    // Predicated region
    $region10: #{generator_forward.1} parent=1 // pred_check
      _
    $region11: #{generator_forward.1} parent=1 // pred_check_branch
      %39 = sbr.rel (0) target = $region13
    $region12: #{generator_forward.1} parent=1 // pred_region
      %s41 = ssub.s32 2048, 2048
      %42 = vsyncadd [#allocation3], %s41
      %s43 = sshll.u32 [#allocation2], 4
      %s44 = int_to_ptr.vmem [resolvable:$true] %s43
      %49 = dma.hbm_to_vmem [thread:$0]  %s2, 2048, %s44, [#allocation3], 128, 128, 8
    $region13: #{generator_forward.1} parent=1 // pred_fallthru
      _
    // Predicated region
    $region14: #{generator_forward.1} parent=1 // pred_check
      _
    $region15: #{generator_forward.1} parent=1 // pred_check_branch
      %51 = sbr.rel (0) target = $region17
    $region16: #{generator_forward.1} parent=1 // pred_region
      %s53 = ssub.s32 32, 32
      %54 = vsyncadd [#allocation6], %s53
      %s56 = sshll.u32 [#allocation5], 4
      %s57 = int_to_ptr.vmem [resolvable:$true] %s56
      %59 = dma.hbm_to_vmem [thread:$0]  %s3, 32, %s57, [#allocation6]
    $region17: #{generator_forward.1} parent=1 // pred_fallthru
      _
    // Predicated region
    $region18: #{generator_forward.1} parent=1 // pred_check
      _
    $region19: #{generator_forward.1} parent=1 // pred_check_branch
      %61 = sbr.rel (0) target = $region21
    $region20: #{generator_forward.1} parent=1 // pred_region
      %s63 = ssub.s32 2048, 2048
      %64 = vsyncadd [#allocation6], %s63
      %s65 = sshll.u32 [#allocation7], 4
      %s66 = int_to_ptr.vmem [resolvable:$true] %s65
      %71 = dma.hbm_to_vmem [thread:$0]  %s4, 2048, %s66, [#allocation6], 128, 128, 8
    $region21: #{generator_forward.1} parent=1 // pred_fallthru
      _
    // Predicated region
    $region22: #{generator_forward.1} parent=1 // pred_check
      _
    $region23: #{generator_forward.1} parent=1 // pred_check_branch
      %73 = sbr.rel (0) target = $region25
    $region24: #{generator_forward.1} parent=1 // pred_region
      %s75 = ssub.s32 32, 32
      %76 = vsyncadd [#allocation9], %s75
      %s78 = sshll.u32 [#allocation8], 4
      %s79 = int_to_ptr.vmem [resolvable:$true] %s78
      %81 = dma.hbm_to_vmem [thread:$0]  %s5, 32, %s79, [#allocation9]
    $region25: #{generator_forward.1} parent=1 // pred_fallthru
      _
    // Predicated region
    $region26: #{generator_forward.1} parent=1 // pred_check
      _
    $region27: #{generator_forward.1} parent=1 // pred_check_branch
      %83 = sbr.rel (0) target = $region29
    $region28: #{generator_forward.1} parent=1 // pred_region
      %s85 = ssub.s32 32, 32
      %86 = vsyncadd [#allocation9], %s85
      %s88 = sshll.u32 [#allocation10], 4
      %s89 = int_to_ptr.vmem [resolvable:$true] %s88
      %91 = dma.hbm_to_vmem [thread:$0]  %s6, 32, %s89, [#allocation9]
    $region29: #{generator_forward.1} parent=1 // pred_fallthru
      _
    // Predicated region
    $region30: #{generator_forward.1} parent=1 // pred_check
      _
    $region31: #{generator_forward.1} parent=1 // pred_check_branch
      %93 = sbr.rel (0) target = $region33
    $region32: #{generator_forward.1} parent=1 // pred_region
      %s95 = ssub.s32 32, 32
      %96 = vsyncadd [#allocation12], %s95
      %s98 = sshll.u32 [#allocation11], 4
      %s99 = int_to_ptr.vmem [resolvable:$true] %s98
      %101 = dma.hbm_to_vmem [thread:$0]  %s7, 32, %s99, [#allocation12]
    $region33: #{generator_forward.1} parent=1 // pred_fallthru
      _
    // Predicated region
    $region34: #{generator_forward.1} parent=1 // pred_check
      _
    $region35: #{generator_forward.1} parent=1 // pred_check_branch
      %103 = sbr.rel (0) target = $region37
    $region36: #{generator_forward.1} parent=1 // pred_region
      %s105 = ssub.s32 8192, 8192
      %106 = vsyncadd [#allocation12], %s105
      %s107 = sshll.u32 [#allocation13], 4
      %s108 = int_to_ptr.vmem [resolvable:$true] %s107
      %113 = dma.hbm_to_vmem [thread:$0]  %s8, 8192, %s108, [#allocation12], 256, 256, 16
    $region37: #{generator_forward.1} parent=1 // pred_fallthru
      _
    // Predicated region
    $region38: #{generator_forward.1} parent=1 // pred_check
      _
    $region39: #{generator_forward.1} parent=1 // pred_check_branch
      %115 = sbr.rel (0) target = $region41
    $region40: #{generator_forward.1} parent=1 // pred_region
      %s117 = ssub.s32 8192, 8192
      %118 = vsyncadd [#allocation15], %s117
      %s119 = sshll.u32 [#allocation14], 4
      %s120 = int_to_ptr.vmem [resolvable:$true] %s119
      %125 = dma.hbm_to_vmem [thread:$0]  %s9, 8192, %s120, [#allocation15], 256, 256, 16
    $region41: #{generator_forward.1} parent=1 // pred_fallthru
      _
    // Predicated region
    $region42: #{generator_forward.1} parent=1 // pred_check
      _
    $region43: #{generator_forward.1} parent=1 // pred_check_branch
      %127 = sbr.rel (0) target = $region45
    $region44: #{generator_forward.1} parent=1 // pred_region
      %s129 = ssub.s32 64, 64
      %130 = vsyncadd [#allocation15], %s129
      %s132 = sshll.u32 [#allocation16], 4
      %s133 = int_to_ptr.vmem [resolvable:$true] %s132
      %135 = dma.hbm_to_vmem [thread:$0]  %s10, 64, %s133, [#allocation15]
    $region45: #{generator_forward.1} parent=1 // pred_fallthru
      _
    // Predicated region
    $region46: #{generator_forward.1} parent=1 // pred_check
      _
    $region47: #{generator_forward.1} parent=1 // pred_check_branch
      %137 = sbr.rel (0) target = $region49
    $region48: #{generator_forward.1} parent=1 // pred_region
      %s139 = ssub.s32 64, 64
      %140 = vsyncadd [#allocation18], %s139
      %s142 = sshll.u32 [#allocation17], 4
      %s143 = int_to_ptr.vmem [resolvable:$true] %s142
      %145 = dma.hbm_to_vmem [thread:$0]  %s11, 64, %s143, [#allocation18]
    $region49: #{generator_forward.1} parent=1 // pred_fallthru
      _
    // Predicated region
    $region50: #{generator_forward.1} parent=1 // pred_check
      _
    $region51: #{generator_forward.1} parent=1 // pred_check_branch
      %147 = sbr.rel (0) target = $region53
    $region52: #{generator_forward.1} parent=1 // pred_region
      %s149 = ssub.s32 64, 64
      %150 = vsyncadd [#allocation18], %s149
      %s152 = sshll.u32 [#allocation19], 4
      %s153 = int_to_ptr.vmem [resolvable:$true] %s152
      %155 = dma.hbm_to_vmem [thread:$0]  %s12, 64, %s153, [#allocation18]
    $region53: #{generator_forward.1} parent=1 // pred_fallthru
      _
    // Predicated region
    $region54: #{generator_forward.1} parent=1 // pred_check
      _
    $region55: #{generator_forward.1} parent=1 // pred_check_branch
      %157 = sbr.rel (0) target = $region57
    $region56: #{generator_forward.1} parent=1 // pred_region
      %s159 = ssub.s32 32768, 32768
      %160 = vsyncadd [#allocation21], %s159
      %s161 = sshll.u32 [#allocation20], 4
      %s162 = int_to_ptr.vmem [resolvable:$true] %s161
      %167 = dma.hbm_to_vmem [thread:$0]  %s13, 32768, %s162, [#allocation21], 512, 512, 32
    $region57: #{generator_forward.1} parent=1 // pred_fallthru
      _
    // Predicated region
    $region58: #{generator_forward.1} parent=1 // pred_check
      _
    $region59: #{generator_forward.1} parent=1 // pred_check_branch
      %169 = sbr.rel (0) target = $region61
    $region60: #{generator_forward.1} parent=1 // pred_region
      %s171 = ssub.s32 128, 128
      %172 = vsyncadd [#allocation21], %s171
      %s174 = sshll.u32 [#allocation22], 4
      %s175 = int_to_ptr.vmem [resolvable:$true] %s174
      %177 = dma.hbm_to_vmem [thread:$0]  %s14, 128, %s175, [#allocation21]
    $region61: #{generator_forward.1} parent=1 // pred_fallthru
      _
    // Predicated region
    $region62: #{generator_forward.1} parent=1 // pred_check
      _
    $region63: #{generator_forward.1} parent=1 // pred_check_branch
      %179 = sbr.rel (0) target = $region65
    $region64: #{generator_forward.1} parent=1 // pred_region
      %s181 = ssub.s32 128, 128
      %182 = vsyncadd [#allocation24], %s181
      %s184 = sshll.u32 [#allocation23], 4
      %s185 = int_to_ptr.vmem [resolvable:$true] %s184
      %187 = dma.hbm_to_vmem [thread:$0]  %s15, 128, %s185, [#allocation24]
    $region65: #{generator_forward.1} parent=1 // pred_fallthru
      _
    // Predicated region
    $region66: #{generator_forward.1} parent=1 // pred_check
      _
    $region67: #{generator_forward.1} parent=1 // pred_check_branch
      %189 = sbr.rel (0) target = $region69
    $region68: #{generator_forward.1} parent=1 // pred_region
      %s191 = ssub.s32 128, 128
      %192 = vsyncadd [#allocation24], %s191
      %s194 = sshll.u32 [#allocation25], 4
      %s195 = int_to_ptr.vmem [resolvable:$true] %s194
      %197 = dma.hbm_to_vmem [thread:$0]  %s16, 128, %s195, [#allocation24]
    $region69: #{generator_forward.1} parent=1 // pred_fallthru
      _
    // Predicated region
    $region70: #{generator_forward.1} parent=1 // pred_check
      _
    $region71: #{generator_forward.1} parent=1 // pred_check_branch
      %199 = sbr.rel (0) target = $region73
    $region72: #{generator_forward.1} parent=1 // pred_region
      %s201 = ssub.s32 57344, 57344
      %202 = vsyncadd [#allocation27], %s201
      %s203 = sshll.u32 [#allocation26], 4
      %s204 = int_to_ptr.vmem [resolvable:$true] %s203
      %209 = dma.hbm_to_vmem [thread:$0]  %s17, 57344, %s204, [#allocation27], 448, 448, 28
    $region73: #{generator_forward.1} parent=1 // pred_fallthru
      _
    // Predicated region
    $region74: #{generator_forward.1} parent=1 // pred_check
      _
    $region75: #{generator_forward.1} parent=1 // pred_check_branch
      %211 = sbr.rel (0) target = $region77
    $region76: #{generator_forward.1} parent=1 // pred_region
      %s213 = ssub.s32 112, 112
      %214 = vsyncadd [#allocation27], %s213
      %s216 = sshll.u32 [#allocation28], 4
      %s217 = int_to_ptr.vmem [resolvable:$true] %s216
      %219 = dma.hbm_to_vmem [thread:$0]  %s18, 112, %s217, [#allocation27]
    $region77: #{generator_forward.1} parent=1 // pred_fallthru
      _
    // Predicated region
    $region78: #{generator_forward.1} parent=1 // pred_check
      _
    $region79: #{generator_forward.1} parent=1 // pred_check_branch
      %221 = sbr.rel (0) target = $region81
    $region80: #{generator_forward.1} parent=1 // pred_region
      %222 = dma.done [#allocation3], 2048
    $region81: #{generator_forward.1} parent=1 // pred_fallthru
      _
    // Predicated region
    $region82: #{generator_forward.1} parent=1 // pred_check
      _
    $region83: #{generator_forward.1} parent=1 // pred_check_branch
      %224 = sbr.rel (0) target = $region85
    $region84: #{generator_forward.1} parent=1 // pred_region
      %225 = dma.done [#allocation6], 32
    $region85: #{generator_forward.1} parent=1 // pred_fallthru
      _
    // Predicated region
    $region86: #{generator_forward.1} parent=1 // pred_check
      _
    $region87: #{generator_forward.1} parent=1 // pred_check_branch
      %227 = sbr.rel (0) target = $region89
    $region88: #{generator_forward.1} parent=1 // pred_region
      %228 = dma.done [#allocation6], 2048
    $region89: #{generator_forward.1} parent=1 // pred_fallthru
      _
    // Predicated region
    $region90: #{generator_forward.1} parent=1 // pred_check
      _
    $region91: #{generator_forward.1} parent=1 // pred_check_branch
      %230 = sbr.rel (0) target = $region93
    $region92: #{generator_forward.1} parent=1 // pred_region
      %231 = dma.done [#allocation9], 32
    $region93: #{generator_forward.1} parent=1 // pred_fallthru
      _
    // Predicated region
    $region94: #{generator_forward.1} parent=1 // pred_check
      _
    $region95: #{generator_forward.1} parent=1 // pred_check_branch
      %233 = sbr.rel (0) target = $region97
    $region96: #{generator_forward.1} parent=1 // pred_region
      %234 = dma.done [#allocation9], 32
    $region97: #{generator_forward.1} parent=1 // pred_fallthru
      _
    // Predicated region
    $region98: #{generator_forward.1} parent=1 // pred_check
      _
    $region99: #{generator_forward.1} parent=1 // pred_check_branch
      %236 = sbr.rel (0) target = $region101
    $region100: #{generator_forward.1} parent=1 // pred_region
      %237 = dma.done [#allocation12], 32
    $region101: #{generator_forward.1} parent=1 // pred_fallthru
      _
    // Predicated region
    $region102: #{generator_forward.1} parent=1 // pred_check
      _
    $region103: #{generator_forward.1} parent=1 // pred_check_branch
      %239 = sbr.rel (0) target = $region105
    $region104: #{generator_forward.1} parent=1 // pred_region
      %240 = dma.done [#allocation12], 8192
    $region105: #{generator_forward.1} parent=1 // pred_fallthru
      _
    // Predicated region
    $region106: #{generator_forward.1} parent=1 // pred_check
      _
    $region107: #{generator_forward.1} parent=1 // pred_check_branch
      %242 = sbr.rel (0) target = $region109
    $region108: #{generator_forward.1} parent=1 // pred_region
      %243 = dma.done [#allocation15], 8192
    $region109: #{generator_forward.1} parent=1 // pred_fallthru
      _
    // Predicated region
    $region110: #{generator_forward.1} parent=1 // pred_check
      _
    $region111: #{generator_forward.1} parent=1 // pred_check_branch
      %245 = sbr.rel (0) target = $region113
    $region112: #{generator_forward.1} parent=1 // pred_region
      %246 = dma.done [#allocation15], 64
    $region113: #{generator_forward.1} parent=1 // pred_fallthru
      _
    // Predicated region
    $region114: #{generator_forward.1} parent=1 // pred_check
      _
    $region115: #{generator_forward.1} parent=1 // pred_check_branch
      %248 = sbr.rel (0) target = $region117
    $region116: #{generator_forward.1} parent=1 // pred_region
      %249 = dma.done [#allocation18], 64
    $region117: #{generator_forward.1} parent=1 // pred_fallthru
      _
    // Predicated region
    $region118: #{generator_forward.1} parent=1 // pred_check
      _
    $region119: #{generator_forward.1} parent=1 // pred_check_branch
      %251 = sbr.rel (0) target = $region121
    $region120: #{generator_forward.1} parent=1 // pred_region
      %252 = dma.done [#allocation18], 64
    $region121: #{generator_forward.1} parent=1 // pred_fallthru
      _
    // Predicated region
    $region122: #{generator_forward.1} parent=1 // pred_check
      _
    $region123: #{generator_forward.1} parent=1 // pred_check_branch
      %254 = sbr.rel (0) target = $region125
    $region124: #{generator_forward.1} parent=1 // pred_region
      %255 = dma.done [#allocation21], 32768
    $region125: #{generator_forward.1} parent=1 // pred_fallthru
      _
    // Predicated region
    $region126: #{generator_forward.1} parent=1 // pred_check
      _
    $region127: #{generator_forward.1} parent=1 // pred_check_branch
      %257 = sbr.rel (0) target = $region129
    $region128: #{generator_forward.1} parent=1 // pred_region
      %258 = dma.done [#allocation21], 128
    $region129: #{generator_forward.1} parent=1 // pred_fallthru
      _
    // Predicated region
    $region130: #{generator_forward.1} parent=1 // pred_check
      _
    $region131: #{generator_forward.1} parent=1 // pred_check_branch
      %260 = sbr.rel (0) target = $region133
    $region132: #{generator_forward.1} parent=1 // pred_region
      %261 = dma.done [#allocation24], 128
    $region133: #{generator_forward.1} parent=1 // pred_fallthru
      _
    // Predicated region
    $region134: #{generator_forward.1} parent=1 // pred_check
      _
    $region135: #{generator_forward.1} parent=1 // pred_check_branch
      %263 = sbr.rel (0) target = $region137
    $region136: #{generator_forward.1} parent=1 // pred_region
      %264 = dma.done [#allocation24], 128
    $region137: #{generator_forward.1} parent=1 // pred_fallthru
      _
    // Predicated region
    $region138: #{generator_forward.1} parent=1 // pred_check
      _
    $region139: #{generator_forward.1} parent=1 // pred_check_branch
      %266 = sbr.rel (0) target = $region141
    $region140: #{generator_forward.1} parent=1 // pred_region
      %267 = dma.done [#allocation27], 57344
    $region141: #{generator_forward.1} parent=1 // pred_fallthru
      _
    // Predicated region
    $region142: #{generator_forward.1} parent=1 // pred_check
      _
    $region143: #{generator_forward.1} parent=1 // pred_check_branch
      %269 = sbr.rel (0) target = $region145
    $region144: #{generator_forward.1} parent=1 // pred_region
      %270 = dma.done [#allocation27], 112
    $region145: #{generator_forward.1} parent=1 // pred_fallthru
      _
    %v272 = vld [vmem:[%s0] sm:$0xf]
    %v273 = vld [vmem:[%s1] sm:$0xf]
    %v274 = vld [vmem:[#allocation2] sm:$0xff]
    %v275 = vld [vmem:[#allocation2 + $0x8] sm:$0xff]
    %v276 = vld [vmem:[#allocation2 + $0x10] sm:$0xff]
    %v277 = vld [vmem:[#allocation2 + $0x18] sm:$0xff]
    %v278 = vld [vmem:[#allocation2 + $0x20] sm:$0xff]
    %v279 = vld [vmem:[#allocation2 + $0x28] sm:$0xff]
    %v280 = vld [vmem:[#allocation2 + $0x30] sm:$0xff]
    %v281 = vld [vmem:[#allocation2 + $0x38] sm:$0xff]
    %v282 = vld [vmem:[#allocation2 + $0x40] sm:$0xff]
    %v283 = vld [vmem:[#allocation2 + $0x48] sm:$0xff]
    %v284 = vld [vmem:[#allocation2 + $0x50] sm:$0xff]
    %v285 = vld [vmem:[#allocation2 + $0x58] sm:$0xff]
    %v286 = vld [vmem:[#allocation2 + $0x60] sm:$0xff]
    %v287 = vld [vmem:[#allocation2 + $0x68] sm:$0xff]
    %v288 = vld [vmem:[#allocation2 + $0x70] sm:$0xff]
    %v289 = vld [vmem:[#allocation2 + $0x78] sm:$0xff]
    %v290 = vld [vmem:[#allocation5] sm:$0x3]
    %v292 = vlaneseq
    %v293 = vshrl.u32 %v292, 7
    %v294 = vsub.s32 0, %v293
    %v295 = vrot.slane %v290, %v294
    %v296 = vlaneseq
    %v297 = vshrl.u32 %v296, 7
    %v298 = vsub.s32 1, %v297
    %v299 = vrot.slane %v290, %v298
    %v318 = vunpack.c.l.b16 %v274
    %v319 = vunpack.c.h.b16 %v274
    %v320 = vunpack.c.l.b16 %v275
    %v321 = vunpack.c.h.b16 %v275
    %v322 = vunpack.c.l.b16 %v276
    %v323 = vunpack.c.h.b16 %v276
    %v324 = vunpack.c.l.b16 %v277
    %v325 = vunpack.c.h.b16 %v277
    %v326 = vunpack.c.l.b16 %v278
    %v327 = vunpack.c.h.b16 %v278
    %v328 = vunpack.c.l.b16 %v279
    %v329 = vunpack.c.h.b16 %v279
    %v330 = vunpack.c.l.b16 %v280
    %v331 = vunpack.c.h.b16 %v280
    %v332 = vunpack.c.l.b16 %v281
    %v333 = vunpack.c.h.b16 %v281
    %v334 = vunpack.c.l.b16 %v282
    %v335 = vunpack.c.h.b16 %v282
    %v336 = vunpack.c.l.b16 %v283
    %v337 = vunpack.c.h.b16 %v283
    %v338 = vunpack.c.l.b16 %v284
    %v339 = vunpack.c.h.b16 %v284
    %v340 = vunpack.c.l.b16 %v285
    %v341 = vunpack.c.h.b16 %v285
    %v342 = vunpack.c.l.b16 %v286
    %v343 = vunpack.c.h.b16 %v286
    %v344 = vunpack.c.l.b16 %v287
    %v345 = vunpack.c.h.b16 %v287
    %v346 = vunpack.c.l.b16 %v288
    %v347 = vunpack.c.h.b16 %v288
    %v348 = vunpack.c.l.b16 %v289
    %v349 = vunpack.c.h.b16 %v289
    %v350 = vpack.c.b16 %v320, %v318
    %v351 = vpack.c.b16 %v321, %v319
    %v352 = vpack.c.b16 %v324, %v322
    %v353 = vpack.c.b16 %v325, %v323
    %v354 = vpack.c.b16 %v328, %v326
    %v355 = vpack.c.b16 %v329, %v327
    %v356 = vpack.c.b16 %v332, %v330
    %v357 = vpack.c.b16 %v333, %v331
    %v358 = vpack.c.b16 %v336, %v334
    %v359 = vpack.c.b16 %v337, %v335
    %v360 = vpack.c.b16 %v340, %v338
    %v361 = vpack.c.b16 %v341, %v339
    %v362 = vpack.c.b16 %v344, %v342
    %v363 = vpack.c.b16 %v345, %v343
    %v364 = vpack.c.b16 %v348, %v346
    %v365 = vpack.c.b16 %v349, %v347
    %382 = vmatprep.subr.bf16.mxu0 %v365
    %383 = vmatpush1.bf16.msra.mxu0 %v364
    %384 = vmatprep.subr.bf16.mxu0 %v363
    %385 = vmatpush1.bf16.msra.mxu0 %v362
    %386 = vmatprep.subr.bf16.mxu0 %v361
    %387 = vmatpush1.bf16.msra.mxu0 %v360
    %388 = vmatprep.subr.bf16.mxu0 %v359
    %389 = vmatpush1.bf16.msra.mxu0 %v358
    %390 = vmatprep.subr.bf16.mxu0 %v357
    %391 = vmatpush1.bf16.msra.mxu0 %v356
    %392 = vmatprep.subr.bf16.mxu0 %v355
    %393 = vmatpush1.bf16.msra.mxu0 %v354
    %394 = vmatprep.subr.bf16.mxu0 %v353
    %395 = vmatpush1.bf16.msra.mxu0 %v352
    %396 = vmatprep.subr.bf16.mxu0 %v351
    %397 = vmatpush1.bf16.msra.mxu0 %v350
    %398 = vmatprep.subr.bf16.mxu0 0
    %399 = vmatpush2.bf16.msra.mxu0 0
    %400 = vmatprep.subr.bf16.mxu0 0
    %401 = vmatpush2.bf16.msra.mxu0 0
    %402 = vmatprep.subr.bf16.mxu0 0
    %403 = vmatpush2.bf16.msra.mxu0 0
    %404 = vmatprep.subr.bf16.mxu0 0
    %405 = vmatpush2.bf16.msra.mxu0 0
    %406 = vmatprep.subr.bf16.mxu0 0
    %407 = vmatpush2.bf16.msra.mxu0 0
    %408 = vmatprep.subr.bf16.mxu0 0
    %409 = vmatpush2.bf16.msra.mxu0 0
    %410 = vmatprep.subr.bf16.mxu0 0
    %411 = vmatpush2.bf16.msra.mxu0 0
    %412 = vmatprep.subr.bf16.mxu0 0
    %413 = vmatpush2.bf16.msra.mxu0 0
    %414 = vmatprep.mubr.bf16.mxu0 0
    %415 = vmatmul.mubr.bf16.gmra.mxu0 %v272
    %v416 = vpop.f32.mrf.mxu0
    %v417 = vadd.f32 %v295, %v416
    %v418 = vpop.f32.mrf.mxu0
    %v419 = vadd.f32 %v299, %v418
    %v420 = vpop.f32.mrf.mxu0
    %v421 = vpop.f32.mrf.mxu0
    %422 = vdwg.mxu0
    %v423 = vld [vmem:[#allocation10] sm:$0x3]
    %v424 = vld [vmem:[#allocation11] sm:$0x3]
    %v425 = vrot.slane %v417, 4
    %v426 = vadd.f32 %v417, %v425
    %v427 = vrot.slane %v426, 2
    %v428 = vadd.f32 %v426, %v427
    %v429 = vrot.slane %v428, 1
    %v430 = vadd.f32 %v428, %v429
    %v431 = vrot.slane %v419, 4
    %v432 = vadd.f32 %v419, %v431
    %v433 = vrot.slane %v432, 2
    %v434 = vadd.f32 %v432, %v433
    %v435 = vrot.slane %v434, 1
    %v436 = vadd.f32 %v434, %v435
    %v437 = vrcp.pop 8.0
    %v438 = vmul.f32 %v430, %v437
    %v439 = vmul.f32 %v436, %v437
    %v440 = vsub.f32 %v417, %v438
    %v441 = vsub.f32 %v419, %v439
    %v442 = vmul.f32 %v440, %v440
    %v443 = vmul.f32 %v441, %v441
    %v444 = vrot.slane %v442, 4
    %v445 = vadd.f32 %v442, %v444
    %v446 = vrot.slane %v445, 2
    %v447 = vadd.f32 %v445, %v446
    %v448 = vrot.slane %v447, 1
    %v449 = vadd.f32 %v447, %v448
    %v450 = vrot.slane %v443, 4
    %v451 = vadd.f32 %v443, %v450
    %v452 = vrot.slane %v451, 2
    %v453 = vadd.f32 %v451, %v452
    %v454 = vrot.slane %v453, 1
    %v455 = vadd.f32 %v453, %v454
    %v456 = vmul.f32 %v449, %v437
    %v457 = vmul.f32 %v455, %v437
    %v458 = vadd.f32 %v456, 1e-05
    %v459 = vadd.f32 %v457, 1e-05
    %v460 = vrsqrt.pop %v458
    %v461 = vrsqrt.pop %v459
    %v462 = vmul.f32 %v440, %v460
    %v463 = vmul.f32 %v441, %v461
    %v465 = vlaneseq
    %v466 = vshrl.u32 %v465, 7
    %v467 = vsub.s32 0, %v466
    %v468 = vrot.slane %v423, %v467
    %v469 = vlaneseq
    %v470 = vshrl.u32 %v469, 7
    %v471 = vsub.s32 1, %v470
    %v472 = vrot.slane %v423, %v471
    %v475 = vmul.f32 %v462, %v468
    %v476 = vmul.f32 %v463, %v472
    %v478 = vlaneseq
    %v479 = vshrl.u32 %v478, 7
    %v480 = vsub.s32 0, %v479
    %v481 = vrot.slane %v424, %v480
    %v482 = vlaneseq
    %v483 = vshrl.u32 %v482, 7
    %v484 = vsub.s32 1, %v483
    %v485 = vrot.slane %v424, %v484
    %v488 = vadd.f32 %v475, %v481
    %v489 = vadd.f32 %v476, %v485
    %v490 = vmax.f32 %v488, 0.0
    %v491 = vmax.f32 %v489, 0.0
    %v492 = vld [vmem:[#allocation7] sm:$0xff]
    %v493 = vld [vmem:[#allocation7 + $0x8] sm:$0xff]
    %v494 = vld [vmem:[#allocation7 + $0x10] sm:$0xff]
    %v495 = vld [vmem:[#allocation7 + $0x18] sm:$0xff]
    %v496 = vld [vmem:[#allocation7 + $0x20] sm:$0xff]
    %v497 = vld [vmem:[#allocation7 + $0x28] sm:$0xff]
    %v498 = vld [vmem:[#allocation7 + $0x30] sm:$0xff]
    %v499 = vld [vmem:[#allocation7 + $0x38] sm:$0xff]
    %v500 = vld [vmem:[#allocation7 + $0x40] sm:$0xff]
    %v501 = vld [vmem:[#allocation7 + $0x48] sm:$0xff]
    %v502 = vld [vmem:[#allocation7 + $0x50] sm:$0xff]
    %v503 = vld [vmem:[#allocation7 + $0x58] sm:$0xff]
    %v504 = vld [vmem:[#allocation7 + $0x60] sm:$0xff]
    %v505 = vld [vmem:[#allocation7 + $0x68] sm:$0xff]
    %v506 = vld [vmem:[#allocation7 + $0x70] sm:$0xff]
    %v507 = vld [vmem:[#allocation7 + $0x78] sm:$0xff]
    %v508 = vld [vmem:[#allocation8] sm:$0x3]
    %v510 = vlaneseq
    %v511 = vshrl.u32 %v510, 7
    %v512 = vsub.s32 0, %v511
    %v513 = vrot.slane %v508, %v512
    %v514 = vlaneseq
    %v515 = vshrl.u32 %v514, 7
    %v516 = vsub.s32 1, %v515
    %v517 = vrot.slane %v508, %v516
    %v536 = vunpack.c.l.b16 %v492
    %v537 = vunpack.c.h.b16 %v492
    %v538 = vunpack.c.l.b16 %v493
    %v539 = vunpack.c.h.b16 %v493
    %v540 = vunpack.c.l.b16 %v494
    %v541 = vunpack.c.h.b16 %v494
    %v542 = vunpack.c.l.b16 %v495
    %v543 = vunpack.c.h.b16 %v495
    %v544 = vunpack.c.l.b16 %v496
    %v545 = vunpack.c.h.b16 %v496
    %v546 = vunpack.c.l.b16 %v497
    %v547 = vunpack.c.h.b16 %v497
    %v548 = vunpack.c.l.b16 %v498
    %v549 = vunpack.c.h.b16 %v498
    %v550 = vunpack.c.l.b16 %v499
    %v551 = vunpack.c.h.b16 %v499
    %v552 = vunpack.c.l.b16 %v500
    %v553 = vunpack.c.h.b16 %v500
    %v554 = vunpack.c.l.b16 %v501
    %v555 = vunpack.c.h.b16 %v501
    %v556 = vunpack.c.l.b16 %v502
    %v557 = vunpack.c.h.b16 %v502
    %v558 = vunpack.c.l.b16 %v503
    %v559 = vunpack.c.h.b16 %v503
    %v560 = vunpack.c.l.b16 %v504
    %v561 = vunpack.c.h.b16 %v504
    %v562 = vunpack.c.l.b16 %v505
    %v563 = vunpack.c.h.b16 %v505
    %v564 = vunpack.c.l.b16 %v506
    %v565 = vunpack.c.h.b16 %v506
    %v566 = vunpack.c.l.b16 %v507
    %v567 = vunpack.c.h.b16 %v507
    %v568 = vpack.c.b16 %v538, %v536
    %v569 = vpack.c.b16 %v539, %v537
    %v570 = vpack.c.b16 %v542, %v540
    %v571 = vpack.c.b16 %v543, %v541
    %v572 = vpack.c.b16 %v546, %v544
    %v573 = vpack.c.b16 %v547, %v545
    %v574 = vpack.c.b16 %v550, %v548
    %v575 = vpack.c.b16 %v551, %v549
    %v576 = vpack.c.b16 %v554, %v552
    %v577 = vpack.c.b16 %v555, %v553
    %v578 = vpack.c.b16 %v558, %v556
    %v579 = vpack.c.b16 %v559, %v557
    %v580 = vpack.c.b16 %v562, %v560
    %v581 = vpack.c.b16 %v563, %v561
    %v582 = vpack.c.b16 %v566, %v564
    %v583 = vpack.c.b16 %v567, %v565
    %600 = vmatprep.subr.bf16.mxu0 %v583
    %601 = vmatpush1.bf16.msra.mxu0 %v582
    %602 = vmatprep.subr.bf16.mxu0 %v581
    %603 = vmatpush1.bf16.msra.mxu0 %v580
    %604 = vmatprep.subr.bf16.mxu0 %v579
    %605 = vmatpush1.bf16.msra.mxu0 %v578
    %606 = vmatprep.subr.bf16.mxu0 %v577
    %607 = vmatpush1.bf16.msra.mxu0 %v576
    %608 = vmatprep.subr.bf16.mxu0 %v575
    %609 = vmatpush1.bf16.msra.mxu0 %v574
    %610 = vmatprep.subr.bf16.mxu0 %v573
    %611 = vmatpush1.bf16.msra.mxu0 %v572
    %612 = vmatprep.subr.bf16.mxu0 %v571
    %613 = vmatpush1.bf16.msra.mxu0 %v570
    %614 = vmatprep.subr.bf16.mxu0 %v569
    %615 = vmatpush1.bf16.msra.mxu0 %v568
    %616 = vmatprep.subr.bf16.mxu0 0
    %617 = vmatpush2.bf16.msra.mxu0 0
    %618 = vmatprep.subr.bf16.mxu0 0
    %619 = vmatpush2.bf16.msra.mxu0 0
    %620 = vmatprep.subr.bf16.mxu0 0
    %621 = vmatpush2.bf16.msra.mxu0 0
    %622 = vmatprep.subr.bf16.mxu0 0
    %623 = vmatpush2.bf16.msra.mxu0 0
    %624 = vmatprep.subr.bf16.mxu0 0
    %625 = vmatpush2.bf16.msra.mxu0 0
    %626 = vmatprep.subr.bf16.mxu0 0
    %627 = vmatpush2.bf16.msra.mxu0 0
    %628 = vmatprep.subr.bf16.mxu0 0
    %629 = vmatpush2.bf16.msra.mxu0 0
    %630 = vmatprep.subr.bf16.mxu0 0
    %631 = vmatpush2.bf16.msra.mxu0 0
    %632 = vmatprep.mubr.bf16.mxu0 0
    %633 = vmatmul.mubr.bf16.gmra.mxu0 %v273
    %v634 = vpop.f32.mrf.mxu0
    %v635 = vadd.f32 %v513, %v634
    %v636 = vpop.f32.mrf.mxu0
    %v637 = vadd.f32 %v517, %v636
    %v638 = vpop.f32.mrf.mxu0
    %v639 = vpop.f32.mrf.mxu0
    %640 = vdwg.mxu0
    %v641 = vrot.slane %v635, 4
    %v642 = vadd.f32 %v635, %v641
    %v643 = vrot.slane %v642, 2
    %v644 = vadd.f32 %v642, %v643
    %v645 = vrot.slane %v644, 1
    %v646 = vadd.f32 %v644, %v645
    %v647 = vrot.slane %v637, 4
    %v648 = vadd.f32 %v637, %v647
    %v649 = vrot.slane %v648, 2
    %v650 = vadd.f32 %v648, %v649
    %v651 = vrot.slane %v650, 1
    %v652 = vadd.f32 %v650, %v651
    %v653 = vmul.f32 %v646, %v437
    %v654 = vmul.f32 %v652, %v437
    %v655 = vsub.f32 %v635, %v653
    %v656 = vsub.f32 %v637, %v654
    %v657 = vmul.f32 %v655, %v655
    %v658 = vmul.f32 %v656, %v656
    %v659 = vrot.slane %v657, 4
    %v660 = vadd.f32 %v657, %v659
    %v661 = vrot.slane %v660, 2
    %v662 = vadd.f32 %v660, %v661
    %v663 = vrot.slane %v662, 1
    %v664 = vadd.f32 %v662, %v663
    %v665 = vrot.slane %v658, 4
    %v666 = vadd.f32 %v658, %v665
    %v667 = vrot.slane %v666, 2
    %v668 = vadd.f32 %v666, %v667
    %v669 = vrot.slane %v668, 1
    %v670 = vadd.f32 %v668, %v669
    %v671 = vmul.f32 %v664, %v437
    %v672 = vmul.f32 %v670, %v437
    %v673 = vadd.f32 %v671, 1e-05
    %v674 = vadd.f32 %v672, 1e-05
    %v675 = vrsqrt.pop %v673
    %v676 = vrsqrt.pop %v674
    %v677 = vmul.f32 %v655, %v675
    %v678 = vmul.f32 %v656, %v676
    %v679 = vmul.f32 %v677, %v468
    %v680 = vmul.f32 %v678, %v472
    %v681 = vadd.f32 %v679, %v481
    %v682 = vadd.f32 %v680, %v485
    %v683 = vmax.f32 %v681, 0.0
    %v684 = vmax.f32 %v682, 0.0
    %v685 = vpack.c.bf16 %v490, %v490
    %v686 = vpack.c.bf16 %v491, %v491
    %v687 = vld [vmem:[#allocation13] sm:$0xff]
    %v688 = vld [vmem:[#allocation13 + $0x8] sm:$0xff]
    %v689 = vld [vmem:[#allocation13 + $0x10] sm:$0xff]
    %v690 = vld [vmem:[#allocation13 + $0x18] sm:$0xff]
    %v691 = vld [vmem:[#allocation13 + $0x20] sm:$0xff]
    %v692 = vld [vmem:[#allocation13 + $0x28] sm:$0xff]
    %v693 = vld [vmem:[#allocation13 + $0x30] sm:$0xff]
    %v694 = vld [vmem:[#allocation13 + $0x38] sm:$0xff]
    %v695 = vld [vmem:[#allocation13 + $0x40] sm:$0xff]
    %v696 = vld [vmem:[#allocation13 + $0x48] sm:$0xff]
    %v697 = vld [vmem:[#allocation13 + $0x50] sm:$0xff]
    %v698 = vld [vmem:[#allocation13 + $0x58] sm:$0xff]
    %v699 = vld [vmem:[#allocation13 + $0x60] sm:$0xff]
    %v700 = vld [vmem:[#allocation13 + $0x68] sm:$0xff]
    %v701 = vld [vmem:[#allocation13 + $0x70] sm:$0xff]
    %v702 = vld [vmem:[#allocation13 + $0x78] sm:$0xff]
    %v703 = vld [vmem:[#allocation13 + $0x80] sm:$0xff]
    %v704 = vld [vmem:[#allocation13 + $0x88] sm:$0xff]
    %v705 = vld [vmem:[#allocation13 + $0x90] sm:$0xff]
    %v706 = vld [vmem:[#allocation13 + $0x98] sm:$0xff]
    %v707 = vld [vmem:[#allocation13 + $0xa0] sm:$0xff]
    %v708 = vld [vmem:[#allocation13 + $0xa8] sm:$0xff]
    %v709 = vld [vmem:[#allocation13 + $0xb0] sm:$0xff]
    %v710 = vld [vmem:[#allocation13 + $0xb8] sm:$0xff]
    %v711 = vld [vmem:[#allocation13 + $0xc0] sm:$0xff]
    %v712 = vld [vmem:[#allocation13 + $0xc8] sm:$0xff]
    %v713 = vld [vmem:[#allocation13 + $0xd0] sm:$0xff]
    %v714 = vld [vmem:[#allocation13 + $0xd8] sm:$0xff]
    %v715 = vld [vmem:[#allocation13 + $0xe0] sm:$0xff]
    %v716 = vld [vmem:[#allocation13 + $0xe8] sm:$0xff]
    %v717 = vld [vmem:[#allocation13 + $0xf0] sm:$0xff]
    %v718 = vld [vmem:[#allocation13 + $0xf8] sm:$0xff]
    %v719 = vld [vmem:[#allocation13 + $0x100] sm:$0xff]
    %v720 = vld [vmem:[#allocation13 + $0x108] sm:$0xff]
    %v721 = vld [vmem:[#allocation13 + $0x110] sm:$0xff]
    %v722 = vld [vmem:[#allocation13 + $0x118] sm:$0xff]
    %v723 = vld [vmem:[#allocation13 + $0x120] sm:$0xff]
    %v724 = vld [vmem:[#allocation13 + $0x128] sm:$0xff]
    %v725 = vld [vmem:[#allocation13 + $0x130] sm:$0xff]
    %v726 = vld [vmem:[#allocation13 + $0x138] sm:$0xff]
    %v727 = vld [vmem:[#allocation13 + $0x140] sm:$0xff]
    %v728 = vld [vmem:[#allocation13 + $0x148] sm:$0xff]
    %v729 = vld [vmem:[#allocation13 + $0x150] sm:$0xff]
    %v730 = vld [vmem:[#allocation13 + $0x158] sm:$0xff]
    %v731 = vld [vmem:[#allocation13 + $0x160] sm:$0xff]
    %v732 = vld [vmem:[#allocation13 + $0x168] sm:$0xff]
    %v733 = vld [vmem:[#allocation13 + $0x170] sm:$0xff]
    %v734 = vld [vmem:[#allocation13 + $0x178] sm:$0xff]
    %v735 = vld [vmem:[#allocation13 + $0x180] sm:$0xff]
    %v736 = vld [vmem:[#allocation13 + $0x188] sm:$0xff]
    %v737 = vld [vmem:[#allocation13 + $0x190] sm:$0xff]
    %v738 = vld [vmem:[#allocation13 + $0x198] sm:$0xff]
    %v739 = vld [vmem:[#allocation13 + $0x1a0] sm:$0xff]
    %v740 = vld [vmem:[#allocation13 + $0x1a8] sm:$0xff]
    %v741 = vld [vmem:[#allocation13 + $0x1b0] sm:$0xff]
    %v742 = vld [vmem:[#allocation13 + $0x1b8] sm:$0xff]
    %v743 = vld [vmem:[#allocation13 + $0x1c0] sm:$0xff]
    %v744 = vld [vmem:[#allocation13 + $0x1c8] sm:$0xff]
    %v745 = vld [vmem:[#allocation13 + $0x1d0] sm:$0xff]
    %v746 = vld [vmem:[#allocation13 + $0x1d8] sm:$0xff]
    %v747 = vld [vmem:[#allocation13 + $0x1e0] sm:$0xff]
    %v748 = vld [vmem:[#allocation13 + $0x1e8] sm:$0xff]
    %v749 = vld [vmem:[#allocation13 + $0x1f0] sm:$0xff]
    %v750 = vld [vmem:[#allocation13 + $0x1f8] sm:$0xff]
    %v751 = vpack.c.bf16 %v683, %v683
    %v752 = vpack.c.bf16 %v684, %v684
    %v753 = vld [vmem:[#allocation14] sm:$0xff]
    %v754 = vld [vmem:[#allocation14 + $0x8] sm:$0xff]
    %v755 = vld [vmem:[#allocation14 + $0x10] sm:$0xff]
    %v756 = vld [vmem:[#allocation14 + $0x18] sm:$0xff]
    %v757 = vld [vmem:[#allocation14 + $0x20] sm:$0xff]
    %v758 = vld [vmem:[#allocation14 + $0x28] sm:$0xff]
    %v759 = vld [vmem:[#allocation14 + $0x30] sm:$0xff]
    %v760 = vld [vmem:[#allocation14 + $0x38] sm:$0xff]
    %v761 = vld [vmem:[#allocation14 + $0x40] sm:$0xff]
    %v762 = vld [vmem:[#allocation14 + $0x48] sm:$0xff]
    %v763 = vld [vmem:[#allocation14 + $0x50] sm:$0xff]
    %v764 = vld [vmem:[#allocation14 + $0x58] sm:$0xff]
    %v765 = vld [vmem:[#allocation14 + $0x60] sm:$0xff]
    %v766 = vld [vmem:[#allocation14 + $0x68] sm:$0xff]
    %v767 = vld [vmem:[#allocation14 + $0x70] sm:$0xff]
    %v768 = vld [vmem:[#allocation14 + $0x78] sm:$0xff]
    %v769 = vld [vmem:[#allocation14 + $0x80] sm:$0xff]
    %v770 = vld [vmem:[#allocation14 + $0x88] sm:$0xff]
    %v771 = vld [vmem:[#allocation14 + $0x90] sm:$0xff]
    %v772 = vld [vmem:[#allocation14 + $0x98] sm:$0xff]
    %v773 = vld [vmem:[#allocation14 + $0xa0] sm:$0xff]
    %v774 = vld [vmem:[#allocation14 + $0xa8] sm:$0xff]
    %v775 = vld [vmem:[#allocation14 + $0xb0] sm:$0xff]
    %v776 = vld [vmem:[#allocation14 + $0xb8] sm:$0xff]
    %v777 = vld [vmem:[#allocation14 + $0xc0] sm:$0xff]
    %v778 = vld [vmem:[#allocation14 + $0xc8] sm:$0xff]
    %v779 = vld [vmem:[#allocation14 + $0xd0] sm:$0xff]
    %v780 = vld [vmem:[#allocation14 + $0xd8] sm:$0xff]
    %v781 = vld [vmem:[#allocation14 + $0xe0] sm:$0xff]
    %v782 = vld [vmem:[#allocation14 + $0xe8] sm:$0xff]
    %v783 = vld [vmem:[#allocation14 + $0xf0] sm:$0xff]
    %v784 = vld [vmem:[#allocation14 + $0xf8] sm:$0xff]
    %v785 = vld [vmem:[#allocation14 + $0x100] sm:$0xff]
    %v786 = vld [vmem:[#allocation14 + $0x108] sm:$0xff]
    %v787 = vld [vmem:[#allocation14 + $0x110] sm:$0xff]
    %v788 = vld [vmem:[#allocation14 + $0x118] sm:$0xff]
    %v789 = vld [vmem:[#allocation14 + $0x120] sm:$0xff]
    %v790 = vld [vmem:[#allocation14 + $0x128] sm:$0xff]
    %v791 = vld [vmem:[#allocation14 + $0x130] sm:$0xff]
    %v792 = vld [vmem:[#allocation14 + $0x138] sm:$0xff]
    %v793 = vld [vmem:[#allocation14 + $0x140] sm:$0xff]
    %v794 = vld [vmem:[#allocation14 + $0x148] sm:$0xff]
    %v795 = vld [vmem:[#allocation14 + $0x150] sm:$0xff]
    %v796 = vld [vmem:[#allocation14 + $0x158] sm:$0xff]
    %v797 = vld [vmem:[#allocation14 + $0x160] sm:$0xff]
    %v798 = vld [vmem:[#allocation14 + $0x168] sm:$0xff]
    %v799 = vld [vmem:[#allocation14 + $0x170] sm:$0xff]
    %v800 = vld [vmem:[#allocation14 + $0x178] sm:$0xff]
    %v801 = vld [vmem:[#allocation14 + $0x180] sm:$0xff]
    %v802 = vld [vmem:[#allocation14 + $0x188] sm:$0xff]
    %v803 = vld [vmem:[#allocation14 + $0x190] sm:$0xff]
    %v804 = vld [vmem:[#allocation14 + $0x198] sm:$0xff]
    %v805 = vld [vmem:[#allocation14 + $0x1a0] sm:$0xff]
    %v806 = vld [vmem:[#allocation14 + $0x1a8] sm:$0xff]
    %v807 = vld [vmem:[#allocation14 + $0x1b0] sm:$0xff]
    %v808 = vld [vmem:[#allocation14 + $0x1b8] sm:$0xff]
    %v809 = vld [vmem:[#allocation14 + $0x1c0] sm:$0xff]
    %v810 = vld [vmem:[#allocation14 + $0x1c8] sm:$0xff]
    %v811 = vld [vmem:[#allocation14 + $0x1d0] sm:$0xff]
    %v812 = vld [vmem:[#allocation14 + $0x1d8] sm:$0xff]
    %v813 = vld [vmem:[#allocation14 + $0x1e0] sm:$0xff]
    %v814 = vld [vmem:[#allocation14 + $0x1e8] sm:$0xff]
    %v815 = vld [vmem:[#allocation14 + $0x1f0] sm:$0xff]
    %v816 = vld [vmem:[#allocation14 + $0x1f8] sm:$0xff]
    %v881 = vunpack.c.l.b16 %v753
    %v882 = vunpack.c.h.b16 %v753
    %v883 = vunpack.c.l.b16 %v754
    %v884 = vunpack.c.h.b16 %v754
    %v885 = vunpack.c.l.b16 %v755
    %v886 = vunpack.c.h.b16 %v755
    %v887 = vunpack.c.l.b16 %v756
    %v888 = vunpack.c.h.b16 %v756
    %v889 = vunpack.c.l.b16 %v757
    %v890 = vunpack.c.h.b16 %v757
    %v891 = vunpack.c.l.b16 %v758
    %v892 = vunpack.c.h.b16 %v758
    %v893 = vunpack.c.l.b16 %v759
    %v894 = vunpack.c.h.b16 %v759
    %v895 = vunpack.c.l.b16 %v760
    %v896 = vunpack.c.h.b16 %v760
    %v897 = vunpack.c.l.b16 %v761
    %v898 = vunpack.c.h.b16 %v761
    %v899 = vunpack.c.l.b16 %v762
    %v900 = vunpack.c.h.b16 %v762
    %v901 = vunpack.c.l.b16 %v763
    %v902 = vunpack.c.h.b16 %v763
    %v903 = vunpack.c.l.b16 %v764
    %v904 = vunpack.c.h.b16 %v764
    %v905 = vunpack.c.l.b16 %v765
    %v906 = vunpack.c.h.b16 %v765
    %v907 = vunpack.c.l.b16 %v766
    %v908 = vunpack.c.h.b16 %v766
    %v909 = vunpack.c.l.b16 %v767
    %v910 = vunpack.c.h.b16 %v767
    %v911 = vunpack.c.l.b16 %v768
    %v912 = vunpack.c.h.b16 %v768
    %v913 = vunpack.c.l.b16 %v769
    %v914 = vunpack.c.h.b16 %v769
    %v915 = vunpack.c.l.b16 %v770
    %v916 = vunpack.c.h.b16 %v770
    %v917 = vunpack.c.l.b16 %v771
    %v918 = vunpack.c.h.b16 %v771
    %v919 = vunpack.c.l.b16 %v772
    %v920 = vunpack.c.h.b16 %v772
    %v921 = vunpack.c.l.b16 %v773
    %v922 = vunpack.c.h.b16 %v773
    %v923 = vunpack.c.l.b16 %v774
    %v924 = vunpack.c.h.b16 %v774
    %v925 = vunpack.c.l.b16 %v775
    %v926 = vunpack.c.h.b16 %v775
    %v927 = vunpack.c.l.b16 %v776
    %v928 = vunpack.c.h.b16 %v776
    %v929 = vunpack.c.l.b16 %v777
    %v930 = vunpack.c.h.b16 %v777
    %v931 = vunpack.c.l.b16 %v778
    %v932 = vunpack.c.h.b16 %v778
    %v933 = vunpack.c.l.b16 %v779
    %v934 = vunpack.c.h.b16 %v779
    %v935 = vunpack.c.l.b16 %v780
    %v936 = vunpack.c.h.b16 %v780
    %v937 = vunpack.c.l.b16 %v781
    %v938 = vunpack.c.h.b16 %v781
    %v939 = vunpack.c.l.b16 %v782
    %v940 = vunpack.c.h.b16 %v782
    %v941 = vunpack.c.l.b16 %v783
    %v942 = vunpack.c.h.b16 %v783
    %v943 = vunpack.c.l.b16 %v784
    %v944 = vunpack.c.h.b16 %v784
    %v945 = vunpack.c.l.b16 %v785
    %v946 = vunpack.c.h.b16 %v785
    %v947 = vunpack.c.l.b16 %v786
    %v948 = vunpack.c.h.b16 %v786
    %v949 = vunpack.c.l.b16 %v787
    %v950 = vunpack.c.h.b16 %v787
    %v951 = vunpack.c.l.b16 %v788
    %v952 = vunpack.c.h.b16 %v788
    %v953 = vunpack.c.l.b16 %v789
    %v954 = vunpack.c.h.b16 %v789
    %v955 = vunpack.c.l.b16 %v790
    %v956 = vunpack.c.h.b16 %v790
    %v957 = vunpack.c.l.b16 %v791
    %v958 = vunpack.c.h.b16 %v791
    %v959 = vunpack.c.l.b16 %v792
    %v960 = vunpack.c.h.b16 %v792
    %v961 = vunpack.c.l.b16 %v793
    %v962 = vunpack.c.h.b16 %v793
    %v963 = vunpack.c.l.b16 %v794
    %v964 = vunpack.c.h.b16 %v794
    %v965 = vunpack.c.l.b16 %v795
    %v966 = vunpack.c.h.b16 %v795
    %v967 = vunpack.c.l.b16 %v796
    %v968 = vunpack.c.h.b16 %v796
    %v969 = vunpack.c.l.b16 %v797
    %v970 = vunpack.c.h.b16 %v797
    %v971 = vunpack.c.l.b16 %v798
    %v972 = vunpack.c.h.b16 %v798
    %v973 = vunpack.c.l.b16 %v799
    %v974 = vunpack.c.h.b16 %v799
    %v975 = vunpack.c.l.b16 %v800
    %v976 = vunpack.c.h.b16 %v800
    %v977 = vunpack.c.l.b16 %v801
    %v978 = vunpack.c.h.b16 %v801
    %v979 = vunpack.c.l.b16 %v802
    %v980 = vunpack.c.h.b16 %v802
    %v981 = vunpack.c.l.b16 %v803
    %v982 = vunpack.c.h.b16 %v803
    %v983 = vunpack.c.l.b16 %v804
    %v984 = vunpack.c.h.b16 %v804
    %v985 = vunpack.c.l.b16 %v805
    %v986 = vunpack.c.h.b16 %v805
    %v987 = vunpack.c.l.b16 %v806
    %v988 = vunpack.c.h.b16 %v806
    %v989 = vunpack.c.l.b16 %v807
    %v990 = vunpack.c.h.b16 %v807
    %v991 = vunpack.c.l.b16 %v808
    %v992 = vunpack.c.h.b16 %v808
    %v993 = vunpack.c.l.b16 %v809
    %v994 = vunpack.c.h.b16 %v809
    %v995 = vunpack.c.l.b16 %v810
    %v996 = vunpack.c.h.b16 %v810
    %v997 = vunpack.c.l.b16 %v811
    %v998 = vunpack.c.h.b16 %v811
    %v999 = vunpack.c.l.b16 %v812
    %v1000 = vunpack.c.h.b16 %v812
    %v1001 = vunpack.c.l.b16 %v813
    %v1002 = vunpack.c.h.b16 %v813
    %v1003 = vunpack.c.l.b16 %v814
    %v1004 = vunpack.c.h.b16 %v814
    %v1005 = vunpack.c.l.b16 %v815
    %v1006 = vunpack.c.h.b16 %v815
    %v1007 = vunpack.c.l.b16 %v816
    %v1008 = vunpack.c.h.b16 %v816
    %v1009 = vpack.c.b16 %v885, %v881
    %v1010 = vpack.c.b16 %v886, %v882
    %v1011 = vpack.c.b16 %v887, %v883
    %v1012 = vpack.c.b16 %v888, %v884
    %v1013 = vpack.c.b16 %v893, %v889
    %v1014 = vpack.c.b16 %v894, %v890
    %v1015 = vpack.c.b16 %v895, %v891
    %v1016 = vpack.c.b16 %v896, %v892
    %v1017 = vpack.c.b16 %v901, %v897
    %v1018 = vpack.c.b16 %v902, %v898
    %v1019 = vpack.c.b16 %v903, %v899
    %v1020 = vpack.c.b16 %v904, %v900
    %v1021 = vpack.c.b16 %v909, %v905
    %v1022 = vpack.c.b16 %v910, %v906
    %v1023 = vpack.c.b16 %v911, %v907
    %v1024 = vpack.c.b16 %v912, %v908
    %v1025 = vpack.c.b16 %v917, %v913
    %v1026 = vpack.c.b16 %v918, %v914
    %v1027 = vpack.c.b16 %v919, %v915
    %v1028 = vpack.c.b16 %v920, %v916
    %v1029 = vpack.c.b16 %v925, %v921
    %v1030 = vpack.c.b16 %v926, %v922
    %v1031 = vpack.c.b16 %v927, %v923
    %v1032 = vpack.c.b16 %v928, %v924
    %v1033 = vpack.c.b16 %v933, %v929
    %v1034 = vpack.c.b16 %v934, %v930
    %v1035 = vpack.c.b16 %v935, %v931
    %v1036 = vpack.c.b16 %v936, %v932
    %v1037 = vpack.c.b16 %v941, %v937
    %v1038 = vpack.c.b16 %v942, %v938
    %v1039 = vpack.c.b16 %v943, %v939
    %v1040 = vpack.c.b16 %v944, %v940
    %v1041 = vpack.c.b16 %v949, %v945
    %v1042 = vpack.c.b16 %v950, %v946
    %v1043 = vpack.c.b16 %v951, %v947
    %v1044 = vpack.c.b16 %v952, %v948
    %v1045 = vpack.c.b16 %v957, %v953
    %v1046 = vpack.c.b16 %v958, %v954
    %v1047 = vpack.c.b16 %v959, %v955
    %v1048 = vpack.c.b16 %v960, %v956
    %v1049 = vpack.c.b16 %v965, %v961
    %v1050 = vpack.c.b16 %v966, %v962
    %v1051 = vpack.c.b16 %v967, %v963
    %v1052 = vpack.c.b16 %v968, %v964
    %v1053 = vpack.c.b16 %v973, %v969
    %v1054 = vpack.c.b16 %v974, %v970
    %v1055 = vpack.c.b16 %v975, %v971
    %v1056 = vpack.c.b16 %v976, %v972
    %v1057 = vpack.c.b16 %v981, %v977
    %v1058 = vpack.c.b16 %v982, %v978
    %v1059 = vpack.c.b16 %v983, %v979
    %v1060 = vpack.c.b16 %v984, %v980
    %v1061 = vpack.c.b16 %v989, %v985
    %v1062 = vpack.c.b16 %v990, %v986
    %v1063 = vpack.c.b16 %v991, %v987
    %v1064 = vpack.c.b16 %v992, %v988
    %v1065 = vpack.c.b16 %v997, %v993
    %v1066 = vpack.c.b16 %v998, %v994
    %v1067 = vpack.c.b16 %v999, %v995
    %v1068 = vpack.c.b16 %v1000, %v996
    %v1069 = vpack.c.b16 %v1005, %v1001
    %v1070 = vpack.c.b16 %v1006, %v1002
    %v1071 = vpack.c.b16 %v1007, %v1003
    %v1072 = vpack.c.b16 %v1008, %v1004
    %1137 = vmatprep.subr.bf16.mxu0 %v1038
    %1138 = vmatpush1.bf16.msra.mxu0 %v1037
    %1139 = vmatprep.subr.bf16.mxu0 %v1034
    %1140 = vmatpush1.bf16.msra.mxu0 %v1033
    %1141 = vmatprep.subr.bf16.mxu0 %v1030
    %1142 = vmatpush1.bf16.msra.mxu0 %v1029
    %1143 = vmatprep.subr.bf16.mxu0 %v1026
    %1144 = vmatpush1.bf16.msra.mxu0 %v1025
    %1145 = vmatprep.subr.bf16.mxu0 %v1022
    %1146 = vmatpush1.bf16.msra.mxu0 %v1021
    %1147 = vmatprep.subr.bf16.mxu0 %v1018
    %1148 = vmatpush1.bf16.msra.mxu0 %v1017
    %1149 = vmatprep.subr.bf16.mxu0 %v1014
    %1150 = vmatpush1.bf16.msra.mxu0 %v1013
    %1151 = vmatprep.subr.bf16.mxu0 %v1010
    %1152 = vmatpush1.bf16.msra.mxu0 %v1009
    %1153 = vmatprep.subr.bf16.mxu0 %v1070
    %1154 = vmatpush2.bf16.msra.mxu0 %v1069
    %1155 = vmatprep.subr.bf16.mxu0 %v1066
    %1156 = vmatpush2.bf16.msra.mxu0 %v1065
    %1157 = vmatprep.subr.bf16.mxu0 %v1062
    %1158 = vmatpush2.bf16.msra.mxu0 %v1061
    %1159 = vmatprep.subr.bf16.mxu0 %v1058
    %1160 = vmatpush2.bf16.msra.mxu0 %v1057
    %1161 = vmatprep.subr.bf16.mxu0 %v1054
    %1162 = vmatpush2.bf16.msra.mxu0 %v1053
    %1163 = vmatprep.subr.bf16.mxu0 %v1050
    %1164 = vmatpush2.bf16.msra.mxu0 %v1049
    %1165 = vmatprep.subr.bf16.mxu0 %v1046
    %1166 = vmatpush2.bf16.msra.mxu0 %v1045
    %1167 = vmatprep.subr.bf16.mxu0 %v1042
    %1168 = vmatpush2.bf16.msra.mxu0 %v1041
    %1169 = vmatprep.mubr.bf16.mxu0 %v752
    %1170 = vmatmul.mubr.bf16.gmra.mxu0 %v751
    %v1171 = vpop.f32.mrf.mxu0
    %v1172 = vadd.f32 0.0, %v1171
    %v1173 = vpop.f32.mrf.mxu0
    %v1174 = vadd.f32 0.0, %v1173
    %v1175 = vpop.f32.mrf.mxu0
    %v1176 = vpop.f32.mrf.mxu0
    %1177 = vdwg.mxu0
    %1178 = vmatprep.subr.bf16.mxu0 %v1040
    %1179 = vmatpush1.bf16.msra.mxu0 %v1039
    %1180 = vmatprep.subr.bf16.mxu0 %v1036
    %1181 = vmatpush1.bf16.msra.mxu0 %v1035
    %1182 = vmatprep.subr.bf16.mxu0 %v1032
    %1183 = vmatpush1.bf16.msra.mxu0 %v1031
    %1184 = vmatprep.subr.bf16.mxu0 %v1028
    %1185 = vmatpush1.bf16.msra.mxu0 %v1027
    %1186 = vmatprep.subr.bf16.mxu0 %v1024
    %1187 = vmatpush1.bf16.msra.mxu0 %v1023
    %1188 = vmatprep.subr.bf16.mxu0 %v1020
    %1189 = vmatpush1.bf16.msra.mxu0 %v1019
    %1190 = vmatprep.subr.bf16.mxu0 %v1016
    %1191 = vmatpush1.bf16.msra.mxu0 %v1015
    %1192 = vmatprep.subr.bf16.mxu0 %v1012
    %1193 = vmatpush1.bf16.msra.mxu0 %v1011
    %1194 = vmatprep.subr.bf16.mxu0 %v1072
    %1195 = vmatpush2.bf16.msra.mxu0 %v1071
    %1196 = vmatprep.subr.bf16.mxu0 %v1068
    %1197 = vmatpush2.bf16.msra.mxu0 %v1067
    %1198 = vmatprep.subr.bf16.mxu0 %v1064
    %1199 = vmatpush2.bf16.msra.mxu0 %v1063
    %1200 = vmatprep.subr.bf16.mxu0 %v1060
    %1201 = vmatpush2.bf16.msra.mxu0 %v1059
    %1202 = vmatprep.subr.bf16.mxu0 %v1056
    %1203 = vmatpush2.bf16.msra.mxu0 %v1055
    %1204 = vmatprep.subr.bf16.mxu0 %v1052
    %1205 = vmatpush2.bf16.msra.mxu0 %v1051
    %1206 = vmatprep.subr.bf16.mxu0 %v1048
    %1207 = vmatpush2.bf16.msra.mxu0 %v1047
    %1208 = vmatprep.subr.bf16.mxu0 %v1044
    %1209 = vmatpush2.bf16.msra.mxu0 %v1043
    %1210 = vmatprep.mubr.bf16.mxu0 %v752
    %1211 = vmatmul.mubr.bf16.gmra.mxu0 %v751
    %v1212 = vpop.f32.mrf.mxu0
    %v1213 = vadd.f32 0.0, %v1212
    %v1214 = vpop.f32.mrf.mxu0
    %v1215 = vadd.f32 0.0, %v1214
    %v1216 = vpop.f32.mrf.mxu0
    %v1217 = vpop.f32.mrf.mxu0
    %1218 = vdwg.mxu0
    %v1283 = vunpack.c.l.b16 %v687
    %v1284 = vunpack.c.h.b16 %v687
    %v1285 = vunpack.c.l.b16 %v688
    %v1286 = vunpack.c.h.b16 %v688
    %v1287 = vunpack.c.l.b16 %v689
    %v1288 = vunpack.c.h.b16 %v689
    %v1289 = vunpack.c.l.b16 %v690
    %v1290 = vunpack.c.h.b16 %v690
    %v1291 = vunpack.c.l.b16 %v691
    %v1292 = vunpack.c.h.b16 %v691
    %v1293 = vunpack.c.l.b16 %v692
    %v1294 = vunpack.c.h.b16 %v692
    %v1295 = vunpack.c.l.b16 %v693
    %v1296 = vunpack.c.h.b16 %v693
    %v1297 = vunpack.c.l.b16 %v694
    %v1298 = vunpack.c.h.b16 %v694
    %v1299 = vunpack.c.l.b16 %v695
    %v1300 = vunpack.c.h.b16 %v695
    %v1301 = vunpack.c.l.b16 %v696
    %v1302 = vunpack.c.h.b16 %v696
    %v1303 = vunpack.c.l.b16 %v697
    %v1304 = vunpack.c.h.b16 %v697
    %v1305 = vunpack.c.l.b16 %v698
    %v1306 = vunpack.c.h.b16 %v698
    %v1307 = vunpack.c.l.b16 %v699
    %v1308 = vunpack.c.h.b16 %v699
    %v1309 = vunpack.c.l.b16 %v700
    %v1310 = vunpack.c.h.b16 %v700
    %v1311 = vunpack.c.l.b16 %v701
    %v1312 = vunpack.c.h.b16 %v701
    %v1313 = vunpack.c.l.b16 %v702
    %v1314 = vunpack.c.h.b16 %v702
    %v1315 = vunpack.c.l.b16 %v703
    %v1316 = vunpack.c.h.b16 %v703
    %v1317 = vunpack.c.l.b16 %v704
    %v1318 = vunpack.c.h.b16 %v704
    %v1319 = vunpack.c.l.b16 %v705
    %v1320 = vunpack.c.h.b16 %v705
    %v1321 = vunpack.c.l.b16 %v706
    %v1322 = vunpack.c.h.b16 %v706
    %v1323 = vunpack.c.l.b16 %v707
    %v1324 = vunpack.c.h.b16 %v707
    %v1325 = vunpack.c.l.b16 %v708
    %v1326 = vunpack.c.h.b16 %v708
    %v1327 = vunpack.c.l.b16 %v709
    %v1328 = vunpack.c.h.b16 %v709
    %v1329 = vunpack.c.l.b16 %v710
    %v1330 = vunpack.c.h.b16 %v710
    %v1331 = vunpack.c.l.b16 %v711
    %v1332 = vunpack.c.h.b16 %v711
    %v1333 = vunpack.c.l.b16 %v712
    %v1334 = vunpack.c.h.b16 %v712
    %v1335 = vunpack.c.l.b16 %v713
    %v1336 = vunpack.c.h.b16 %v713
    %v1337 = vunpack.c.l.b16 %v714
    %v1338 = vunpack.c.h.b16 %v714
    %v1339 = vunpack.c.l.b16 %v715
    %v1340 = vunpack.c.h.b16 %v715
    %v1341 = vunpack.c.l.b16 %v716
    %v1342 = vunpack.c.h.b16 %v716
    %v1343 = vunpack.c.l.b16 %v717
    %v1344 = vunpack.c.h.b16 %v717
    %v1345 = vunpack.c.l.b16 %v718
    %v1346 = vunpack.c.h.b16 %v718
    %v1347 = vunpack.c.l.b16 %v719
    %v1348 = vunpack.c.h.b16 %v719
    %v1349 = vunpack.c.l.b16 %v720
    %v1350 = vunpack.c.h.b16 %v720
    %v1351 = vunpack.c.l.b16 %v721
    %v1352 = vunpack.c.h.b16 %v721
    %v1353 = vunpack.c.l.b16 %v722
    %v1354 = vunpack.c.h.b16 %v722
    %v1355 = vunpack.c.l.b16 %v723
    %v1356 = vunpack.c.h.b16 %v723
    %v1357 = vunpack.c.l.b16 %v724
    %v1358 = vunpack.c.h.b16 %v724
    %v1359 = vunpack.c.l.b16 %v725
    %v1360 = vunpack.c.h.b16 %v725
    %v1361 = vunpack.c.l.b16 %v726
    %v1362 = vunpack.c.h.b16 %v726
    %v1363 = vunpack.c.l.b16 %v727
    %v1364 = vunpack.c.h.b16 %v727
    %v1365 = vunpack.c.l.b16 %v728
    %v1366 = vunpack.c.h.b16 %v728
    %v1367 = vunpack.c.l.b16 %v729
    %v1368 = vunpack.c.h.b16 %v729
    %v1369 = vunpack.c.l.b16 %v730
    %v1370 = vunpack.c.h.b16 %v730
    %v1371 = vunpack.c.l.b16 %v731
    %v1372 = vunpack.c.h.b16 %v731
    %v1373 = vunpack.c.l.b16 %v732
    %v1374 = vunpack.c.h.b16 %v732
    %v1375 = vunpack.c.l.b16 %v733
    %v1376 = vunpack.c.h.b16 %v733
    %v1377 = vunpack.c.l.b16 %v734
    %v1378 = vunpack.c.h.b16 %v734
    %v1379 = vunpack.c.l.b16 %v735
    %v1380 = vunpack.c.h.b16 %v735
    %v1381 = vunpack.c.l.b16 %v736
    %v1382 = vunpack.c.h.b16 %v736
    %v1383 = vunpack.c.l.b16 %v737
    %v1384 = vunpack.c.h.b16 %v737
    %v1385 = vunpack.c.l.b16 %v738
    %v1386 = vunpack.c.h.b16 %v738
    %v1387 = vunpack.c.l.b16 %v739
    %v1388 = vunpack.c.h.b16 %v739
    %v1389 = vunpack.c.l.b16 %v740
    %v1390 = vunpack.c.h.b16 %v740
    %v1391 = vunpack.c.l.b16 %v741
    %v1392 = vunpack.c.h.b16 %v741
    %v1393 = vunpack.c.l.b16 %v742
    %v1394 = vunpack.c.h.b16 %v742
    %v1395 = vunpack.c.l.b16 %v743
    %v1396 = vunpack.c.h.b16 %v743
    %v1397 = vunpack.c.l.b16 %v744
    %v1398 = vunpack.c.h.b16 %v744
    %v1399 = vunpack.c.l.b16 %v745
    %v1400 = vunpack.c.h.b16 %v745
    %v1401 = vunpack.c.l.b16 %v746
    %v1402 = vunpack.c.h.b16 %v746
    %v1403 = vunpack.c.l.b16 %v747
    %v1404 = vunpack.c.h.b16 %v747
    %v1405 = vunpack.c.l.b16 %v748
    %v1406 = vunpack.c.h.b16 %v748
    %v1407 = vunpack.c.l.b16 %v749
    %v1408 = vunpack.c.h.b16 %v749
    %v1409 = vunpack.c.l.b16 %v750
    %v1410 = vunpack.c.h.b16 %v750
    %v1411 = vpack.c.b16 %v1287, %v1283
    %v1412 = vpack.c.b16 %v1288, %v1284
    %v1413 = vpack.c.b16 %v1289, %v1285
    %v1414 = vpack.c.b16 %v1290, %v1286
    %v1415 = vpack.c.b16 %v1295, %v1291
    %v1416 = vpack.c.b16 %v1296, %v1292
    %v1417 = vpack.c.b16 %v1297, %v1293
    %v1418 = vpack.c.b16 %v1298, %v1294
    %v1419 = vpack.c.b16 %v1303, %v1299
    %v1420 = vpack.c.b16 %v1304, %v1300
    %v1421 = vpack.c.b16 %v1305, %v1301
    %v1422 = vpack.c.b16 %v1306, %v1302
    %v1423 = vpack.c.b16 %v1311, %v1307
    %v1424 = vpack.c.b16 %v1312, %v1308
    %v1425 = vpack.c.b16 %v1313, %v1309
    %v1426 = vpack.c.b16 %v1314, %v1310
    %v1427 = vpack.c.b16 %v1319, %v1315
    %v1428 = vpack.c.b16 %v1320, %v1316
    %v1429 = vpack.c.b16 %v1321, %v1317
    %v1430 = vpack.c.b16 %v1322, %v1318
    %v1431 = vpack.c.b16 %v1327, %v1323
    %v1432 = vpack.c.b16 %v1328, %v1324
    %v1433 = vpack.c.b16 %v1329, %v1325
    %v1434 = vpack.c.b16 %v1330, %v1326
    %v1435 = vpack.c.b16 %v1335, %v1331
    %v1436 = vpack.c.b16 %v1336, %v1332
    %v1437 = vpack.c.b16 %v1337, %v1333
    %v1438 = vpack.c.b16 %v1338, %v1334
    %v1439 = vpack.c.b16 %v1343, %v1339
    %v1440 = vpack.c.b16 %v1344, %v1340
    %v1441 = vpack.c.b16 %v1345, %v1341
    %v1442 = vpack.c.b16 %v1346, %v1342
    %v1443 = vpack.c.b16 %v1351, %v1347
    %v1444 = vpack.c.b16 %v1352, %v1348
    %v1445 = vpack.c.b16 %v1353, %v1349
    %v1446 = vpack.c.b16 %v1354, %v1350
    %v1447 = vpack.c.b16 %v1359, %v1355
    %v1448 = vpack.c.b16 %v1360, %v1356
    %v1449 = vpack.c.b16 %v1361, %v1357
    %v1450 = vpack.c.b16 %v1362, %v1358
    %v1451 = vpack.c.b16 %v1367, %v1363
    %v1452 = vpack.c.b16 %v1368, %v1364
    %v1453 = vpack.c.b16 %v1369, %v1365
    %v1454 = vpack.c.b16 %v1370, %v1366
    %v1455 = vpack.c.b16 %v1375, %v1371
    %v1456 = vpack.c.b16 %v1376, %v1372
    %v1457 = vpack.c.b16 %v1377, %v1373
    %v1458 = vpack.c.b16 %v1378, %v1374
    %v1459 = vpack.c.b16 %v1383, %v1379
    %v1460 = vpack.c.b16 %v1384, %v1380
    %v1461 = vpack.c.b16 %v1385, %v1381
    %v1462 = vpack.c.b16 %v1386, %v1382
    %v1463 = vpack.c.b16 %v1391, %v1387
    %v1464 = vpack.c.b16 %v1392, %v1388
    %v1465 = vpack.c.b16 %v1393, %v1389
    %v1466 = vpack.c.b16 %v1394, %v1390
    %v1467 = vpack.c.b16 %v1399, %v1395
    %v1468 = vpack.c.b16 %v1400, %v1396
    %v1469 = vpack.c.b16 %v1401, %v1397
    %v1470 = vpack.c.b16 %v1402, %v1398
    %v1471 = vpack.c.b16 %v1407, %v1403
    %v1472 = vpack.c.b16 %v1408, %v1404
    %v1473 = vpack.c.b16 %v1409, %v1405
    %v1474 = vpack.c.b16 %v1410, %v1406
    %1539 = vmatprep.subr.bf16.mxu0 %v1440
    %1540 = vmatpush1.bf16.msra.mxu0 %v1439
    %1541 = vmatprep.subr.bf16.mxu0 %v1436
    %1542 = vmatpush1.bf16.msra.mxu0 %v1435
    %1543 = vmatprep.subr.bf16.mxu0 %v1432
    %1544 = vmatpush1.bf16.msra.mxu0 %v1431
    %1545 = vmatprep.subr.bf16.mxu0 %v1428
    %1546 = vmatpush1.bf16.msra.mxu0 %v1427
    %1547 = vmatprep.subr.bf16.mxu0 %v1424
    %1548 = vmatpush1.bf16.msra.mxu0 %v1423
    %1549 = vmatprep.subr.bf16.mxu0 %v1420
    %1550 = vmatpush1.bf16.msra.mxu0 %v1419
    %1551 = vmatprep.subr.bf16.mxu0 %v1416
    %1552 = vmatpush1.bf16.msra.mxu0 %v1415
    %1553 = vmatprep.subr.bf16.mxu0 %v1412
    %1554 = vmatpush1.bf16.msra.mxu0 %v1411
    %1555 = vmatprep.subr.bf16.mxu0 %v1472
    %1556 = vmatpush2.bf16.msra.mxu0 %v1471
    %1557 = vmatprep.subr.bf16.mxu0 %v1468
    %1558 = vmatpush2.bf16.msra.mxu0 %v1467
    %1559 = vmatprep.subr.bf16.mxu0 %v1464
    %1560 = vmatpush2.bf16.msra.mxu0 %v1463
    %1561 = vmatprep.subr.bf16.mxu0 %v1460
    %1562 = vmatpush2.bf16.msra.mxu0 %v1459
    %1563 = vmatprep.subr.bf16.mxu0 %v1456
    %1564 = vmatpush2.bf16.msra.mxu0 %v1455
    %1565 = vmatprep.subr.bf16.mxu0 %v1452
    %1566 = vmatpush2.bf16.msra.mxu0 %v1451
    %1567 = vmatprep.subr.bf16.mxu0 %v1448
    %1568 = vmatpush2.bf16.msra.mxu0 %v1447
    %1569 = vmatprep.subr.bf16.mxu0 %v1444
    %1570 = vmatpush2.bf16.msra.mxu0 %v1443
    %1571 = vmatprep.mubr.bf16.mxu0 %v686
    %1572 = vmatmul.mubr.bf16.gmra.mxu0 %v685
    %v1573 = vpop.f32.mrf.mxu0
    %v1574 = vadd.f32 %v1172, %v1573
    %v1575 = vpop.f32.mrf.mxu0
    %v1576 = vadd.f32 %v1174, %v1575
    %v1577 = vpop.f32.mrf.mxu0
    %v1578 = vpop.f32.mrf.mxu0
    %1579 = vdwg.mxu0
    %1580 = vmatprep.subr.bf16.mxu0 %v1442
    %1581 = vmatpush1.bf16.msra.mxu0 %v1441
    %1582 = vmatprep.subr.bf16.mxu0 %v1438
    %1583 = vmatpush1.bf16.msra.mxu0 %v1437
    %1584 = vmatprep.subr.bf16.mxu0 %v1434
    %1585 = vmatpush1.bf16.msra.mxu0 %v1433
    %1586 = vmatprep.subr.bf16.mxu0 %v1430
    %1587 = vmatpush1.bf16.msra.mxu0 %v1429
    %1588 = vmatprep.subr.bf16.mxu0 %v1426
    %1589 = vmatpush1.bf16.msra.mxu0 %v1425
    %1590 = vmatprep.subr.bf16.mxu0 %v1422
    %1591 = vmatpush1.bf16.msra.mxu0 %v1421
    %1592 = vmatprep.subr.bf16.mxu0 %v1418
    %1593 = vmatpush1.bf16.msra.mxu0 %v1417
    %1594 = vmatprep.subr.bf16.mxu0 %v1414
    %1595 = vmatpush1.bf16.msra.mxu0 %v1413
    %1596 = vmatprep.subr.bf16.mxu0 %v1474
    %1597 = vmatpush2.bf16.msra.mxu0 %v1473
    %1598 = vmatprep.subr.bf16.mxu0 %v1470
    %1599 = vmatpush2.bf16.msra.mxu0 %v1469
    %1600 = vmatprep.subr.bf16.mxu0 %v1466
    %1601 = vmatpush2.bf16.msra.mxu0 %v1465
    %1602 = vmatprep.subr.bf16.mxu0 %v1462
    %1603 = vmatpush2.bf16.msra.mxu0 %v1461
    %1604 = vmatprep.subr.bf16.mxu0 %v1458
    %1605 = vmatpush2.bf16.msra.mxu0 %v1457
    %1606 = vmatprep.subr.bf16.mxu0 %v1454
    %1607 = vmatpush2.bf16.msra.mxu0 %v1453
    %1608 = vmatprep.subr.bf16.mxu0 %v1450
    %1609 = vmatpush2.bf16.msra.mxu0 %v1449
    %1610 = vmatprep.subr.bf16.mxu0 %v1446
    %1611 = vmatpush2.bf16.msra.mxu0 %v1445
    %1612 = vmatprep.mubr.bf16.mxu0 %v686
    %1613 = vmatmul.mubr.bf16.gmra.mxu0 %v685
    %v1614 = vpop.f32.mrf.mxu0
    %v1615 = vadd.f32 %v1213, %v1614
    %v1616 = vpop.f32.mrf.mxu0
    %v1617 = vadd.f32 %v1215, %v1616
    %v1618 = vpop.f32.mrf.mxu0
    %v1619 = vpop.f32.mrf.mxu0
    %1620 = vdwg.mxu0
    %v1621 = vld [vmem:[#allocation16] sm:$0xf]
    %v1623 = vlaneseq
    %v1624 = vshrl.u32 %v1623, 7
    %v1625 = vsub.s32 0, %v1624
    %v1626 = vrot.slane %v1621, %v1625
    %v1627 = vlaneseq
    %v1628 = vshrl.u32 %v1627, 7
    %v1629 = vsub.s32 1, %v1628
    %v1630 = vrot.slane %v1621, %v1629
    %v1631 = vlaneseq
    %v1632 = vshrl.u32 %v1631, 7
    %v1633 = vsub.s32 2, %v1632
    %v1634 = vrot.slane %v1621, %v1633
    %v1635 = vlaneseq
    %v1636 = vshrl.u32 %v1635, 7
    %v1637 = vsub.s32 3, %v1636
    %v1638 = vrot.slane %v1621, %v1637
    %v1643 = vadd.f32 %v1574, %v1626
    %v1644 = vadd.f32 %v1576, %v1630
    %v1645 = vadd.f32 %v1615, %v1634
    %v1646 = vadd.f32 %v1617, %v1638
    %v1647 = vld [vmem:[#allocation17] sm:$0xf]
    %v1648 = vld [vmem:[#allocation19] sm:$0xf]
    %v1649 = vrot.slane %v1643, 4
    %v1650 = vadd.f32 %v1643, %v1649
    %v1651 = vrot.slane %v1650, 2
    %v1652 = vadd.f32 %v1650, %v1651
    %v1653 = vrot.slane %v1652, 1
    %v1654 = vadd.f32 %v1652, %v1653
    %v1655 = vrot.slane %v1644, 4
    %v1656 = vadd.f32 %v1644, %v1655
    %v1657 = vrot.slane %v1656, 2
    %v1658 = vadd.f32 %v1656, %v1657
    %v1659 = vrot.slane %v1658, 1
    %v1660 = vadd.f32 %v1658, %v1659
    %v1661 = vrot.slane %v1645, 4
    %v1662 = vadd.f32 %v1645, %v1661
    %v1663 = vrot.slane %v1662, 2
    %v1664 = vadd.f32 %v1662, %v1663
    %v1665 = vrot.slane %v1664, 1
    %v1666 = vadd.f32 %v1664, %v1665
    %v1667 = vrot.slane %v1646, 4
    %v1668 = vadd.f32 %v1646, %v1667
    %v1669 = vrot.slane %v1668, 2
    %v1670 = vadd.f32 %v1668, %v1669
    %v1671 = vrot.slane %v1670, 1
    %v1672 = vadd.f32 %v1670, %v1671
    %v1673 = vmul.f32 %v1654, %v437
    %v1674 = vmul.f32 %v1660, %v437
    %v1675 = vmul.f32 %v1666, %v437
    %v1676 = vmul.f32 %v1672, %v437
    %v1677 = vsub.f32 %v1643, %v1673
    %v1678 = vsub.f32 %v1644, %v1674
    %v1679 = vsub.f32 %v1645, %v1675
    %v1680 = vsub.f32 %v1646, %v1676
    %v1681 = vmul.f32 %v1677, %v1677
    %v1682 = vmul.f32 %v1678, %v1678
    %v1683 = vmul.f32 %v1679, %v1679
    %v1684 = vmul.f32 %v1680, %v1680
    %v1685 = vrot.slane %v1681, 4
    %v1686 = vadd.f32 %v1681, %v1685
    %v1687 = vrot.slane %v1686, 2
    %v1688 = vadd.f32 %v1686, %v1687
    %v1689 = vrot.slane %v1688, 1
    %v1690 = vadd.f32 %v1688, %v1689
    %v1691 = vrot.slane %v1682, 4
    %v1692 = vadd.f32 %v1682, %v1691
    %v1693 = vrot.slane %v1692, 2
    %v1694 = vadd.f32 %v1692, %v1693
    %v1695 = vrot.slane %v1694, 1
    %v1696 = vadd.f32 %v1694, %v1695
    %v1697 = vrot.slane %v1683, 4
    %v1698 = vadd.f32 %v1683, %v1697
    %v1699 = vrot.slane %v1698, 2
    %v1700 = vadd.f32 %v1698, %v1699
    %v1701 = vrot.slane %v1700, 1
    %v1702 = vadd.f32 %v1700, %v1701
    %v1703 = vrot.slane %v1684, 4
    %v1704 = vadd.f32 %v1684, %v1703
    %v1705 = vrot.slane %v1704, 2
    %v1706 = vadd.f32 %v1704, %v1705
    %v1707 = vrot.slane %v1706, 1
    %v1708 = vadd.f32 %v1706, %v1707
    %v1709 = vmul.f32 %v1690, %v437
    %v1710 = vmul.f32 %v1696, %v437
    %v1711 = vmul.f32 %v1702, %v437
    %v1712 = vmul.f32 %v1708, %v437
    %v1713 = vadd.f32 %v1709, 1e-05
    %v1714 = vadd.f32 %v1710, 1e-05
    %v1715 = vadd.f32 %v1711, 1e-05
    %v1716 = vadd.f32 %v1712, 1e-05
    %v1717 = vrsqrt.pop %v1713
    %v1718 = vrsqrt.pop %v1714
    %v1719 = vrsqrt.pop %v1715
    %v1720 = vrsqrt.pop %v1716
    %v1721 = vmul.f32 %v1677, %v1717
    %v1722 = vmul.f32 %v1678, %v1718
    %v1723 = vmul.f32 %v1679, %v1719
    %v1724 = vmul.f32 %v1680, %v1720
    %v1726 = vlaneseq
    %v1727 = vshrl.u32 %v1726, 7
    %v1728 = vsub.s32 0, %v1727
    %v1729 = vrot.slane %v1647, %v1728
    %v1730 = vlaneseq
    %v1731 = vshrl.u32 %v1730, 7
    %v1732 = vsub.s32 1, %v1731
    %v1733 = vrot.slane %v1647, %v1732
    %v1734 = vlaneseq
    %v1735 = vshrl.u32 %v1734, 7
    %v1736 = vsub.s32 2, %v1735
    %v1737 = vrot.slane %v1647, %v1736
    %v1738 = vlaneseq
    %v1739 = vshrl.u32 %v1738, 7
    %v1740 = vsub.s32 3, %v1739
    %v1741 = vrot.slane %v1647, %v1740
    %v1746 = vmul.f32 %v1721, %v1729
    %v1747 = vmul.f32 %v1722, %v1733
    %v1748 = vmul.f32 %v1723, %v1737
    %v1749 = vmul.f32 %v1724, %v1741
    %v1751 = vlaneseq
    %v1752 = vshrl.u32 %v1751, 7
    %v1753 = vsub.s32 0, %v1752
    %v1754 = vrot.slane %v1648, %v1753
    %v1755 = vlaneseq
    %v1756 = vshrl.u32 %v1755, 7
    %v1757 = vsub.s32 1, %v1756
    %v1758 = vrot.slane %v1648, %v1757
    %v1759 = vlaneseq
    %v1760 = vshrl.u32 %v1759, 7
    %v1761 = vsub.s32 2, %v1760
    %v1762 = vrot.slane %v1648, %v1761
    %v1763 = vlaneseq
    %v1764 = vshrl.u32 %v1763, 7
    %v1765 = vsub.s32 3, %v1764
    %v1766 = vrot.slane %v1648, %v1765
    %v1771 = vadd.f32 %v1746, %v1754
    %v1772 = vadd.f32 %v1747, %v1758
    %v1773 = vadd.f32 %v1748, %v1762
    %v1774 = vadd.f32 %v1749, %v1766
    %v1775 = vmax.f32 %v1771, 0.0
    %v1776 = vmax.f32 %v1772, 0.0
    %v1777 = vmax.f32 %v1773, 0.0
    %v1778 = vmax.f32 %v1774, 0.0
    %v1779 = vpack.c.bf16 %v1775, %v1775
    %v1780 = vpack.c.bf16 %v1776, %v1776
    %v1781 = vpack.c.bf16 %v1777, %v1777
    %v1782 = vpack.c.bf16 %v1778, %v1778
    %v1783 = vld [vmem:[#allocation20] sm:$0xff]
    %v1784 = vld [vmem:[#allocation20 + $0x8] sm:$0xff]
    %v1785 = vld [vmem:[#allocation20 + $0x10] sm:$0xff]
    %v1786 = vld [vmem:[#allocation20 + $0x18] sm:$0xff]
    %v1787 = vld [vmem:[#allocation20 + $0x20] sm:$0xff]
    %v1788 = vld [vmem:[#allocation20 + $0x28] sm:$0xff]
    %v1789 = vld [vmem:[#allocation20 + $0x30] sm:$0xff]
    %v1790 = vld [vmem:[#allocation20 + $0x38] sm:$0xff]
    %v1791 = vld [vmem:[#allocation20 + $0x40] sm:$0xff]
    %v1792 = vld [vmem:[#allocation20 + $0x48] sm:$0xff]
    %v1793 = vld [vmem:[#allocation20 + $0x50] sm:$0xff]
    %v1794 = vld [vmem:[#allocation20 + $0x58] sm:$0xff]
    %v1795 = vld [vmem:[#allocation20 + $0x60] sm:$0xff]
    %v1796 = vld [vmem:[#allocation20 + $0x68] sm:$0xff]
    %v1797 = vld [vmem:[#allocation20 + $0x70] sm:$0xff]
    %v1798 = vld [vmem:[#allocation20 + $0x78] sm:$0xff]
    %v1799 = vld [vmem:[#allocation20 + $0x80] sm:$0xff]
    %v1800 = vld [vmem:[#allocation20 + $0x88] sm:$0xff]
    %v1801 = vld [vmem:[#allocation20 + $0x90] sm:$0xff]
    %v1802 = vld [vmem:[#allocation20 + $0x98] sm:$0xff]
    %v1803 = vld [vmem:[#allocation20 + $0xa0] sm:$0xff]
    %v1804 = vld [vmem:[#allocation20 + $0xa8] sm:$0xff]
    %v1805 = vld [vmem:[#allocation20 + $0xb0] sm:$0xff]
    %v1806 = vld [vmem:[#allocation20 + $0xb8] sm:$0xff]
    %v1807 = vld [vmem:[#allocation20 + $0xc0] sm:$0xff]
    %v1808 = vld [vmem:[#allocation20 + $0xc8] sm:$0xff]
    %v1809 = vld [vmem:[#allocation20 + $0xd0] sm:$0xff]
    %v1810 = vld [vmem:[#allocation20 + $0xd8] sm:$0xff]
    %v1811 = vld [vmem:[#allocation20 + $0xe0] sm:$0xff]
    %v1812 = vld [vmem:[#allocation20 + $0xe8] sm:$0xff]
    %v1813 = vld [vmem:[#allocation20 + $0xf0] sm:$0xff]
    %v1814 = vld [vmem:[#allocation20 + $0xf8] sm:$0xff]
    %v1815 = vld [vmem:[#allocation20 + $0x100] sm:$0xff]
    %v1816 = vld [vmem:[#allocation20 + $0x108] sm:$0xff]
    %v1817 = vld [vmem:[#allocation20 + $0x110] sm:$0xff]
    %v1818 = vld [vmem:[#allocation20 + $0x118] sm:$0xff]
    %v1819 = vld [vmem:[#allocation20 + $0x120] sm:$0xff]
    %v1820 = vld [vmem:[#allocation20 + $0x128] sm:$0xff]
    %v1821 = vld [vmem:[#allocation20 + $0x130] sm:$0xff]
    %v1822 = vld [vmem:[#allocation20 + $0x138] sm:$0xff]
    %v1823 = vld [vmem:[#allocation20 + $0x140] sm:$0xff]
    %v1824 = vld [vmem:[#allocation20 + $0x148] sm:$0xff]
    %v1825 = vld [vmem:[#allocation20 + $0x150] sm:$0xff]
    %v1826 = vld [vmem:[#allocation20 + $0x158] sm:$0xff]
    %v1827 = vld [vmem:[#allocation20 + $0x160] sm:$0xff]
    %v1828 = vld [vmem:[#allocation20 + $0x168] sm:$0xff]
    %v1829 = vld [vmem:[#allocation20 + $0x170] sm:$0xff]
    %v1830 = vld [vmem:[#allocation20 + $0x178] sm:$0xff]
    %v1831 = vld [vmem:[#allocation20 + $0x180] sm:$0xff]
    %v1832 = vld [vmem:[#allocation20 + $0x188] sm:$0xff]
    %v1833 = vld [vmem:[#allocation20 + $0x190] sm:$0xff]
    %v1834 = vld [vmem:[#allocation20 + $0x198] sm:$0xff]
    %v1835 = vld [vmem:[#allocation20 + $0x1a0] sm:$0xff]
    %v1836 = vld [vmem:[#allocation20 + $0x1a8] sm:$0xff]
    %v1837 = vld [vmem:[#allocation20 + $0x1b0] sm:$0xff]
    %v1838 = vld [vmem:[#allocation20 + $0x1b8] sm:$0xff]
    %v1839 = vld [vmem:[#allocation20 + $0x1c0] sm:$0xff]
    %v1840 = vld [vmem:[#allocation20 + $0x1c8] sm:$0xff]
    %v1841 = vld [vmem:[#allocation20 + $0x1d0] sm:$0xff]
    %v1842 = vld [vmem:[#allocation20 + $0x1d8] sm:$0xff]
    %v1843 = vld [vmem:[#allocation20 + $0x1e0] sm:$0xff]
    %v1844 = vld [vmem:[#allocation20 + $0x1e8] sm:$0xff]
    %v1845 = vld [vmem:[#allocation20 + $0x1f0] sm:$0xff]
    %v1846 = vld [vmem:[#allocation20 + $0x1f8] sm:$0xff]
    %v1847 = vld [vmem:[#allocation20 + $0x200] sm:$0xff]
    %v1848 = vld [vmem:[#allocation20 + $0x208] sm:$0xff]
    %v1849 = vld [vmem:[#allocation20 + $0x210] sm:$0xff]
    %v1850 = vld [vmem:[#allocation20 + $0x218] sm:$0xff]
    %v1851 = vld [vmem:[#allocation20 + $0x220] sm:$0xff]
    %v1852 = vld [vmem:[#allocation20 + $0x228] sm:$0xff]
    %v1853 = vld [vmem:[#allocation20 + $0x230] sm:$0xff]
    %v1854 = vld [vmem:[#allocation20 + $0x238] sm:$0xff]
    %v1855 = vld [vmem:[#allocation20 + $0x240] sm:$0xff]
    %v1856 = vld [vmem:[#allocation20 + $0x248] sm:$0xff]
    %v1857 = vld [vmem:[#allocation20 + $0x250] sm:$0xff]
    %v1858 = vld [vmem:[#allocation20 + $0x258] sm:$0xff]
    %v1859 = vld [vmem:[#allocation20 + $0x260] sm:$0xff]
    %v1860 = vld [vmem:[#allocation20 + $0x268] sm:$0xff]
    %v1861 = vld [vmem:[#allocation20 + $0x270] sm:$0xff]
    %v1862 = vld [vmem:[#allocation20 + $0x278] sm:$0xff]
    %v1863 = vld [vmem:[#allocation20 + $0x280] sm:$0xff]
    %v1864 = vld [vmem:[#allocation20 + $0x288] sm:$0xff]
    %v1865 = vld [vmem:[#allocation20 + $0x290] sm:$0xff]
    %v1866 = vld [vmem:[#allocation20 + $0x298] sm:$0xff]
    %v1867 = vld [vmem:[#allocation20 + $0x2a0] sm:$0xff]
    %v1868 = vld [vmem:[#allocation20 + $0x2a8] sm:$0xff]
    %v1869 = vld [vmem:[#allocation20 + $0x2b0] sm:$0xff]
    %v1870 = vld [vmem:[#allocation20 + $0x2b8] sm:$0xff]
    %v1871 = vld [vmem:[#allocation20 + $0x2c0] sm:$0xff]
    %v1872 = vld [vmem:[#allocation20 + $0x2c8] sm:$0xff]
    %v1873 = vld [vmem:[#allocation20 + $0x2d0] sm:$0xff]
    %v1874 = vld [vmem:[#allocation20 + $0x2d8] sm:$0xff]
    %v1875 = vld [vmem:[#allocation20 + $0x2e0] sm:$0xff]
    %v1876 = vld [vmem:[#allocation20 + $0x2e8] sm:$0xff]
    %v1877 = vld [vmem:[#allocation20 + $0x2f0] sm:$0xff]
    %v1878 = vld [vmem:[#allocation20 + $0x2f8] sm:$0xff]
    %v1879 = vld [vmem:[#allocation20 + $0x300] sm:$0xff]
    %v1880 = vld [vmem:[#allocation20 + $0x308] sm:$0xff]
    %v1881 = vld [vmem:[#allocation20 + $0x310] sm:$0xff]
    %v1882 = vld [vmem:[#allocation20 + $0x318] sm:$0xff]
    %v1883 = vld [vmem:[#allocation20 + $0x320] sm:$0xff]
    %v1884 = vld [vmem:[#allocation20 + $0x328] sm:$0xff]
    %v1885 = vld [vmem:[#allocation20 + $0x330] sm:$0xff]
    %v1886 = vld [vmem:[#allocation20 + $0x338] sm:$0xff]
    %v1887 = vld [vmem:[#allocation20 + $0x340] sm:$0xff]
    %v1888 = vld [vmem:[#allocation20 + $0x348] sm:$0xff]
    %v1889 = vld [vmem:[#allocation20 + $0x350] sm:$0xff]
    %v1890 = vld [vmem:[#allocation20 + $0x358] sm:$0xff]
    %v1891 = vld [vmem:[#allocation20 + $0x360] sm:$0xff]
    %v1892 = vld [vmem:[#allocation20 + $0x368] sm:$0xff]
    %v1893 = vld [vmem:[#allocation20 + $0x370] sm:$0xff]
    %v1894 = vld [vmem:[#allocation20 + $0x378] sm:$0xff]
    %v1895 = vld [vmem:[#allocation20 + $0x380] sm:$0xff]
    %v1896 = vld [vmem:[#allocation20 + $0x388] sm:$0xff]
    %v1897 = vld [vmem:[#allocation20 + $0x390] sm:$0xff]
    %v1898 = vld [vmem:[#allocation20 + $0x398] sm:$0xff]
    %v1899 = vld [vmem:[#allocation20 + $0x3a0] sm:$0xff]
    %v1900 = vld [vmem:[#allocation20 + $0x3a8] sm:$0xff]
    %v1901 = vld [vmem:[#allocation20 + $0x3b0] sm:$0xff]
    %v1902 = vld [vmem:[#allocation20 + $0x3b8] sm:$0xff]
    %v1903 = vld [vmem:[#allocation20 + $0x3c0] sm:$0xff]
    %v1904 = vld [vmem:[#allocation20 + $0x3c8] sm:$0xff]
    %v1905 = vld [vmem:[#allocation20 + $0x3d0] sm:$0xff]
    %v1906 = vld [vmem:[#allocation20 + $0x3d8] sm:$0xff]
    %v1907 = vld [vmem:[#allocation20 + $0x3e0] sm:$0xff]
    %v1908 = vld [vmem:[#allocation20 + $0x3e8] sm:$0xff]
    %v1909 = vld [vmem:[#allocation20 + $0x3f0] sm:$0xff]
    %v1910 = vld [vmem:[#allocation20 + $0x3f8] sm:$0xff]
    %v1911 = vld [vmem:[#allocation20 + $0x400] sm:$0xff]
    %v1912 = vld [vmem:[#allocation20 + $0x408] sm:$0xff]
    %v1913 = vld [vmem:[#allocation20 + $0x410] sm:$0xff]
    %v1914 = vld [vmem:[#allocation20 + $0x418] sm:$0xff]
    %v1915 = vld [vmem:[#allocation20 + $0x420] sm:$0xff]
    %v1916 = vld [vmem:[#allocation20 + $0x428] sm:$0xff]
    %v1917 = vld [vmem:[#allocation20 + $0x430] sm:$0xff]
    %v1918 = vld [vmem:[#allocation20 + $0x438] sm:$0xff]
    %v1919 = vld [vmem:[#allocation20 + $0x440] sm:$0xff]
    %v1920 = vld [vmem:[#allocation20 + $0x448] sm:$0xff]
    %v1921 = vld [vmem:[#allocation20 + $0x450] sm:$0xff]
    %v1922 = vld [vmem:[#allocation20 + $0x458] sm:$0xff]
    %v1923 = vld [vmem:[#allocation20 + $0x460] sm:$0xff]
    %v1924 = vld [vmem:[#allocation20 + $0x468] sm:$0xff]
    %v1925 = vld [vmem:[#allocation20 + $0x470] sm:$0xff]
    %v1926 = vld [vmem:[#allocation20 + $0x478] sm:$0xff]
    %v1927 = vld [vmem:[#allocation20 + $0x480] sm:$0xff]
    %v1928 = vld [vmem:[#allocation20 + $0x488] sm:$0xff]
    %v1929 = vld [vmem:[#allocation20 + $0x490] sm:$0xff]
    %v1930 = vld [vmem:[#allocation20 + $0x498] sm:$0xff]
    %v1931 = vld [vmem:[#allocation20 + $0x4a0] sm:$0xff]
    %v1932 = vld [vmem:[#allocation20 + $0x4a8] sm:$0xff]
    %v1933 = vld [vmem:[#allocation20 + $0x4b0] sm:$0xff]
    %v1934 = vld [vmem:[#allocation20 + $0x4b8] sm:$0xff]
    %v1935 = vld [vmem:[#allocation20 + $0x4c0] sm:$0xff]
    %v1936 = vld [vmem:[#allocation20 + $0x4c8] sm:$0xff]
    %v1937 = vld [vmem:[#allocation20 + $0x4d0] sm:$0xff]
    %v1938 = vld [vmem:[#allocation20 + $0x4d8] sm:$0xff]
    %v1939 = vld [vmem:[#allocation20 + $0x4e0] sm:$0xff]
    %v1940 = vld [vmem:[#allocation20 + $0x4e8] sm:$0xff]
    %v1941 = vld [vmem:[#allocation20 + $0x4f0] sm:$0xff]
    %v1942 = vld [vmem:[#allocation20 + $0x4f8] sm:$0xff]
    %v1943 = vld [vmem:[#allocation20 + $0x500] sm:$0xff]
    %v1944 = vld [vmem:[#allocation20 + $0x508] sm:$0xff]
    %v1945 = vld [vmem:[#allocation20 + $0x510] sm:$0xff]
    %v1946 = vld [vmem:[#allocation20 + $0x518] sm:$0xff]
    %v1947 = vld [vmem:[#allocation20 + $0x520] sm:$0xff]
    %v1948 = vld [vmem:[#allocation20 + $0x528] sm:$0xff]
    %v1949 = vld [vmem:[#allocation20 + $0x530] sm:$0xff]
    %v1950 = vld [vmem:[#allocation20 + $0x538] sm:$0xff]
    %v1951 = vld [vmem:[#allocation20 + $0x540] sm:$0xff]
    %v1952 = vld [vmem:[#allocation20 + $0x548] sm:$0xff]
    %v1953 = vld [vmem:[#allocation20 + $0x550] sm:$0xff]
    %v1954 = vld [vmem:[#allocation20 + $0x558] sm:$0xff]
    %v1955 = vld [vmem:[#allocation20 + $0x560] sm:$0xff]
    %v1956 = vld [vmem:[#allocation20 + $0x568] sm:$0xff]
    %v1957 = vld [vmem:[#allocation20 + $0x570] sm:$0xff]
    %v1958 = vld [vmem:[#allocation20 + $0x578] sm:$0xff]
    %v1959 = vld [vmem:[#allocation20 + $0x580] sm:$0xff]
    %v1960 = vld [vmem:[#allocation20 + $0x588] sm:$0xff]
    %v1961 = vld [vmem:[#allocation20 + $0x590] sm:$0xff]
    %v1962 = vld [vmem:[#allocation20 + $0x598] sm:$0xff]
    %v1963 = vld [vmem:[#allocation20 + $0x5a0] sm:$0xff]
    %v1964 = vld [vmem:[#allocation20 + $0x5a8] sm:$0xff]
    %v1965 = vld [vmem:[#allocation20 + $0x5b0] sm:$0xff]
    %v1966 = vld [vmem:[#allocation20 + $0x5b8] sm:$0xff]
    %v1967 = vld [vmem:[#allocation20 + $0x5c0] sm:$0xff]
    %v1968 = vld [vmem:[#allocation20 + $0x5c8] sm:$0xff]
    %v1969 = vld [vmem:[#allocation20 + $0x5d0] sm:$0xff]
    %v1970 = vld [vmem:[#allocation20 + $0x5d8] sm:$0xff]
    %v1971 = vld [vmem:[#allocation20 + $0x5e0] sm:$0xff]
    %v1972 = vld [vmem:[#allocation20 + $0x5e8] sm:$0xff]
    %v1973 = vld [vmem:[#allocation20 + $0x5f0] sm:$0xff]
    %v1974 = vld [vmem:[#allocation20 + $0x5f8] sm:$0xff]
    %v1975 = vld [vmem:[#allocation20 + $0x600] sm:$0xff]
    %v1976 = vld [vmem:[#allocation20 + $0x608] sm:$0xff]
    %v1977 = vld [vmem:[#allocation20 + $0x610] sm:$0xff]
    %v1978 = vld [vmem:[#allocation20 + $0x618] sm:$0xff]
    %v1979 = vld [vmem:[#allocation20 + $0x620] sm:$0xff]
    %v1980 = vld [vmem:[#allocation20 + $0x628] sm:$0xff]
    %v1981 = vld [vmem:[#allocation20 + $0x630] sm:$0xff]
    %v1982 = vld [vmem:[#allocation20 + $0x638] sm:$0xff]
    %v1983 = vld [vmem:[#allocation20 + $0x640] sm:$0xff]
    %v1984 = vld [vmem:[#allocation20 + $0x648] sm:$0xff]
    %v1985 = vld [vmem:[#allocation20 + $0x650] sm:$0xff]
    %v1986 = vld [vmem:[#allocation20 + $0x658] sm:$0xff]
    %v1987 = vld [vmem:[#allocation20 + $0x660] sm:$0xff]
    %v1988 = vld [vmem:[#allocation20 + $0x668] sm:$0xff]
    %v1989 = vld [vmem:[#allocation20 + $0x670] sm:$0xff]
    %v1990 = vld [vmem:[#allocation20 + $0x678] sm:$0xff]
    %v1991 = vld [vmem:[#allocation20 + $0x680] sm:$0xff]
    %v1992 = vld [vmem:[#allocation20 + $0x688] sm:$0xff]
    %v1993 = vld [vmem:[#allocation20 + $0x690] sm:$0xff]
    %v1994 = vld [vmem:[#allocation20 + $0x698] sm:$0xff]
    %v1995 = vld [vmem:[#allocation20 + $0x6a0] sm:$0xff]
    %v1996 = vld [vmem:[#allocation20 + $0x6a8] sm:$0xff]
    %v1997 = vld [vmem:[#allocation20 + $0x6b0] sm:$0xff]
    %v1998 = vld [vmem:[#allocation20 + $0x6b8] sm:$0xff]
    %v1999 = vld [vmem:[#allocation20 + $0x6c0] sm:$0xff]
    %v2000 = vld [vmem:[#allocation20 + $0x6c8] sm:$0xff]
    %v2001 = vld [vmem:[#allocation20 + $0x6d0] sm:$0xff]
    %v2002 = vld [vmem:[#allocation20 + $0x6d8] sm:$0xff]
    %v2003 = vld [vmem:[#allocation20 + $0x6e0] sm:$0xff]
    %v2004 = vld [vmem:[#allocation20 + $0x6e8] sm:$0xff]
    %v2005 = vld [vmem:[#allocation20 + $0x6f0] sm:$0xff]
    %v2006 = vld [vmem:[#allocation20 + $0x6f8] sm:$0xff]
    %v2007 = vld [vmem:[#allocation20 + $0x700] sm:$0xff]
    %v2008 = vld [vmem:[#allocation20 + $0x708] sm:$0xff]
    %v2009 = vld [vmem:[#allocation20 + $0x710] sm:$0xff]
    %v2010 = vld [vmem:[#allocation20 + $0x718] sm:$0xff]
    %v2011 = vld [vmem:[#allocation20 + $0x720] sm:$0xff]
    %v2012 = vld [vmem:[#allocation20 + $0x728] sm:$0xff]
    %v2013 = vld [vmem:[#allocation20 + $0x730] sm:$0xff]
    %v2014 = vld [vmem:[#allocation20 + $0x738] sm:$0xff]
    %v2015 = vld [vmem:[#allocation20 + $0x740] sm:$0xff]
    %v2016 = vld [vmem:[#allocation20 + $0x748] sm:$0xff]
    %v2017 = vld [vmem:[#allocation20 + $0x750] sm:$0xff]
    %v2018 = vld [vmem:[#allocation20 + $0x758] sm:$0xff]
    %v2019 = vld [vmem:[#allocation20 + $0x760] sm:$0xff]
    %v2020 = vld [vmem:[#allocation20 + $0x768] sm:$0xff]
    %v2021 = vld [vmem:[#allocation20 + $0x770] sm:$0xff]
    %v2022 = vld [vmem:[#allocation20 + $0x778] sm:$0xff]
    %v2023 = vld [vmem:[#allocation20 + $0x780] sm:$0xff]
    %v2024 = vld [vmem:[#allocation20 + $0x788] sm:$0xff]
    %v2025 = vld [vmem:[#allocation20 + $0x790] sm:$0xff]
    %v2026 = vld [vmem:[#allocation20 + $0x798] sm:$0xff]
    %v2027 = vld [vmem:[#allocation20 + $0x7a0] sm:$0xff]
    %v2028 = vld [vmem:[#allocation20 + $0x7a8] sm:$0xff]
    %v2029 = vld [vmem:[#allocation20 + $0x7b0] sm:$0xff]
    %v2030 = vld [vmem:[#allocation20 + $0x7b8] sm:$0xff]
    %v2031 = vld [vmem:[#allocation20 + $0x7c0] sm:$0xff]
    %v2032 = vld [vmem:[#allocation20 + $0x7c8] sm:$0xff]
    %v2033 = vld [vmem:[#allocation20 + $0x7d0] sm:$0xff]
    %v2034 = vld [vmem:[#allocation20 + $0x7d8] sm:$0xff]
    %v2035 = vld [vmem:[#allocation20 + $0x7e0] sm:$0xff]
    %v2036 = vld [vmem:[#allocation20 + $0x7e8] sm:$0xff]
    %v2037 = vld [vmem:[#allocation20 + $0x7f0] sm:$0xff]
    %v2038 = vld [vmem:[#allocation20 + $0x7f8] sm:$0xff]
    %v2039 = vld [vmem:[#allocation22] sm:$0xff]
    %v2041 = vlaneseq
    %v2042 = vshrl.u32 %v2041, 7
    %v2043 = vsub.s32 0, %v2042
    %v2044 = vrot.slane %v2039, %v2043
    %v2045 = vlaneseq
    %v2046 = vshrl.u32 %v2045, 7
    %v2047 = vsub.s32 1, %v2046
    %v2048 = vrot.slane %v2039, %v2047
    %v2049 = vlaneseq
    %v2050 = vshrl.u32 %v2049, 7
    %v2051 = vsub.s32 2, %v2050
    %v2052 = vrot.slane %v2039, %v2051
    %v2053 = vlaneseq
    %v2054 = vshrl.u32 %v2053, 7
    %v2055 = vsub.s32 3, %v2054
    %v2056 = vrot.slane %v2039, %v2055
    %v2057 = vlaneseq
    %v2058 = vshrl.u32 %v2057, 7
    %v2059 = vsub.s32 4, %v2058
    %v2060 = vrot.slane %v2039, %v2059
    %v2061 = vlaneseq
    %v2062 = vshrl.u32 %v2061, 7
    %v2063 = vsub.s32 5, %v2062
    %v2064 = vrot.slane %v2039, %v2063
    %v2065 = vlaneseq
    %v2066 = vshrl.u32 %v2065, 7
    %v2067 = vsub.s32 6, %v2066
    %v2068 = vrot.slane %v2039, %v2067
    %v2069 = vlaneseq
    %v2070 = vshrl.u32 %v2069, 7
    %v2071 = vsub.s32 7, %v2070
    %v2072 = vrot.slane %v2039, %v2071
    %v2337 = vunpack.c.l.b16 %v1783
    %v2338 = vunpack.c.h.b16 %v1783
    %v2339 = vunpack.c.l.b16 %v1784
    %v2340 = vunpack.c.h.b16 %v1784
    %v2341 = vunpack.c.l.b16 %v1785
    %v2342 = vunpack.c.h.b16 %v1785
    %v2343 = vunpack.c.l.b16 %v1786
    %v2344 = vunpack.c.h.b16 %v1786
    %v2345 = vunpack.c.l.b16 %v1787
    %v2346 = vunpack.c.h.b16 %v1787
    %v2347 = vunpack.c.l.b16 %v1788
    %v2348 = vunpack.c.h.b16 %v1788
    %v2349 = vunpack.c.l.b16 %v1789
    %v2350 = vunpack.c.h.b16 %v1789
    %v2351 = vunpack.c.l.b16 %v1790
    %v2352 = vunpack.c.h.b16 %v1790
    %v2353 = vunpack.c.l.b16 %v1791
    %v2354 = vunpack.c.h.b16 %v1791
    %v2355 = vunpack.c.l.b16 %v1792
    %v2356 = vunpack.c.h.b16 %v1792
    %v2357 = vunpack.c.l.b16 %v1793
    %v2358 = vunpack.c.h.b16 %v1793
    %v2359 = vunpack.c.l.b16 %v1794
    %v2360 = vunpack.c.h.b16 %v1794
    %v2361 = vunpack.c.l.b16 %v1795
    %v2362 = vunpack.c.h.b16 %v1795
    %v2363 = vunpack.c.l.b16 %v1796
    %v2364 = vunpack.c.h.b16 %v1796
    %v2365 = vunpack.c.l.b16 %v1797
    %v2366 = vunpack.c.h.b16 %v1797
    %v2367 = vunpack.c.l.b16 %v1798
    %v2368 = vunpack.c.h.b16 %v1798
    %v2369 = vunpack.c.l.b16 %v1799
    %v2370 = vunpack.c.h.b16 %v1799
    %v2371 = vunpack.c.l.b16 %v1800
    %v2372 = vunpack.c.h.b16 %v1800
    %v2373 = vunpack.c.l.b16 %v1801
    %v2374 = vunpack.c.h.b16 %v1801
    %v2375 = vunpack.c.l.b16 %v1802
    %v2376 = vunpack.c.h.b16 %v1802
    %v2377 = vunpack.c.l.b16 %v1803
    %v2378 = vunpack.c.h.b16 %v1803
    %v2379 = vunpack.c.l.b16 %v1804
    %v2380 = vunpack.c.h.b16 %v1804
    %v2381 = vunpack.c.l.b16 %v1805
    %v2382 = vunpack.c.h.b16 %v1805
    %v2383 = vunpack.c.l.b16 %v1806
    %v2384 = vunpack.c.h.b16 %v1806
    %v2385 = vunpack.c.l.b16 %v1807
    %v2386 = vunpack.c.h.b16 %v1807
    %v2387 = vunpack.c.l.b16 %v1808
    %v2388 = vunpack.c.h.b16 %v1808
    %v2389 = vunpack.c.l.b16 %v1809
    %v2390 = vunpack.c.h.b16 %v1809
    %v2391 = vunpack.c.l.b16 %v1810
    %v2392 = vunpack.c.h.b16 %v1810
    %v2393 = vunpack.c.l.b16 %v1811
    %v2394 = vunpack.c.h.b16 %v1811
    %v2395 = vunpack.c.l.b16 %v1812
    %v2396 = vunpack.c.h.b16 %v1812
    %v2397 = vunpack.c.l.b16 %v1813
    %v2398 = vunpack.c.h.b16 %v1813
    %v2399 = vunpack.c.l.b16 %v1814
    %v2400 = vunpack.c.h.b16 %v1814
    %v2401 = vunpack.c.l.b16 %v1815
    %v2402 = vunpack.c.h.b16 %v1815
    %v2403 = vunpack.c.l.b16 %v1816
    %v2404 = vunpack.c.h.b16 %v1816
    %v2405 = vunpack.c.l.b16 %v1817
    %v2406 = vunpack.c.h.b16 %v1817
    %v2407 = vunpack.c.l.b16 %v1818
    %v2408 = vunpack.c.h.b16 %v1818
    %v2409 = vunpack.c.l.b16 %v1819
    %v2410 = vunpack.c.h.b16 %v1819
    %v2411 = vunpack.c.l.b16 %v1820
    %v2412 = vunpack.c.h.b16 %v1820
    %v2413 = vunpack.c.l.b16 %v1821
    %v2414 = vunpack.c.h.b16 %v1821
    %v2415 = vunpack.c.l.b16 %v1822
    %v2416 = vunpack.c.h.b16 %v1822
    %v2417 = vunpack.c.l.b16 %v1823
    %v2418 = vunpack.c.h.b16 %v1823
    %v2419 = vunpack.c.l.b16 %v1824
    %v2420 = vunpack.c.h.b16 %v1824
    %v2421 = vunpack.c.l.b16 %v1825
    %v2422 = vunpack.c.h.b16 %v1825
    %v2423 = vunpack.c.l.b16 %v1826
    %v2424 = vunpack.c.h.b16 %v1826
    %v2425 = vunpack.c.l.b16 %v1827
    %v2426 = vunpack.c.h.b16 %v1827
    %v2427 = vunpack.c.l.b16 %v1828
    %v2428 = vunpack.c.h.b16 %v1828
    %v2429 = vunpack.c.l.b16 %v1829
    %v2430 = vunpack.c.h.b16 %v1829
    %v2431 = vunpack.c.l.b16 %v1830
    %v2432 = vunpack.c.h.b16 %v1830
    %v2433 = vunpack.c.l.b16 %v1831
    %v2434 = vunpack.c.h.b16 %v1831
    %v2435 = vunpack.c.l.b16 %v1832
    %v2436 = vunpack.c.h.b16 %v1832
    %v2437 = vunpack.c.l.b16 %v1833
    %v2438 = vunpack.c.h.b16 %v1833
    %v2439 = vunpack.c.l.b16 %v1834
    %v2440 = vunpack.c.h.b16 %v1834
    %v2441 = vunpack.c.l.b16 %v1835
    %v2442 = vunpack.c.h.b16 %v1835
    %v2443 = vunpack.c.l.b16 %v1836
    %v2444 = vunpack.c.h.b16 %v1836
    %v2445 = vunpack.c.l.b16 %v1837
    %v2446 = vunpack.c.h.b16 %v1837
    %v2447 = vunpack.c.l.b16 %v1838
    %v2448 = vunpack.c.h.b16 %v1838
    %v2449 = vunpack.c.l.b16 %v1839
    %v2450 = vunpack.c.h.b16 %v1839
    %v2451 = vunpack.c.l.b16 %v1840
    %v2452 = vunpack.c.h.b16 %v1840
    %v2453 = vunpack.c.l.b16 %v1841
    %v2454 = vunpack.c.h.b16 %v1841
    %v2455 = vunpack.c.l.b16 %v1842
    %v2456 = vunpack.c.h.b16 %v1842
    %v2457 = vunpack.c.l.b16 %v1843
    %v2458 = vunpack.c.h.b16 %v1843
    %v2459 = vunpack.c.l.b16 %v1844
    %v2460 = vunpack.c.h.b16 %v1844
    %v2461 = vunpack.c.l.b16 %v1845
    %v2462 = vunpack.c.h.b16 %v1845
    %v2463 = vunpack.c.l.b16 %v1846
    %v2464 = vunpack.c.h.b16 %v1846
    %v2465 = vunpack.c.l.b16 %v1847
    %v2466 = vunpack.c.h.b16 %v1847
    %v2467 = vunpack.c.l.b16 %v1848
    %v2468 = vunpack.c.h.b16 %v1848
    %v2469 = vunpack.c.l.b16 %v1849
    %v2470 = vunpack.c.h.b16 %v1849
    %v2471 = vunpack.c.l.b16 %v1850
    %v2472 = vunpack.c.h.b16 %v1850
    %v2473 = vunpack.c.l.b16 %v1851
    %v2474 = vunpack.c.h.b16 %v1851
    %v2475 = vunpack.c.l.b16 %v1852
    %v2476 = vunpack.c.h.b16 %v1852
    %v2477 = vunpack.c.l.b16 %v1853
    %v2478 = vunpack.c.h.b16 %v1853
    %v2479 = vunpack.c.l.b16 %v1854
    %v2480 = vunpack.c.h.b16 %v1854
    %v2481 = vunpack.c.l.b16 %v1855
    %v2482 = vunpack.c.h.b16 %v1855
    %v2483 = vunpack.c.l.b16 %v1856
    %v2484 = vunpack.c.h.b16 %v1856
    %v2485 = vunpack.c.l.b16 %v1857
    %v2486 = vunpack.c.h.b16 %v1857
    %v2487 = vunpack.c.l.b16 %v1858
    %v2488 = vunpack.c.h.b16 %v1858
    %v2489 = vunpack.c.l.b16 %v1859
    %v2490 = vunpack.c.h.b16 %v1859
    %v2491 = vunpack.c.l.b16 %v1860
    %v2492 = vunpack.c.h.b16 %v1860
    %v2493 = vunpack.c.l.b16 %v1861
    %v2494 = vunpack.c.h.b16 %v1861
    %v2495 = vunpack.c.l.b16 %v1862
    %v2496 = vunpack.c.h.b16 %v1862
    %v2497 = vunpack.c.l.b16 %v1863
    %v2498 = vunpack.c.h.b16 %v1863
    %v2499 = vunpack.c.l.b16 %v1864
    %v2500 = vunpack.c.h.b16 %v1864
    %v2501 = vunpack.c.l.b16 %v1865
    %v2502 = vunpack.c.h.b16 %v1865
    %v2503 = vunpack.c.l.b16 %v1866
    %v2504 = vunpack.c.h.b16 %v1866
    %v2505 = vunpack.c.l.b16 %v1867
    %v2506 = vunpack.c.h.b16 %v1867
    %v2507 = vunpack.c.l.b16 %v1868
    %v2508 = vunpack.c.h.b16 %v1868
    %v2509 = vunpack.c.l.b16 %v1869
    %v2510 = vunpack.c.h.b16 %v1869
    %v2511 = vunpack.c.l.b16 %v1870
    %v2512 = vunpack.c.h.b16 %v1870
    %v2513 = vunpack.c.l.b16 %v1871
    %v2514 = vunpack.c.h.b16 %v1871
    %v2515 = vunpack.c.l.b16 %v1872
    %v2516 = vunpack.c.h.b16 %v1872
    %v2517 = vunpack.c.l.b16 %v1873
    %v2518 = vunpack.c.h.b16 %v1873
    %v2519 = vunpack.c.l.b16 %v1874
    %v2520 = vunpack.c.h.b16 %v1874
    %v2521 = vunpack.c.l.b16 %v1875
    %v2522 = vunpack.c.h.b16 %v1875
    %v2523 = vunpack.c.l.b16 %v1876
    %v2524 = vunpack.c.h.b16 %v1876
    %v2525 = vunpack.c.l.b16 %v1877
    %v2526 = vunpack.c.h.b16 %v1877
    %v2527 = vunpack.c.l.b16 %v1878
    %v2528 = vunpack.c.h.b16 %v1878
    %v2529 = vunpack.c.l.b16 %v1879
    %v2530 = vunpack.c.h.b16 %v1879
    %v2531 = vunpack.c.l.b16 %v1880
    %v2532 = vunpack.c.h.b16 %v1880
    %v2533 = vunpack.c.l.b16 %v1881
    %v2534 = vunpack.c.h.b16 %v1881
    %v2535 = vunpack.c.l.b16 %v1882
    %v2536 = vunpack.c.h.b16 %v1882
    %v2537 = vunpack.c.l.b16 %v1883
    %v2538 = vunpack.c.h.b16 %v1883
    %v2539 = vunpack.c.l.b16 %v1884
    %v2540 = vunpack.c.h.b16 %v1884
    %v2541 = vunpack.c.l.b16 %v1885
    %v2542 = vunpack.c.h.b16 %v1885
    %v2543 = vunpack.c.l.b16 %v1886
    %v2544 = vunpack.c.h.b16 %v1886
    %v2545 = vunpack.c.l.b16 %v1887
    %v2546 = vunpack.c.h.b16 %v1887
    %v2547 = vunpack.c.l.b16 %v1888
    %v2548 = vunpack.c.h.b16 %v1888
    %v2549 = vunpack.c.l.b16 %v1889
    %v2550 = vunpack.c.h.b16 %v1889
    %v2551 = vunpack.c.l.b16 %v1890
    %v2552 = vunpack.c.h.b16 %v1890
    %v2553 = vunpack.c.l.b16 %v1891
    %v2554 = vunpack.c.h.b16 %v1891
    %v2555 = vunpack.c.l.b16 %v1892
    %v2556 = vunpack.c.h.b16 %v1892
    %v2557 = vunpack.c.l.b16 %v1893
    %v2558 = vunpack.c.h.b16 %v1893
    %v2559 = vunpack.c.l.b16 %v1894
    %v2560 = vunpack.c.h.b16 %v1894
    %v2561 = vunpack.c.l.b16 %v1895
    %v2562 = vunpack.c.h.b16 %v1895
    %v2563 = vunpack.c.l.b16 %v1896
    %v2564 = vunpack.c.h.b16 %v1896
    %v2565 = vunpack.c.l.b16 %v1897
    %v2566 = vunpack.c.h.b16 %v1897
    %v2567 = vunpack.c.l.b16 %v1898
    %v2568 = vunpack.c.h.b16 %v1898
    %v2569 = vunpack.c.l.b16 %v1899
    %v2570 = vunpack.c.h.b16 %v1899
    %v2571 = vunpack.c.l.b16 %v1900
    %v2572 = vunpack.c.h.b16 %v1900
    %v2573 = vunpack.c.l.b16 %v1901
    %v2574 = vunpack.c.h.b16 %v1901
    %v2575 = vunpack.c.l.b16 %v1902
    %v2576 = vunpack.c.h.b16 %v1902
    %v2577 = vunpack.c.l.b16 %v1903
    %v2578 = vunpack.c.h.b16 %v1903
    %v2579 = vunpack.c.l.b16 %v1904
    %v2580 = vunpack.c.h.b16 %v1904
    %v2581 = vunpack.c.l.b16 %v1905
    %v2582 = vunpack.c.h.b16 %v1905
    %v2583 = vunpack.c.l.b16 %v1906
    %v2584 = vunpack.c.h.b16 %v1906
    %v2585 = vunpack.c.l.b16 %v1907
    %v2586 = vunpack.c.h.b16 %v1907
    %v2587 = vunpack.c.l.b16 %v1908
    %v2588 = vunpack.c.h.b16 %v1908
    %v2589 = vunpack.c.l.b16 %v1909
    %v2590 = vunpack.c.h.b16 %v1909
    %v2591 = vunpack.c.l.b16 %v1910
    %v2592 = vunpack.c.h.b16 %v1910
    %v2593 = vunpack.c.l.b16 %v1911
    %v2594 = vunpack.c.h.b16 %v1911
    %v2595 = vunpack.c.l.b16 %v1912
    %v2596 = vunpack.c.h.b16 %v1912
    %v2597 = vunpack.c.l.b16 %v1913
    %v2598 = vunpack.c.h.b16 %v1913
    %v2599 = vunpack.c.l.b16 %v1914
    %v2600 = vunpack.c.h.b16 %v1914
    %v2601 = vunpack.c.l.b16 %v1915
    %v2602 = vunpack.c.h.b16 %v1915
    %v2603 = vunpack.c.l.b16 %v1916
    %v2604 = vunpack.c.h.b16 %v1916
    %v2605 = vunpack.c.l.b16 %v1917
    %v2606 = vunpack.c.h.b16 %v1917
    %v2607 = vunpack.c.l.b16 %v1918
    %v2608 = vunpack.c.h.b16 %v1918
    %v2609 = vunpack.c.l.b16 %v1919
    %v2610 = vunpack.c.h.b16 %v1919
    %v2611 = vunpack.c.l.b16 %v1920
    %v2612 = vunpack.c.h.b16 %v1920
    %v2613 = vunpack.c.l.b16 %v1921
    %v2614 = vunpack.c.h.b16 %v1921
    %v2615 = vunpack.c.l.b16 %v1922
    %v2616 = vunpack.c.h.b16 %v1922
    %v2617 = vunpack.c.l.b16 %v1923
    %v2618 = vunpack.c.h.b16 %v1923
    %v2619 = vunpack.c.l.b16 %v1924
    %v2620 = vunpack.c.h.b16 %v1924
    %v2621 = vunpack.c.l.b16 %v1925
    %v2622 = vunpack.c.h.b16 %v1925
    %v2623 = vunpack.c.l.b16 %v1926
    %v2624 = vunpack.c.h.b16 %v1926
    %v2625 = vunpack.c.l.b16 %v1927
    %v2626 = vunpack.c.h.b16 %v1927
    %v2627 = vunpack.c.l.b16 %v1928
    %v2628 = vunpack.c.h.b16 %v1928
    %v2629 = vunpack.c.l.b16 %v1929
    %v2630 = vunpack.c.h.b16 %v1929
    %v2631 = vunpack.c.l.b16 %v1930
    %v2632 = vunpack.c.h.b16 %v1930
    %v2633 = vunpack.c.l.b16 %v1931
    %v2634 = vunpack.c.h.b16 %v1931
    %v2635 = vunpack.c.l.b16 %v1932
    %v2636 = vunpack.c.h.b16 %v1932
    %v2637 = vunpack.c.l.b16 %v1933
    %v2638 = vunpack.c.h.b16 %v1933
    %v2639 = vunpack.c.l.b16 %v1934
    %v2640 = vunpack.c.h.b16 %v1934
    %v2641 = vunpack.c.l.b16 %v1935
    %v2642 = vunpack.c.h.b16 %v1935
    %v2643 = vunpack.c.l.b16 %v1936
    %v2644 = vunpack.c.h.b16 %v1936
    %v2645 = vunpack.c.l.b16 %v1937
    %v2646 = vunpack.c.h.b16 %v1937
    %v2647 = vunpack.c.l.b16 %v1938
    %v2648 = vunpack.c.h.b16 %v1938
    %v2649 = vunpack.c.l.b16 %v1939
    %v2650 = vunpack.c.h.b16 %v1939
    %v2651 = vunpack.c.l.b16 %v1940
    %v2652 = vunpack.c.h.b16 %v1940
    %v2653 = vunpack.c.l.b16 %v1941
    %v2654 = vunpack.c.h.b16 %v1941
    %v2655 = vunpack.c.l.b16 %v1942
    %v2656 = vunpack.c.h.b16 %v1942
    %v2657 = vunpack.c.l.b16 %v1943
    %v2658 = vunpack.c.h.b16 %v1943
    %v2659 = vunpack.c.l.b16 %v1944
    %v2660 = vunpack.c.h.b16 %v1944
    %v2661 = vunpack.c.l.b16 %v1945
    %v2662 = vunpack.c.h.b16 %v1945
    %v2663 = vunpack.c.l.b16 %v1946
    %v2664 = vunpack.c.h.b16 %v1946
    %v2665 = vunpack.c.l.b16 %v1947
    %v2666 = vunpack.c.h.b16 %v1947
    %v2667 = vunpack.c.l.b16 %v1948
    %v2668 = vunpack.c.h.b16 %v1948
    %v2669 = vunpack.c.l.b16 %v1949
    %v2670 = vunpack.c.h.b16 %v1949
    %v2671 = vunpack.c.l.b16 %v1950
    %v2672 = vunpack.c.h.b16 %v1950
    %v2673 = vunpack.c.l.b16 %v1951
    %v2674 = vunpack.c.h.b16 %v1951
    %v2675 = vunpack.c.l.b16 %v1952
    %v2676 = vunpack.c.h.b16 %v1952
    %v2677 = vunpack.c.l.b16 %v1953
    %v2678 = vunpack.c.h.b16 %v1953
    %v2679 = vunpack.c.l.b16 %v1954
    %v2680 = vunpack.c.h.b16 %v1954
    %v2681 = vunpack.c.l.b16 %v1955
    %v2682 = vunpack.c.h.b16 %v1955
    %v2683 = vunpack.c.l.b16 %v1956
    %v2684 = vunpack.c.h.b16 %v1956
    %v2685 = vunpack.c.l.b16 %v1957
    %v2686 = vunpack.c.h.b16 %v1957
    %v2687 = vunpack.c.l.b16 %v1958
    %v2688 = vunpack.c.h.b16 %v1958
    %v2689 = vunpack.c.l.b16 %v1959
    %v2690 = vunpack.c.h.b16 %v1959
    %v2691 = vunpack.c.l.b16 %v1960
    %v2692 = vunpack.c.h.b16 %v1960
    %v2693 = vunpack.c.l.b16 %v1961
    %v2694 = vunpack.c.h.b16 %v1961
    %v2695 = vunpack.c.l.b16 %v1962
    %v2696 = vunpack.c.h.b16 %v1962
    %v2697 = vunpack.c.l.b16 %v1963
    %v2698 = vunpack.c.h.b16 %v1963
    %v2699 = vunpack.c.l.b16 %v1964
    %v2700 = vunpack.c.h.b16 %v1964
    %v2701 = vunpack.c.l.b16 %v1965
    %v2702 = vunpack.c.h.b16 %v1965
    %v2703 = vunpack.c.l.b16 %v1966
    %v2704 = vunpack.c.h.b16 %v1966
    %v2705 = vunpack.c.l.b16 %v1967
    %v2706 = vunpack.c.h.b16 %v1967
    %v2707 = vunpack.c.l.b16 %v1968
    %v2708 = vunpack.c.h.b16 %v1968
    %v2709 = vunpack.c.l.b16 %v1969
    %v2710 = vunpack.c.h.b16 %v1969
    %v2711 = vunpack.c.l.b16 %v1970
    %v2712 = vunpack.c.h.b16 %v1970
    %v2713 = vunpack.c.l.b16 %v1971
    %v2714 = vunpack.c.h.b16 %v1971
    %v2715 = vunpack.c.l.b16 %v1972
    %v2716 = vunpack.c.h.b16 %v1972
    %v2717 = vunpack.c.l.b16 %v1973
    %v2718 = vunpack.c.h.b16 %v1973
    %v2719 = vunpack.c.l.b16 %v1974
    %v2720 = vunpack.c.h.b16 %v1974
    %v2721 = vunpack.c.l.b16 %v1975
    %v2722 = vunpack.c.h.b16 %v1975
    %v2723 = vunpack.c.l.b16 %v1976
    %v2724 = vunpack.c.h.b16 %v1976
    %v2725 = vunpack.c.l.b16 %v1977
    %v2726 = vunpack.c.h.b16 %v1977
    %v2727 = vunpack.c.l.b16 %v1978
    %v2728 = vunpack.c.h.b16 %v1978
    %v2729 = vunpack.c.l.b16 %v1979
    %v2730 = vunpack.c.h.b16 %v1979
    %v2731 = vunpack.c.l.b16 %v1980
    %v2732 = vunpack.c.h.b16 %v1980
    %v2733 = vunpack.c.l.b16 %v1981
    %v2734 = vunpack.c.h.b16 %v1981
    %v2735 = vunpack.c.l.b16 %v1982
    %v2736 = vunpack.c.h.b16 %v1982
    %v2737 = vunpack.c.l.b16 %v1983
    %v2738 = vunpack.c.h.b16 %v1983
    %v2739 = vunpack.c.l.b16 %v1984
    %v2740 = vunpack.c.h.b16 %v1984
    %v2741 = vunpack.c.l.b16 %v1985
    %v2742 = vunpack.c.h.b16 %v1985
    %v2743 = vunpack.c.l.b16 %v1986
    %v2744 = vunpack.c.h.b16 %v1986
    %v2745 = vunpack.c.l.b16 %v1987
    %v2746 = vunpack.c.h.b16 %v1987
    %v2747 = vunpack.c.l.b16 %v1988
    %v2748 = vunpack.c.h.b16 %v1988
    %v2749 = vunpack.c.l.b16 %v1989
    %v2750 = vunpack.c.h.b16 %v1989
    %v2751 = vunpack.c.l.b16 %v1990
    %v2752 = vunpack.c.h.b16 %v1990
    %v2753 = vunpack.c.l.b16 %v1991
    %v2754 = vunpack.c.h.b16 %v1991
    %v2755 = vunpack.c.l.b16 %v1992
    %v2756 = vunpack.c.h.b16 %v1992
    %v2757 = vunpack.c.l.b16 %v1993
    %v2758 = vunpack.c.h.b16 %v1993
    %v2759 = vunpack.c.l.b16 %v1994
    %v2760 = vunpack.c.h.b16 %v1994
    %v2761 = vunpack.c.l.b16 %v1995
    %v2762 = vunpack.c.h.b16 %v1995
    %v2763 = vunpack.c.l.b16 %v1996
    %v2764 = vunpack.c.h.b16 %v1996
    %v2765 = vunpack.c.l.b16 %v1997
    %v2766 = vunpack.c.h.b16 %v1997
    %v2767 = vunpack.c.l.b16 %v1998
    %v2768 = vunpack.c.h.b16 %v1998
    %v2769 = vunpack.c.l.b16 %v1999
    %v2770 = vunpack.c.h.b16 %v1999
    %v2771 = vunpack.c.l.b16 %v2000
    %v2772 = vunpack.c.h.b16 %v2000
    %v2773 = vunpack.c.l.b16 %v2001
    %v2774 = vunpack.c.h.b16 %v2001
    %v2775 = vunpack.c.l.b16 %v2002
    %v2776 = vunpack.c.h.b16 %v2002
    %v2777 = vunpack.c.l.b16 %v2003
    %v2778 = vunpack.c.h.b16 %v2003
    %v2779 = vunpack.c.l.b16 %v2004
    %v2780 = vunpack.c.h.b16 %v2004
    %v2781 = vunpack.c.l.b16 %v2005
    %v2782 = vunpack.c.h.b16 %v2005
    %v2783 = vunpack.c.l.b16 %v2006
    %v2784 = vunpack.c.h.b16 %v2006
    %v2785 = vunpack.c.l.b16 %v2007
    %v2786 = vunpack.c.h.b16 %v2007
    %v2787 = vunpack.c.l.b16 %v2008
    %v2788 = vunpack.c.h.b16 %v2008
    %v2789 = vunpack.c.l.b16 %v2009
    %v2790 = vunpack.c.h.b16 %v2009
    %v2791 = vunpack.c.l.b16 %v2010
    %v2792 = vunpack.c.h.b16 %v2010
    %v2793 = vunpack.c.l.b16 %v2011
    %v2794 = vunpack.c.h.b16 %v2011
    %v2795 = vunpack.c.l.b16 %v2012
    %v2796 = vunpack.c.h.b16 %v2012
    %v2797 = vunpack.c.l.b16 %v2013
    %v2798 = vunpack.c.h.b16 %v2013
    %v2799 = vunpack.c.l.b16 %v2014
    %v2800 = vunpack.c.h.b16 %v2014
    %v2801 = vunpack.c.l.b16 %v2015
    %v2802 = vunpack.c.h.b16 %v2015
    %v2803 = vunpack.c.l.b16 %v2016
    %v2804 = vunpack.c.h.b16 %v2016
    %v2805 = vunpack.c.l.b16 %v2017
    %v2806 = vunpack.c.h.b16 %v2017
    %v2807 = vunpack.c.l.b16 %v2018
    %v2808 = vunpack.c.h.b16 %v2018
    %v2809 = vunpack.c.l.b16 %v2019
    %v2810 = vunpack.c.h.b16 %v2019
    %v2811 = vunpack.c.l.b16 %v2020
    %v2812 = vunpack.c.h.b16 %v2020
    %v2813 = vunpack.c.l.b16 %v2021
    %v2814 = vunpack.c.h.b16 %v2021
    %v2815 = vunpack.c.l.b16 %v2022
    %v2816 = vunpack.c.h.b16 %v2022
    %v2817 = vunpack.c.l.b16 %v2023
    %v2818 = vunpack.c.h.b16 %v2023
    %v2819 = vunpack.c.l.b16 %v2024
    %v2820 = vunpack.c.h.b16 %v2024
    %v2821 = vunpack.c.l.b16 %v2025
    %v2822 = vunpack.c.h.b16 %v2025
    %v2823 = vunpack.c.l.b16 %v2026
    %v2824 = vunpack.c.h.b16 %v2026
    %v2825 = vunpack.c.l.b16 %v2027
    %v2826 = vunpack.c.h.b16 %v2027
    %v2827 = vunpack.c.l.b16 %v2028
    %v2828 = vunpack.c.h.b16 %v2028
    %v2829 = vunpack.c.l.b16 %v2029
    %v2830 = vunpack.c.h.b16 %v2029
    %v2831 = vunpack.c.l.b16 %v2030
    %v2832 = vunpack.c.h.b16 %v2030
    %v2833 = vunpack.c.l.b16 %v2031
    %v2834 = vunpack.c.h.b16 %v2031
    %v2835 = vunpack.c.l.b16 %v2032
    %v2836 = vunpack.c.h.b16 %v2032
    %v2837 = vunpack.c.l.b16 %v2033
    %v2838 = vunpack.c.h.b16 %v2033
    %v2839 = vunpack.c.l.b16 %v2034
    %v2840 = vunpack.c.h.b16 %v2034
    %v2841 = vunpack.c.l.b16 %v2035
    %v2842 = vunpack.c.h.b16 %v2035
    %v2843 = vunpack.c.l.b16 %v2036
    %v2844 = vunpack.c.h.b16 %v2036
    %v2845 = vunpack.c.l.b16 %v2037
    %v2846 = vunpack.c.h.b16 %v2037
    %v2847 = vunpack.c.l.b16 %v2038
    %v2848 = vunpack.c.h.b16 %v2038
    %v2849 = vpack.c.b16 %v2345, %v2337
    %v2850 = vpack.c.b16 %v2346, %v2338
    %v2851 = vpack.c.b16 %v2347, %v2339
    %v2852 = vpack.c.b16 %v2348, %v2340
    %v2853 = vpack.c.b16 %v2349, %v2341
    %v2854 = vpack.c.b16 %v2350, %v2342
    %v2855 = vpack.c.b16 %v2351, %v2343
    %v2856 = vpack.c.b16 %v2352, %v2344
    %v2857 = vpack.c.b16 %v2361, %v2353
    %v2858 = vpack.c.b16 %v2362, %v2354
    %v2859 = vpack.c.b16 %v2363, %v2355
    %v2860 = vpack.c.b16 %v2364, %v2356
    %v2861 = vpack.c.b16 %v2365, %v2357
    %v2862 = vpack.c.b16 %v2366, %v2358
    %v2863 = vpack.c.b16 %v2367, %v2359
    %v2864 = vpack.c.b16 %v2368, %v2360
    %v2865 = vpack.c.b16 %v2377, %v2369
    %v2866 = vpack.c.b16 %v2378, %v2370
    %v2867 = vpack.c.b16 %v2379, %v2371
    %v2868 = vpack.c.b16 %v2380, %v2372
    %v2869 = vpack.c.b16 %v2381, %v2373
    %v2870 = vpack.c.b16 %v2382, %v2374
    %v2871 = vpack.c.b16 %v2383, %v2375
    %v2872 = vpack.c.b16 %v2384, %v2376
    %v2873 = vpack.c.b16 %v2393, %v2385
    %v2874 = vpack.c.b16 %v2394, %v2386
    %v2875 = vpack.c.b16 %v2395, %v2387
    %v2876 = vpack.c.b16 %v2396, %v2388
    %v2877 = vpack.c.b16 %v2397, %v2389
    %v2878 = vpack.c.b16 %v2398, %v2390
    %v2879 = vpack.c.b16 %v2399, %v2391
    %v2880 = vpack.c.b16 %v2400, %v2392
    %v2881 = vpack.c.b16 %v2409, %v2401
    %v2882 = vpack.c.b16 %v2410, %v2402
    %v2883 = vpack.c.b16 %v2411, %v2403
    %v2884 = vpack.c.b16 %v2412, %v2404
    %v2885 = vpack.c.b16 %v2413, %v2405
    %v2886 = vpack.c.b16 %v2414, %v2406
    %v2887 = vpack.c.b16 %v2415, %v2407
    %v2888 = vpack.c.b16 %v2416, %v2408
    %v2889 = vpack.c.b16 %v2425, %v2417
    %v2890 = vpack.c.b16 %v2426, %v2418
    %v2891 = vpack.c.b16 %v2427, %v2419
    %v2892 = vpack.c.b16 %v2428, %v2420
    %v2893 = vpack.c.b16 %v2429, %v2421
    %v2894 = vpack.c.b16 %v2430, %v2422
    %v2895 = vpack.c.b16 %v2431, %v2423
    %v2896 = vpack.c.b16 %v2432, %v2424
    %v2897 = vpack.c.b16 %v2441, %v2433
    %v2898 = vpack.c.b16 %v2442, %v2434
    %v2899 = vpack.c.b16 %v2443, %v2435
    %v2900 = vpack.c.b16 %v2444, %v2436
    %v2901 = vpack.c.b16 %v2445, %v2437
    %v2902 = vpack.c.b16 %v2446, %v2438
    %v2903 = vpack.c.b16 %v2447, %v2439
    %v2904 = vpack.c.b16 %v2448, %v2440
    %v2905 = vpack.c.b16 %v2457, %v2449
    %v2906 = vpack.c.b16 %v2458, %v2450
    %v2907 = vpack.c.b16 %v2459, %v2451
    %v2908 = vpack.c.b16 %v2460, %v2452
    %v2909 = vpack.c.b16 %v2461, %v2453
    %v2910 = vpack.c.b16 %v2462, %v2454
    %v2911 = vpack.c.b16 %v2463, %v2455
    %v2912 = vpack.c.b16 %v2464, %v2456
    %v2913 = vpack.c.b16 %v2473, %v2465
    %v2914 = vpack.c.b16 %v2474, %v2466
    %v2915 = vpack.c.b16 %v2475, %v2467
    %v2916 = vpack.c.b16 %v2476, %v2468
    %v2917 = vpack.c.b16 %v2477, %v2469
    %v2918 = vpack.c.b16 %v2478, %v2470
    %v2919 = vpack.c.b16 %v2479, %v2471
    %v2920 = vpack.c.b16 %v2480, %v2472
    %v2921 = vpack.c.b16 %v2489, %v2481
    %v2922 = vpack.c.b16 %v2490, %v2482
    %v2923 = vpack.c.b16 %v2491, %v2483
    %v2924 = vpack.c.b16 %v2492, %v2484
    %v2925 = vpack.c.b16 %v2493, %v2485
    %v2926 = vpack.c.b16 %v2494, %v2486
    %v2927 = vpack.c.b16 %v2495, %v2487
    %v2928 = vpack.c.b16 %v2496, %v2488
    %v2929 = vpack.c.b16 %v2505, %v2497
    %v2930 = vpack.c.b16 %v2506, %v2498
    %v2931 = vpack.c.b16 %v2507, %v2499
    %v2932 = vpack.c.b16 %v2508, %v2500
    %v2933 = vpack.c.b16 %v2509, %v2501
    %v2934 = vpack.c.b16 %v2510, %v2502
    %v2935 = vpack.c.b16 %v2511, %v2503
    %v2936 = vpack.c.b16 %v2512, %v2504
    %v2937 = vpack.c.b16 %v2521, %v2513
    %v2938 = vpack.c.b16 %v2522, %v2514
    %v2939 = vpack.c.b16 %v2523, %v2515
    %v2940 = vpack.c.b16 %v2524, %v2516
    %v2941 = vpack.c.b16 %v2525, %v2517
    %v2942 = vpack.c.b16 %v2526, %v2518
    %v2943 = vpack.c.b16 %v2527, %v2519
    %v2944 = vpack.c.b16 %v2528, %v2520
    %v2945 = vpack.c.b16 %v2537, %v2529
    %v2946 = vpack.c.b16 %v2538, %v2530
    %v2947 = vpack.c.b16 %v2539, %v2531
    %v2948 = vpack.c.b16 %v2540, %v2532
    %v2949 = vpack.c.b16 %v2541, %v2533
    %v2950 = vpack.c.b16 %v2542, %v2534
    %v2951 = vpack.c.b16 %v2543, %v2535
    %v2952 = vpack.c.b16 %v2544, %v2536
    %v2953 = vpack.c.b16 %v2553, %v2545
    %v2954 = vpack.c.b16 %v2554, %v2546
    %v2955 = vpack.c.b16 %v2555, %v2547
    %v2956 = vpack.c.b16 %v2556, %v2548
    %v2957 = vpack.c.b16 %v2557, %v2549
    %v2958 = vpack.c.b16 %v2558, %v2550
    %v2959 = vpack.c.b16 %v2559, %v2551
    %v2960 = vpack.c.b16 %v2560, %v2552
    %v2961 = vpack.c.b16 %v2569, %v2561
    %v2962 = vpack.c.b16 %v2570, %v2562
    %v2963 = vpack.c.b16 %v2571, %v2563
    %v2964 = vpack.c.b16 %v2572, %v2564
    %v2965 = vpack.c.b16 %v2573, %v2565
    %v2966 = vpack.c.b16 %v2574, %v2566
    %v2967 = vpack.c.b16 %v2575, %v2567
    %v2968 = vpack.c.b16 %v2576, %v2568
    %v2969 = vpack.c.b16 %v2585, %v2577
    %v2970 = vpack.c.b16 %v2586, %v2578
    %v2971 = vpack.c.b16 %v2587, %v2579
    %v2972 = vpack.c.b16 %v2588, %v2580
    %v2973 = vpack.c.b16 %v2589, %v2581
    %v2974 = vpack.c.b16 %v2590, %v2582
    %v2975 = vpack.c.b16 %v2591, %v2583
    %v2976 = vpack.c.b16 %v2592, %v2584
    %v2977 = vpack.c.b16 %v2601, %v2593
    %v2978 = vpack.c.b16 %v2602, %v2594
    %v2979 = vpack.c.b16 %v2603, %v2595
    %v2980 = vpack.c.b16 %v2604, %v2596
    %v2981 = vpack.c.b16 %v2605, %v2597
    %v2982 = vpack.c.b16 %v2606, %v2598
    %v2983 = vpack.c.b16 %v2607, %v2599
    %v2984 = vpack.c.b16 %v2608, %v2600
    %v2985 = vpack.c.b16 %v2617, %v2609
    %v2986 = vpack.c.b16 %v2618, %v2610
    %v2987 = vpack.c.b16 %v2619, %v2611
    %v2988 = vpack.c.b16 %v2620, %v2612
    %v2989 = vpack.c.b16 %v2621, %v2613
    %v2990 = vpack.c.b16 %v2622, %v2614
    %v2991 = vpack.c.b16 %v2623, %v2615
    %v2992 = vpack.c.b16 %v2624, %v2616
    %v2993 = vpack.c.b16 %v2633, %v2625
    %v2994 = vpack.c.b16 %v2634, %v2626
    %v2995 = vpack.c.b16 %v2635, %v2627
    %v2996 = vpack.c.b16 %v2636, %v2628
    %v2997 = vpack.c.b16 %v2637, %v2629
    %v2998 = vpack.c.b16 %v2638, %v2630
    %v2999 = vpack.c.b16 %v2639, %v2631
    %v3000 = vpack.c.b16 %v2640, %v2632
    %v3001 = vpack.c.b16 %v2649, %v2641
    %v3002 = vpack.c.b16 %v2650, %v2642
    %v3003 = vpack.c.b16 %v2651, %v2643
    %v3004 = vpack.c.b16 %v2652, %v2644
    %v3005 = vpack.c.b16 %v2653, %v2645
    %v3006 = vpack.c.b16 %v2654, %v2646
    %v3007 = vpack.c.b16 %v2655, %v2647
    %v3008 = vpack.c.b16 %v2656, %v2648
    %v3009 = vpack.c.b16 %v2665, %v2657
    %v3010 = vpack.c.b16 %v2666, %v2658
    %v3011 = vpack.c.b16 %v2667, %v2659
    %v3012 = vpack.c.b16 %v2668, %v2660
    %v3013 = vpack.c.b16 %v2669, %v2661
    %v3014 = vpack.c.b16 %v2670, %v2662
    %v3015 = vpack.c.b16 %v2671, %v2663
    %v3016 = vpack.c.b16 %v2672, %v2664
    %v3017 = vpack.c.b16 %v2681, %v2673
    %v3018 = vpack.c.b16 %v2682, %v2674
    %v3019 = vpack.c.b16 %v2683, %v2675
    %v3020 = vpack.c.b16 %v2684, %v2676
    %v3021 = vpack.c.b16 %v2685, %v2677
    %v3022 = vpack.c.b16 %v2686, %v2678
    %v3023 = vpack.c.b16 %v2687, %v2679
    %v3024 = vpack.c.b16 %v2688, %v2680
    %v3025 = vpack.c.b16 %v2697, %v2689
    %v3026 = vpack.c.b16 %v2698, %v2690
    %v3027 = vpack.c.b16 %v2699, %v2691
    %v3028 = vpack.c.b16 %v2700, %v2692
    %v3029 = vpack.c.b16 %v2701, %v2693
    %v3030 = vpack.c.b16 %v2702, %v2694
    %v3031 = vpack.c.b16 %v2703, %v2695
    %v3032 = vpack.c.b16 %v2704, %v2696
    %v3033 = vpack.c.b16 %v2713, %v2705
    %v3034 = vpack.c.b16 %v2714, %v2706
    %v3035 = vpack.c.b16 %v2715, %v2707
    %v3036 = vpack.c.b16 %v2716, %v2708
    %v3037 = vpack.c.b16 %v2717, %v2709
    %v3038 = vpack.c.b16 %v2718, %v2710
    %v3039 = vpack.c.b16 %v2719, %v2711
    %v3040 = vpack.c.b16 %v2720, %v2712
    %v3041 = vpack.c.b16 %v2729, %v2721
    %v3042 = vpack.c.b16 %v2730, %v2722
    %v3043 = vpack.c.b16 %v2731, %v2723
    %v3044 = vpack.c.b16 %v2732, %v2724
    %v3045 = vpack.c.b16 %v2733, %v2725
    %v3046 = vpack.c.b16 %v2734, %v2726
    %v3047 = vpack.c.b16 %v2735, %v2727
    %v3048 = vpack.c.b16 %v2736, %v2728
    %v3049 = vpack.c.b16 %v2745, %v2737
    %v3050 = vpack.c.b16 %v2746, %v2738
    %v3051 = vpack.c.b16 %v2747, %v2739
    %v3052 = vpack.c.b16 %v2748, %v2740
    %v3053 = vpack.c.b16 %v2749, %v2741
    %v3054 = vpack.c.b16 %v2750, %v2742
    %v3055 = vpack.c.b16 %v2751, %v2743
    %v3056 = vpack.c.b16 %v2752, %v2744
    %v3057 = vpack.c.b16 %v2761, %v2753
    %v3058 = vpack.c.b16 %v2762, %v2754
    %v3059 = vpack.c.b16 %v2763, %v2755
    %v3060 = vpack.c.b16 %v2764, %v2756
    %v3061 = vpack.c.b16 %v2765, %v2757
    %v3062 = vpack.c.b16 %v2766, %v2758
    %v3063 = vpack.c.b16 %v2767, %v2759
    %v3064 = vpack.c.b16 %v2768, %v2760
    %v3065 = vpack.c.b16 %v2777, %v2769
    %v3066 = vpack.c.b16 %v2778, %v2770
    %v3067 = vpack.c.b16 %v2779, %v2771
    %v3068 = vpack.c.b16 %v2780, %v2772
    %v3069 = vpack.c.b16 %v2781, %v2773
    %v3070 = vpack.c.b16 %v2782, %v2774
    %v3071 = vpack.c.b16 %v2783, %v2775
    %v3072 = vpack.c.b16 %v2784, %v2776
    %v3073 = vpack.c.b16 %v2793, %v2785
    %v3074 = vpack.c.b16 %v2794, %v2786
    %v3075 = vpack.c.b16 %v2795, %v2787
    %v3076 = vpack.c.b16 %v2796, %v2788
    %v3077 = vpack.c.b16 %v2797, %v2789
    %v3078 = vpack.c.b16 %v2798, %v2790
    %v3079 = vpack.c.b16 %v2799, %v2791
    %v3080 = vpack.c.b16 %v2800, %v2792
    %v3081 = vpack.c.b16 %v2809, %v2801
    %v3082 = vpack.c.b16 %v2810, %v2802
    %v3083 = vpack.c.b16 %v2811, %v2803
    %v3084 = vpack.c.b16 %v2812, %v2804
    %v3085 = vpack.c.b16 %v2813, %v2805
    %v3086 = vpack.c.b16 %v2814, %v2806
    %v3087 = vpack.c.b16 %v2815, %v2807
    %v3088 = vpack.c.b16 %v2816, %v2808
    %v3089 = vpack.c.b16 %v2825, %v2817
    %v3090 = vpack.c.b16 %v2826, %v2818
    %v3091 = vpack.c.b16 %v2827, %v2819
    %v3092 = vpack.c.b16 %v2828, %v2820
    %v3093 = vpack.c.b16 %v2829, %v2821
    %v3094 = vpack.c.b16 %v2830, %v2822
    %v3095 = vpack.c.b16 %v2831, %v2823
    %v3096 = vpack.c.b16 %v2832, %v2824
    %v3097 = vpack.c.b16 %v2841, %v2833
    %v3098 = vpack.c.b16 %v2842, %v2834
    %v3099 = vpack.c.b16 %v2843, %v2835
    %v3100 = vpack.c.b16 %v2844, %v2836
    %v3101 = vpack.c.b16 %v2845, %v2837
    %v3102 = vpack.c.b16 %v2846, %v2838
    %v3103 = vpack.c.b16 %v2847, %v2839
    %v3104 = vpack.c.b16 %v2848, %v2840
    %3361 = vmatprep.subr.bf16.mxu0 %v2906
    %3362 = vmatpush1.bf16.msra.mxu0 %v2905
    %3363 = vmatprep.subr.bf16.mxu0 %v2898
    %3364 = vmatpush1.bf16.msra.mxu0 %v2897
    %3365 = vmatprep.subr.bf16.mxu0 %v2890
    %3366 = vmatpush1.bf16.msra.mxu0 %v2889
    %3367 = vmatprep.subr.bf16.mxu0 %v2882
    %3368 = vmatpush1.bf16.msra.mxu0 %v2881
    %3369 = vmatprep.subr.bf16.mxu0 %v2874
    %3370 = vmatpush1.bf16.msra.mxu0 %v2873
    %3371 = vmatprep.subr.bf16.mxu0 %v2866
    %3372 = vmatpush1.bf16.msra.mxu0 %v2865
    %3373 = vmatprep.subr.bf16.mxu0 %v2858
    %3374 = vmatpush1.bf16.msra.mxu0 %v2857
    %3375 = vmatprep.subr.bf16.mxu0 %v2850
    %3376 = vmatpush1.bf16.msra.mxu0 %v2849
    %3377 = vmatprep.subr.bf16.mxu0 %v2970
    %3378 = vmatpush2.bf16.msra.mxu0 %v2969
    %3379 = vmatprep.subr.bf16.mxu0 %v2962
    %3380 = vmatpush2.bf16.msra.mxu0 %v2961
    %3381 = vmatprep.subr.bf16.mxu0 %v2954
    %3382 = vmatpush2.bf16.msra.mxu0 %v2953
    %3383 = vmatprep.subr.bf16.mxu0 %v2946
    %3384 = vmatpush2.bf16.msra.mxu0 %v2945
    %3385 = vmatprep.subr.bf16.mxu0 %v2938
    %3386 = vmatpush2.bf16.msra.mxu0 %v2937
    %3387 = vmatprep.subr.bf16.mxu0 %v2930
    %3388 = vmatpush2.bf16.msra.mxu0 %v2929
    %3389 = vmatprep.subr.bf16.mxu0 %v2922
    %3390 = vmatpush2.bf16.msra.mxu0 %v2921
    %3391 = vmatprep.subr.bf16.mxu0 %v2914
    %3392 = vmatpush2.bf16.msra.mxu0 %v2913
    %3393 = vmatprep.mubr.bf16.mxu0 %v1780
    %3394 = vmatmul.mubr.bf16.gmra.mxu0 %v1779
    %v3395 = vpop.f32.mrf.mxu0
    %v3396 = vadd.f32 %v2044, %v3395
    %v3397 = vpop.f32.mrf.mxu0
    %v3398 = vadd.f32 %v2048, %v3397
    %v3399 = vpop.f32.mrf.mxu0
    %v3400 = vpop.f32.mrf.mxu0
    %3401 = vdwg.mxu0
    %3402 = vmatprep.subr.bf16.mxu0 %v3034
    %3403 = vmatpush1.bf16.msra.mxu0 %v3033
    %3404 = vmatprep.subr.bf16.mxu0 %v3026
    %3405 = vmatpush1.bf16.msra.mxu0 %v3025
    %3406 = vmatprep.subr.bf16.mxu0 %v3018
    %3407 = vmatpush1.bf16.msra.mxu0 %v3017
    %3408 = vmatprep.subr.bf16.mxu0 %v3010
    %3409 = vmatpush1.bf16.msra.mxu0 %v3009
    %3410 = vmatprep.subr.bf16.mxu0 %v3002
    %3411 = vmatpush1.bf16.msra.mxu0 %v3001
    %3412 = vmatprep.subr.bf16.mxu0 %v2994
    %3413 = vmatpush1.bf16.msra.mxu0 %v2993
    %3414 = vmatprep.subr.bf16.mxu0 %v2986
    %3415 = vmatpush1.bf16.msra.mxu0 %v2985
    %3416 = vmatprep.subr.bf16.mxu0 %v2978
    %3417 = vmatpush1.bf16.msra.mxu0 %v2977
    %3418 = vmatprep.subr.bf16.mxu0 %v3098
    %3419 = vmatpush2.bf16.msra.mxu0 %v3097
    %3420 = vmatprep.subr.bf16.mxu0 %v3090
    %3421 = vmatpush2.bf16.msra.mxu0 %v3089
    %3422 = vmatprep.subr.bf16.mxu0 %v3082
    %3423 = vmatpush2.bf16.msra.mxu0 %v3081
    %3424 = vmatprep.subr.bf16.mxu0 %v3074
    %3425 = vmatpush2.bf16.msra.mxu0 %v3073
    %3426 = vmatprep.subr.bf16.mxu0 %v3066
    %3427 = vmatpush2.bf16.msra.mxu0 %v3065
    %3428 = vmatprep.subr.bf16.mxu0 %v3058
    %3429 = vmatpush2.bf16.msra.mxu0 %v3057
    %3430 = vmatprep.subr.bf16.mxu0 %v3050
    %3431 = vmatpush2.bf16.msra.mxu0 %v3049
    %3432 = vmatprep.subr.bf16.mxu0 %v3042
    %3433 = vmatpush2.bf16.msra.mxu0 %v3041
    %3434 = vmatprep.mubr.bf16.mxu0 %v1782
    %3435 = vmatmul.mubr.bf16.gmra.mxu0 %v1781
    %v3436 = vpop.f32.mrf.mxu0
    %v3437 = vadd.f32 %v3396, %v3436
    %v3438 = vpop.f32.mrf.mxu0
    %v3439 = vadd.f32 %v3398, %v3438
    %v3440 = vpop.f32.mrf.mxu0
    %v3441 = vpop.f32.mrf.mxu0
    %3442 = vdwg.mxu0
    %3443 = vmatprep.subr.bf16.mxu0 %v2908
    %3444 = vmatpush1.bf16.msra.mxu0 %v2907
    %3445 = vmatprep.subr.bf16.mxu0 %v2900
    %3446 = vmatpush1.bf16.msra.mxu0 %v2899
    %3447 = vmatprep.subr.bf16.mxu0 %v2892
    %3448 = vmatpush1.bf16.msra.mxu0 %v2891
    %3449 = vmatprep.subr.bf16.mxu0 %v2884
    %3450 = vmatpush1.bf16.msra.mxu0 %v2883
    %3451 = vmatprep.subr.bf16.mxu0 %v2876
    %3452 = vmatpush1.bf16.msra.mxu0 %v2875
    %3453 = vmatprep.subr.bf16.mxu0 %v2868
    %3454 = vmatpush1.bf16.msra.mxu0 %v2867
    %3455 = vmatprep.subr.bf16.mxu0 %v2860
    %3456 = vmatpush1.bf16.msra.mxu0 %v2859
    %3457 = vmatprep.subr.bf16.mxu0 %v2852
    %3458 = vmatpush1.bf16.msra.mxu0 %v2851
    %3459 = vmatprep.subr.bf16.mxu0 %v2972
    %3460 = vmatpush2.bf16.msra.mxu0 %v2971
    %3461 = vmatprep.subr.bf16.mxu0 %v2964
    %3462 = vmatpush2.bf16.msra.mxu0 %v2963
    %3463 = vmatprep.subr.bf16.mxu0 %v2956
    %3464 = vmatpush2.bf16.msra.mxu0 %v2955
    %3465 = vmatprep.subr.bf16.mxu0 %v2948
    %3466 = vmatpush2.bf16.msra.mxu0 %v2947
    %3467 = vmatprep.subr.bf16.mxu0 %v2940
    %3468 = vmatpush2.bf16.msra.mxu0 %v2939
    %3469 = vmatprep.subr.bf16.mxu0 %v2932
    %3470 = vmatpush2.bf16.msra.mxu0 %v2931
    %3471 = vmatprep.subr.bf16.mxu0 %v2924
    %3472 = vmatpush2.bf16.msra.mxu0 %v2923
    %3473 = vmatprep.subr.bf16.mxu0 %v2916
    %3474 = vmatpush2.bf16.msra.mxu0 %v2915
    %3475 = vmatprep.mubr.bf16.mxu0 %v1780
    %3476 = vmatmul.mubr.bf16.gmra.mxu0 %v1779
    %v3477 = vpop.f32.mrf.mxu0
    %v3478 = vadd.f32 %v2052, %v3477
    %v3479 = vpop.f32.mrf.mxu0
    %v3480 = vadd.f32 %v2056, %v3479
    %v3481 = vpop.f32.mrf.mxu0
    %v3482 = vpop.f32.mrf.mxu0
    %3483 = vdwg.mxu0
    %3484 = vmatprep.subr.bf16.mxu0 %v3036
    %3485 = vmatpush1.bf16.msra.mxu0 %v3035
    %3486 = vmatprep.subr.bf16.mxu0 %v3028
    %3487 = vmatpush1.bf16.msra.mxu0 %v3027
    %3488 = vmatprep.subr.bf16.mxu0 %v3020
    %3489 = vmatpush1.bf16.msra.mxu0 %v3019
    %3490 = vmatprep.subr.bf16.mxu0 %v3012
    %3491 = vmatpush1.bf16.msra.mxu0 %v3011
    %3492 = vmatprep.subr.bf16.mxu0 %v3004
    %3493 = vmatpush1.bf16.msra.mxu0 %v3003
    %3494 = vmatprep.subr.bf16.mxu0 %v2996
    %3495 = vmatpush1.bf16.msra.mxu0 %v2995
    %3496 = vmatprep.subr.bf16.mxu0 %v2988
    %3497 = vmatpush1.bf16.msra.mxu0 %v2987
    %3498 = vmatprep.subr.bf16.mxu0 %v2980
    %3499 = vmatpush1.bf16.msra.mxu0 %v2979
    %3500 = vmatprep.subr.bf16.mxu0 %v3100
    %3501 = vmatpush2.bf16.msra.mxu0 %v3099
    %3502 = vmatprep.subr.bf16.mxu0 %v3092
    %3503 = vmatpush2.bf16.msra.mxu0 %v3091
    %3504 = vmatprep.subr.bf16.mxu0 %v3084
    %3505 = vmatpush2.bf16.msra.mxu0 %v3083
    %3506 = vmatprep.subr.bf16.mxu0 %v3076
    %3507 = vmatpush2.bf16.msra.mxu0 %v3075
    %3508 = vmatprep.subr.bf16.mxu0 %v3068
    %3509 = vmatpush2.bf16.msra.mxu0 %v3067
    %3510 = vmatprep.subr.bf16.mxu0 %v3060
    %3511 = vmatpush2.bf16.msra.mxu0 %v3059
    %3512 = vmatprep.subr.bf16.mxu0 %v3052
    %3513 = vmatpush2.bf16.msra.mxu0 %v3051
    %3514 = vmatprep.subr.bf16.mxu0 %v3044
    %3515 = vmatpush2.bf16.msra.mxu0 %v3043
    %3516 = vmatprep.mubr.bf16.mxu0 %v1782
    %3517 = vmatmul.mubr.bf16.gmra.mxu0 %v1781
    %v3518 = vpop.f32.mrf.mxu0
    %v3519 = vadd.f32 %v3478, %v3518
    %v3520 = vpop.f32.mrf.mxu0
    %v3521 = vadd.f32 %v3480, %v3520
    %v3522 = vpop.f32.mrf.mxu0
    %v3523 = vpop.f32.mrf.mxu0
    %3524 = vdwg.mxu0
    %3525 = vmatprep.subr.bf16.mxu0 %v2910
    %3526 = vmatpush1.bf16.msra.mxu0 %v2909
    %3527 = vmatprep.subr.bf16.mxu0 %v2902
    %3528 = vmatpush1.bf16.msra.mxu0 %v2901
    %3529 = vmatprep.subr.bf16.mxu0 %v2894
    %3530 = vmatpush1.bf16.msra.mxu0 %v2893
    %3531 = vmatprep.subr.bf16.mxu0 %v2886
    %3532 = vmatpush1.bf16.msra.mxu0 %v2885
    %3533 = vmatprep.subr.bf16.mxu0 %v2878
    %3534 = vmatpush1.bf16.msra.mxu0 %v2877
    %3535 = vmatprep.subr.bf16.mxu0 %v2870
    %3536 = vmatpush1.bf16.msra.mxu0 %v2869
    %3537 = vmatprep.subr.bf16.mxu0 %v2862
    %3538 = vmatpush1.bf16.msra.mxu0 %v2861
    %3539 = vmatprep.subr.bf16.mxu0 %v2854
    %3540 = vmatpush1.bf16.msra.mxu0 %v2853
    %3541 = vmatprep.subr.bf16.mxu0 %v2974
    %3542 = vmatpush2.bf16.msra.mxu0 %v2973
    %3543 = vmatprep.subr.bf16.mxu0 %v2966
    %3544 = vmatpush2.bf16.msra.mxu0 %v2965
    %3545 = vmatprep.subr.bf16.mxu0 %v2958
    %3546 = vmatpush2.bf16.msra.mxu0 %v2957
    %3547 = vmatprep.subr.bf16.mxu0 %v2950
    %3548 = vmatpush2.bf16.msra.mxu0 %v2949
    %3549 = vmatprep.subr.bf16.mxu0 %v2942
    %3550 = vmatpush2.bf16.msra.mxu0 %v2941
    %3551 = vmatprep.subr.bf16.mxu0 %v2934
    %3552 = vmatpush2.bf16.msra.mxu0 %v2933
    %3553 = vmatprep.subr.bf16.mxu0 %v2926
    %3554 = vmatpush2.bf16.msra.mxu0 %v2925
    %3555 = vmatprep.subr.bf16.mxu0 %v2918
    %3556 = vmatpush2.bf16.msra.mxu0 %v2917
    %3557 = vmatprep.mubr.bf16.mxu0 %v1780
    %3558 = vmatmul.mubr.bf16.gmra.mxu0 %v1779
    %v3559 = vpop.f32.mrf.mxu0
    %v3560 = vadd.f32 %v2060, %v3559
    %v3561 = vpop.f32.mrf.mxu0
    %v3562 = vadd.f32 %v2064, %v3561
    %v3563 = vpop.f32.mrf.mxu0
    %v3564 = vpop.f32.mrf.mxu0
    %3565 = vdwg.mxu0
    %3566 = vmatprep.subr.bf16.mxu0 %v3038
    %3567 = vmatpush1.bf16.msra.mxu0 %v3037
    %3568 = vmatprep.subr.bf16.mxu0 %v3030
    %3569 = vmatpush1.bf16.msra.mxu0 %v3029
    %3570 = vmatprep.subr.bf16.mxu0 %v3022
    %3571 = vmatpush1.bf16.msra.mxu0 %v3021
    %3572 = vmatprep.subr.bf16.mxu0 %v3014
    %3573 = vmatpush1.bf16.msra.mxu0 %v3013
    %3574 = vmatprep.subr.bf16.mxu0 %v3006
    %3575 = vmatpush1.bf16.msra.mxu0 %v3005
    %3576 = vmatprep.subr.bf16.mxu0 %v2998
    %3577 = vmatpush1.bf16.msra.mxu0 %v2997
    %3578 = vmatprep.subr.bf16.mxu0 %v2990
    %3579 = vmatpush1.bf16.msra.mxu0 %v2989
    %3580 = vmatprep.subr.bf16.mxu0 %v2982
    %3581 = vmatpush1.bf16.msra.mxu0 %v2981
    %3582 = vmatprep.subr.bf16.mxu0 %v3102
    %3583 = vmatpush2.bf16.msra.mxu0 %v3101
    %3584 = vmatprep.subr.bf16.mxu0 %v3094
    %3585 = vmatpush2.bf16.msra.mxu0 %v3093
    %3586 = vmatprep.subr.bf16.mxu0 %v3086
    %3587 = vmatpush2.bf16.msra.mxu0 %v3085
    %3588 = vmatprep.subr.bf16.mxu0 %v3078
    %3589 = vmatpush2.bf16.msra.mxu0 %v3077
    %3590 = vmatprep.subr.bf16.mxu0 %v3070
    %3591 = vmatpush2.bf16.msra.mxu0 %v3069
    %3592 = vmatprep.subr.bf16.mxu0 %v3062
    %3593 = vmatpush2.bf16.msra.mxu0 %v3061
    %3594 = vmatprep.subr.bf16.mxu0 %v3054
    %3595 = vmatpush2.bf16.msra.mxu0 %v3053
    %3596 = vmatprep.subr.bf16.mxu0 %v3046
    %3597 = vmatpush2.bf16.msra.mxu0 %v3045
    %3598 = vmatprep.mubr.bf16.mxu0 %v1782
    %3599 = vmatmul.mubr.bf16.gmra.mxu0 %v1781
    %v3600 = vpop.f32.mrf.mxu0
    %v3601 = vadd.f32 %v3560, %v3600
    %v3602 = vpop.f32.mrf.mxu0
    %v3603 = vadd.f32 %v3562, %v3602
    %v3604 = vpop.f32.mrf.mxu0
    %v3605 = vpop.f32.mrf.mxu0
    %3606 = vdwg.mxu0
    %3607 = vmatprep.subr.bf16.mxu0 %v2912
    %3608 = vmatpush1.bf16.msra.mxu0 %v2911
    %3609 = vmatprep.subr.bf16.mxu0 %v2904
    %3610 = vmatpush1.bf16.msra.mxu0 %v2903
    %3611 = vmatprep.subr.bf16.mxu0 %v2896
    %3612 = vmatpush1.bf16.msra.mxu0 %v2895
    %3613 = vmatprep.subr.bf16.mxu0 %v2888
    %3614 = vmatpush1.bf16.msra.mxu0 %v2887
    %3615 = vmatprep.subr.bf16.mxu0 %v2880
    %3616 = vmatpush1.bf16.msra.mxu0 %v2879
    %3617 = vmatprep.subr.bf16.mxu0 %v2872
    %3618 = vmatpush1.bf16.msra.mxu0 %v2871
    %3619 = vmatprep.subr.bf16.mxu0 %v2864
    %3620 = vmatpush1.bf16.msra.mxu0 %v2863
    %3621 = vmatprep.subr.bf16.mxu0 %v2856
    %3622 = vmatpush1.bf16.msra.mxu0 %v2855
    %3623 = vmatprep.subr.bf16.mxu0 %v2976
    %3624 = vmatpush2.bf16.msra.mxu0 %v2975
    %3625 = vmatprep.subr.bf16.mxu0 %v2968
    %3626 = vmatpush2.bf16.msra.mxu0 %v2967
    %3627 = vmatprep.subr.bf16.mxu0 %v2960
    %3628 = vmatpush2.bf16.msra.mxu0 %v2959
    %3629 = vmatprep.subr.bf16.mxu0 %v2952
    %3630 = vmatpush2.bf16.msra.mxu0 %v2951
    %3631 = vmatprep.subr.bf16.mxu0 %v2944
    %3632 = vmatpush2.bf16.msra.mxu0 %v2943
    %3633 = vmatprep.subr.bf16.mxu0 %v2936
    %3634 = vmatpush2.bf16.msra.mxu0 %v2935
    %3635 = vmatprep.subr.bf16.mxu0 %v2928
    %3636 = vmatpush2.bf16.msra.mxu0 %v2927
    %3637 = vmatprep.subr.bf16.mxu0 %v2920
    %3638 = vmatpush2.bf16.msra.mxu0 %v2919
    %3639 = vmatprep.mubr.bf16.mxu0 %v1780
    %3640 = vmatmul.mubr.bf16.gmra.mxu0 %v1779
    %v3641 = vpop.f32.mrf.mxu0
    %v3642 = vadd.f32 %v2068, %v3641
    %v3643 = vpop.f32.mrf.mxu0
    %v3644 = vadd.f32 %v2072, %v3643
    %v3645 = vpop.f32.mrf.mxu0
    %v3646 = vpop.f32.mrf.mxu0
    %3647 = vdwg.mxu0
    %3648 = vmatprep.subr.bf16.mxu0 %v3040
    %3649 = vmatpush1.bf16.msra.mxu0 %v3039
    %3650 = vmatprep.subr.bf16.mxu0 %v3032
    %3651 = vmatpush1.bf16.msra.mxu0 %v3031
    %3652 = vmatprep.subr.bf16.mxu0 %v3024
    %3653 = vmatpush1.bf16.msra.mxu0 %v3023
    %3654 = vmatprep.subr.bf16.mxu0 %v3016
    %3655 = vmatpush1.bf16.msra.mxu0 %v3015
    %3656 = vmatprep.subr.bf16.mxu0 %v3008
    %3657 = vmatpush1.bf16.msra.mxu0 %v3007
    %3658 = vmatprep.subr.bf16.mxu0 %v3000
    %3659 = vmatpush1.bf16.msra.mxu0 %v2999
    %3660 = vmatprep.subr.bf16.mxu0 %v2992
    %3661 = vmatpush1.bf16.msra.mxu0 %v2991
    %3662 = vmatprep.subr.bf16.mxu0 %v2984
    %3663 = vmatpush1.bf16.msra.mxu0 %v2983
    %3664 = vmatprep.subr.bf16.mxu0 %v3104
    %3665 = vmatpush2.bf16.msra.mxu0 %v3103
    %3666 = vmatprep.subr.bf16.mxu0 %v3096
    %3667 = vmatpush2.bf16.msra.mxu0 %v3095
    %3668 = vmatprep.subr.bf16.mxu0 %v3088
    %3669 = vmatpush2.bf16.msra.mxu0 %v3087
    %3670 = vmatprep.subr.bf16.mxu0 %v3080
    %3671 = vmatpush2.bf16.msra.mxu0 %v3079
    %3672 = vmatprep.subr.bf16.mxu0 %v3072
    %3673 = vmatpush2.bf16.msra.mxu0 %v3071
    %3674 = vmatprep.subr.bf16.mxu0 %v3064
    %3675 = vmatpush2.bf16.msra.mxu0 %v3063
    %3676 = vmatprep.subr.bf16.mxu0 %v3056
    %3677 = vmatpush2.bf16.msra.mxu0 %v3055
    %3678 = vmatprep.subr.bf16.mxu0 %v3048
    %3679 = vmatpush2.bf16.msra.mxu0 %v3047
    %3680 = vmatprep.mubr.bf16.mxu0 %v1782
    %3681 = vmatmul.mubr.bf16.gmra.mxu0 %v1781
    %v3682 = vpop.f32.mrf.mxu0
    %v3683 = vadd.f32 %v3642, %v3682
    %v3684 = vpop.f32.mrf.mxu0
    %v3685 = vadd.f32 %v3644, %v3684
    %v3686 = vpop.f32.mrf.mxu0
    %v3687 = vpop.f32.mrf.mxu0
    %3688 = vdwg.mxu0
    %v3689 = vld [vmem:[#allocation23] sm:$0xff]
    %v3690 = vld [vmem:[#allocation25] sm:$0xff]
    %v3691 = vrot.slane %v3437, 4
    %v3692 = vadd.f32 %v3437, %v3691
    %v3693 = vrot.slane %v3692, 2
    %v3694 = vadd.f32 %v3692, %v3693
    %v3695 = vrot.slane %v3694, 1
    %v3696 = vadd.f32 %v3694, %v3695
    %v3697 = vrot.slane %v3439, 4
    %v3698 = vadd.f32 %v3439, %v3697
    %v3699 = vrot.slane %v3698, 2
    %v3700 = vadd.f32 %v3698, %v3699
    %v3701 = vrot.slane %v3700, 1
    %v3702 = vadd.f32 %v3700, %v3701
    %v3703 = vrot.slane %v3519, 4
    %v3704 = vadd.f32 %v3519, %v3703
    %v3705 = vrot.slane %v3704, 2
    %v3706 = vadd.f32 %v3704, %v3705
    %v3707 = vrot.slane %v3706, 1
    %v3708 = vadd.f32 %v3706, %v3707
    %v3709 = vrot.slane %v3521, 4
    %v3710 = vadd.f32 %v3521, %v3709
    %v3711 = vrot.slane %v3710, 2
    %v3712 = vadd.f32 %v3710, %v3711
    %v3713 = vrot.slane %v3712, 1
    %v3714 = vadd.f32 %v3712, %v3713
    %v3715 = vrot.slane %v3601, 4
    %v3716 = vadd.f32 %v3601, %v3715
    %v3717 = vrot.slane %v3716, 2
    %v3718 = vadd.f32 %v3716, %v3717
    %v3719 = vrot.slane %v3718, 1
    %v3720 = vadd.f32 %v3718, %v3719
    %v3721 = vrot.slane %v3603, 4
    %v3722 = vadd.f32 %v3603, %v3721
    %v3723 = vrot.slane %v3722, 2
    %v3724 = vadd.f32 %v3722, %v3723
    %v3725 = vrot.slane %v3724, 1
    %v3726 = vadd.f32 %v3724, %v3725
    %v3727 = vrot.slane %v3683, 4
    %v3728 = vadd.f32 %v3683, %v3727
    %v3729 = vrot.slane %v3728, 2
    %v3730 = vadd.f32 %v3728, %v3729
    %v3731 = vrot.slane %v3730, 1
    %v3732 = vadd.f32 %v3730, %v3731
    %v3733 = vrot.slane %v3685, 4
    %v3734 = vadd.f32 %v3685, %v3733
    %v3735 = vrot.slane %v3734, 2
    %v3736 = vadd.f32 %v3734, %v3735
    %v3737 = vrot.slane %v3736, 1
    %v3738 = vadd.f32 %v3736, %v3737
    %v3739 = vmul.f32 %v3696, %v437
    %v3740 = vmul.f32 %v3702, %v437
    %v3741 = vmul.f32 %v3708, %v437
    %v3742 = vmul.f32 %v3714, %v437
    %v3743 = vmul.f32 %v3720, %v437
    %v3744 = vmul.f32 %v3726, %v437
    %v3745 = vmul.f32 %v3732, %v437
    %v3746 = vmul.f32 %v3738, %v437
    %v3747 = vsub.f32 %v3437, %v3739
    %v3748 = vsub.f32 %v3439, %v3740
    %v3749 = vsub.f32 %v3519, %v3741
    %v3750 = vsub.f32 %v3521, %v3742
    %v3751 = vsub.f32 %v3601, %v3743
    %v3752 = vsub.f32 %v3603, %v3744
    %v3753 = vsub.f32 %v3683, %v3745
    %v3754 = vsub.f32 %v3685, %v3746
    %v3755 = vmul.f32 %v3747, %v3747
    %v3756 = vmul.f32 %v3748, %v3748
    %v3757 = vmul.f32 %v3749, %v3749
    %v3758 = vmul.f32 %v3750, %v3750
    %v3759 = vmul.f32 %v3751, %v3751
    %v3760 = vmul.f32 %v3752, %v3752
    %v3761 = vmul.f32 %v3753, %v3753
    %v3762 = vmul.f32 %v3754, %v3754
    %v3763 = vrot.slane %v3755, 4
    %v3764 = vadd.f32 %v3755, %v3763
    %v3765 = vrot.slane %v3764, 2
    %v3766 = vadd.f32 %v3764, %v3765
    %v3767 = vrot.slane %v3766, 1
    %v3768 = vadd.f32 %v3766, %v3767
    %v3769 = vrot.slane %v3756, 4
    %v3770 = vadd.f32 %v3756, %v3769
    %v3771 = vrot.slane %v3770, 2
    %v3772 = vadd.f32 %v3770, %v3771
    %v3773 = vrot.slane %v3772, 1
    %v3774 = vadd.f32 %v3772, %v3773
    %v3775 = vrot.slane %v3757, 4
    %v3776 = vadd.f32 %v3757, %v3775
    %v3777 = vrot.slane %v3776, 2
    %v3778 = vadd.f32 %v3776, %v3777
    %v3779 = vrot.slane %v3778, 1
    %v3780 = vadd.f32 %v3778, %v3779
    %v3781 = vrot.slane %v3758, 4
    %v3782 = vadd.f32 %v3758, %v3781
    %v3783 = vrot.slane %v3782, 2
    %v3784 = vadd.f32 %v3782, %v3783
    %v3785 = vrot.slane %v3784, 1
    %v3786 = vadd.f32 %v3784, %v3785
    %v3787 = vrot.slane %v3759, 4
    %v3788 = vadd.f32 %v3759, %v3787
    %v3789 = vrot.slane %v3788, 2
    %v3790 = vadd.f32 %v3788, %v3789
    %v3791 = vrot.slane %v3790, 1
    %v3792 = vadd.f32 %v3790, %v3791
    %v3793 = vrot.slane %v3760, 4
    %v3794 = vadd.f32 %v3760, %v3793
    %v3795 = vrot.slane %v3794, 2
    %v3796 = vadd.f32 %v3794, %v3795
    %v3797 = vrot.slane %v3796, 1
    %v3798 = vadd.f32 %v3796, %v3797
    %v3799 = vrot.slane %v3761, 4
    %v3800 = vadd.f32 %v3761, %v3799
    %v3801 = vrot.slane %v3800, 2
    %v3802 = vadd.f32 %v3800, %v3801
    %v3803 = vrot.slane %v3802, 1
    %v3804 = vadd.f32 %v3802, %v3803
    %v3805 = vrot.slane %v3762, 4
    %v3806 = vadd.f32 %v3762, %v3805
    %v3807 = vrot.slane %v3806, 2
    %v3808 = vadd.f32 %v3806, %v3807
    %v3809 = vrot.slane %v3808, 1
    %v3810 = vadd.f32 %v3808, %v3809
    %v3811 = vmul.f32 %v3768, %v437
    %v3812 = vmul.f32 %v3774, %v437
    %v3813 = vmul.f32 %v3780, %v437
    %v3814 = vmul.f32 %v3786, %v437
    %v3815 = vmul.f32 %v3792, %v437
    %v3816 = vmul.f32 %v3798, %v437
    %v3817 = vmul.f32 %v3804, %v437
    %v3818 = vmul.f32 %v3810, %v437
    %v3819 = vadd.f32 %v3811, 1e-05
    %v3820 = vadd.f32 %v3812, 1e-05
    %v3821 = vadd.f32 %v3813, 1e-05
    %v3822 = vadd.f32 %v3814, 1e-05
    %v3823 = vadd.f32 %v3815, 1e-05
    %v3824 = vadd.f32 %v3816, 1e-05
    %v3825 = vadd.f32 %v3817, 1e-05
    %v3826 = vadd.f32 %v3818, 1e-05
    %v3827 = vrsqrt.pop %v3819
    %v3828 = vrsqrt.pop %v3820
    %v3829 = vrsqrt.pop %v3821
    %v3830 = vrsqrt.pop %v3822
    %v3831 = vrsqrt.pop %v3823
    %v3832 = vrsqrt.pop %v3824
    %v3833 = vrsqrt.pop %v3825
    %v3834 = vrsqrt.pop %v3826
    %v3835 = vmul.f32 %v3747, %v3827
    %v3836 = vmul.f32 %v3748, %v3828
    %v3837 = vmul.f32 %v3749, %v3829
    %v3838 = vmul.f32 %v3750, %v3830
    %v3839 = vmul.f32 %v3751, %v3831
    %v3840 = vmul.f32 %v3752, %v3832
    %v3841 = vmul.f32 %v3753, %v3833
    %v3842 = vmul.f32 %v3754, %v3834
    %v3844 = vlaneseq
    %v3845 = vshrl.u32 %v3844, 7
    %v3846 = vsub.s32 0, %v3845
    %v3847 = vrot.slane %v3689, %v3846
    %v3848 = vlaneseq
    %v3849 = vshrl.u32 %v3848, 7
    %v3850 = vsub.s32 1, %v3849
    %v3851 = vrot.slane %v3689, %v3850
    %v3852 = vlaneseq
    %v3853 = vshrl.u32 %v3852, 7
    %v3854 = vsub.s32 2, %v3853
    %v3855 = vrot.slane %v3689, %v3854
    %v3856 = vlaneseq
    %v3857 = vshrl.u32 %v3856, 7
    %v3858 = vsub.s32 3, %v3857
    %v3859 = vrot.slane %v3689, %v3858
    %v3860 = vlaneseq
    %v3861 = vshrl.u32 %v3860, 7
    %v3862 = vsub.s32 4, %v3861
    %v3863 = vrot.slane %v3689, %v3862
    %v3864 = vlaneseq
    %v3865 = vshrl.u32 %v3864, 7
    %v3866 = vsub.s32 5, %v3865
    %v3867 = vrot.slane %v3689, %v3866
    %v3868 = vlaneseq
    %v3869 = vshrl.u32 %v3868, 7
    %v3870 = vsub.s32 6, %v3869
    %v3871 = vrot.slane %v3689, %v3870
    %v3872 = vlaneseq
    %v3873 = vshrl.u32 %v3872, 7
    %v3874 = vsub.s32 7, %v3873
    %v3875 = vrot.slane %v3689, %v3874
    %v3884 = vmul.f32 %v3835, %v3847
    %v3885 = vmul.f32 %v3836, %v3851
    %v3886 = vmul.f32 %v3837, %v3855
    %v3887 = vmul.f32 %v3838, %v3859
    %v3888 = vmul.f32 %v3839, %v3863
    %v3889 = vmul.f32 %v3840, %v3867
    %v3890 = vmul.f32 %v3841, %v3871
    %v3891 = vmul.f32 %v3842, %v3875
    %v3893 = vlaneseq
    %v3894 = vshrl.u32 %v3893, 7
    %v3895 = vsub.s32 0, %v3894
    %v3896 = vrot.slane %v3690, %v3895
    %v3897 = vlaneseq
    %v3898 = vshrl.u32 %v3897, 7
    %v3899 = vsub.s32 1, %v3898
    %v3900 = vrot.slane %v3690, %v3899
    %v3901 = vlaneseq
    %v3902 = vshrl.u32 %v3901, 7
    %v3903 = vsub.s32 2, %v3902
    %v3904 = vrot.slane %v3690, %v3903
    %v3905 = vlaneseq
    %v3906 = vshrl.u32 %v3905, 7
    %v3907 = vsub.s32 3, %v3906
    %v3908 = vrot.slane %v3690, %v3907
    %v3909 = vlaneseq
    %v3910 = vshrl.u32 %v3909, 7
    %v3911 = vsub.s32 4, %v3910
    %v3912 = vrot.slane %v3690, %v3911
    %v3913 = vlaneseq
    %v3914 = vshrl.u32 %v3913, 7
    %v3915 = vsub.s32 5, %v3914
    %v3916 = vrot.slane %v3690, %v3915
    %v3917 = vlaneseq
    %v3918 = vshrl.u32 %v3917, 7
    %v3919 = vsub.s32 6, %v3918
    %v3920 = vrot.slane %v3690, %v3919
    %v3921 = vlaneseq
    %v3922 = vshrl.u32 %v3921, 7
    %v3923 = vsub.s32 7, %v3922
    %v3924 = vrot.slane %v3690, %v3923
    %v3933 = vadd.f32 %v3884, %v3896
    %v3934 = vadd.f32 %v3885, %v3900
    %v3935 = vadd.f32 %v3886, %v3904
    %v3936 = vadd.f32 %v3887, %v3908
    %v3937 = vadd.f32 %v3888, %v3912
    %v3938 = vadd.f32 %v3889, %v3916
    %v3939 = vadd.f32 %v3890, %v3920
    %v3940 = vadd.f32 %v3891, %v3924
    %v3941 = vmax.f32 %v3933, 0.0
    %v3942 = vmax.f32 %v3934, 0.0
    %v3943 = vmax.f32 %v3935, 0.0
    %v3944 = vmax.f32 %v3936, 0.0
    %v3945 = vmax.f32 %v3937, 0.0
    %v3946 = vmax.f32 %v3938, 0.0
    %v3947 = vmax.f32 %v3939, 0.0
    %v3948 = vmax.f32 %v3940, 0.0
    %v3949 = vpack.c.bf16 %v3941, %v3941
    %v3950 = vpack.c.bf16 %v3942, %v3942
    %v3951 = vpack.c.bf16 %v3943, %v3943
    %v3952 = vpack.c.bf16 %v3944, %v3944
    %v3953 = vpack.c.bf16 %v3945, %v3945
    %v3954 = vpack.c.bf16 %v3946, %v3946
    %v3955 = vpack.c.bf16 %v3947, %v3947
    %v3956 = vpack.c.bf16 %v3948, %v3948
    %v3957 = vld [vmem:[#allocation26] sm:$0xff]
    %v3958 = vld [vmem:[#allocation26 + $0x8] sm:$0xff]
    %v3959 = vld [vmem:[#allocation26 + $0x10] sm:$0xff]
    %v3960 = vld [vmem:[#allocation26 + $0x18] sm:$0xf]
    %v3961 = vld [vmem:[#allocation26 + $0x1c] sm:$0xff]
    %v3962 = vld [vmem:[#allocation26 + $0x24] sm:$0xff]
    %v3963 = vld [vmem:[#allocation26 + $0x2c] sm:$0xff]
    %v3964 = vld [vmem:[#allocation26 + $0x34] sm:$0xf]
    %v3965 = vld [vmem:[#allocation26 + $0x38] sm:$0xff]
    %v3966 = vld [vmem:[#allocation26 + $0x40] sm:$0xff]
    %v3967 = vld [vmem:[#allocation26 + $0x48] sm:$0xff]
    %v3968 = vld [vmem:[#allocation26 + $0x50] sm:$0xf]
    %v3969 = vld [vmem:[#allocation26 + $0x54] sm:$0xff]
    %v3970 = vld [vmem:[#allocation26 + $0x5c] sm:$0xff]
    %v3971 = vld [vmem:[#allocation26 + $0x64] sm:$0xff]
    %v3972 = vld [vmem:[#allocation26 + $0x6c] sm:$0xf]
    %v3973 = vld [vmem:[#allocation26 + $0x70] sm:$0xff]
    %v3974 = vld [vmem:[#allocation26 + $0x78] sm:$0xff]
    %v3975 = vld [vmem:[#allocation26 + $0x80] sm:$0xff]
    %v3976 = vld [vmem:[#allocation26 + $0x88] sm:$0xf]
    %v3977 = vld [vmem:[#allocation26 + $0x8c] sm:$0xff]
    %v3978 = vld [vmem:[#allocation26 + $0x94] sm:$0xff]
    %v3979 = vld [vmem:[#allocation26 + $0x9c] sm:$0xff]
    %v3980 = vld [vmem:[#allocation26 + $0xa4] sm:$0xf]
    %v3981 = vld [vmem:[#allocation26 + $0xa8] sm:$0xff]
    %v3982 = vld [vmem:[#allocation26 + $0xb0] sm:$0xff]
    %v3983 = vld [vmem:[#allocation26 + $0xb8] sm:$0xff]
    %v3984 = vld [vmem:[#allocation26 + $0xc0] sm:$0xf]
    %v3985 = vld [vmem:[#allocation26 + $0xc4] sm:$0xff]
    %v3986 = vld [vmem:[#allocation26 + $0xcc] sm:$0xff]
    %v3987 = vld [vmem:[#allocation26 + $0xd4] sm:$0xff]
    %v3988 = vld [vmem:[#allocation26 + $0xdc] sm:$0xf]
    %v3989 = vld [vmem:[#allocation26 + $0xe0] sm:$0xff]
    %v3990 = vld [vmem:[#allocation26 + $0xe8] sm:$0xff]
    %v3991 = vld [vmem:[#allocation26 + $0xf0] sm:$0xff]
    %v3992 = vld [vmem:[#allocation26 + $0xf8] sm:$0xf]
    %v3993 = vld [vmem:[#allocation26 + $0xfc] sm:$0xff]
    %v3994 = vld [vmem:[#allocation26 + $0x104] sm:$0xff]
    %v3995 = vld [vmem:[#allocation26 + $0x10c] sm:$0xff]
    %v3996 = vld [vmem:[#allocation26 + $0x114] sm:$0xf]
    %v3997 = vld [vmem:[#allocation26 + $0x118] sm:$0xff]
    %v3998 = vld [vmem:[#allocation26 + $0x120] sm:$0xff]
    %v3999 = vld [vmem:[#allocation26 + $0x128] sm:$0xff]
    %v4000 = vld [vmem:[#allocation26 + $0x130] sm:$0xf]
    %v4001 = vld [vmem:[#allocation26 + $0x134] sm:$0xff]
    %v4002 = vld [vmem:[#allocation26 + $0x13c] sm:$0xff]
    %v4003 = vld [vmem:[#allocation26 + $0x144] sm:$0xff]
    %v4004 = vld [vmem:[#allocation26 + $0x14c] sm:$0xf]
    %v4005 = vld [vmem:[#allocation26 + $0x150] sm:$0xff]
    %v4006 = vld [vmem:[#allocation26 + $0x158] sm:$0xff]
    %v4007 = vld [vmem:[#allocation26 + $0x160] sm:$0xff]
    %v4008 = vld [vmem:[#allocation26 + $0x168] sm:$0xf]
    %v4009 = vld [vmem:[#allocation26 + $0x16c] sm:$0xff]
    %v4010 = vld [vmem:[#allocation26 + $0x174] sm:$0xff]
    %v4011 = vld [vmem:[#allocation26 + $0x17c] sm:$0xff]
    %v4012 = vld [vmem:[#allocation26 + $0x184] sm:$0xf]
    %v4013 = vld [vmem:[#allocation26 + $0x188] sm:$0xff]
    %v4014 = vld [vmem:[#allocation26 + $0x190] sm:$0xff]
    %v4015 = vld [vmem:[#allocation26 + $0x198] sm:$0xff]
    %v4016 = vld [vmem:[#allocation26 + $0x1a0] sm:$0xf]
    %v4017 = vld [vmem:[#allocation26 + $0x1a4] sm:$0xff]
    %v4018 = vld [vmem:[#allocation26 + $0x1ac] sm:$0xff]
    %v4019 = vld [vmem:[#allocation26 + $0x1b4] sm:$0xff]
    %v4020 = vld [vmem:[#allocation26 + $0x1bc] sm:$0xf]
    %v4021 = vld [vmem:[#allocation26 + $0x1c0] sm:$0xff]
    %v4022 = vld [vmem:[#allocation26 + $0x1c8] sm:$0xff]
    %v4023 = vld [vmem:[#allocation26 + $0x1d0] sm:$0xff]
    %v4024 = vld [vmem:[#allocation26 + $0x1d8] sm:$0xf]
    %v4025 = vld [vmem:[#allocation26 + $0x1dc] sm:$0xff]
    %v4026 = vld [vmem:[#allocation26 + $0x1e4] sm:$0xff]
    %v4027 = vld [vmem:[#allocation26 + $0x1ec] sm:$0xff]
    %v4028 = vld [vmem:[#allocation26 + $0x1f4] sm:$0xf]
    %v4029 = vld [vmem:[#allocation26 + $0x1f8] sm:$0xff]
    %v4030 = vld [vmem:[#allocation26 + $0x200] sm:$0xff]
    %v4031 = vld [vmem:[#allocation26 + $0x208] sm:$0xff]
    %v4032 = vld [vmem:[#allocation26 + $0x210] sm:$0xf]
    %v4033 = vld [vmem:[#allocation26 + $0x214] sm:$0xff]
    %v4034 = vld [vmem:[#allocation26 + $0x21c] sm:$0xff]
    %v4035 = vld [vmem:[#allocation26 + $0x224] sm:$0xff]
    %v4036 = vld [vmem:[#allocation26 + $0x22c] sm:$0xf]
    %v4037 = vld [vmem:[#allocation26 + $0x230] sm:$0xff]
    %v4038 = vld [vmem:[#allocation26 + $0x238] sm:$0xff]
    %v4039 = vld [vmem:[#allocation26 + $0x240] sm:$0xff]
    %v4040 = vld [vmem:[#allocation26 + $0x248] sm:$0xf]
    %v4041 = vld [vmem:[#allocation26 + $0x24c] sm:$0xff]
    %v4042 = vld [vmem:[#allocation26 + $0x254] sm:$0xff]
    %v4043 = vld [vmem:[#allocation26 + $0x25c] sm:$0xff]
    %v4044 = vld [vmem:[#allocation26 + $0x264] sm:$0xf]
    %v4045 = vld [vmem:[#allocation26 + $0x268] sm:$0xff]
    %v4046 = vld [vmem:[#allocation26 + $0x270] sm:$0xff]
    %v4047 = vld [vmem:[#allocation26 + $0x278] sm:$0xff]
    %v4048 = vld [vmem:[#allocation26 + $0x280] sm:$0xf]
    %v4049 = vld [vmem:[#allocation26 + $0x284] sm:$0xff]
    %v4050 = vld [vmem:[#allocation26 + $0x28c] sm:$0xff]
    %v4051 = vld [vmem:[#allocation26 + $0x294] sm:$0xff]
    %v4052 = vld [vmem:[#allocation26 + $0x29c] sm:$0xf]
    %v4053 = vld [vmem:[#allocation26 + $0x2a0] sm:$0xff]
    %v4054 = vld [vmem:[#allocation26 + $0x2a8] sm:$0xff]
    %v4055 = vld [vmem:[#allocation26 + $0x2b0] sm:$0xff]
    %v4056 = vld [vmem:[#allocation26 + $0x2b8] sm:$0xf]
    %v4057 = vld [vmem:[#allocation26 + $0x2bc] sm:$0xff]
    %v4058 = vld [vmem:[#allocation26 + $0x2c4] sm:$0xff]
    %v4059 = vld [vmem:[#allocation26 + $0x2cc] sm:$0xff]
    %v4060 = vld [vmem:[#allocation26 + $0x2d4] sm:$0xf]
    %v4061 = vld [vmem:[#allocation26 + $0x2d8] sm:$0xff]
    %v4062 = vld [vmem:[#allocation26 + $0x2e0] sm:$0xff]
    %v4063 = vld [vmem:[#allocation26 + $0x2e8] sm:$0xff]
    %v4064 = vld [vmem:[#allocation26 + $0x2f0] sm:$0xf]
    %v4065 = vld [vmem:[#allocation26 + $0x2f4] sm:$0xff]
    %v4066 = vld [vmem:[#allocation26 + $0x2fc] sm:$0xff]
    %v4067 = vld [vmem:[#allocation26 + $0x304] sm:$0xff]
    %v4068 = vld [vmem:[#allocation26 + $0x30c] sm:$0xf]
    %v4069 = vld [vmem:[#allocation26 + $0x310] sm:$0xff]
    %v4070 = vld [vmem:[#allocation26 + $0x318] sm:$0xff]
    %v4071 = vld [vmem:[#allocation26 + $0x320] sm:$0xff]
    %v4072 = vld [vmem:[#allocation26 + $0x328] sm:$0xf]
    %v4073 = vld [vmem:[#allocation26 + $0x32c] sm:$0xff]
    %v4074 = vld [vmem:[#allocation26 + $0x334] sm:$0xff]
    %v4075 = vld [vmem:[#allocation26 + $0x33c] sm:$0xff]
    %v4076 = vld [vmem:[#allocation26 + $0x344] sm:$0xf]
    %v4077 = vld [vmem:[#allocation26 + $0x348] sm:$0xff]
    %v4078 = vld [vmem:[#allocation26 + $0x350] sm:$0xff]
    %v4079 = vld [vmem:[#allocation26 + $0x358] sm:$0xff]
    %v4080 = vld [vmem:[#allocation26 + $0x360] sm:$0xf]
    %v4081 = vld [vmem:[#allocation26 + $0x364] sm:$0xff]
    %v4082 = vld [vmem:[#allocation26 + $0x36c] sm:$0xff]
    %v4083 = vld [vmem:[#allocation26 + $0x374] sm:$0xff]
    %v4084 = vld [vmem:[#allocation26 + $0x37c] sm:$0xf]
    %v4085 = vld [vmem:[#allocation26 + $0x380] sm:$0xff]
    %v4086 = vld [vmem:[#allocation26 + $0x388] sm:$0xff]
    %v4087 = vld [vmem:[#allocation26 + $0x390] sm:$0xff]
    %v4088 = vld [vmem:[#allocation26 + $0x398] sm:$0xf]
    %v4089 = vld [vmem:[#allocation26 + $0x39c] sm:$0xff]
    %v4090 = vld [vmem:[#allocation26 + $0x3a4] sm:$0xff]
    %v4091 = vld [vmem:[#allocation26 + $0x3ac] sm:$0xff]
    %v4092 = vld [vmem:[#allocation26 + $0x3b4] sm:$0xf]
    %v4093 = vld [vmem:[#allocation26 + $0x3b8] sm:$0xff]
    %v4094 = vld [vmem:[#allocation26 + $0x3c0] sm:$0xff]
    %v4095 = vld [vmem:[#allocation26 + $0x3c8] sm:$0xff]
    %v4096 = vld [vmem:[#allocation26 + $0x3d0] sm:$0xf]
    %v4097 = vld [vmem:[#allocation26 + $0x3d4] sm:$0xff]
    %v4098 = vld [vmem:[#allocation26 + $0x3dc] sm:$0xff]
    %v4099 = vld [vmem:[#allocation26 + $0x3e4] sm:$0xff]
    %v4100 = vld [vmem:[#allocation26 + $0x3ec] sm:$0xf]
    %v4101 = vld [vmem:[#allocation26 + $0x3f0] sm:$0xff]
    %v4102 = vld [vmem:[#allocation26 + $0x3f8] sm:$0xff]
    %v4103 = vld [vmem:[#allocation26 + $0x400] sm:$0xff]
    %v4104 = vld [vmem:[#allocation26 + $0x408] sm:$0xf]
    %v4105 = vld [vmem:[#allocation26 + $0x40c] sm:$0xff]
    %v4106 = vld [vmem:[#allocation26 + $0x414] sm:$0xff]
    %v4107 = vld [vmem:[#allocation26 + $0x41c] sm:$0xff]
    %v4108 = vld [vmem:[#allocation26 + $0x424] sm:$0xf]
    %v4109 = vld [vmem:[#allocation26 + $0x428] sm:$0xff]
    %v4110 = vld [vmem:[#allocation26 + $0x430] sm:$0xff]
    %v4111 = vld [vmem:[#allocation26 + $0x438] sm:$0xff]
    %v4112 = vld [vmem:[#allocation26 + $0x440] sm:$0xf]
    %v4113 = vld [vmem:[#allocation26 + $0x444] sm:$0xff]
    %v4114 = vld [vmem:[#allocation26 + $0x44c] sm:$0xff]
    %v4115 = vld [vmem:[#allocation26 + $0x454] sm:$0xff]
    %v4116 = vld [vmem:[#allocation26 + $0x45c] sm:$0xf]
    %v4117 = vld [vmem:[#allocation26 + $0x460] sm:$0xff]
    %v4118 = vld [vmem:[#allocation26 + $0x468] sm:$0xff]
    %v4119 = vld [vmem:[#allocation26 + $0x470] sm:$0xff]
    %v4120 = vld [vmem:[#allocation26 + $0x478] sm:$0xf]
    %v4121 = vld [vmem:[#allocation26 + $0x47c] sm:$0xff]
    %v4122 = vld [vmem:[#allocation26 + $0x484] sm:$0xff]
    %v4123 = vld [vmem:[#allocation26 + $0x48c] sm:$0xff]
    %v4124 = vld [vmem:[#allocation26 + $0x494] sm:$0xf]
    %v4125 = vld [vmem:[#allocation26 + $0x498] sm:$0xff]
    %v4126 = vld [vmem:[#allocation26 + $0x4a0] sm:$0xff]
    %v4127 = vld [vmem:[#allocation26 + $0x4a8] sm:$0xff]
    %v4128 = vld [vmem:[#allocation26 + $0x4b0] sm:$0xf]
    %v4129 = vld [vmem:[#allocation26 + $0x4b4] sm:$0xff]
    %v4130 = vld [vmem:[#allocation26 + $0x4bc] sm:$0xff]
    %v4131 = vld [vmem:[#allocation26 + $0x4c4] sm:$0xff]
    %v4132 = vld [vmem:[#allocation26 + $0x4cc] sm:$0xf]
    %v4133 = vld [vmem:[#allocation26 + $0x4d0] sm:$0xff]
    %v4134 = vld [vmem:[#allocation26 + $0x4d8] sm:$0xff]
    %v4135 = vld [vmem:[#allocation26 + $0x4e0] sm:$0xff]
    %v4136 = vld [vmem:[#allocation26 + $0x4e8] sm:$0xf]
    %v4137 = vld [vmem:[#allocation26 + $0x4ec] sm:$0xff]
    %v4138 = vld [vmem:[#allocation26 + $0x4f4] sm:$0xff]
    %v4139 = vld [vmem:[#allocation26 + $0x4fc] sm:$0xff]
    %v4140 = vld [vmem:[#allocation26 + $0x504] sm:$0xf]
    %v4141 = vld [vmem:[#allocation26 + $0x508] sm:$0xff]
    %v4142 = vld [vmem:[#allocation26 + $0x510] sm:$0xff]
    %v4143 = vld [vmem:[#allocation26 + $0x518] sm:$0xff]
    %v4144 = vld [vmem:[#allocation26 + $0x520] sm:$0xf]
    %v4145 = vld [vmem:[#allocation26 + $0x524] sm:$0xff]
    %v4146 = vld [vmem:[#allocation26 + $0x52c] sm:$0xff]
    %v4147 = vld [vmem:[#allocation26 + $0x534] sm:$0xff]
    %v4148 = vld [vmem:[#allocation26 + $0x53c] sm:$0xf]
    %v4149 = vld [vmem:[#allocation26 + $0x540] sm:$0xff]
    %v4150 = vld [vmem:[#allocation26 + $0x548] sm:$0xff]
    %v4151 = vld [vmem:[#allocation26 + $0x550] sm:$0xff]
    %v4152 = vld [vmem:[#allocation26 + $0x558] sm:$0xf]
    %v4153 = vld [vmem:[#allocation26 + $0x55c] sm:$0xff]
    %v4154 = vld [vmem:[#allocation26 + $0x564] sm:$0xff]
    %v4155 = vld [vmem:[#allocation26 + $0x56c] sm:$0xff]
    %v4156 = vld [vmem:[#allocation26 + $0x574] sm:$0xf]
    %v4157 = vld [vmem:[#allocation26 + $0x578] sm:$0xff]
    %v4158 = vld [vmem:[#allocation26 + $0x580] sm:$0xff]
    %v4159 = vld [vmem:[#allocation26 + $0x588] sm:$0xff]
    %v4160 = vld [vmem:[#allocation26 + $0x590] sm:$0xf]
    %v4161 = vld [vmem:[#allocation26 + $0x594] sm:$0xff]
    %v4162 = vld [vmem:[#allocation26 + $0x59c] sm:$0xff]
    %v4163 = vld [vmem:[#allocation26 + $0x5a4] sm:$0xff]
    %v4164 = vld [vmem:[#allocation26 + $0x5ac] sm:$0xf]
    %v4165 = vld [vmem:[#allocation26 + $0x5b0] sm:$0xff]
    %v4166 = vld [vmem:[#allocation26 + $0x5b8] sm:$0xff]
    %v4167 = vld [vmem:[#allocation26 + $0x5c0] sm:$0xff]
    %v4168 = vld [vmem:[#allocation26 + $0x5c8] sm:$0xf]
    %v4169 = vld [vmem:[#allocation26 + $0x5cc] sm:$0xff]
    %v4170 = vld [vmem:[#allocation26 + $0x5d4] sm:$0xff]
    %v4171 = vld [vmem:[#allocation26 + $0x5dc] sm:$0xff]
    %v4172 = vld [vmem:[#allocation26 + $0x5e4] sm:$0xf]
    %v4173 = vld [vmem:[#allocation26 + $0x5e8] sm:$0xff]
    %v4174 = vld [vmem:[#allocation26 + $0x5f0] sm:$0xff]
    %v4175 = vld [vmem:[#allocation26 + $0x5f8] sm:$0xff]
    %v4176 = vld [vmem:[#allocation26 + $0x600] sm:$0xf]
    %v4177 = vld [vmem:[#allocation26 + $0x604] sm:$0xff]
    %v4178 = vld [vmem:[#allocation26 + $0x60c] sm:$0xff]
    %v4179 = vld [vmem:[#allocation26 + $0x614] sm:$0xff]
    %v4180 = vld [vmem:[#allocation26 + $0x61c] sm:$0xf]
    %v4181 = vld [vmem:[#allocation26 + $0x620] sm:$0xff]
    %v4182 = vld [vmem:[#allocation26 + $0x628] sm:$0xff]
    %v4183 = vld [vmem:[#allocation26 + $0x630] sm:$0xff]
    %v4184 = vld [vmem:[#allocation26 + $0x638] sm:$0xf]
    %v4185 = vld [vmem:[#allocation26 + $0x63c] sm:$0xff]
    %v4186 = vld [vmem:[#allocation26 + $0x644] sm:$0xff]
    %v4187 = vld [vmem:[#allocation26 + $0x64c] sm:$0xff]
    %v4188 = vld [vmem:[#allocation26 + $0x654] sm:$0xf]
    %v4189 = vld [vmem:[#allocation26 + $0x658] sm:$0xff]
    %v4190 = vld [vmem:[#allocation26 + $0x660] sm:$0xff]
    %v4191 = vld [vmem:[#allocation26 + $0x668] sm:$0xff]
    %v4192 = vld [vmem:[#allocation26 + $0x670] sm:$0xf]
    %v4193 = vld [vmem:[#allocation26 + $0x674] sm:$0xff]
    %v4194 = vld [vmem:[#allocation26 + $0x67c] sm:$0xff]
    %v4195 = vld [vmem:[#allocation26 + $0x684] sm:$0xff]
    %v4196 = vld [vmem:[#allocation26 + $0x68c] sm:$0xf]
    %v4197 = vld [vmem:[#allocation26 + $0x690] sm:$0xff]
    %v4198 = vld [vmem:[#allocation26 + $0x698] sm:$0xff]
    %v4199 = vld [vmem:[#allocation26 + $0x6a0] sm:$0xff]
    %v4200 = vld [vmem:[#allocation26 + $0x6a8] sm:$0xf]
    %v4201 = vld [vmem:[#allocation26 + $0x6ac] sm:$0xff]
    %v4202 = vld [vmem:[#allocation26 + $0x6b4] sm:$0xff]
    %v4203 = vld [vmem:[#allocation26 + $0x6bc] sm:$0xff]
    %v4204 = vld [vmem:[#allocation26 + $0x6c4] sm:$0xf]
    %v4205 = vld [vmem:[#allocation26 + $0x6c8] sm:$0xff]
    %v4206 = vld [vmem:[#allocation26 + $0x6d0] sm:$0xff]
    %v4207 = vld [vmem:[#allocation26 + $0x6d8] sm:$0xff]
    %v4208 = vld [vmem:[#allocation26 + $0x6e0] sm:$0xf]
    %v4209 = vld [vmem:[#allocation26 + $0x6e4] sm:$0xff]
    %v4210 = vld [vmem:[#allocation26 + $0x6ec] sm:$0xff]
    %v4211 = vld [vmem:[#allocation26 + $0x6f4] sm:$0xff]
    %v4212 = vld [vmem:[#allocation26 + $0x6fc] sm:$0xf]
    %v4213 = vld [vmem:[#allocation26 + $0x700] sm:$0xff]
    %v4214 = vld [vmem:[#allocation26 + $0x708] sm:$0xff]
    %v4215 = vld [vmem:[#allocation26 + $0x710] sm:$0xff]
    %v4216 = vld [vmem:[#allocation26 + $0x718] sm:$0xf]
    %v4217 = vld [vmem:[#allocation26 + $0x71c] sm:$0xff]
    %v4218 = vld [vmem:[#allocation26 + $0x724] sm:$0xff]
    %v4219 = vld [vmem:[#allocation26 + $0x72c] sm:$0xff]
    %v4220 = vld [vmem:[#allocation26 + $0x734] sm:$0xf]
    %v4221 = vld [vmem:[#allocation26 + $0x738] sm:$0xff]
    %v4222 = vld [vmem:[#allocation26 + $0x740] sm:$0xff]
    %v4223 = vld [vmem:[#allocation26 + $0x748] sm:$0xff]
    %v4224 = vld [vmem:[#allocation26 + $0x750] sm:$0xf]
    %v4225 = vld [vmem:[#allocation26 + $0x754] sm:$0xff]
    %v4226 = vld [vmem:[#allocation26 + $0x75c] sm:$0xff]
    %v4227 = vld [vmem:[#allocation26 + $0x764] sm:$0xff]
    %v4228 = vld [vmem:[#allocation26 + $0x76c] sm:$0xf]
    %v4229 = vld [vmem:[#allocation26 + $0x770] sm:$0xff]
    %v4230 = vld [vmem:[#allocation26 + $0x778] sm:$0xff]
    %v4231 = vld [vmem:[#allocation26 + $0x780] sm:$0xff]
    %v4232 = vld [vmem:[#allocation26 + $0x788] sm:$0xf]
    %v4233 = vld [vmem:[#allocation26 + $0x78c] sm:$0xff]
    %v4234 = vld [vmem:[#allocation26 + $0x794] sm:$0xff]
    %v4235 = vld [vmem:[#allocation26 + $0x79c] sm:$0xff]
    %v4236 = vld [vmem:[#allocation26 + $0x7a4] sm:$0xf]
    %v4237 = vld [vmem:[#allocation26 + $0x7a8] sm:$0xff]
    %v4238 = vld [vmem:[#allocation26 + $0x7b0] sm:$0xff]
    %v4239 = vld [vmem:[#allocation26 + $0x7b8] sm:$0xff]
    %v4240 = vld [vmem:[#allocation26 + $0x7c0] sm:$0xf]
    %v4241 = vld [vmem:[#allocation26 + $0x7c4] sm:$0xff]
    %v4242 = vld [vmem:[#allocation26 + $0x7cc] sm:$0xff]
    %v4243 = vld [vmem:[#allocation26 + $0x7d4] sm:$0xff]
    %v4244 = vld [vmem:[#allocation26 + $0x7dc] sm:$0xf]
    %v4245 = vld [vmem:[#allocation26 + $0x7e0] sm:$0xff]
    %v4246 = vld [vmem:[#allocation26 + $0x7e8] sm:$0xff]
    %v4247 = vld [vmem:[#allocation26 + $0x7f0] sm:$0xff]
    %v4248 = vld [vmem:[#allocation26 + $0x7f8] sm:$0xf]
    %v4249 = vld [vmem:[#allocation26 + $0x7fc] sm:$0xff]
    %v4250 = vld [vmem:[#allocation26 + $0x804] sm:$0xff]
    %v4251 = vld [vmem:[#allocation26 + $0x80c] sm:$0xff]
    %v4252 = vld [vmem:[#allocation26 + $0x814] sm:$0xf]
    %v4253 = vld [vmem:[#allocation26 + $0x818] sm:$0xff]
    %v4254 = vld [vmem:[#allocation26 + $0x820] sm:$0xff]
    %v4255 = vld [vmem:[#allocation26 + $0x828] sm:$0xff]
    %v4256 = vld [vmem:[#allocation26 + $0x830] sm:$0xf]
    %v4257 = vld [vmem:[#allocation26 + $0x834] sm:$0xff]
    %v4258 = vld [vmem:[#allocation26 + $0x83c] sm:$0xff]
    %v4259 = vld [vmem:[#allocation26 + $0x844] sm:$0xff]
    %v4260 = vld [vmem:[#allocation26 + $0x84c] sm:$0xf]
    %v4261 = vld [vmem:[#allocation26 + $0x850] sm:$0xff]
    %v4262 = vld [vmem:[#allocation26 + $0x858] sm:$0xff]
    %v4263 = vld [vmem:[#allocation26 + $0x860] sm:$0xff]
    %v4264 = vld [vmem:[#allocation26 + $0x868] sm:$0xf]
    %v4265 = vld [vmem:[#allocation26 + $0x86c] sm:$0xff]
    %v4266 = vld [vmem:[#allocation26 + $0x874] sm:$0xff]
    %v4267 = vld [vmem:[#allocation26 + $0x87c] sm:$0xff]
    %v4268 = vld [vmem:[#allocation26 + $0x884] sm:$0xf]
    %v4269 = vld [vmem:[#allocation26 + $0x888] sm:$0xff]
    %v4270 = vld [vmem:[#allocation26 + $0x890] sm:$0xff]
    %v4271 = vld [vmem:[#allocation26 + $0x898] sm:$0xff]
    %v4272 = vld [vmem:[#allocation26 + $0x8a0] sm:$0xf]
    %v4273 = vld [vmem:[#allocation26 + $0x8a4] sm:$0xff]
    %v4274 = vld [vmem:[#allocation26 + $0x8ac] sm:$0xff]
    %v4275 = vld [vmem:[#allocation26 + $0x8b4] sm:$0xff]
    %v4276 = vld [vmem:[#allocation26 + $0x8bc] sm:$0xf]
    %v4277 = vld [vmem:[#allocation26 + $0x8c0] sm:$0xff]
    %v4278 = vld [vmem:[#allocation26 + $0x8c8] sm:$0xff]
    %v4279 = vld [vmem:[#allocation26 + $0x8d0] sm:$0xff]
    %v4280 = vld [vmem:[#allocation26 + $0x8d8] sm:$0xf]
    %v4281 = vld [vmem:[#allocation26 + $0x8dc] sm:$0xff]
    %v4282 = vld [vmem:[#allocation26 + $0x8e4] sm:$0xff]
    %v4283 = vld [vmem:[#allocation26 + $0x8ec] sm:$0xff]
    %v4284 = vld [vmem:[#allocation26 + $0x8f4] sm:$0xf]
    %v4285 = vld [vmem:[#allocation26 + $0x8f8] sm:$0xff]
    %v4286 = vld [vmem:[#allocation26 + $0x900] sm:$0xff]
    %v4287 = vld [vmem:[#allocation26 + $0x908] sm:$0xff]
    %v4288 = vld [vmem:[#allocation26 + $0x910] sm:$0xf]
    %v4289 = vld [vmem:[#allocation26 + $0x914] sm:$0xff]
    %v4290 = vld [vmem:[#allocation26 + $0x91c] sm:$0xff]
    %v4291 = vld [vmem:[#allocation26 + $0x924] sm:$0xff]
    %v4292 = vld [vmem:[#allocation26 + $0x92c] sm:$0xf]
    %v4293 = vld [vmem:[#allocation26 + $0x930] sm:$0xff]
    %v4294 = vld [vmem:[#allocation26 + $0x938] sm:$0xff]
    %v4295 = vld [vmem:[#allocation26 + $0x940] sm:$0xff]
    %v4296 = vld [vmem:[#allocation26 + $0x948] sm:$0xf]
    %v4297 = vld [vmem:[#allocation26 + $0x94c] sm:$0xff]
    %v4298 = vld [vmem:[#allocation26 + $0x954] sm:$0xff]
    %v4299 = vld [vmem:[#allocation26 + $0x95c] sm:$0xff]
    %v4300 = vld [vmem:[#allocation26 + $0x964] sm:$0xf]
    %v4301 = vld [vmem:[#allocation26 + $0x968] sm:$0xff]
    %v4302 = vld [vmem:[#allocation26 + $0x970] sm:$0xff]
    %v4303 = vld [vmem:[#allocation26 + $0x978] sm:$0xff]
    %v4304 = vld [vmem:[#allocation26 + $0x980] sm:$0xf]
    %v4305 = vld [vmem:[#allocation26 + $0x984] sm:$0xff]
    %v4306 = vld [vmem:[#allocation26 + $0x98c] sm:$0xff]
    %v4307 = vld [vmem:[#allocation26 + $0x994] sm:$0xff]
    %v4308 = vld [vmem:[#allocation26 + $0x99c] sm:$0xf]
    %v4309 = vld [vmem:[#allocation26 + $0x9a0] sm:$0xff]
    %v4310 = vld [vmem:[#allocation26 + $0x9a8] sm:$0xff]
    %v4311 = vld [vmem:[#allocation26 + $0x9b0] sm:$0xff]
    %v4312 = vld [vmem:[#allocation26 + $0x9b8] sm:$0xf]
    %v4313 = vld [vmem:[#allocation26 + $0x9bc] sm:$0xff]
    %v4314 = vld [vmem:[#allocation26 + $0x9c4] sm:$0xff]
    %v4315 = vld [vmem:[#allocation26 + $0x9cc] sm:$0xff]
    %v4316 = vld [vmem:[#allocation26 + $0x9d4] sm:$0xf]
    %v4317 = vld [vmem:[#allocation26 + $0x9d8] sm:$0xff]
    %v4318 = vld [vmem:[#allocation26 + $0x9e0] sm:$0xff]
    %v4319 = vld [vmem:[#allocation26 + $0x9e8] sm:$0xff]
    %v4320 = vld [vmem:[#allocation26 + $0x9f0] sm:$0xf]
    %v4321 = vld [vmem:[#allocation26 + $0x9f4] sm:$0xff]
    %v4322 = vld [vmem:[#allocation26 + $0x9fc] sm:$0xff]
    %v4323 = vld [vmem:[#allocation26 + $0xa04] sm:$0xff]
    %v4324 = vld [vmem:[#allocation26 + $0xa0c] sm:$0xf]
    %v4325 = vld [vmem:[#allocation26 + $0xa10] sm:$0xff]
    %v4326 = vld [vmem:[#allocation26 + $0xa18] sm:$0xff]
    %v4327 = vld [vmem:[#allocation26 + $0xa20] sm:$0xff]
    %v4328 = vld [vmem:[#allocation26 + $0xa28] sm:$0xf]
    %v4329 = vld [vmem:[#allocation26 + $0xa2c] sm:$0xff]
    %v4330 = vld [vmem:[#allocation26 + $0xa34] sm:$0xff]
    %v4331 = vld [vmem:[#allocation26 + $0xa3c] sm:$0xff]
    %v4332 = vld [vmem:[#allocation26 + $0xa44] sm:$0xf]
    %v4333 = vld [vmem:[#allocation26 + $0xa48] sm:$0xff]
    %v4334 = vld [vmem:[#allocation26 + $0xa50] sm:$0xff]
    %v4335 = vld [vmem:[#allocation26 + $0xa58] sm:$0xff]
    %v4336 = vld [vmem:[#allocation26 + $0xa60] sm:$0xf]
    %v4337 = vld [vmem:[#allocation26 + $0xa64] sm:$0xff]
    %v4338 = vld [vmem:[#allocation26 + $0xa6c] sm:$0xff]
    %v4339 = vld [vmem:[#allocation26 + $0xa74] sm:$0xff]
    %v4340 = vld [vmem:[#allocation26 + $0xa7c] sm:$0xf]
    %v4341 = vld [vmem:[#allocation26 + $0xa80] sm:$0xff]
    %v4342 = vld [vmem:[#allocation26 + $0xa88] sm:$0xff]
    %v4343 = vld [vmem:[#allocation26 + $0xa90] sm:$0xff]
    %v4344 = vld [vmem:[#allocation26 + $0xa98] sm:$0xf]
    %v4345 = vld [vmem:[#allocation26 + $0xa9c] sm:$0xff]
    %v4346 = vld [vmem:[#allocation26 + $0xaa4] sm:$0xff]
    %v4347 = vld [vmem:[#allocation26 + $0xaac] sm:$0xff]
    %v4348 = vld [vmem:[#allocation26 + $0xab4] sm:$0xf]
    %v4349 = vld [vmem:[#allocation26 + $0xab8] sm:$0xff]
    %v4350 = vld [vmem:[#allocation26 + $0xac0] sm:$0xff]
    %v4351 = vld [vmem:[#allocation26 + $0xac8] sm:$0xff]
    %v4352 = vld [vmem:[#allocation26 + $0xad0] sm:$0xf]
    %v4353 = vld [vmem:[#allocation26 + $0xad4] sm:$0xff]
    %v4354 = vld [vmem:[#allocation26 + $0xadc] sm:$0xff]
    %v4355 = vld [vmem:[#allocation26 + $0xae4] sm:$0xff]
    %v4356 = vld [vmem:[#allocation26 + $0xaec] sm:$0xf]
    %v4357 = vld [vmem:[#allocation26 + $0xaf0] sm:$0xff]
    %v4358 = vld [vmem:[#allocation26 + $0xaf8] sm:$0xff]
    %v4359 = vld [vmem:[#allocation26 + $0xb00] sm:$0xff]
    %v4360 = vld [vmem:[#allocation26 + $0xb08] sm:$0xf]
    %v4361 = vld [vmem:[#allocation26 + $0xb0c] sm:$0xff]
    %v4362 = vld [vmem:[#allocation26 + $0xb14] sm:$0xff]
    %v4363 = vld [vmem:[#allocation26 + $0xb1c] sm:$0xff]
    %v4364 = vld [vmem:[#allocation26 + $0xb24] sm:$0xf]
    %v4365 = vld [vmem:[#allocation26 + $0xb28] sm:$0xff]
    %v4366 = vld [vmem:[#allocation26 + $0xb30] sm:$0xff]
    %v4367 = vld [vmem:[#allocation26 + $0xb38] sm:$0xff]
    %v4368 = vld [vmem:[#allocation26 + $0xb40] sm:$0xf]
    %v4369 = vld [vmem:[#allocation26 + $0xb44] sm:$0xff]
    %v4370 = vld [vmem:[#allocation26 + $0xb4c] sm:$0xff]
    %v4371 = vld [vmem:[#allocation26 + $0xb54] sm:$0xff]
    %v4372 = vld [vmem:[#allocation26 + $0xb5c] sm:$0xf]
    %v4373 = vld [vmem:[#allocation26 + $0xb60] sm:$0xff]
    %v4374 = vld [vmem:[#allocation26 + $0xb68] sm:$0xff]
    %v4375 = vld [vmem:[#allocation26 + $0xb70] sm:$0xff]
    %v4376 = vld [vmem:[#allocation26 + $0xb78] sm:$0xf]
    %v4377 = vld [vmem:[#allocation26 + $0xb7c] sm:$0xff]
    %v4378 = vld [vmem:[#allocation26 + $0xb84] sm:$0xff]
    %v4379 = vld [vmem:[#allocation26 + $0xb8c] sm:$0xff]
    %v4380 = vld [vmem:[#allocation26 + $0xb94] sm:$0xf]
    %v4381 = vld [vmem:[#allocation26 + $0xb98] sm:$0xff]
    %v4382 = vld [vmem:[#allocation26 + $0xba0] sm:$0xff]
    %v4383 = vld [vmem:[#allocation26 + $0xba8] sm:$0xff]
    %v4384 = vld [vmem:[#allocation26 + $0xbb0] sm:$0xf]
    %v4385 = vld [vmem:[#allocation26 + $0xbb4] sm:$0xff]
    %v4386 = vld [vmem:[#allocation26 + $0xbbc] sm:$0xff]
    %v4387 = vld [vmem:[#allocation26 + $0xbc4] sm:$0xff]
    %v4388 = vld [vmem:[#allocation26 + $0xbcc] sm:$0xf]
    %v4389 = vld [vmem:[#allocation26 + $0xbd0] sm:$0xff]
    %v4390 = vld [vmem:[#allocation26 + $0xbd8] sm:$0xff]
    %v4391 = vld [vmem:[#allocation26 + $0xbe0] sm:$0xff]
    %v4392 = vld [vmem:[#allocation26 + $0xbe8] sm:$0xf]
    %v4393 = vld [vmem:[#allocation26 + $0xbec] sm:$0xff]
    %v4394 = vld [vmem:[#allocation26 + $0xbf4] sm:$0xff]
    %v4395 = vld [vmem:[#allocation26 + $0xbfc] sm:$0xff]
    %v4396 = vld [vmem:[#allocation26 + $0xc04] sm:$0xf]
    %v4397 = vld [vmem:[#allocation26 + $0xc08] sm:$0xff]
    %v4398 = vld [vmem:[#allocation26 + $0xc10] sm:$0xff]
    %v4399 = vld [vmem:[#allocation26 + $0xc18] sm:$0xff]
    %v4400 = vld [vmem:[#allocation26 + $0xc20] sm:$0xf]
    %v4401 = vld [vmem:[#allocation26 + $0xc24] sm:$0xff]
    %v4402 = vld [vmem:[#allocation26 + $0xc2c] sm:$0xff]
    %v4403 = vld [vmem:[#allocation26 + $0xc34] sm:$0xff]
    %v4404 = vld [vmem:[#allocation26 + $0xc3c] sm:$0xf]
    %v4405 = vld [vmem:[#allocation26 + $0xc40] sm:$0xff]
    %v4406 = vld [vmem:[#allocation26 + $0xc48] sm:$0xff]
    %v4407 = vld [vmem:[#allocation26 + $0xc50] sm:$0xff]
    %v4408 = vld [vmem:[#allocation26 + $0xc58] sm:$0xf]
    %v4409 = vld [vmem:[#allocation26 + $0xc5c] sm:$0xff]
    %v4410 = vld [vmem:[#allocation26 + $0xc64] sm:$0xff]
    %v4411 = vld [vmem:[#allocation26 + $0xc6c] sm:$0xff]
    %v4412 = vld [vmem:[#allocation26 + $0xc74] sm:$0xf]
    %v4413 = vld [vmem:[#allocation26 + $0xc78] sm:$0xff]
    %v4414 = vld [vmem:[#allocation26 + $0xc80] sm:$0xff]
    %v4415 = vld [vmem:[#allocation26 + $0xc88] sm:$0xff]
    %v4416 = vld [vmem:[#allocation26 + $0xc90] sm:$0xf]
    %v4417 = vld [vmem:[#allocation26 + $0xc94] sm:$0xff]
    %v4418 = vld [vmem:[#allocation26 + $0xc9c] sm:$0xff]
    %v4419 = vld [vmem:[#allocation26 + $0xca4] sm:$0xff]
    %v4420 = vld [vmem:[#allocation26 + $0xcac] sm:$0xf]
    %v4421 = vld [vmem:[#allocation26 + $0xcb0] sm:$0xff]
    %v4422 = vld [vmem:[#allocation26 + $0xcb8] sm:$0xff]
    %v4423 = vld [vmem:[#allocation26 + $0xcc0] sm:$0xff]
    %v4424 = vld [vmem:[#allocation26 + $0xcc8] sm:$0xf]
    %v4425 = vld [vmem:[#allocation26 + $0xccc] sm:$0xff]
    %v4426 = vld [vmem:[#allocation26 + $0xcd4] sm:$0xff]
    %v4427 = vld [vmem:[#allocation26 + $0xcdc] sm:$0xff]
    %v4428 = vld [vmem:[#allocation26 + $0xce4] sm:$0xf]
    %v4429 = vld [vmem:[#allocation26 + $0xce8] sm:$0xff]
    %v4430 = vld [vmem:[#allocation26 + $0xcf0] sm:$0xff]
    %v4431 = vld [vmem:[#allocation26 + $0xcf8] sm:$0xff]
    %v4432 = vld [vmem:[#allocation26 + $0xd00] sm:$0xf]
    %v4433 = vld [vmem:[#allocation26 + $0xd04] sm:$0xff]
    %v4434 = vld [vmem:[#allocation26 + $0xd0c] sm:$0xff]
    %v4435 = vld [vmem:[#allocation26 + $0xd14] sm:$0xff]
    %v4436 = vld [vmem:[#allocation26 + $0xd1c] sm:$0xf]
    %v4437 = vld [vmem:[#allocation26 + $0xd20] sm:$0xff]
    %v4438 = vld [vmem:[#allocation26 + $0xd28] sm:$0xff]
    %v4439 = vld [vmem:[#allocation26 + $0xd30] sm:$0xff]
    %v4440 = vld [vmem:[#allocation26 + $0xd38] sm:$0xf]
    %v4441 = vld [vmem:[#allocation26 + $0xd3c] sm:$0xff]
    %v4442 = vld [vmem:[#allocation26 + $0xd44] sm:$0xff]
    %v4443 = vld [vmem:[#allocation26 + $0xd4c] sm:$0xff]
    %v4444 = vld [vmem:[#allocation26 + $0xd54] sm:$0xf]
    %v4445 = vld [vmem:[#allocation26 + $0xd58] sm:$0xff]
    %v4446 = vld [vmem:[#allocation26 + $0xd60] sm:$0xff]
    %v4447 = vld [vmem:[#allocation26 + $0xd68] sm:$0xff]
    %v4448 = vld [vmem:[#allocation26 + $0xd70] sm:$0xf]
    %v4449 = vld [vmem:[#allocation26 + $0xd74] sm:$0xff]
    %v4450 = vld [vmem:[#allocation26 + $0xd7c] sm:$0xff]
    %v4451 = vld [vmem:[#allocation26 + $0xd84] sm:$0xff]
    %v4452 = vld [vmem:[#allocation26 + $0xd8c] sm:$0xf]
    %v4453 = vld [vmem:[#allocation26 + $0xd90] sm:$0xff]
    %v4454 = vld [vmem:[#allocation26 + $0xd98] sm:$0xff]
    %v4455 = vld [vmem:[#allocation26 + $0xda0] sm:$0xff]
    %v4456 = vld [vmem:[#allocation26 + $0xda8] sm:$0xf]
    %v4457 = vld [vmem:[#allocation26 + $0xdac] sm:$0xff]
    %v4458 = vld [vmem:[#allocation26 + $0xdb4] sm:$0xff]
    %v4459 = vld [vmem:[#allocation26 + $0xdbc] sm:$0xff]
    %v4460 = vld [vmem:[#allocation26 + $0xdc4] sm:$0xf]
    %v4461 = vld [vmem:[#allocation26 + $0xdc8] sm:$0xff]
    %v4462 = vld [vmem:[#allocation26 + $0xdd0] sm:$0xff]
    %v4463 = vld [vmem:[#allocation26 + $0xdd8] sm:$0xff]
    %v4464 = vld [vmem:[#allocation26 + $0xde0] sm:$0xf]
    %v4465 = vld [vmem:[#allocation26 + $0xde4] sm:$0xff]
    %v4466 = vld [vmem:[#allocation26 + $0xdec] sm:$0xff]
    %v4467 = vld [vmem:[#allocation26 + $0xdf4] sm:$0xff]
    %v4468 = vld [vmem:[#allocation26 + $0xdfc] sm:$0xf]
    %v4469 = vld [vmem:[#allocation28] sm:$0xff]
    %v4471 = vlaneseq
    %v4472 = vshrl.u32 %v4471, 7
    %v4473 = vsub.s32 0, %v4472
    %v4474 = vrot.slane %v4469, %v4473
    %v4475 = vlaneseq
    %v4476 = vshrl.u32 %v4475, 7
    %v4477 = vsub.s32 1, %v4476
    %v4478 = vrot.slane %v4469, %v4477
    %v4479 = vlaneseq
    %v4480 = vshrl.u32 %v4479, 7
    %v4481 = vsub.s32 2, %v4480
    %v4482 = vrot.slane %v4469, %v4481
    %v4483 = vlaneseq
    %v4484 = vshrl.u32 %v4483, 7
    %v4485 = vsub.s32 3, %v4484
    %v4486 = vrot.slane %v4469, %v4485
    %v4487 = vlaneseq
    %v4488 = vshrl.u32 %v4487, 7
    %v4489 = vsub.s32 4, %v4488
    %v4490 = vrot.slane %v4469, %v4489
    %v4491 = vlaneseq
    %v4492 = vshrl.u32 %v4491, 7
    %v4493 = vsub.s32 5, %v4492
    %v4494 = vrot.slane %v4469, %v4493
    %v4495 = vlaneseq
    %v4496 = vshrl.u32 %v4495, 7
    %v4497 = vsub.s32 6, %v4496
    %v4498 = vrot.slane %v4469, %v4497
    %v5018 = vunpack.c.l.b16 %v3957
    %v5019 = vunpack.c.h.b16 %v3957
    %v5020 = vunpack.c.l.b16 %v3958
    %v5021 = vunpack.c.h.b16 %v3958
    %v5022 = vunpack.c.l.b16 %v3959
    %v5023 = vunpack.c.h.b16 %v3959
    %v5024 = vunpack.c.l.b16 %v3960
    %v5025 = vunpack.c.l.b16 %v3961
    %v5026 = vunpack.c.h.b16 %v3961
    %v5027 = vunpack.c.l.b16 %v3962
    %v5028 = vunpack.c.h.b16 %v3962
    %v5029 = vunpack.c.l.b16 %v3963
    %v5030 = vunpack.c.h.b16 %v3963
    %v5031 = vunpack.c.l.b16 %v3964
    %v5032 = vunpack.c.l.b16 %v3965
    %v5033 = vunpack.c.h.b16 %v3965
    %v5034 = vunpack.c.l.b16 %v3966
    %v5035 = vunpack.c.h.b16 %v3966
    %v5036 = vunpack.c.l.b16 %v3967
    %v5037 = vunpack.c.h.b16 %v3967
    %v5038 = vunpack.c.l.b16 %v3968
    %v5039 = vunpack.c.l.b16 %v3969
    %v5040 = vunpack.c.h.b16 %v3969
    %v5041 = vunpack.c.l.b16 %v3970
    %v5042 = vunpack.c.h.b16 %v3970
    %v5043 = vunpack.c.l.b16 %v3971
    %v5044 = vunpack.c.h.b16 %v3971
    %v5045 = vunpack.c.l.b16 %v3972
    %v5046 = vunpack.c.l.b16 %v3973
    %v5047 = vunpack.c.h.b16 %v3973
    %v5048 = vunpack.c.l.b16 %v3974
    %v5049 = vunpack.c.h.b16 %v3974
    %v5050 = vunpack.c.l.b16 %v3975
    %v5051 = vunpack.c.h.b16 %v3975
    %v5052 = vunpack.c.l.b16 %v3976
    %v5053 = vunpack.c.l.b16 %v3977
    %v5054 = vunpack.c.h.b16 %v3977
    %v5055 = vunpack.c.l.b16 %v3978
    %v5056 = vunpack.c.h.b16 %v3978
    %v5057 = vunpack.c.l.b16 %v3979
    %v5058 = vunpack.c.h.b16 %v3979
    %v5059 = vunpack.c.l.b16 %v3980
    %v5060 = vunpack.c.l.b16 %v3981
    %v5061 = vunpack.c.h.b16 %v3981
    %v5062 = vunpack.c.l.b16 %v3982
    %v5063 = vunpack.c.h.b16 %v3982
    %v5064 = vunpack.c.l.b16 %v3983
    %v5065 = vunpack.c.h.b16 %v3983
    %v5066 = vunpack.c.l.b16 %v3984
    %v5067 = vunpack.c.l.b16 %v3985
    %v5068 = vunpack.c.h.b16 %v3985
    %v5069 = vunpack.c.l.b16 %v3986
    %v5070 = vunpack.c.h.b16 %v3986
    %v5071 = vunpack.c.l.b16 %v3987
    %v5072 = vunpack.c.h.b16 %v3987
    %v5073 = vunpack.c.l.b16 %v3988
    %v5074 = vunpack.c.l.b16 %v3989
    %v5075 = vunpack.c.h.b16 %v3989
    %v5076 = vunpack.c.l.b16 %v3990
    %v5077 = vunpack.c.h.b16 %v3990
    %v5078 = vunpack.c.l.b16 %v3991
    %v5079 = vunpack.c.h.b16 %v3991
    %v5080 = vunpack.c.l.b16 %v3992
    %v5081 = vunpack.c.l.b16 %v3993
    %v5082 = vunpack.c.h.b16 %v3993
    %v5083 = vunpack.c.l.b16 %v3994
    %v5084 = vunpack.c.h.b16 %v3994
    %v5085 = vunpack.c.l.b16 %v3995
    %v5086 = vunpack.c.h.b16 %v3995
    %v5087 = vunpack.c.l.b16 %v3996
    %v5088 = vunpack.c.l.b16 %v3997
    %v5089 = vunpack.c.h.b16 %v3997
    %v5090 = vunpack.c.l.b16 %v3998
    %v5091 = vunpack.c.h.b16 %v3998
    %v5092 = vunpack.c.l.b16 %v3999
    %v5093 = vunpack.c.h.b16 %v3999
    %v5094 = vunpack.c.l.b16 %v4000
    %v5095 = vunpack.c.l.b16 %v4001
    %v5096 = vunpack.c.h.b16 %v4001
    %v5097 = vunpack.c.l.b16 %v4002
    %v5098 = vunpack.c.h.b16 %v4002
    %v5099 = vunpack.c.l.b16 %v4003
    %v5100 = vunpack.c.h.b16 %v4003
    %v5101 = vunpack.c.l.b16 %v4004
    %v5102 = vunpack.c.l.b16 %v4005
    %v5103 = vunpack.c.h.b16 %v4005
    %v5104 = vunpack.c.l.b16 %v4006
    %v5105 = vunpack.c.h.b16 %v4006
    %v5106 = vunpack.c.l.b16 %v4007
    %v5107 = vunpack.c.h.b16 %v4007
    %v5108 = vunpack.c.l.b16 %v4008
    %v5109 = vunpack.c.l.b16 %v4009
    %v5110 = vunpack.c.h.b16 %v4009
    %v5111 = vunpack.c.l.b16 %v4010
    %v5112 = vunpack.c.h.b16 %v4010
    %v5113 = vunpack.c.l.b16 %v4011
    %v5114 = vunpack.c.h.b16 %v4011
    %v5115 = vunpack.c.l.b16 %v4012
    %v5116 = vunpack.c.l.b16 %v4013
    %v5117 = vunpack.c.h.b16 %v4013
    %v5118 = vunpack.c.l.b16 %v4014
    %v5119 = vunpack.c.h.b16 %v4014
    %v5120 = vunpack.c.l.b16 %v4015
    %v5121 = vunpack.c.h.b16 %v4015
    %v5122 = vunpack.c.l.b16 %v4016
    %v5123 = vunpack.c.l.b16 %v4017
    %v5124 = vunpack.c.h.b16 %v4017
    %v5125 = vunpack.c.l.b16 %v4018
    %v5126 = vunpack.c.h.b16 %v4018
    %v5127 = vunpack.c.l.b16 %v4019
    %v5128 = vunpack.c.h.b16 %v4019
    %v5129 = vunpack.c.l.b16 %v4020
    %v5130 = vunpack.c.l.b16 %v4021
    %v5131 = vunpack.c.h.b16 %v4021
    %v5132 = vunpack.c.l.b16 %v4022
    %v5133 = vunpack.c.h.b16 %v4022
    %v5134 = vunpack.c.l.b16 %v4023
    %v5135 = vunpack.c.h.b16 %v4023
    %v5136 = vunpack.c.l.b16 %v4024
    %v5137 = vunpack.c.l.b16 %v4025
    %v5138 = vunpack.c.h.b16 %v4025
    %v5139 = vunpack.c.l.b16 %v4026
    %v5140 = vunpack.c.h.b16 %v4026
    %v5141 = vunpack.c.l.b16 %v4027
    %v5142 = vunpack.c.h.b16 %v4027
    %v5143 = vunpack.c.l.b16 %v4028
    %v5144 = vunpack.c.l.b16 %v4029
    %v5145 = vunpack.c.h.b16 %v4029
    %v5146 = vunpack.c.l.b16 %v4030
    %v5147 = vunpack.c.h.b16 %v4030
    %v5148 = vunpack.c.l.b16 %v4031
    %v5149 = vunpack.c.h.b16 %v4031
    %v5150 = vunpack.c.l.b16 %v4032
    %v5151 = vunpack.c.l.b16 %v4033
    %v5152 = vunpack.c.h.b16 %v4033
    %v5153 = vunpack.c.l.b16 %v4034
    %v5154 = vunpack.c.h.b16 %v4034
    %v5155 = vunpack.c.l.b16 %v4035
    %v5156 = vunpack.c.h.b16 %v4035
    %v5157 = vunpack.c.l.b16 %v4036
    %v5158 = vunpack.c.l.b16 %v4037
    %v5159 = vunpack.c.h.b16 %v4037
    %v5160 = vunpack.c.l.b16 %v4038
    %v5161 = vunpack.c.h.b16 %v4038
    %v5162 = vunpack.c.l.b16 %v4039
    %v5163 = vunpack.c.h.b16 %v4039
    %v5164 = vunpack.c.l.b16 %v4040
    %v5165 = vunpack.c.l.b16 %v4041
    %v5166 = vunpack.c.h.b16 %v4041
    %v5167 = vunpack.c.l.b16 %v4042
    %v5168 = vunpack.c.h.b16 %v4042
    %v5169 = vunpack.c.l.b16 %v4043
    %v5170 = vunpack.c.h.b16 %v4043
    %v5171 = vunpack.c.l.b16 %v4044
    %v5172 = vunpack.c.l.b16 %v4045
    %v5173 = vunpack.c.h.b16 %v4045
    %v5174 = vunpack.c.l.b16 %v4046
    %v5175 = vunpack.c.h.b16 %v4046
    %v5176 = vunpack.c.l.b16 %v4047
    %v5177 = vunpack.c.h.b16 %v4047
    %v5178 = vunpack.c.l.b16 %v4048
    %v5179 = vunpack.c.l.b16 %v4049
    %v5180 = vunpack.c.h.b16 %v4049
    %v5181 = vunpack.c.l.b16 %v4050
    %v5182 = vunpack.c.h.b16 %v4050
    %v5183 = vunpack.c.l.b16 %v4051
    %v5184 = vunpack.c.h.b16 %v4051
    %v5185 = vunpack.c.l.b16 %v4052
    %v5186 = vunpack.c.l.b16 %v4053
    %v5187 = vunpack.c.h.b16 %v4053
    %v5188 = vunpack.c.l.b16 %v4054
    %v5189 = vunpack.c.h.b16 %v4054
    %v5190 = vunpack.c.l.b16 %v4055
    %v5191 = vunpack.c.h.b16 %v4055
    %v5192 = vunpack.c.l.b16 %v4056
    %v5193 = vunpack.c.l.b16 %v4057
    %v5194 = vunpack.c.h.b16 %v4057
    %v5195 = vunpack.c.l.b16 %v4058
    %v5196 = vunpack.c.h.b16 %v4058
    %v5197 = vunpack.c.l.b16 %v4059
    %v5198 = vunpack.c.h.b16 %v4059
    %v5199 = vunpack.c.l.b16 %v4060
    %v5200 = vunpack.c.l.b16 %v4061
    %v5201 = vunpack.c.h.b16 %v4061
    %v5202 = vunpack.c.l.b16 %v4062
    %v5203 = vunpack.c.h.b16 %v4062
    %v5204 = vunpack.c.l.b16 %v4063
    %v5205 = vunpack.c.h.b16 %v4063
    %v5206 = vunpack.c.l.b16 %v4064
    %v5207 = vunpack.c.l.b16 %v4065
    %v5208 = vunpack.c.h.b16 %v4065
    %v5209 = vunpack.c.l.b16 %v4066
    %v5210 = vunpack.c.h.b16 %v4066
    %v5211 = vunpack.c.l.b16 %v4067
    %v5212 = vunpack.c.h.b16 %v4067
    %v5213 = vunpack.c.l.b16 %v4068
    %v5214 = vunpack.c.l.b16 %v4069
    %v5215 = vunpack.c.h.b16 %v4069
    %v5216 = vunpack.c.l.b16 %v4070
    %v5217 = vunpack.c.h.b16 %v4070
    %v5218 = vunpack.c.l.b16 %v4071
    %v5219 = vunpack.c.h.b16 %v4071
    %v5220 = vunpack.c.l.b16 %v4072
    %v5221 = vunpack.c.l.b16 %v4073
    %v5222 = vunpack.c.h.b16 %v4073
    %v5223 = vunpack.c.l.b16 %v4074
    %v5224 = vunpack.c.h.b16 %v4074
    %v5225 = vunpack.c.l.b16 %v4075
    %v5226 = vunpack.c.h.b16 %v4075
    %v5227 = vunpack.c.l.b16 %v4076
    %v5228 = vunpack.c.l.b16 %v4077
    %v5229 = vunpack.c.h.b16 %v4077
    %v5230 = vunpack.c.l.b16 %v4078
    %v5231 = vunpack.c.h.b16 %v4078
    %v5232 = vunpack.c.l.b16 %v4079
    %v5233 = vunpack.c.h.b16 %v4079
    %v5234 = vunpack.c.l.b16 %v4080
    %v5235 = vunpack.c.l.b16 %v4081
    %v5236 = vunpack.c.h.b16 %v4081
    %v5237 = vunpack.c.l.b16 %v4082
    %v5238 = vunpack.c.h.b16 %v4082
    %v5239 = vunpack.c.l.b16 %v4083
    %v5240 = vunpack.c.h.b16 %v4083
    %v5241 = vunpack.c.l.b16 %v4084
    %v5242 = vunpack.c.l.b16 %v4085
    %v5243 = vunpack.c.h.b16 %v4085
    %v5244 = vunpack.c.l.b16 %v4086
    %v5245 = vunpack.c.h.b16 %v4086
    %v5246 = vunpack.c.l.b16 %v4087
    %v5247 = vunpack.c.h.b16 %v4087
    %v5248 = vunpack.c.l.b16 %v4088
    %v5249 = vunpack.c.l.b16 %v4089
    %v5250 = vunpack.c.h.b16 %v4089
    %v5251 = vunpack.c.l.b16 %v4090
    %v5252 = vunpack.c.h.b16 %v4090
    %v5253 = vunpack.c.l.b16 %v4091
    %v5254 = vunpack.c.h.b16 %v4091
    %v5255 = vunpack.c.l.b16 %v4092
    %v5256 = vunpack.c.l.b16 %v4093
    %v5257 = vunpack.c.h.b16 %v4093
    %v5258 = vunpack.c.l.b16 %v4094
    %v5259 = vunpack.c.h.b16 %v4094
    %v5260 = vunpack.c.l.b16 %v4095
    %v5261 = vunpack.c.h.b16 %v4095
    %v5262 = vunpack.c.l.b16 %v4096
    %v5263 = vunpack.c.l.b16 %v4097
    %v5264 = vunpack.c.h.b16 %v4097
    %v5265 = vunpack.c.l.b16 %v4098
    %v5266 = vunpack.c.h.b16 %v4098
    %v5267 = vunpack.c.l.b16 %v4099
    %v5268 = vunpack.c.h.b16 %v4099
    %v5269 = vunpack.c.l.b16 %v4100
    %v5270 = vunpack.c.l.b16 %v4101
    %v5271 = vunpack.c.h.b16 %v4101
    %v5272 = vunpack.c.l.b16 %v4102
    %v5273 = vunpack.c.h.b16 %v4102
    %v5274 = vunpack.c.l.b16 %v4103
    %v5275 = vunpack.c.h.b16 %v4103
    %v5276 = vunpack.c.l.b16 %v4104
    %v5277 = vunpack.c.l.b16 %v4105
    %v5278 = vunpack.c.h.b16 %v4105
    %v5279 = vunpack.c.l.b16 %v4106
    %v5280 = vunpack.c.h.b16 %v4106
    %v5281 = vunpack.c.l.b16 %v4107
    %v5282 = vunpack.c.h.b16 %v4107
    %v5283 = vunpack.c.l.b16 %v4108
    %v5284 = vunpack.c.l.b16 %v4109
    %v5285 = vunpack.c.h.b16 %v4109
    %v5286 = vunpack.c.l.b16 %v4110
    %v5287 = vunpack.c.h.b16 %v4110
    %v5288 = vunpack.c.l.b16 %v4111
    %v5289 = vunpack.c.h.b16 %v4111
    %v5290 = vunpack.c.l.b16 %v4112
    %v5291 = vunpack.c.l.b16 %v4113
    %v5292 = vunpack.c.h.b16 %v4113
    %v5293 = vunpack.c.l.b16 %v4114
    %v5294 = vunpack.c.h.b16 %v4114
    %v5295 = vunpack.c.l.b16 %v4115
    %v5296 = vunpack.c.h.b16 %v4115
    %v5297 = vunpack.c.l.b16 %v4116
    %v5298 = vunpack.c.l.b16 %v4117
    %v5299 = vunpack.c.h.b16 %v4117
    %v5300 = vunpack.c.l.b16 %v4118
    %v5301 = vunpack.c.h.b16 %v4118
    %v5302 = vunpack.c.l.b16 %v4119
    %v5303 = vunpack.c.h.b16 %v4119
    %v5304 = vunpack.c.l.b16 %v4120
    %v5305 = vunpack.c.l.b16 %v4121
    %v5306 = vunpack.c.h.b16 %v4121
    %v5307 = vunpack.c.l.b16 %v4122
    %v5308 = vunpack.c.h.b16 %v4122
    %v5309 = vunpack.c.l.b16 %v4123
    %v5310 = vunpack.c.h.b16 %v4123
    %v5311 = vunpack.c.l.b16 %v4124
    %v5312 = vunpack.c.l.b16 %v4125
    %v5313 = vunpack.c.h.b16 %v4125
    %v5314 = vunpack.c.l.b16 %v4126
    %v5315 = vunpack.c.h.b16 %v4126
    %v5316 = vunpack.c.l.b16 %v4127
    %v5317 = vunpack.c.h.b16 %v4127
    %v5318 = vunpack.c.l.b16 %v4128
    %v5319 = vunpack.c.l.b16 %v4129
    %v5320 = vunpack.c.h.b16 %v4129
    %v5321 = vunpack.c.l.b16 %v4130
    %v5322 = vunpack.c.h.b16 %v4130
    %v5323 = vunpack.c.l.b16 %v4131
    %v5324 = vunpack.c.h.b16 %v4131
    %v5325 = vunpack.c.l.b16 %v4132
    %v5326 = vunpack.c.l.b16 %v4133
    %v5327 = vunpack.c.h.b16 %v4133
    %v5328 = vunpack.c.l.b16 %v4134
    %v5329 = vunpack.c.h.b16 %v4134
    %v5330 = vunpack.c.l.b16 %v4135
    %v5331 = vunpack.c.h.b16 %v4135
    %v5332 = vunpack.c.l.b16 %v4136
    %v5333 = vunpack.c.l.b16 %v4137
    %v5334 = vunpack.c.h.b16 %v4137
    %v5335 = vunpack.c.l.b16 %v4138
    %v5336 = vunpack.c.h.b16 %v4138
    %v5337 = vunpack.c.l.b16 %v4139
    %v5338 = vunpack.c.h.b16 %v4139
    %v5339 = vunpack.c.l.b16 %v4140
    %v5340 = vunpack.c.l.b16 %v4141
    %v5341 = vunpack.c.h.b16 %v4141
    %v5342 = vunpack.c.l.b16 %v4142
    %v5343 = vunpack.c.h.b16 %v4142
    %v5344 = vunpack.c.l.b16 %v4143
    %v5345 = vunpack.c.h.b16 %v4143
    %v5346 = vunpack.c.l.b16 %v4144
    %v5347 = vunpack.c.l.b16 %v4145
    %v5348 = vunpack.c.h.b16 %v4145
    %v5349 = vunpack.c.l.b16 %v4146
    %v5350 = vunpack.c.h.b16 %v4146
    %v5351 = vunpack.c.l.b16 %v4147
    %v5352 = vunpack.c.h.b16 %v4147
    %v5353 = vunpack.c.l.b16 %v4148
    %v5354 = vunpack.c.l.b16 %v4149
    %v5355 = vunpack.c.h.b16 %v4149
    %v5356 = vunpack.c.l.b16 %v4150
    %v5357 = vunpack.c.h.b16 %v4150
    %v5358 = vunpack.c.l.b16 %v4151
    %v5359 = vunpack.c.h.b16 %v4151
    %v5360 = vunpack.c.l.b16 %v4152
    %v5361 = vunpack.c.l.b16 %v4153
    %v5362 = vunpack.c.h.b16 %v4153
    %v5363 = vunpack.c.l.b16 %v4154
    %v5364 = vunpack.c.h.b16 %v4154
    %v5365 = vunpack.c.l.b16 %v4155
    %v5366 = vunpack.c.h.b16 %v4155
    %v5367 = vunpack.c.l.b16 %v4156
    %v5368 = vunpack.c.l.b16 %v4157
    %v5369 = vunpack.c.h.b16 %v4157
    %v5370 = vunpack.c.l.b16 %v4158
    %v5371 = vunpack.c.h.b16 %v4158
    %v5372 = vunpack.c.l.b16 %v4159
    %v5373 = vunpack.c.h.b16 %v4159
    %v5374 = vunpack.c.l.b16 %v4160
    %v5375 = vunpack.c.l.b16 %v4161
    %v5376 = vunpack.c.h.b16 %v4161
    %v5377 = vunpack.c.l.b16 %v4162
    %v5378 = vunpack.c.h.b16 %v4162
    %v5379 = vunpack.c.l.b16 %v4163
    %v5380 = vunpack.c.h.b16 %v4163
    %v5381 = vunpack.c.l.b16 %v4164
    %v5382 = vunpack.c.l.b16 %v4165
    %v5383 = vunpack.c.h.b16 %v4165
    %v5384 = vunpack.c.l.b16 %v4166
    %v5385 = vunpack.c.h.b16 %v4166
    %v5386 = vunpack.c.l.b16 %v4167
    %v5387 = vunpack.c.h.b16 %v4167
    %v5388 = vunpack.c.l.b16 %v4168
    %v5389 = vunpack.c.l.b16 %v4169
    %v5390 = vunpack.c.h.b16 %v4169
    %v5391 = vunpack.c.l.b16 %v4170
    %v5392 = vunpack.c.h.b16 %v4170
    %v5393 = vunpack.c.l.b16 %v4171
    %v5394 = vunpack.c.h.b16 %v4171
    %v5395 = vunpack.c.l.b16 %v4172
    %v5396 = vunpack.c.l.b16 %v4173
    %v5397 = vunpack.c.h.b16 %v4173
    %v5398 = vunpack.c.l.b16 %v4174
    %v5399 = vunpack.c.h.b16 %v4174
    %v5400 = vunpack.c.l.b16 %v4175
    %v5401 = vunpack.c.h.b16 %v4175
    %v5402 = vunpack.c.l.b16 %v4176
    %v5403 = vunpack.c.l.b16 %v4177
    %v5404 = vunpack.c.h.b16 %v4177
    %v5405 = vunpack.c.l.b16 %v4178
    %v5406 = vunpack.c.h.b16 %v4178
    %v5407 = vunpack.c.l.b16 %v4179
    %v5408 = vunpack.c.h.b16 %v4179
    %v5409 = vunpack.c.l.b16 %v4180
    %v5410 = vunpack.c.l.b16 %v4181
    %v5411 = vunpack.c.h.b16 %v4181
    %v5412 = vunpack.c.l.b16 %v4182
    %v5413 = vunpack.c.h.b16 %v4182
    %v5414 = vunpack.c.l.b16 %v4183
    %v5415 = vunpack.c.h.b16 %v4183
    %v5416 = vunpack.c.l.b16 %v4184
    %v5417 = vunpack.c.l.b16 %v4185
    %v5418 = vunpack.c.h.b16 %v4185
    %v5419 = vunpack.c.l.b16 %v4186
    %v5420 = vunpack.c.h.b16 %v4186
    %v5421 = vunpack.c.l.b16 %v4187
    %v5422 = vunpack.c.h.b16 %v4187
    %v5423 = vunpack.c.l.b16 %v4188
    %v5424 = vunpack.c.l.b16 %v4189
    %v5425 = vunpack.c.h.b16 %v4189
    %v5426 = vunpack.c.l.b16 %v4190
    %v5427 = vunpack.c.h.b16 %v4190
    %v5428 = vunpack.c.l.b16 %v4191
    %v5429 = vunpack.c.h.b16 %v4191
    %v5430 = vunpack.c.l.b16 %v4192
    %v5431 = vunpack.c.l.b16 %v4193
    %v5432 = vunpack.c.h.b16 %v4193
    %v5433 = vunpack.c.l.b16 %v4194
    %v5434 = vunpack.c.h.b16 %v4194
    %v5435 = vunpack.c.l.b16 %v4195
    %v5436 = vunpack.c.h.b16 %v4195
    %v5437 = vunpack.c.l.b16 %v4196
    %v5438 = vunpack.c.l.b16 %v4197
    %v5439 = vunpack.c.h.b16 %v4197
    %v5440 = vunpack.c.l.b16 %v4198
    %v5441 = vunpack.c.h.b16 %v4198
    %v5442 = vunpack.c.l.b16 %v4199
    %v5443 = vunpack.c.h.b16 %v4199
    %v5444 = vunpack.c.l.b16 %v4200
    %v5445 = vunpack.c.l.b16 %v4201
    %v5446 = vunpack.c.h.b16 %v4201
    %v5447 = vunpack.c.l.b16 %v4202
    %v5448 = vunpack.c.h.b16 %v4202
    %v5449 = vunpack.c.l.b16 %v4203
    %v5450 = vunpack.c.h.b16 %v4203
    %v5451 = vunpack.c.l.b16 %v4204
    %v5452 = vunpack.c.l.b16 %v4205
    %v5453 = vunpack.c.h.b16 %v4205
    %v5454 = vunpack.c.l.b16 %v4206
    %v5455 = vunpack.c.h.b16 %v4206
    %v5456 = vunpack.c.l.b16 %v4207
    %v5457 = vunpack.c.h.b16 %v4207
    %v5458 = vunpack.c.l.b16 %v4208
    %v5459 = vunpack.c.l.b16 %v4209
    %v5460 = vunpack.c.h.b16 %v4209
    %v5461 = vunpack.c.l.b16 %v4210
    %v5462 = vunpack.c.h.b16 %v4210
    %v5463 = vunpack.c.l.b16 %v4211
    %v5464 = vunpack.c.h.b16 %v4211
    %v5465 = vunpack.c.l.b16 %v4212
    %v5466 = vunpack.c.l.b16 %v4213
    %v5467 = vunpack.c.h.b16 %v4213
    %v5468 = vunpack.c.l.b16 %v4214
    %v5469 = vunpack.c.h.b16 %v4214
    %v5470 = vunpack.c.l.b16 %v4215
    %v5471 = vunpack.c.h.b16 %v4215
    %v5472 = vunpack.c.l.b16 %v4216
    %v5473 = vunpack.c.l.b16 %v4217
    %v5474 = vunpack.c.h.b16 %v4217
    %v5475 = vunpack.c.l.b16 %v4218
    %v5476 = vunpack.c.h.b16 %v4218
    %v5477 = vunpack.c.l.b16 %v4219
    %v5478 = vunpack.c.h.b16 %v4219
    %v5479 = vunpack.c.l.b16 %v4220
    %v5480 = vunpack.c.l.b16 %v4221
    %v5481 = vunpack.c.h.b16 %v4221
    %v5482 = vunpack.c.l.b16 %v4222
    %v5483 = vunpack.c.h.b16 %v4222
    %v5484 = vunpack.c.l.b16 %v4223
    %v5485 = vunpack.c.h.b16 %v4223
    %v5486 = vunpack.c.l.b16 %v4224
    %v5487 = vunpack.c.l.b16 %v4225
    %v5488 = vunpack.c.h.b16 %v4225
    %v5489 = vunpack.c.l.b16 %v4226
    %v5490 = vunpack.c.h.b16 %v4226
    %v5491 = vunpack.c.l.b16 %v4227
    %v5492 = vunpack.c.h.b16 %v4227
    %v5493 = vunpack.c.l.b16 %v4228
    %v5494 = vunpack.c.l.b16 %v4229
    %v5495 = vunpack.c.h.b16 %v4229
    %v5496 = vunpack.c.l.b16 %v4230
    %v5497 = vunpack.c.h.b16 %v4230
    %v5498 = vunpack.c.l.b16 %v4231
    %v5499 = vunpack.c.h.b16 %v4231
    %v5500 = vunpack.c.l.b16 %v4232
    %v5501 = vunpack.c.l.b16 %v4233
    %v5502 = vunpack.c.h.b16 %v4233
    %v5503 = vunpack.c.l.b16 %v4234
    %v5504 = vunpack.c.h.b16 %v4234
    %v5505 = vunpack.c.l.b16 %v4235
    %v5506 = vunpack.c.h.b16 %v4235
    %v5507 = vunpack.c.l.b16 %v4236
    %v5508 = vunpack.c.l.b16 %v4237
    %v5509 = vunpack.c.h.b16 %v4237
    %v5510 = vunpack.c.l.b16 %v4238
    %v5511 = vunpack.c.h.b16 %v4238
    %v5512 = vunpack.c.l.b16 %v4239
    %v5513 = vunpack.c.h.b16 %v4239
    %v5514 = vunpack.c.l.b16 %v4240
    %v5515 = vunpack.c.l.b16 %v4241
    %v5516 = vunpack.c.h.b16 %v4241
    %v5517 = vunpack.c.l.b16 %v4242
    %v5518 = vunpack.c.h.b16 %v4242
    %v5519 = vunpack.c.l.b16 %v4243
    %v5520 = vunpack.c.h.b16 %v4243
    %v5521 = vunpack.c.l.b16 %v4244
    %v5522 = vunpack.c.l.b16 %v4245
    %v5523 = vunpack.c.h.b16 %v4245
    %v5524 = vunpack.c.l.b16 %v4246
    %v5525 = vunpack.c.h.b16 %v4246
    %v5526 = vunpack.c.l.b16 %v4247
    %v5527 = vunpack.c.h.b16 %v4247
    %v5528 = vunpack.c.l.b16 %v4248
    %v5529 = vunpack.c.l.b16 %v4249
    %v5530 = vunpack.c.h.b16 %v4249
    %v5531 = vunpack.c.l.b16 %v4250
    %v5532 = vunpack.c.h.b16 %v4250
    %v5533 = vunpack.c.l.b16 %v4251
    %v5534 = vunpack.c.h.b16 %v4251
    %v5535 = vunpack.c.l.b16 %v4252
    %v5536 = vunpack.c.l.b16 %v4253
    %v5537 = vunpack.c.h.b16 %v4253
    %v5538 = vunpack.c.l.b16 %v4254
    %v5539 = vunpack.c.h.b16 %v4254
    %v5540 = vunpack.c.l.b16 %v4255
    %v5541 = vunpack.c.h.b16 %v4255
    %v5542 = vunpack.c.l.b16 %v4256
    %v5543 = vunpack.c.l.b16 %v4257
    %v5544 = vunpack.c.h.b16 %v4257
    %v5545 = vunpack.c.l.b16 %v4258
    %v5546 = vunpack.c.h.b16 %v4258
    %v5547 = vunpack.c.l.b16 %v4259
    %v5548 = vunpack.c.h.b16 %v4259
    %v5549 = vunpack.c.l.b16 %v4260
    %v5550 = vunpack.c.l.b16 %v4261
    %v5551 = vunpack.c.h.b16 %v4261
    %v5552 = vunpack.c.l.b16 %v4262
    %v5553 = vunpack.c.h.b16 %v4262
    %v5554 = vunpack.c.l.b16 %v4263
    %v5555 = vunpack.c.h.b16 %v4263
    %v5556 = vunpack.c.l.b16 %v4264
    %v5557 = vunpack.c.l.b16 %v4265
    %v5558 = vunpack.c.h.b16 %v4265
    %v5559 = vunpack.c.l.b16 %v4266
    %v5560 = vunpack.c.h.b16 %v4266
    %v5561 = vunpack.c.l.b16 %v4267
    %v5562 = vunpack.c.h.b16 %v4267
    %v5563 = vunpack.c.l.b16 %v4268
    %v5564 = vunpack.c.l.b16 %v4269
    %v5565 = vunpack.c.h.b16 %v4269
    %v5566 = vunpack.c.l.b16 %v4270
    %v5567 = vunpack.c.h.b16 %v4270
    %v5568 = vunpack.c.l.b16 %v4271
    %v5569 = vunpack.c.h.b16 %v4271
    %v5570 = vunpack.c.l.b16 %v4272
    %v5571 = vunpack.c.l.b16 %v4273
    %v5572 = vunpack.c.h.b16 %v4273
    %v5573 = vunpack.c.l.b16 %v4274
    %v5574 = vunpack.c.h.b16 %v4274
    %v5575 = vunpack.c.l.b16 %v4275
    %v5576 = vunpack.c.h.b16 %v4275
    %v5577 = vunpack.c.l.b16 %v4276
    %v5578 = vunpack.c.l.b16 %v4277
    %v5579 = vunpack.c.h.b16 %v4277
    %v5580 = vunpack.c.l.b16 %v4278
    %v5581 = vunpack.c.h.b16 %v4278
    %v5582 = vunpack.c.l.b16 %v4279
    %v5583 = vunpack.c.h.b16 %v4279
    %v5584 = vunpack.c.l.b16 %v4280
    %v5585 = vunpack.c.l.b16 %v4281
    %v5586 = vunpack.c.h.b16 %v4281
    %v5587 = vunpack.c.l.b16 %v4282
    %v5588 = vunpack.c.h.b16 %v4282
    %v5589 = vunpack.c.l.b16 %v4283
    %v5590 = vunpack.c.h.b16 %v4283
    %v5591 = vunpack.c.l.b16 %v4284
    %v5592 = vunpack.c.l.b16 %v4285
    %v5593 = vunpack.c.h.b16 %v4285
    %v5594 = vunpack.c.l.b16 %v4286
    %v5595 = vunpack.c.h.b16 %v4286
    %v5596 = vunpack.c.l.b16 %v4287
    %v5597 = vunpack.c.h.b16 %v4287
    %v5598 = vunpack.c.l.b16 %v4288
    %v5599 = vunpack.c.l.b16 %v4289
    %v5600 = vunpack.c.h.b16 %v4289
    %v5601 = vunpack.c.l.b16 %v4290
    %v5602 = vunpack.c.h.b16 %v4290
    %v5603 = vunpack.c.l.b16 %v4291
    %v5604 = vunpack.c.h.b16 %v4291
    %v5605 = vunpack.c.l.b16 %v4292
    %v5606 = vunpack.c.l.b16 %v4293
    %v5607 = vunpack.c.h.b16 %v4293
    %v5608 = vunpack.c.l.b16 %v4294
    %v5609 = vunpack.c.h.b16 %v4294
    %v5610 = vunpack.c.l.b16 %v4295
    %v5611 = vunpack.c.h.b16 %v4295
    %v5612 = vunpack.c.l.b16 %v4296
    %v5613 = vunpack.c.l.b16 %v4297
    %v5614 = vunpack.c.h.b16 %v4297
    %v5615 = vunpack.c.l.b16 %v4298
    %v5616 = vunpack.c.h.b16 %v4298
    %v5617 = vunpack.c.l.b16 %v4299
    %v5618 = vunpack.c.h.b16 %v4299
    %v5619 = vunpack.c.l.b16 %v4300
    %v5620 = vunpack.c.l.b16 %v4301
    %v5621 = vunpack.c.h.b16 %v4301
    %v5622 = vunpack.c.l.b16 %v4302
    %v5623 = vunpack.c.h.b16 %v4302
    %v5624 = vunpack.c.l.b16 %v4303
    %v5625 = vunpack.c.h.b16 %v4303
    %v5626 = vunpack.c.l.b16 %v4304
    %v5627 = vunpack.c.l.b16 %v4305
    %v5628 = vunpack.c.h.b16 %v4305
    %v5629 = vunpack.c.l.b16 %v4306
    %v5630 = vunpack.c.h.b16 %v4306
    %v5631 = vunpack.c.l.b16 %v4307
    %v5632 = vunpack.c.h.b16 %v4307
    %v5633 = vunpack.c.l.b16 %v4308
    %v5634 = vunpack.c.l.b16 %v4309
    %v5635 = vunpack.c.h.b16 %v4309
    %v5636 = vunpack.c.l.b16 %v4310
    %v5637 = vunpack.c.h.b16 %v4310
    %v5638 = vunpack.c.l.b16 %v4311
    %v5639 = vunpack.c.h.b16 %v4311
    %v5640 = vunpack.c.l.b16 %v4312
    %v5641 = vunpack.c.l.b16 %v4313
    %v5642 = vunpack.c.h.b16 %v4313
    %v5643 = vunpack.c.l.b16 %v4314
    %v5644 = vunpack.c.h.b16 %v4314
    %v5645 = vunpack.c.l.b16 %v4315
    %v5646 = vunpack.c.h.b16 %v4315
    %v5647 = vunpack.c.l.b16 %v4316
    %v5648 = vunpack.c.l.b16 %v4317
    %v5649 = vunpack.c.h.b16 %v4317
    %v5650 = vunpack.c.l.b16 %v4318
    %v5651 = vunpack.c.h.b16 %v4318
    %v5652 = vunpack.c.l.b16 %v4319
    %v5653 = vunpack.c.h.b16 %v4319
    %v5654 = vunpack.c.l.b16 %v4320
    %v5655 = vunpack.c.l.b16 %v4321
    %v5656 = vunpack.c.h.b16 %v4321
    %v5657 = vunpack.c.l.b16 %v4322
    %v5658 = vunpack.c.h.b16 %v4322
    %v5659 = vunpack.c.l.b16 %v4323
    %v5660 = vunpack.c.h.b16 %v4323
    %v5661 = vunpack.c.l.b16 %v4324
    %v5662 = vunpack.c.l.b16 %v4325
    %v5663 = vunpack.c.h.b16 %v4325
    %v5664 = vunpack.c.l.b16 %v4326
    %v5665 = vunpack.c.h.b16 %v4326
    %v5666 = vunpack.c.l.b16 %v4327
    %v5667 = vunpack.c.h.b16 %v4327
    %v5668 = vunpack.c.l.b16 %v4328
    %v5669 = vunpack.c.l.b16 %v4329
    %v5670 = vunpack.c.h.b16 %v4329
    %v5671 = vunpack.c.l.b16 %v4330
    %v5672 = vunpack.c.h.b16 %v4330
    %v5673 = vunpack.c.l.b16 %v4331
    %v5674 = vunpack.c.h.b16 %v4331
    %v5675 = vunpack.c.l.b16 %v4332
    %v5676 = vunpack.c.l.b16 %v4333
    %v5677 = vunpack.c.h.b16 %v4333
    %v5678 = vunpack.c.l.b16 %v4334
    %v5679 = vunpack.c.h.b16 %v4334
    %v5680 = vunpack.c.l.b16 %v4335
    %v5681 = vunpack.c.h.b16 %v4335
    %v5682 = vunpack.c.l.b16 %v4336
    %v5683 = vunpack.c.l.b16 %v4337
    %v5684 = vunpack.c.h.b16 %v4337
    %v5685 = vunpack.c.l.b16 %v4338
    %v5686 = vunpack.c.h.b16 %v4338
    %v5687 = vunpack.c.l.b16 %v4339
    %v5688 = vunpack.c.h.b16 %v4339
    %v5689 = vunpack.c.l.b16 %v4340
    %v5690 = vunpack.c.l.b16 %v4341
    %v5691 = vunpack.c.h.b16 %v4341
    %v5692 = vunpack.c.l.b16 %v4342
    %v5693 = vunpack.c.h.b16 %v4342
    %v5694 = vunpack.c.l.b16 %v4343
    %v5695 = vunpack.c.h.b16 %v4343
    %v5696 = vunpack.c.l.b16 %v4344
    %v5697 = vunpack.c.l.b16 %v4345
    %v5698 = vunpack.c.h.b16 %v4345
    %v5699 = vunpack.c.l.b16 %v4346
    %v5700 = vunpack.c.h.b16 %v4346
    %v5701 = vunpack.c.l.b16 %v4347
    %v5702 = vunpack.c.h.b16 %v4347
    %v5703 = vunpack.c.l.b16 %v4348
    %v5704 = vunpack.c.l.b16 %v4349
    %v5705 = vunpack.c.h.b16 %v4349
    %v5706 = vunpack.c.l.b16 %v4350
    %v5707 = vunpack.c.h.b16 %v4350
    %v5708 = vunpack.c.l.b16 %v4351
    %v5709 = vunpack.c.h.b16 %v4351
    %v5710 = vunpack.c.l.b16 %v4352
    %v5711 = vunpack.c.l.b16 %v4353
    %v5712 = vunpack.c.h.b16 %v4353
    %v5713 = vunpack.c.l.b16 %v4354
    %v5714 = vunpack.c.h.b16 %v4354
    %v5715 = vunpack.c.l.b16 %v4355
    %v5716 = vunpack.c.h.b16 %v4355
    %v5717 = vunpack.c.l.b16 %v4356
    %v5718 = vunpack.c.l.b16 %v4357
    %v5719 = vunpack.c.h.b16 %v4357
    %v5720 = vunpack.c.l.b16 %v4358
    %v5721 = vunpack.c.h.b16 %v4358
    %v5722 = vunpack.c.l.b16 %v4359
    %v5723 = vunpack.c.h.b16 %v4359
    %v5724 = vunpack.c.l.b16 %v4360
    %v5725 = vunpack.c.l.b16 %v4361
    %v5726 = vunpack.c.h.b16 %v4361
    %v5727 = vunpack.c.l.b16 %v4362
    %v5728 = vunpack.c.h.b16 %v4362
    %v5729 = vunpack.c.l.b16 %v4363
    %v5730 = vunpack.c.h.b16 %v4363
    %v5731 = vunpack.c.l.b16 %v4364
    %v5732 = vunpack.c.l.b16 %v4365
    %v5733 = vunpack.c.h.b16 %v4365
    %v5734 = vunpack.c.l.b16 %v4366
    %v5735 = vunpack.c.h.b16 %v4366
    %v5736 = vunpack.c.l.b16 %v4367
    %v5737 = vunpack.c.h.b16 %v4367
    %v5738 = vunpack.c.l.b16 %v4368
    %v5739 = vunpack.c.l.b16 %v4369
    %v5740 = vunpack.c.h.b16 %v4369
    %v5741 = vunpack.c.l.b16 %v4370
    %v5742 = vunpack.c.h.b16 %v4370
    %v5743 = vunpack.c.l.b16 %v4371
    %v5744 = vunpack.c.h.b16 %v4371
    %v5745 = vunpack.c.l.b16 %v4372
    %v5746 = vunpack.c.l.b16 %v4373
    %v5747 = vunpack.c.h.b16 %v4373
    %v5748 = vunpack.c.l.b16 %v4374
    %v5749 = vunpack.c.h.b16 %v4374
    %v5750 = vunpack.c.l.b16 %v4375
    %v5751 = vunpack.c.h.b16 %v4375
    %v5752 = vunpack.c.l.b16 %v4376
    %v5753 = vunpack.c.l.b16 %v4377
    %v5754 = vunpack.c.h.b16 %v4377
    %v5755 = vunpack.c.l.b16 %v4378
    %v5756 = vunpack.c.h.b16 %v4378
    %v5757 = vunpack.c.l.b16 %v4379
    %v5758 = vunpack.c.h.b16 %v4379
    %v5759 = vunpack.c.l.b16 %v4380
    %v5760 = vunpack.c.l.b16 %v4381
    %v5761 = vunpack.c.h.b16 %v4381
    %v5762 = vunpack.c.l.b16 %v4382
    %v5763 = vunpack.c.h.b16 %v4382
    %v5764 = vunpack.c.l.b16 %v4383
    %v5765 = vunpack.c.h.b16 %v4383
    %v5766 = vunpack.c.l.b16 %v4384
    %v5767 = vunpack.c.l.b16 %v4385
    %v5768 = vunpack.c.h.b16 %v4385
    %v5769 = vunpack.c.l.b16 %v4386
    %v5770 = vunpack.c.h.b16 %v4386
    %v5771 = vunpack.c.l.b16 %v4387
    %v5772 = vunpack.c.h.b16 %v4387
    %v5773 = vunpack.c.l.b16 %v4388
    %v5774 = vunpack.c.l.b16 %v4389
    %v5775 = vunpack.c.h.b16 %v4389
    %v5776 = vunpack.c.l.b16 %v4390
    %v5777 = vunpack.c.h.b16 %v4390
    %v5778 = vunpack.c.l.b16 %v4391
    %v5779 = vunpack.c.h.b16 %v4391
    %v5780 = vunpack.c.l.b16 %v4392
    %v5781 = vunpack.c.l.b16 %v4393
    %v5782 = vunpack.c.h.b16 %v4393
    %v5783 = vunpack.c.l.b16 %v4394
    %v5784 = vunpack.c.h.b16 %v4394
    %v5785 = vunpack.c.l.b16 %v4395
    %v5786 = vunpack.c.h.b16 %v4395
    %v5787 = vunpack.c.l.b16 %v4396
    %v5788 = vunpack.c.l.b16 %v4397
    %v5789 = vunpack.c.h.b16 %v4397
    %v5790 = vunpack.c.l.b16 %v4398
    %v5791 = vunpack.c.h.b16 %v4398
    %v5792 = vunpack.c.l.b16 %v4399
    %v5793 = vunpack.c.h.b16 %v4399
    %v5794 = vunpack.c.l.b16 %v4400
    %v5795 = vunpack.c.l.b16 %v4401
    %v5796 = vunpack.c.h.b16 %v4401
    %v5797 = vunpack.c.l.b16 %v4402
    %v5798 = vunpack.c.h.b16 %v4402
    %v5799 = vunpack.c.l.b16 %v4403
    %v5800 = vunpack.c.h.b16 %v4403
    %v5801 = vunpack.c.l.b16 %v4404
    %v5802 = vunpack.c.l.b16 %v4405
    %v5803 = vunpack.c.h.b16 %v4405
    %v5804 = vunpack.c.l.b16 %v4406
    %v5805 = vunpack.c.h.b16 %v4406
    %v5806 = vunpack.c.l.b16 %v4407
    %v5807 = vunpack.c.h.b16 %v4407
    %v5808 = vunpack.c.l.b16 %v4408
    %v5809 = vunpack.c.l.b16 %v4409
    %v5810 = vunpack.c.h.b16 %v4409
    %v5811 = vunpack.c.l.b16 %v4410
    %v5812 = vunpack.c.h.b16 %v4410
    %v5813 = vunpack.c.l.b16 %v4411
    %v5814 = vunpack.c.h.b16 %v4411
    %v5815 = vunpack.c.l.b16 %v4412
    %v5816 = vunpack.c.l.b16 %v4413
    %v5817 = vunpack.c.h.b16 %v4413
    %v5818 = vunpack.c.l.b16 %v4414
    %v5819 = vunpack.c.h.b16 %v4414
    %v5820 = vunpack.c.l.b16 %v4415
    %v5821 = vunpack.c.h.b16 %v4415
    %v5822 = vunpack.c.l.b16 %v4416
    %v5823 = vunpack.c.l.b16 %v4417
    %v5824 = vunpack.c.h.b16 %v4417
    %v5825 = vunpack.c.l.b16 %v4418
    %v5826 = vunpack.c.h.b16 %v4418
    %v5827 = vunpack.c.l.b16 %v4419
    %v5828 = vunpack.c.h.b16 %v4419
    %v5829 = vunpack.c.l.b16 %v4420
    %v5830 = vunpack.c.l.b16 %v4421
    %v5831 = vunpack.c.h.b16 %v4421
    %v5832 = vunpack.c.l.b16 %v4422
    %v5833 = vunpack.c.h.b16 %v4422
    %v5834 = vunpack.c.l.b16 %v4423
    %v5835 = vunpack.c.h.b16 %v4423
    %v5836 = vunpack.c.l.b16 %v4424
    %v5837 = vunpack.c.l.b16 %v4425
    %v5838 = vunpack.c.h.b16 %v4425
    %v5839 = vunpack.c.l.b16 %v4426
    %v5840 = vunpack.c.h.b16 %v4426
    %v5841 = vunpack.c.l.b16 %v4427
    %v5842 = vunpack.c.h.b16 %v4427
    %v5843 = vunpack.c.l.b16 %v4428
    %v5844 = vunpack.c.l.b16 %v4429
    %v5845 = vunpack.c.h.b16 %v4429
    %v5846 = vunpack.c.l.b16 %v4430
    %v5847 = vunpack.c.h.b16 %v4430
    %v5848 = vunpack.c.l.b16 %v4431
    %v5849 = vunpack.c.h.b16 %v4431
    %v5850 = vunpack.c.l.b16 %v4432
    %v5851 = vunpack.c.l.b16 %v4433
    %v5852 = vunpack.c.h.b16 %v4433
    %v5853 = vunpack.c.l.b16 %v4434
    %v5854 = vunpack.c.h.b16 %v4434
    %v5855 = vunpack.c.l.b16 %v4435
    %v5856 = vunpack.c.h.b16 %v4435
    %v5857 = vunpack.c.l.b16 %v4436
    %v5858 = vunpack.c.l.b16 %v4437
    %v5859 = vunpack.c.h.b16 %v4437
    %v5860 = vunpack.c.l.b16 %v4438
    %v5861 = vunpack.c.h.b16 %v4438
    %v5862 = vunpack.c.l.b16 %v4439
    %v5863 = vunpack.c.h.b16 %v4439
    %v5864 = vunpack.c.l.b16 %v4440
    %v5865 = vunpack.c.l.b16 %v4441
    %v5866 = vunpack.c.h.b16 %v4441
    %v5867 = vunpack.c.l.b16 %v4442
    %v5868 = vunpack.c.h.b16 %v4442
    %v5869 = vunpack.c.l.b16 %v4443
    %v5870 = vunpack.c.h.b16 %v4443
    %v5871 = vunpack.c.l.b16 %v4444
    %v5872 = vunpack.c.l.b16 %v4445
    %v5873 = vunpack.c.h.b16 %v4445
    %v5874 = vunpack.c.l.b16 %v4446
    %v5875 = vunpack.c.h.b16 %v4446
    %v5876 = vunpack.c.l.b16 %v4447
    %v5877 = vunpack.c.h.b16 %v4447
    %v5878 = vunpack.c.l.b16 %v4448
    %v5879 = vunpack.c.l.b16 %v4449
    %v5880 = vunpack.c.h.b16 %v4449
    %v5881 = vunpack.c.l.b16 %v4450
    %v5882 = vunpack.c.h.b16 %v4450
    %v5883 = vunpack.c.l.b16 %v4451
    %v5884 = vunpack.c.h.b16 %v4451
    %v5885 = vunpack.c.l.b16 %v4452
    %v5886 = vunpack.c.l.b16 %v4453
    %v5887 = vunpack.c.h.b16 %v4453
    %v5888 = vunpack.c.l.b16 %v4454
    %v5889 = vunpack.c.h.b16 %v4454
    %v5890 = vunpack.c.l.b16 %v4455
    %v5891 = vunpack.c.h.b16 %v4455
    %v5892 = vunpack.c.l.b16 %v4456
    %v5893 = vunpack.c.l.b16 %v4457
    %v5894 = vunpack.c.h.b16 %v4457
    %v5895 = vunpack.c.l.b16 %v4458
    %v5896 = vunpack.c.h.b16 %v4458
    %v5897 = vunpack.c.l.b16 %v4459
    %v5898 = vunpack.c.h.b16 %v4459
    %v5899 = vunpack.c.l.b16 %v4460
    %v5900 = vunpack.c.l.b16 %v4461
    %v5901 = vunpack.c.h.b16 %v4461
    %v5902 = vunpack.c.l.b16 %v4462
    %v5903 = vunpack.c.h.b16 %v4462
    %v5904 = vunpack.c.l.b16 %v4463
    %v5905 = vunpack.c.h.b16 %v4463
    %v5906 = vunpack.c.l.b16 %v4464
    %v5907 = vunpack.c.l.b16 %v4465
    %v5908 = vunpack.c.h.b16 %v4465
    %v5909 = vunpack.c.l.b16 %v4466
    %v5910 = vunpack.c.h.b16 %v4466
    %v5911 = vunpack.c.l.b16 %v4467
    %v5912 = vunpack.c.h.b16 %v4467
    %v5913 = vunpack.c.l.b16 %v4468
    %v5914 = vpack.c.b16 %v5025, %v5018
    %v5915 = vpack.c.b16 %v5026, %v5019
    %v5916 = vpack.c.b16 %v5027, %v5020
    %v5917 = vpack.c.b16 %v5028, %v5021
    %v5918 = vpack.c.b16 %v5029, %v5022
    %v5919 = vpack.c.b16 %v5030, %v5023
    %v5920 = vpack.c.b16 %v5031, %v5024
    %v5921 = vpack.c.b16 %v5039, %v5032
    %v5922 = vpack.c.b16 %v5040, %v5033
    %v5923 = vpack.c.b16 %v5041, %v5034
    %v5924 = vpack.c.b16 %v5042, %v5035
    %v5925 = vpack.c.b16 %v5043, %v5036
    %v5926 = vpack.c.b16 %v5044, %v5037
    %v5927 = vpack.c.b16 %v5045, %v5038
    %v5928 = vpack.c.b16 %v5053, %v5046
    %v5929 = vpack.c.b16 %v5054, %v5047
    %v5930 = vpack.c.b16 %v5055, %v5048
    %v5931 = vpack.c.b16 %v5056, %v5049
    %v5932 = vpack.c.b16 %v5057, %v5050
    %v5933 = vpack.c.b16 %v5058, %v5051
    %v5934 = vpack.c.b16 %v5059, %v5052
    %v5935 = vpack.c.b16 %v5067, %v5060
    %v5936 = vpack.c.b16 %v5068, %v5061
    %v5937 = vpack.c.b16 %v5069, %v5062
    %v5938 = vpack.c.b16 %v5070, %v5063
    %v5939 = vpack.c.b16 %v5071, %v5064
    %v5940 = vpack.c.b16 %v5072, %v5065
    %v5941 = vpack.c.b16 %v5073, %v5066
    %v5942 = vpack.c.b16 %v5081, %v5074
    %v5943 = vpack.c.b16 %v5082, %v5075
    %v5944 = vpack.c.b16 %v5083, %v5076
    %v5945 = vpack.c.b16 %v5084, %v5077
    %v5946 = vpack.c.b16 %v5085, %v5078
    %v5947 = vpack.c.b16 %v5086, %v5079
    %v5948 = vpack.c.b16 %v5087, %v5080
    %v5949 = vpack.c.b16 %v5095, %v5088
    %v5950 = vpack.c.b16 %v5096, %v5089
    %v5951 = vpack.c.b16 %v5097, %v5090
    %v5952 = vpack.c.b16 %v5098, %v5091
    %v5953 = vpack.c.b16 %v5099, %v5092
    %v5954 = vpack.c.b16 %v5100, %v5093
    %v5955 = vpack.c.b16 %v5101, %v5094
    %v5956 = vpack.c.b16 %v5109, %v5102
    %v5957 = vpack.c.b16 %v5110, %v5103
    %v5958 = vpack.c.b16 %v5111, %v5104
    %v5959 = vpack.c.b16 %v5112, %v5105
    %v5960 = vpack.c.b16 %v5113, %v5106
    %v5961 = vpack.c.b16 %v5114, %v5107
    %v5962 = vpack.c.b16 %v5115, %v5108
    %v5963 = vpack.c.b16 %v5123, %v5116
    %v5964 = vpack.c.b16 %v5124, %v5117
    %v5965 = vpack.c.b16 %v5125, %v5118
    %v5966 = vpack.c.b16 %v5126, %v5119
    %v5967 = vpack.c.b16 %v5127, %v5120
    %v5968 = vpack.c.b16 %v5128, %v5121
    %v5969 = vpack.c.b16 %v5129, %v5122
    %v5970 = vpack.c.b16 %v5137, %v5130
    %v5971 = vpack.c.b16 %v5138, %v5131
    %v5972 = vpack.c.b16 %v5139, %v5132
    %v5973 = vpack.c.b16 %v5140, %v5133
    %v5974 = vpack.c.b16 %v5141, %v5134
    %v5975 = vpack.c.b16 %v5142, %v5135
    %v5976 = vpack.c.b16 %v5143, %v5136
    %v5977 = vpack.c.b16 %v5151, %v5144
    %v5978 = vpack.c.b16 %v5152, %v5145
    %v5979 = vpack.c.b16 %v5153, %v5146
    %v5980 = vpack.c.b16 %v5154, %v5147
    %v5981 = vpack.c.b16 %v5155, %v5148
    %v5982 = vpack.c.b16 %v5156, %v5149
    %v5983 = vpack.c.b16 %v5157, %v5150
    %v5984 = vpack.c.b16 %v5165, %v5158
    %v5985 = vpack.c.b16 %v5166, %v5159
    %v5986 = vpack.c.b16 %v5167, %v5160
    %v5987 = vpack.c.b16 %v5168, %v5161
    %v5988 = vpack.c.b16 %v5169, %v5162
    %v5989 = vpack.c.b16 %v5170, %v5163
    %v5990 = vpack.c.b16 %v5171, %v5164
    %v5991 = vpack.c.b16 %v5179, %v5172
    %v5992 = vpack.c.b16 %v5180, %v5173
    %v5993 = vpack.c.b16 %v5181, %v5174
    %v5994 = vpack.c.b16 %v5182, %v5175
    %v5995 = vpack.c.b16 %v5183, %v5176
    %v5996 = vpack.c.b16 %v5184, %v5177
    %v5997 = vpack.c.b16 %v5185, %v5178
    %v5998 = vpack.c.b16 %v5193, %v5186
    %v5999 = vpack.c.b16 %v5194, %v5187
    %v6000 = vpack.c.b16 %v5195, %v5188
    %v6001 = vpack.c.b16 %v5196, %v5189
    %v6002 = vpack.c.b16 %v5197, %v5190
    %v6003 = vpack.c.b16 %v5198, %v5191
    %v6004 = vpack.c.b16 %v5199, %v5192
    %v6005 = vpack.c.b16 %v5207, %v5200
    %v6006 = vpack.c.b16 %v5208, %v5201
    %v6007 = vpack.c.b16 %v5209, %v5202
    %v6008 = vpack.c.b16 %v5210, %v5203
    %v6009 = vpack.c.b16 %v5211, %v5204
    %v6010 = vpack.c.b16 %v5212, %v5205
    %v6011 = vpack.c.b16 %v5213, %v5206
    %v6012 = vpack.c.b16 %v5221, %v5214
    %v6013 = vpack.c.b16 %v5222, %v5215
    %v6014 = vpack.c.b16 %v5223, %v5216
    %v6015 = vpack.c.b16 %v5224, %v5217
    %v6016 = vpack.c.b16 %v5225, %v5218
    %v6017 = vpack.c.b16 %v5226, %v5219
    %v6018 = vpack.c.b16 %v5227, %v5220
    %v6019 = vpack.c.b16 %v5235, %v5228
    %v6020 = vpack.c.b16 %v5236, %v5229
    %v6021 = vpack.c.b16 %v5237, %v5230
    %v6022 = vpack.c.b16 %v5238, %v5231
    %v6023 = vpack.c.b16 %v5239, %v5232
    %v6024 = vpack.c.b16 %v5240, %v5233
    %v6025 = vpack.c.b16 %v5241, %v5234
    %v6026 = vpack.c.b16 %v5249, %v5242
    %v6027 = vpack.c.b16 %v5250, %v5243
    %v6028 = vpack.c.b16 %v5251, %v5244
    %v6029 = vpack.c.b16 %v5252, %v5245
    %v6030 = vpack.c.b16 %v5253, %v5246
    %v6031 = vpack.c.b16 %v5254, %v5247
    %v6032 = vpack.c.b16 %v5255, %v5248
    %v6033 = vpack.c.b16 %v5263, %v5256
    %v6034 = vpack.c.b16 %v5264, %v5257
    %v6035 = vpack.c.b16 %v5265, %v5258
    %v6036 = vpack.c.b16 %v5266, %v5259
    %v6037 = vpack.c.b16 %v5267, %v5260
    %v6038 = vpack.c.b16 %v5268, %v5261
    %v6039 = vpack.c.b16 %v5269, %v5262
    %v6040 = vpack.c.b16 %v5277, %v5270
    %v6041 = vpack.c.b16 %v5278, %v5271
    %v6042 = vpack.c.b16 %v5279, %v5272
    %v6043 = vpack.c.b16 %v5280, %v5273
    %v6044 = vpack.c.b16 %v5281, %v5274
    %v6045 = vpack.c.b16 %v5282, %v5275
    %v6046 = vpack.c.b16 %v5283, %v5276
    %v6047 = vpack.c.b16 %v5291, %v5284
    %v6048 = vpack.c.b16 %v5292, %v5285
    %v6049 = vpack.c.b16 %v5293, %v5286
    %v6050 = vpack.c.b16 %v5294, %v5287
    %v6051 = vpack.c.b16 %v5295, %v5288
    %v6052 = vpack.c.b16 %v5296, %v5289
    %v6053 = vpack.c.b16 %v5297, %v5290
    %v6054 = vpack.c.b16 %v5305, %v5298
    %v6055 = vpack.c.b16 %v5306, %v5299
    %v6056 = vpack.c.b16 %v5307, %v5300
    %v6057 = vpack.c.b16 %v5308, %v5301
    %v6058 = vpack.c.b16 %v5309, %v5302
    %v6059 = vpack.c.b16 %v5310, %v5303
    %v6060 = vpack.c.b16 %v5311, %v5304
    %v6061 = vpack.c.b16 %v5319, %v5312
    %v6062 = vpack.c.b16 %v5320, %v5313
    %v6063 = vpack.c.b16 %v5321, %v5314
    %v6064 = vpack.c.b16 %v5322, %v5315
    %v6065 = vpack.c.b16 %v5323, %v5316
    %v6066 = vpack.c.b16 %v5324, %v5317
    %v6067 = vpack.c.b16 %v5325, %v5318
    %v6068 = vpack.c.b16 %v5333, %v5326
    %v6069 = vpack.c.b16 %v5334, %v5327
    %v6070 = vpack.c.b16 %v5335, %v5328
    %v6071 = vpack.c.b16 %v5336, %v5329
    %v6072 = vpack.c.b16 %v5337, %v5330
    %v6073 = vpack.c.b16 %v5338, %v5331
    %v6074 = vpack.c.b16 %v5339, %v5332
    %v6075 = vpack.c.b16 %v5347, %v5340
    %v6076 = vpack.c.b16 %v5348, %v5341
    %v6077 = vpack.c.b16 %v5349, %v5342
    %v6078 = vpack.c.b16 %v5350, %v5343
    %v6079 = vpack.c.b16 %v5351, %v5344
    %v6080 = vpack.c.b16 %v5352, %v5345
    %v6081 = vpack.c.b16 %v5353, %v5346
    %v6082 = vpack.c.b16 %v5361, %v5354
    %v6083 = vpack.c.b16 %v5362, %v5355
    %v6084 = vpack.c.b16 %v5363, %v5356
    %v6085 = vpack.c.b16 %v5364, %v5357
    %v6086 = vpack.c.b16 %v5365, %v5358
    %v6087 = vpack.c.b16 %v5366, %v5359
    %v6088 = vpack.c.b16 %v5367, %v5360
    %v6089 = vpack.c.b16 %v5375, %v5368
    %v6090 = vpack.c.b16 %v5376, %v5369
    %v6091 = vpack.c.b16 %v5377, %v5370
    %v6092 = vpack.c.b16 %v5378, %v5371
    %v6093 = vpack.c.b16 %v5379, %v5372
    %v6094 = vpack.c.b16 %v5380, %v5373
    %v6095 = vpack.c.b16 %v5381, %v5374
    %v6096 = vpack.c.b16 %v5389, %v5382
    %v6097 = vpack.c.b16 %v5390, %v5383
    %v6098 = vpack.c.b16 %v5391, %v5384
    %v6099 = vpack.c.b16 %v5392, %v5385
    %v6100 = vpack.c.b16 %v5393, %v5386
    %v6101 = vpack.c.b16 %v5394, %v5387
    %v6102 = vpack.c.b16 %v5395, %v5388
    %v6103 = vpack.c.b16 %v5403, %v5396
    %v6104 = vpack.c.b16 %v5404, %v5397
    %v6105 = vpack.c.b16 %v5405, %v5398
    %v6106 = vpack.c.b16 %v5406, %v5399
    %v6107 = vpack.c.b16 %v5407, %v5400
    %v6108 = vpack.c.b16 %v5408, %v5401
    %v6109 = vpack.c.b16 %v5409, %v5402
    %v6110 = vpack.c.b16 %v5417, %v5410
    %v6111 = vpack.c.b16 %v5418, %v5411
    %v6112 = vpack.c.b16 %v5419, %v5412
    %v6113 = vpack.c.b16 %v5420, %v5413
    %v6114 = vpack.c.b16 %v5421, %v5414
    %v6115 = vpack.c.b16 %v5422, %v5415
    %v6116 = vpack.c.b16 %v5423, %v5416
    %v6117 = vpack.c.b16 %v5431, %v5424
    %v6118 = vpack.c.b16 %v5432, %v5425
    %v6119 = vpack.c.b16 %v5433, %v5426
    %v6120 = vpack.c.b16 %v5434, %v5427
    %v6121 = vpack.c.b16 %v5435, %v5428
    %v6122 = vpack.c.b16 %v5436, %v5429
    %v6123 = vpack.c.b16 %v5437, %v5430
    %v6124 = vpack.c.b16 %v5445, %v5438
    %v6125 = vpack.c.b16 %v5446, %v5439
    %v6126 = vpack.c.b16 %v5447, %v5440
    %v6127 = vpack.c.b16 %v5448, %v5441
    %v6128 = vpack.c.b16 %v5449, %v5442
    %v6129 = vpack.c.b16 %v5450, %v5443
    %v6130 = vpack.c.b16 %v5451, %v5444
    %v6131 = vpack.c.b16 %v5459, %v5452
    %v6132 = vpack.c.b16 %v5460, %v5453
    %v6133 = vpack.c.b16 %v5461, %v5454
    %v6134 = vpack.c.b16 %v5462, %v5455
    %v6135 = vpack.c.b16 %v5463, %v5456
    %v6136 = vpack.c.b16 %v5464, %v5457
    %v6137 = vpack.c.b16 %v5465, %v5458
    %v6138 = vpack.c.b16 %v5473, %v5466
    %v6139 = vpack.c.b16 %v5474, %v5467
    %v6140 = vpack.c.b16 %v5475, %v5468
    %v6141 = vpack.c.b16 %v5476, %v5469
    %v6142 = vpack.c.b16 %v5477, %v5470
    %v6143 = vpack.c.b16 %v5478, %v5471
    %v6144 = vpack.c.b16 %v5479, %v5472
    %v6145 = vpack.c.b16 %v5487, %v5480
    %v6146 = vpack.c.b16 %v5488, %v5481
    %v6147 = vpack.c.b16 %v5489, %v5482
    %v6148 = vpack.c.b16 %v5490, %v5483
    %v6149 = vpack.c.b16 %v5491, %v5484
    %v6150 = vpack.c.b16 %v5492, %v5485
    %v6151 = vpack.c.b16 %v5493, %v5486
    %v6152 = vpack.c.b16 %v5501, %v5494
    %v6153 = vpack.c.b16 %v5502, %v5495
    %v6154 = vpack.c.b16 %v5503, %v5496
    %v6155 = vpack.c.b16 %v5504, %v5497
    %v6156 = vpack.c.b16 %v5505, %v5498
    %v6157 = vpack.c.b16 %v5506, %v5499
    %v6158 = vpack.c.b16 %v5507, %v5500
    %v6159 = vpack.c.b16 %v5515, %v5508
    %v6160 = vpack.c.b16 %v5516, %v5509
    %v6161 = vpack.c.b16 %v5517, %v5510
    %v6162 = vpack.c.b16 %v5518, %v5511
    %v6163 = vpack.c.b16 %v5519, %v5512
    %v6164 = vpack.c.b16 %v5520, %v5513
    %v6165 = vpack.c.b16 %v5521, %v5514
    %v6166 = vpack.c.b16 %v5529, %v5522
    %v6167 = vpack.c.b16 %v5530, %v5523
    %v6168 = vpack.c.b16 %v5531, %v5524
    %v6169 = vpack.c.b16 %v5532, %v5525
    %v6170 = vpack.c.b16 %v5533, %v5526
    %v6171 = vpack.c.b16 %v5534, %v5527
    %v6172 = vpack.c.b16 %v5535, %v5528
    %v6173 = vpack.c.b16 %v5543, %v5536
    %v6174 = vpack.c.b16 %v5544, %v5537
    %v6175 = vpack.c.b16 %v5545, %v5538
    %v6176 = vpack.c.b16 %v5546, %v5539
    %v6177 = vpack.c.b16 %v5547, %v5540
    %v6178 = vpack.c.b16 %v5548, %v5541
    %v6179 = vpack.c.b16 %v5549, %v5542
    %v6180 = vpack.c.b16 %v5557, %v5550
    %v6181 = vpack.c.b16 %v5558, %v5551
    %v6182 = vpack.c.b16 %v5559, %v5552
    %v6183 = vpack.c.b16 %v5560, %v5553
    %v6184 = vpack.c.b16 %v5561, %v5554
    %v6185 = vpack.c.b16 %v5562, %v5555
    %v6186 = vpack.c.b16 %v5563, %v5556
    %v6187 = vpack.c.b16 %v5571, %v5564
    %v6188 = vpack.c.b16 %v5572, %v5565
    %v6189 = vpack.c.b16 %v5573, %v5566
    %v6190 = vpack.c.b16 %v5574, %v5567
    %v6191 = vpack.c.b16 %v5575, %v5568
    %v6192 = vpack.c.b16 %v5576, %v5569
    %v6193 = vpack.c.b16 %v5577, %v5570
    %v6194 = vpack.c.b16 %v5585, %v5578
    %v6195 = vpack.c.b16 %v5586, %v5579
    %v6196 = vpack.c.b16 %v5587, %v5580
    %v6197 = vpack.c.b16 %v5588, %v5581
    %v6198 = vpack.c.b16 %v5589, %v5582
    %v6199 = vpack.c.b16 %v5590, %v5583
    %v6200 = vpack.c.b16 %v5591, %v5584
    %v6201 = vpack.c.b16 %v5599, %v5592
    %v6202 = vpack.c.b16 %v5600, %v5593
    %v6203 = vpack.c.b16 %v5601, %v5594
    %v6204 = vpack.c.b16 %v5602, %v5595
    %v6205 = vpack.c.b16 %v5603, %v5596
    %v6206 = vpack.c.b16 %v5604, %v5597
    %v6207 = vpack.c.b16 %v5605, %v5598
    %v6208 = vpack.c.b16 %v5613, %v5606
    %v6209 = vpack.c.b16 %v5614, %v5607
    %v6210 = vpack.c.b16 %v5615, %v5608
    %v6211 = vpack.c.b16 %v5616, %v5609
    %v6212 = vpack.c.b16 %v5617, %v5610
    %v6213 = vpack.c.b16 %v5618, %v5611
    %v6214 = vpack.c.b16 %v5619, %v5612
    %v6215 = vpack.c.b16 %v5627, %v5620
    %v6216 = vpack.c.b16 %v5628, %v5621
    %v6217 = vpack.c.b16 %v5629, %v5622
    %v6218 = vpack.c.b16 %v5630, %v5623
    %v6219 = vpack.c.b16 %v5631, %v5624
    %v6220 = vpack.c.b16 %v5632, %v5625
    %v6221 = vpack.c.b16 %v5633, %v5626
    %v6222 = vpack.c.b16 %v5641, %v5634
    %v6223 = vpack.c.b16 %v5642, %v5635
    %v6224 = vpack.c.b16 %v5643, %v5636
    %v6225 = vpack.c.b16 %v5644, %v5637
    %v6226 = vpack.c.b16 %v5645, %v5638
    %v6227 = vpack.c.b16 %v5646, %v5639
    %v6228 = vpack.c.b16 %v5647, %v5640
    %v6229 = vpack.c.b16 %v5655, %v5648
    %v6230 = vpack.c.b16 %v5656, %v5649
    %v6231 = vpack.c.b16 %v5657, %v5650
    %v6232 = vpack.c.b16 %v5658, %v5651
    %v6233 = vpack.c.b16 %v5659, %v5652
    %v6234 = vpack.c.b16 %v5660, %v5653
    %v6235 = vpack.c.b16 %v5661, %v5654
    %v6236 = vpack.c.b16 %v5669, %v5662
    %v6237 = vpack.c.b16 %v5670, %v5663
    %v6238 = vpack.c.b16 %v5671, %v5664
    %v6239 = vpack.c.b16 %v5672, %v5665
    %v6240 = vpack.c.b16 %v5673, %v5666
    %v6241 = vpack.c.b16 %v5674, %v5667
    %v6242 = vpack.c.b16 %v5675, %v5668
    %v6243 = vpack.c.b16 %v5683, %v5676
    %v6244 = vpack.c.b16 %v5684, %v5677
    %v6245 = vpack.c.b16 %v5685, %v5678
    %v6246 = vpack.c.b16 %v5686, %v5679
    %v6247 = vpack.c.b16 %v5687, %v5680
    %v6248 = vpack.c.b16 %v5688, %v5681
    %v6249 = vpack.c.b16 %v5689, %v5682
    %v6250 = vpack.c.b16 %v5697, %v5690
    %v6251 = vpack.c.b16 %v5698, %v5691
    %v6252 = vpack.c.b16 %v5699, %v5692
    %v6253 = vpack.c.b16 %v5700, %v5693
    %v6254 = vpack.c.b16 %v5701, %v5694
    %v6255 = vpack.c.b16 %v5702, %v5695
    %v6256 = vpack.c.b16 %v5703, %v5696
    %v6257 = vpack.c.b16 %v5711, %v5704
    %v6258 = vpack.c.b16 %v5712, %v5705
    %v6259 = vpack.c.b16 %v5713, %v5706
    %v6260 = vpack.c.b16 %v5714, %v5707
    %v6261 = vpack.c.b16 %v5715, %v5708
    %v6262 = vpack.c.b16 %v5716, %v5709
    %v6263 = vpack.c.b16 %v5717, %v5710
    %v6264 = vpack.c.b16 %v5725, %v5718
    %v6265 = vpack.c.b16 %v5726, %v5719
    %v6266 = vpack.c.b16 %v5727, %v5720
    %v6267 = vpack.c.b16 %v5728, %v5721
    %v6268 = vpack.c.b16 %v5729, %v5722
    %v6269 = vpack.c.b16 %v5730, %v5723
    %v6270 = vpack.c.b16 %v5731, %v5724
    %v6271 = vpack.c.b16 %v5739, %v5732
    %v6272 = vpack.c.b16 %v5740, %v5733
    %v6273 = vpack.c.b16 %v5741, %v5734
    %v6274 = vpack.c.b16 %v5742, %v5735
    %v6275 = vpack.c.b16 %v5743, %v5736
    %v6276 = vpack.c.b16 %v5744, %v5737
    %v6277 = vpack.c.b16 %v5745, %v5738
    %v6278 = vpack.c.b16 %v5753, %v5746
    %v6279 = vpack.c.b16 %v5754, %v5747
    %v6280 = vpack.c.b16 %v5755, %v5748
    %v6281 = vpack.c.b16 %v5756, %v5749
    %v6282 = vpack.c.b16 %v5757, %v5750
    %v6283 = vpack.c.b16 %v5758, %v5751
    %v6284 = vpack.c.b16 %v5759, %v5752
    %v6285 = vpack.c.b16 %v5767, %v5760
    %v6286 = vpack.c.b16 %v5768, %v5761
    %v6287 = vpack.c.b16 %v5769, %v5762
    %v6288 = vpack.c.b16 %v5770, %v5763
    %v6289 = vpack.c.b16 %v5771, %v5764
    %v6290 = vpack.c.b16 %v5772, %v5765
    %v6291 = vpack.c.b16 %v5773, %v5766
    %v6292 = vpack.c.b16 %v5781, %v5774
    %v6293 = vpack.c.b16 %v5782, %v5775
    %v6294 = vpack.c.b16 %v5783, %v5776
    %v6295 = vpack.c.b16 %v5784, %v5777
    %v6296 = vpack.c.b16 %v5785, %v5778
    %v6297 = vpack.c.b16 %v5786, %v5779
    %v6298 = vpack.c.b16 %v5787, %v5780
    %v6299 = vpack.c.b16 %v5795, %v5788
    %v6300 = vpack.c.b16 %v5796, %v5789
    %v6301 = vpack.c.b16 %v5797, %v5790
    %v6302 = vpack.c.b16 %v5798, %v5791
    %v6303 = vpack.c.b16 %v5799, %v5792
    %v6304 = vpack.c.b16 %v5800, %v5793
    %v6305 = vpack.c.b16 %v5801, %v5794
    %v6306 = vpack.c.b16 %v5809, %v5802
    %v6307 = vpack.c.b16 %v5810, %v5803
    %v6308 = vpack.c.b16 %v5811, %v5804
    %v6309 = vpack.c.b16 %v5812, %v5805
    %v6310 = vpack.c.b16 %v5813, %v5806
    %v6311 = vpack.c.b16 %v5814, %v5807
    %v6312 = vpack.c.b16 %v5815, %v5808
    %v6313 = vpack.c.b16 %v5823, %v5816
    %v6314 = vpack.c.b16 %v5824, %v5817
    %v6315 = vpack.c.b16 %v5825, %v5818
    %v6316 = vpack.c.b16 %v5826, %v5819
    %v6317 = vpack.c.b16 %v5827, %v5820
    %v6318 = vpack.c.b16 %v5828, %v5821
    %v6319 = vpack.c.b16 %v5829, %v5822
    %v6320 = vpack.c.b16 %v5837, %v5830
    %v6321 = vpack.c.b16 %v5838, %v5831
    %v6322 = vpack.c.b16 %v5839, %v5832
    %v6323 = vpack.c.b16 %v5840, %v5833
    %v6324 = vpack.c.b16 %v5841, %v5834
    %v6325 = vpack.c.b16 %v5842, %v5835
    %v6326 = vpack.c.b16 %v5843, %v5836
    %v6327 = vpack.c.b16 %v5851, %v5844
    %v6328 = vpack.c.b16 %v5852, %v5845
    %v6329 = vpack.c.b16 %v5853, %v5846
    %v6330 = vpack.c.b16 %v5854, %v5847
    %v6331 = vpack.c.b16 %v5855, %v5848
    %v6332 = vpack.c.b16 %v5856, %v5849
    %v6333 = vpack.c.b16 %v5857, %v5850
    %v6334 = vpack.c.b16 %v5865, %v5858
    %v6335 = vpack.c.b16 %v5866, %v5859
    %v6336 = vpack.c.b16 %v5867, %v5860
    %v6337 = vpack.c.b16 %v5868, %v5861
    %v6338 = vpack.c.b16 %v5869, %v5862
    %v6339 = vpack.c.b16 %v5870, %v5863
    %v6340 = vpack.c.b16 %v5871, %v5864
    %v6341 = vpack.c.b16 %v5879, %v5872
    %v6342 = vpack.c.b16 %v5880, %v5873
    %v6343 = vpack.c.b16 %v5881, %v5874
    %v6344 = vpack.c.b16 %v5882, %v5875
    %v6345 = vpack.c.b16 %v5883, %v5876
    %v6346 = vpack.c.b16 %v5884, %v5877
    %v6347 = vpack.c.b16 %v5885, %v5878
    %v6348 = vpack.c.b16 %v5893, %v5886
    %v6349 = vpack.c.b16 %v5894, %v5887
    %v6350 = vpack.c.b16 %v5895, %v5888
    %v6351 = vpack.c.b16 %v5896, %v5889
    %v6352 = vpack.c.b16 %v5897, %v5890
    %v6353 = vpack.c.b16 %v5898, %v5891
    %v6354 = vpack.c.b16 %v5899, %v5892
    %v6355 = vpack.c.b16 %v5907, %v5900
    %v6356 = vpack.c.b16 %v5908, %v5901
    %v6357 = vpack.c.b16 %v5909, %v5902
    %v6358 = vpack.c.b16 %v5910, %v5903
    %v6359 = vpack.c.b16 %v5911, %v5904
    %v6360 = vpack.c.b16 %v5912, %v5905
    %v6361 = vpack.c.b16 %v5913, %v5906
    %6810 = vmatprep.subr.bf16.mxu0 %v5964
    %6811 = vmatpush1.bf16.msra.mxu0 %v5963
    %6812 = vmatprep.subr.bf16.mxu0 %v5957
    %6813 = vmatpush1.bf16.msra.mxu0 %v5956
    %6814 = vmatprep.subr.bf16.mxu0 %v5950
    %6815 = vmatpush1.bf16.msra.mxu0 %v5949
    %6816 = vmatprep.subr.bf16.mxu0 %v5943
    %6817 = vmatpush1.bf16.msra.mxu0 %v5942
    %6818 = vmatprep.subr.bf16.mxu0 %v5936
    %6819 = vmatpush1.bf16.msra.mxu0 %v5935
    %6820 = vmatprep.subr.bf16.mxu0 %v5929
    %6821 = vmatpush1.bf16.msra.mxu0 %v5928
    %6822 = vmatprep.subr.bf16.mxu0 %v5922
    %6823 = vmatpush1.bf16.msra.mxu0 %v5921
    %6824 = vmatprep.subr.bf16.mxu0 %v5915
    %6825 = vmatpush1.bf16.msra.mxu0 %v5914
    %6826 = vmatprep.subr.bf16.mxu0 %v6020
    %6827 = vmatpush2.bf16.msra.mxu0 %v6019
    %6828 = vmatprep.subr.bf16.mxu0 %v6013
    %6829 = vmatpush2.bf16.msra.mxu0 %v6012
    %6830 = vmatprep.subr.bf16.mxu0 %v6006
    %6831 = vmatpush2.bf16.msra.mxu0 %v6005
    %6832 = vmatprep.subr.bf16.mxu0 %v5999
    %6833 = vmatpush2.bf16.msra.mxu0 %v5998
    %6834 = vmatprep.subr.bf16.mxu0 %v5992
    %6835 = vmatpush2.bf16.msra.mxu0 %v5991
    %6836 = vmatprep.subr.bf16.mxu0 %v5985
    %6837 = vmatpush2.bf16.msra.mxu0 %v5984
    %6838 = vmatprep.subr.bf16.mxu0 %v5978
    %6839 = vmatpush2.bf16.msra.mxu0 %v5977
    %6840 = vmatprep.subr.bf16.mxu0 %v5971
    %6841 = vmatpush2.bf16.msra.mxu0 %v5970
    %6842 = vmatprep.mubr.bf16.mxu0 %v3950
    %6843 = vmatmul.mubr.bf16.gmra.mxu0 %v3949
    %v6844 = vpop.f32.mrf.mxu0
    %v6845 = vadd.f32 %v4474, %v6844
    %v6846 = vpop.f32.mrf.mxu0
    %v6847 = vadd.f32 %v4478, %v6846
    %v6848 = vpop.f32.mrf.mxu0
    %v6849 = vpop.f32.mrf.mxu0
    %6850 = vdwg.mxu0
    %6851 = vmatprep.subr.bf16.mxu0 %v6076
    %6852 = vmatpush1.bf16.msra.mxu0 %v6075
    %6853 = vmatprep.subr.bf16.mxu0 %v6069
    %6854 = vmatpush1.bf16.msra.mxu0 %v6068
    %6855 = vmatprep.subr.bf16.mxu0 %v6062
    %6856 = vmatpush1.bf16.msra.mxu0 %v6061
    %6857 = vmatprep.subr.bf16.mxu0 %v6055
    %6858 = vmatpush1.bf16.msra.mxu0 %v6054
    %6859 = vmatprep.subr.bf16.mxu0 %v6048
    %6860 = vmatpush1.bf16.msra.mxu0 %v6047
    %6861 = vmatprep.subr.bf16.mxu0 %v6041
    %6862 = vmatpush1.bf16.msra.mxu0 %v6040
    %6863 = vmatprep.subr.bf16.mxu0 %v6034
    %6864 = vmatpush1.bf16.msra.mxu0 %v6033
    %6865 = vmatprep.subr.bf16.mxu0 %v6027
    %6866 = vmatpush1.bf16.msra.mxu0 %v6026
    %6867 = vmatprep.subr.bf16.mxu0 %v6132
    %6868 = vmatpush2.bf16.msra.mxu0 %v6131
    %6869 = vmatprep.subr.bf16.mxu0 %v6125
    %6870 = vmatpush2.bf16.msra.mxu0 %v6124
    %6871 = vmatprep.subr.bf16.mxu0 %v6118
    %6872 = vmatpush2.bf16.msra.mxu0 %v6117
    %6873 = vmatprep.subr.bf16.mxu0 %v6111
    %6874 = vmatpush2.bf16.msra.mxu0 %v6110
    %6875 = vmatprep.subr.bf16.mxu0 %v6104
    %6876 = vmatpush2.bf16.msra.mxu0 %v6103
    %6877 = vmatprep.subr.bf16.mxu0 %v6097
    %6878 = vmatpush2.bf16.msra.mxu0 %v6096
    %6879 = vmatprep.subr.bf16.mxu0 %v6090
    %6880 = vmatpush2.bf16.msra.mxu0 %v6089
    %6881 = vmatprep.subr.bf16.mxu0 %v6083
    %6882 = vmatpush2.bf16.msra.mxu0 %v6082
    %6883 = vmatprep.mubr.bf16.mxu0 %v3952
    %6884 = vmatmul.mubr.bf16.gmra.mxu0 %v3951
    %v6885 = vpop.f32.mrf.mxu0
    %v6886 = vadd.f32 %v6845, %v6885
    %v6887 = vpop.f32.mrf.mxu0
    %v6888 = vadd.f32 %v6847, %v6887
    %v6889 = vpop.f32.mrf.mxu0
    %v6890 = vpop.f32.mrf.mxu0
    %6891 = vdwg.mxu0
    %6892 = vmatprep.subr.bf16.mxu0 %v6188
    %6893 = vmatpush1.bf16.msra.mxu0 %v6187
    %6894 = vmatprep.subr.bf16.mxu0 %v6181
    %6895 = vmatpush1.bf16.msra.mxu0 %v6180
    %6896 = vmatprep.subr.bf16.mxu0 %v6174
    %6897 = vmatpush1.bf16.msra.mxu0 %v6173
    %6898 = vmatprep.subr.bf16.mxu0 %v6167
    %6899 = vmatpush1.bf16.msra.mxu0 %v6166
    %6900 = vmatprep.subr.bf16.mxu0 %v6160
    %6901 = vmatpush1.bf16.msra.mxu0 %v6159
    %6902 = vmatprep.subr.bf16.mxu0 %v6153
    %6903 = vmatpush1.bf16.msra.mxu0 %v6152
    %6904 = vmatprep.subr.bf16.mxu0 %v6146
    %6905 = vmatpush1.bf16.msra.mxu0 %v6145
    %6906 = vmatprep.subr.bf16.mxu0 %v6139
    %6907 = vmatpush1.bf16.msra.mxu0 %v6138
    %6908 = vmatprep.subr.bf16.mxu0 %v6244
    %6909 = vmatpush2.bf16.msra.mxu0 %v6243
    %6910 = vmatprep.subr.bf16.mxu0 %v6237
    %6911 = vmatpush2.bf16.msra.mxu0 %v6236
    %6912 = vmatprep.subr.bf16.mxu0 %v6230
    %6913 = vmatpush2.bf16.msra.mxu0 %v6229
    %6914 = vmatprep.subr.bf16.mxu0 %v6223
    %6915 = vmatpush2.bf16.msra.mxu0 %v6222
    %6916 = vmatprep.subr.bf16.mxu0 %v6216
    %6917 = vmatpush2.bf16.msra.mxu0 %v6215
    %6918 = vmatprep.subr.bf16.mxu0 %v6209
    %6919 = vmatpush2.bf16.msra.mxu0 %v6208
    %6920 = vmatprep.subr.bf16.mxu0 %v6202
    %6921 = vmatpush2.bf16.msra.mxu0 %v6201
    %6922 = vmatprep.subr.bf16.mxu0 %v6195
    %6923 = vmatpush2.bf16.msra.mxu0 %v6194
    %6924 = vmatprep.mubr.bf16.mxu0 %v3954
    %6925 = vmatmul.mubr.bf16.gmra.mxu0 %v3953
    %v6926 = vpop.f32.mrf.mxu0
    %v6927 = vadd.f32 %v6886, %v6926
    %v6928 = vpop.f32.mrf.mxu0
    %v6929 = vadd.f32 %v6888, %v6928
    %v6930 = vpop.f32.mrf.mxu0
    %v6931 = vpop.f32.mrf.mxu0
    %6932 = vdwg.mxu0
    %6933 = vmatprep.subr.bf16.mxu0 %v6300
    %6934 = vmatpush1.bf16.msra.mxu0 %v6299
    %6935 = vmatprep.subr.bf16.mxu0 %v6293
    %6936 = vmatpush1.bf16.msra.mxu0 %v6292
    %6937 = vmatprep.subr.bf16.mxu0 %v6286
    %6938 = vmatpush1.bf16.msra.mxu0 %v6285
    %6939 = vmatprep.subr.bf16.mxu0 %v6279
    %6940 = vmatpush1.bf16.msra.mxu0 %v6278
    %6941 = vmatprep.subr.bf16.mxu0 %v6272
    %6942 = vmatpush1.bf16.msra.mxu0 %v6271
    %6943 = vmatprep.subr.bf16.mxu0 %v6265
    %6944 = vmatpush1.bf16.msra.mxu0 %v6264
    %6945 = vmatprep.subr.bf16.mxu0 %v6258
    %6946 = vmatpush1.bf16.msra.mxu0 %v6257
    %6947 = vmatprep.subr.bf16.mxu0 %v6251
    %6948 = vmatpush1.bf16.msra.mxu0 %v6250
    %6949 = vmatprep.subr.bf16.mxu0 %v6356
    %6950 = vmatpush2.bf16.msra.mxu0 %v6355
    %6951 = vmatprep.subr.bf16.mxu0 %v6349
    %6952 = vmatpush2.bf16.msra.mxu0 %v6348
    %6953 = vmatprep.subr.bf16.mxu0 %v6342
    %6954 = vmatpush2.bf16.msra.mxu0 %v6341
    %6955 = vmatprep.subr.bf16.mxu0 %v6335
    %6956 = vmatpush2.bf16.msra.mxu0 %v6334
    %6957 = vmatprep.subr.bf16.mxu0 %v6328
    %6958 = vmatpush2.bf16.msra.mxu0 %v6327
    %6959 = vmatprep.subr.bf16.mxu0 %v6321
    %6960 = vmatpush2.bf16.msra.mxu0 %v6320
    %6961 = vmatprep.subr.bf16.mxu0 %v6314
    %6962 = vmatpush2.bf16.msra.mxu0 %v6313
    %6963 = vmatprep.subr.bf16.mxu0 %v6307
    %6964 = vmatpush2.bf16.msra.mxu0 %v6306
    %6965 = vmatprep.mubr.bf16.mxu0 %v3956
    %6966 = vmatmul.mubr.bf16.gmra.mxu0 %v3955
    %v6967 = vpop.f32.mrf.mxu0
    %v6968 = vadd.f32 %v6927, %v6967
    %v6969 = vpop.f32.mrf.mxu0
    %v6970 = vadd.f32 %v6929, %v6969
    %v6971 = vpop.f32.mrf.mxu0
    %v6972 = vpop.f32.mrf.mxu0
    %6973 = vdwg.mxu0
    %6974 = vmatprep.subr.bf16.mxu0 %v5966
    %6975 = vmatpush1.bf16.msra.mxu0 %v5965
    %6976 = vmatprep.subr.bf16.mxu0 %v5959
    %6977 = vmatpush1.bf16.msra.mxu0 %v5958
    %6978 = vmatprep.subr.bf16.mxu0 %v5952
    %6979 = vmatpush1.bf16.msra.mxu0 %v5951
    %6980 = vmatprep.subr.bf16.mxu0 %v5945
    %6981 = vmatpush1.bf16.msra.mxu0 %v5944
    %6982 = vmatprep.subr.bf16.mxu0 %v5938
    %6983 = vmatpush1.bf16.msra.mxu0 %v5937
    %6984 = vmatprep.subr.bf16.mxu0 %v5931
    %6985 = vmatpush1.bf16.msra.mxu0 %v5930
    %6986 = vmatprep.subr.bf16.mxu0 %v5924
    %6987 = vmatpush1.bf16.msra.mxu0 %v5923
    %6988 = vmatprep.subr.bf16.mxu0 %v5917
    %6989 = vmatpush1.bf16.msra.mxu0 %v5916
    %6990 = vmatprep.subr.bf16.mxu0 %v6022
    %6991 = vmatpush2.bf16.msra.mxu0 %v6021
    %6992 = vmatprep.subr.bf16.mxu0 %v6015
    %6993 = vmatpush2.bf16.msra.mxu0 %v6014
    %6994 = vmatprep.subr.bf16.mxu0 %v6008
    %6995 = vmatpush2.bf16.msra.mxu0 %v6007
    %6996 = vmatprep.subr.bf16.mxu0 %v6001
    %6997 = vmatpush2.bf16.msra.mxu0 %v6000
    %6998 = vmatprep.subr.bf16.mxu0 %v5994
    %6999 = vmatpush2.bf16.msra.mxu0 %v5993
    %7000 = vmatprep.subr.bf16.mxu0 %v5987
    %7001 = vmatpush2.bf16.msra.mxu0 %v5986
    %7002 = vmatprep.subr.bf16.mxu0 %v5980
    %7003 = vmatpush2.bf16.msra.mxu0 %v5979
    %7004 = vmatprep.subr.bf16.mxu0 %v5973
    %7005 = vmatpush2.bf16.msra.mxu0 %v5972
    %7006 = vmatprep.mubr.bf16.mxu0 %v3950
    %7007 = vmatmul.mubr.bf16.gmra.mxu0 %v3949
    %v7008 = vpop.f32.mrf.mxu0
    %v7009 = vadd.f32 %v4482, %v7008
    %v7010 = vpop.f32.mrf.mxu0
    %v7011 = vadd.f32 %v4486, %v7010
    %v7012 = vpop.f32.mrf.mxu0
    %v7013 = vpop.f32.mrf.mxu0
    %7014 = vdwg.mxu0
    %7015 = vmatprep.subr.bf16.mxu0 %v6078
    %7016 = vmatpush1.bf16.msra.mxu0 %v6077
    %7017 = vmatprep.subr.bf16.mxu0 %v6071
    %7018 = vmatpush1.bf16.msra.mxu0 %v6070
    %7019 = vmatprep.subr.bf16.mxu0 %v6064
    %7020 = vmatpush1.bf16.msra.mxu0 %v6063
    %7021 = vmatprep.subr.bf16.mxu0 %v6057
    %7022 = vmatpush1.bf16.msra.mxu0 %v6056
    %7023 = vmatprep.subr.bf16.mxu0 %v6050
    %7024 = vmatpush1.bf16.msra.mxu0 %v6049
    %7025 = vmatprep.subr.bf16.mxu0 %v6043
    %7026 = vmatpush1.bf16.msra.mxu0 %v6042
    %7027 = vmatprep.subr.bf16.mxu0 %v6036
    %7028 = vmatpush1.bf16.msra.mxu0 %v6035
    %7029 = vmatprep.subr.bf16.mxu0 %v6029
    %7030 = vmatpush1.bf16.msra.mxu0 %v6028
    %7031 = vmatprep.subr.bf16.mxu0 %v6134
    %7032 = vmatpush2.bf16.msra.mxu0 %v6133
    %7033 = vmatprep.subr.bf16.mxu0 %v6127
    %7034 = vmatpush2.bf16.msra.mxu0 %v6126
    %7035 = vmatprep.subr.bf16.mxu0 %v6120
    %7036 = vmatpush2.bf16.msra.mxu0 %v6119
    %7037 = vmatprep.subr.bf16.mxu0 %v6113
    %7038 = vmatpush2.bf16.msra.mxu0 %v6112
    %7039 = vmatprep.subr.bf16.mxu0 %v6106
    %7040 = vmatpush2.bf16.msra.mxu0 %v6105
    %7041 = vmatprep.subr.bf16.mxu0 %v6099
    %7042 = vmatpush2.bf16.msra.mxu0 %v6098
    %7043 = vmatprep.subr.bf16.mxu0 %v6092
    %7044 = vmatpush2.bf16.msra.mxu0 %v6091
    %7045 = vmatprep.subr.bf16.mxu0 %v6085
    %7046 = vmatpush2.bf16.msra.mxu0 %v6084
    %7047 = vmatprep.mubr.bf16.mxu0 %v3952
    %7048 = vmatmul.mubr.bf16.gmra.mxu0 %v3951
    %v7049 = vpop.f32.mrf.mxu0
    %v7050 = vadd.f32 %v7009, %v7049
    %v7051 = vpop.f32.mrf.mxu0
    %v7052 = vadd.f32 %v7011, %v7051
    %v7053 = vpop.f32.mrf.mxu0
    %v7054 = vpop.f32.mrf.mxu0
    %7055 = vdwg.mxu0
    %7056 = vmatprep.subr.bf16.mxu0 %v6190
    %7057 = vmatpush1.bf16.msra.mxu0 %v6189
    %7058 = vmatprep.subr.bf16.mxu0 %v6183
    %7059 = vmatpush1.bf16.msra.mxu0 %v6182
    %7060 = vmatprep.subr.bf16.mxu0 %v6176
    %7061 = vmatpush1.bf16.msra.mxu0 %v6175
    %7062 = vmatprep.subr.bf16.mxu0 %v6169
    %7063 = vmatpush1.bf16.msra.mxu0 %v6168
    %7064 = vmatprep.subr.bf16.mxu0 %v6162
    %7065 = vmatpush1.bf16.msra.mxu0 %v6161
    %7066 = vmatprep.subr.bf16.mxu0 %v6155
    %7067 = vmatpush1.bf16.msra.mxu0 %v6154
    %7068 = vmatprep.subr.bf16.mxu0 %v6148
    %7069 = vmatpush1.bf16.msra.mxu0 %v6147
    %7070 = vmatprep.subr.bf16.mxu0 %v6141
    %7071 = vmatpush1.bf16.msra.mxu0 %v6140
    %7072 = vmatprep.subr.bf16.mxu0 %v6246
    %7073 = vmatpush2.bf16.msra.mxu0 %v6245
    %7074 = vmatprep.subr.bf16.mxu0 %v6239
    %7075 = vmatpush2.bf16.msra.mxu0 %v6238
    %7076 = vmatprep.subr.bf16.mxu0 %v6232
    %7077 = vmatpush2.bf16.msra.mxu0 %v6231
    %7078 = vmatprep.subr.bf16.mxu0 %v6225
    %7079 = vmatpush2.bf16.msra.mxu0 %v6224
    %7080 = vmatprep.subr.bf16.mxu0 %v6218
    %7081 = vmatpush2.bf16.msra.mxu0 %v6217
    %7082 = vmatprep.subr.bf16.mxu0 %v6211
    %7083 = vmatpush2.bf16.msra.mxu0 %v6210
    %7084 = vmatprep.subr.bf16.mxu0 %v6204
    %7085 = vmatpush2.bf16.msra.mxu0 %v6203
    %7086 = vmatprep.subr.bf16.mxu0 %v6197
    %7087 = vmatpush2.bf16.msra.mxu0 %v6196
    %7088 = vmatprep.mubr.bf16.mxu0 %v3954
    %7089 = vmatmul.mubr.bf16.gmra.mxu0 %v3953
    %v7090 = vpop.f32.mrf.mxu0
    %v7091 = vadd.f32 %v7050, %v7090
    %v7092 = vpop.f32.mrf.mxu0
    %v7093 = vadd.f32 %v7052, %v7092
    %v7094 = vpop.f32.mrf.mxu0
    %v7095 = vpop.f32.mrf.mxu0
    %7096 = vdwg.mxu0
    %7097 = vmatprep.subr.bf16.mxu0 %v6302
    %7098 = vmatpush1.bf16.msra.mxu0 %v6301
    %7099 = vmatprep.subr.bf16.mxu0 %v6295
    %7100 = vmatpush1.bf16.msra.mxu0 %v6294
    %7101 = vmatprep.subr.bf16.mxu0 %v6288
    %7102 = vmatpush1.bf16.msra.mxu0 %v6287
    %7103 = vmatprep.subr.bf16.mxu0 %v6281
    %7104 = vmatpush1.bf16.msra.mxu0 %v6280
    %7105 = vmatprep.subr.bf16.mxu0 %v6274
    %7106 = vmatpush1.bf16.msra.mxu0 %v6273
    %7107 = vmatprep.subr.bf16.mxu0 %v6267
    %7108 = vmatpush1.bf16.msra.mxu0 %v6266
    %7109 = vmatprep.subr.bf16.mxu0 %v6260
    %7110 = vmatpush1.bf16.msra.mxu0 %v6259
    %7111 = vmatprep.subr.bf16.mxu0 %v6253
    %7112 = vmatpush1.bf16.msra.mxu0 %v6252
    %7113 = vmatprep.subr.bf16.mxu0 %v6358
    %7114 = vmatpush2.bf16.msra.mxu0 %v6357
    %7115 = vmatprep.subr.bf16.mxu0 %v6351
    %7116 = vmatpush2.bf16.msra.mxu0 %v6350
    %7117 = vmatprep.subr.bf16.mxu0 %v6344
    %7118 = vmatpush2.bf16.msra.mxu0 %v6343
    %7119 = vmatprep.subr.bf16.mxu0 %v6337
    %7120 = vmatpush2.bf16.msra.mxu0 %v6336
    %7121 = vmatprep.subr.bf16.mxu0 %v6330
    %7122 = vmatpush2.bf16.msra.mxu0 %v6329
    %7123 = vmatprep.subr.bf16.mxu0 %v6323
    %7124 = vmatpush2.bf16.msra.mxu0 %v6322
    %7125 = vmatprep.subr.bf16.mxu0 %v6316
    %7126 = vmatpush2.bf16.msra.mxu0 %v6315
    %7127 = vmatprep.subr.bf16.mxu0 %v6309
    %7128 = vmatpush2.bf16.msra.mxu0 %v6308
    %7129 = vmatprep.mubr.bf16.mxu0 %v3956
    %7130 = vmatmul.mubr.bf16.gmra.mxu0 %v3955
    %v7131 = vpop.f32.mrf.mxu0
    %v7132 = vadd.f32 %v7091, %v7131
    %v7133 = vpop.f32.mrf.mxu0
    %v7134 = vadd.f32 %v7093, %v7133
    %v7135 = vpop.f32.mrf.mxu0
    %v7136 = vpop.f32.mrf.mxu0
    %7137 = vdwg.mxu0
    %7138 = vmatprep.subr.bf16.mxu0 %v5968
    %7139 = vmatpush1.bf16.msra.mxu0 %v5967
    %7140 = vmatprep.subr.bf16.mxu0 %v5961
    %7141 = vmatpush1.bf16.msra.mxu0 %v5960
    %7142 = vmatprep.subr.bf16.mxu0 %v5954
    %7143 = vmatpush1.bf16.msra.mxu0 %v5953
    %7144 = vmatprep.subr.bf16.mxu0 %v5947
    %7145 = vmatpush1.bf16.msra.mxu0 %v5946
    %7146 = vmatprep.subr.bf16.mxu0 %v5940
    %7147 = vmatpush1.bf16.msra.mxu0 %v5939
    %7148 = vmatprep.subr.bf16.mxu0 %v5933
    %7149 = vmatpush1.bf16.msra.mxu0 %v5932
    %7150 = vmatprep.subr.bf16.mxu0 %v5926
    %7151 = vmatpush1.bf16.msra.mxu0 %v5925
    %7152 = vmatprep.subr.bf16.mxu0 %v5919
    %7153 = vmatpush1.bf16.msra.mxu0 %v5918
    %7154 = vmatprep.subr.bf16.mxu0 %v6024
    %7155 = vmatpush2.bf16.msra.mxu0 %v6023
    %7156 = vmatprep.subr.bf16.mxu0 %v6017
    %7157 = vmatpush2.bf16.msra.mxu0 %v6016
    %7158 = vmatprep.subr.bf16.mxu0 %v6010
    %7159 = vmatpush2.bf16.msra.mxu0 %v6009
    %7160 = vmatprep.subr.bf16.mxu0 %v6003
    %7161 = vmatpush2.bf16.msra.mxu0 %v6002
    %7162 = vmatprep.subr.bf16.mxu0 %v5996
    %7163 = vmatpush2.bf16.msra.mxu0 %v5995
    %7164 = vmatprep.subr.bf16.mxu0 %v5989
    %7165 = vmatpush2.bf16.msra.mxu0 %v5988
    %7166 = vmatprep.subr.bf16.mxu0 %v5982
    %7167 = vmatpush2.bf16.msra.mxu0 %v5981
    %7168 = vmatprep.subr.bf16.mxu0 %v5975
    %7169 = vmatpush2.bf16.msra.mxu0 %v5974
    %7170 = vmatprep.mubr.bf16.mxu0 %v3950
    %7171 = vmatmul.mubr.bf16.gmra.mxu0 %v3949
    %v7172 = vpop.f32.mrf.mxu0
    %v7173 = vadd.f32 %v4490, %v7172
    %v7174 = vpop.f32.mrf.mxu0
    %v7175 = vadd.f32 %v4494, %v7174
    %v7176 = vpop.f32.mrf.mxu0
    %v7177 = vpop.f32.mrf.mxu0
    %7178 = vdwg.mxu0
    %7179 = vmatprep.subr.bf16.mxu0 %v6080
    %7180 = vmatpush1.bf16.msra.mxu0 %v6079
    %7181 = vmatprep.subr.bf16.mxu0 %v6073
    %7182 = vmatpush1.bf16.msra.mxu0 %v6072
    %7183 = vmatprep.subr.bf16.mxu0 %v6066
    %7184 = vmatpush1.bf16.msra.mxu0 %v6065
    %7185 = vmatprep.subr.bf16.mxu0 %v6059
    %7186 = vmatpush1.bf16.msra.mxu0 %v6058
    %7187 = vmatprep.subr.bf16.mxu0 %v6052
    %7188 = vmatpush1.bf16.msra.mxu0 %v6051
    %7189 = vmatprep.subr.bf16.mxu0 %v6045
    %7190 = vmatpush1.bf16.msra.mxu0 %v6044
    %7191 = vmatprep.subr.bf16.mxu0 %v6038
    %7192 = vmatpush1.bf16.msra.mxu0 %v6037
    %7193 = vmatprep.subr.bf16.mxu0 %v6031
    %7194 = vmatpush1.bf16.msra.mxu0 %v6030
    %7195 = vmatprep.subr.bf16.mxu0 %v6136
    %7196 = vmatpush2.bf16.msra.mxu0 %v6135
    %7197 = vmatprep.subr.bf16.mxu0 %v6129
    %7198 = vmatpush2.bf16.msra.mxu0 %v6128
    %7199 = vmatprep.subr.bf16.mxu0 %v6122
    %7200 = vmatpush2.bf16.msra.mxu0 %v6121
    %7201 = vmatprep.subr.bf16.mxu0 %v6115
    %7202 = vmatpush2.bf16.msra.mxu0 %v6114
    %7203 = vmatprep.subr.bf16.mxu0 %v6108
    %7204 = vmatpush2.bf16.msra.mxu0 %v6107
    %7205 = vmatprep.subr.bf16.mxu0 %v6101
    %7206 = vmatpush2.bf16.msra.mxu0 %v6100
    %7207 = vmatprep.subr.bf16.mxu0 %v6094
    %7208 = vmatpush2.bf16.msra.mxu0 %v6093
    %7209 = vmatprep.subr.bf16.mxu0 %v6087
    %7210 = vmatpush2.bf16.msra.mxu0 %v6086
    %7211 = vmatprep.mubr.bf16.mxu0 %v3952
    %7212 = vmatmul.mubr.bf16.gmra.mxu0 %v3951
    %v7213 = vpop.f32.mrf.mxu0
    %v7214 = vadd.f32 %v7173, %v7213
    %v7215 = vpop.f32.mrf.mxu0
    %v7216 = vadd.f32 %v7175, %v7215
    %v7217 = vpop.f32.mrf.mxu0
    %v7218 = vpop.f32.mrf.mxu0
    %7219 = vdwg.mxu0
    %7220 = vmatprep.subr.bf16.mxu0 %v6192
    %7221 = vmatpush1.bf16.msra.mxu0 %v6191
    %7222 = vmatprep.subr.bf16.mxu0 %v6185
    %7223 = vmatpush1.bf16.msra.mxu0 %v6184
    %7224 = vmatprep.subr.bf16.mxu0 %v6178
    %7225 = vmatpush1.bf16.msra.mxu0 %v6177
    %7226 = vmatprep.subr.bf16.mxu0 %v6171
    %7227 = vmatpush1.bf16.msra.mxu0 %v6170
    %7228 = vmatprep.subr.bf16.mxu0 %v6164
    %7229 = vmatpush1.bf16.msra.mxu0 %v6163
    %7230 = vmatprep.subr.bf16.mxu0 %v6157
    %7231 = vmatpush1.bf16.msra.mxu0 %v6156
    %7232 = vmatprep.subr.bf16.mxu0 %v6150
    %7233 = vmatpush1.bf16.msra.mxu0 %v6149
    %7234 = vmatprep.subr.bf16.mxu0 %v6143
    %7235 = vmatpush1.bf16.msra.mxu0 %v6142
    %7236 = vmatprep.subr.bf16.mxu0 %v6248
    %7237 = vmatpush2.bf16.msra.mxu0 %v6247
    %7238 = vmatprep.subr.bf16.mxu0 %v6241
    %7239 = vmatpush2.bf16.msra.mxu0 %v6240
    %7240 = vmatprep.subr.bf16.mxu0 %v6234
    %7241 = vmatpush2.bf16.msra.mxu0 %v6233
    %7242 = vmatprep.subr.bf16.mxu0 %v6227
    %7243 = vmatpush2.bf16.msra.mxu0 %v6226
    %7244 = vmatprep.subr.bf16.mxu0 %v6220
    %7245 = vmatpush2.bf16.msra.mxu0 %v6219
    %7246 = vmatprep.subr.bf16.mxu0 %v6213
    %7247 = vmatpush2.bf16.msra.mxu0 %v6212
    %7248 = vmatprep.subr.bf16.mxu0 %v6206
    %7249 = vmatpush2.bf16.msra.mxu0 %v6205
    %7250 = vmatprep.subr.bf16.mxu0 %v6199
    %7251 = vmatpush2.bf16.msra.mxu0 %v6198
    %7252 = vmatprep.mubr.bf16.mxu0 %v3954
    %7253 = vmatmul.mubr.bf16.gmra.mxu0 %v3953
    %v7254 = vpop.f32.mrf.mxu0
    %v7255 = vadd.f32 %v7214, %v7254
    %v7256 = vpop.f32.mrf.mxu0
    %v7257 = vadd.f32 %v7216, %v7256
    %v7258 = vpop.f32.mrf.mxu0
    %v7259 = vpop.f32.mrf.mxu0
    %7260 = vdwg.mxu0
    %7261 = vmatprep.subr.bf16.mxu0 %v6304
    %7262 = vmatpush1.bf16.msra.mxu0 %v6303
    %7263 = vmatprep.subr.bf16.mxu0 %v6297
    %7264 = vmatpush1.bf16.msra.mxu0 %v6296
    %7265 = vmatprep.subr.bf16.mxu0 %v6290
    %7266 = vmatpush1.bf16.msra.mxu0 %v6289
    %7267 = vmatprep.subr.bf16.mxu0 %v6283
    %7268 = vmatpush1.bf16.msra.mxu0 %v6282
    %7269 = vmatprep.subr.bf16.mxu0 %v6276
    %7270 = vmatpush1.bf16.msra.mxu0 %v6275
    %7271 = vmatprep.subr.bf16.mxu0 %v6269
    %7272 = vmatpush1.bf16.msra.mxu0 %v6268
    %7273 = vmatprep.subr.bf16.mxu0 %v6262
    %7274 = vmatpush1.bf16.msra.mxu0 %v6261
    %7275 = vmatprep.subr.bf16.mxu0 %v6255
    %7276 = vmatpush1.bf16.msra.mxu0 %v6254
    %7277 = vmatprep.subr.bf16.mxu0 %v6360
    %7278 = vmatpush2.bf16.msra.mxu0 %v6359
    %7279 = vmatprep.subr.bf16.mxu0 %v6353
    %7280 = vmatpush2.bf16.msra.mxu0 %v6352
    %7281 = vmatprep.subr.bf16.mxu0 %v6346
    %7282 = vmatpush2.bf16.msra.mxu0 %v6345
    %7283 = vmatprep.subr.bf16.mxu0 %v6339
    %7284 = vmatpush2.bf16.msra.mxu0 %v6338
    %7285 = vmatprep.subr.bf16.mxu0 %v6332
    %7286 = vmatpush2.bf16.msra.mxu0 %v6331
    %7287 = vmatprep.subr.bf16.mxu0 %v6325
    %7288 = vmatpush2.bf16.msra.mxu0 %v6324
    %7289 = vmatprep.subr.bf16.mxu0 %v6318
    %7290 = vmatpush2.bf16.msra.mxu0 %v6317
    %7291 = vmatprep.subr.bf16.mxu0 %v6311
    %7292 = vmatpush2.bf16.msra.mxu0 %v6310
    %7293 = vmatprep.mubr.bf16.mxu0 %v3956
    %7294 = vmatmul.mubr.bf16.gmra.mxu0 %v3955
    %v7295 = vpop.f32.mrf.mxu0
    %v7296 = vadd.f32 %v7255, %v7295
    %v7297 = vpop.f32.mrf.mxu0
    %v7298 = vadd.f32 %v7257, %v7297
    %v7299 = vpop.f32.mrf.mxu0
    %v7300 = vpop.f32.mrf.mxu0
    %7301 = vdwg.mxu0
    %7302 = vmatprep.subr.bf16.mxu0 0
    %7303 = vmatpush1.bf16.msra.mxu0 %v5969
    %7304 = vmatprep.subr.bf16.mxu0 0
    %7305 = vmatpush1.bf16.msra.mxu0 %v5962
    %7306 = vmatprep.subr.bf16.mxu0 0
    %7307 = vmatpush1.bf16.msra.mxu0 %v5955
    %7308 = vmatprep.subr.bf16.mxu0 0
    %7309 = vmatpush1.bf16.msra.mxu0 %v5948
    %7310 = vmatprep.subr.bf16.mxu0 0
    %7311 = vmatpush1.bf16.msra.mxu0 %v5941
    %7312 = vmatprep.subr.bf16.mxu0 0
    %7313 = vmatpush1.bf16.msra.mxu0 %v5934
    %7314 = vmatprep.subr.bf16.mxu0 0
    %7315 = vmatpush1.bf16.msra.mxu0 %v5927
    %7316 = vmatprep.subr.bf16.mxu0 0
    %7317 = vmatpush1.bf16.msra.mxu0 %v5920
    %7318 = vmatprep.subr.bf16.mxu0 0
    %7319 = vmatpush2.bf16.msra.mxu0 %v6025
    %7320 = vmatprep.subr.bf16.mxu0 0
    %7321 = vmatpush2.bf16.msra.mxu0 %v6018
    %7322 = vmatprep.subr.bf16.mxu0 0
    %7323 = vmatpush2.bf16.msra.mxu0 %v6011
    %7324 = vmatprep.subr.bf16.mxu0 0
    %7325 = vmatpush2.bf16.msra.mxu0 %v6004
    %7326 = vmatprep.subr.bf16.mxu0 0
    %7327 = vmatpush2.bf16.msra.mxu0 %v5997
    %7328 = vmatprep.subr.bf16.mxu0 0
    %7329 = vmatpush2.bf16.msra.mxu0 %v5990
    %7330 = vmatprep.subr.bf16.mxu0 0
    %7331 = vmatpush2.bf16.msra.mxu0 %v5983
    %7332 = vmatprep.subr.bf16.mxu0 0
    %7333 = vmatpush2.bf16.msra.mxu0 %v5976
    %7334 = vmatprep.mubr.bf16.mxu0 %v3950
    %7335 = vmatmul.mubr.bf16.gmra.mxu0 %v3949
    %v7336 = vpop.f32.mrf.mxu0
    %v7337 = vadd.f32 %v4498, %v7336
    %v7338 = vpop.f32.mrf.mxu0
    %v7339 = vpop.f32.mrf.mxu0
    %v7340 = vpop.f32.mrf.mxu0
    %7341 = vdwg.mxu0
    %7342 = vmatprep.subr.bf16.mxu0 0
    %7343 = vmatpush1.bf16.msra.mxu0 %v6081
    %7344 = vmatprep.subr.bf16.mxu0 0
    %7345 = vmatpush1.bf16.msra.mxu0 %v6074
    %7346 = vmatprep.subr.bf16.mxu0 0
    %7347 = vmatpush1.bf16.msra.mxu0 %v6067
    %7348 = vmatprep.subr.bf16.mxu0 0
    %7349 = vmatpush1.bf16.msra.mxu0 %v6060
    %7350 = vmatprep.subr.bf16.mxu0 0
    %7351 = vmatpush1.bf16.msra.mxu0 %v6053
    %7352 = vmatprep.subr.bf16.mxu0 0
    %7353 = vmatpush1.bf16.msra.mxu0 %v6046
    %7354 = vmatprep.subr.bf16.mxu0 0
    %7355 = vmatpush1.bf16.msra.mxu0 %v6039
    %7356 = vmatprep.subr.bf16.mxu0 0
    %7357 = vmatpush1.bf16.msra.mxu0 %v6032
    %7358 = vmatprep.subr.bf16.mxu0 0
    %7359 = vmatpush2.bf16.msra.mxu0 %v6137
    %7360 = vmatprep.subr.bf16.mxu0 0
    %7361 = vmatpush2.bf16.msra.mxu0 %v6130
    %7362 = vmatprep.subr.bf16.mxu0 0
    %7363 = vmatpush2.bf16.msra.mxu0 %v6123
    %7364 = vmatprep.subr.bf16.mxu0 0
    %7365 = vmatpush2.bf16.msra.mxu0 %v6116
    %7366 = vmatprep.subr.bf16.mxu0 0
    %7367 = vmatpush2.bf16.msra.mxu0 %v6109
    %7368 = vmatprep.subr.bf16.mxu0 0
    %7369 = vmatpush2.bf16.msra.mxu0 %v6102
    %7370 = vmatprep.subr.bf16.mxu0 0
    %7371 = vmatpush2.bf16.msra.mxu0 %v6095
    %7372 = vmatprep.subr.bf16.mxu0 0
    %7373 = vmatpush2.bf16.msra.mxu0 %v6088
    %7374 = vmatprep.mubr.bf16.mxu0 %v3952
    %7375 = vmatmul.mubr.bf16.gmra.mxu0 %v3951
    %v7376 = vpop.f32.mrf.mxu0
    %v7377 = vadd.f32 %v7337, %v7376
    %v7378 = vpop.f32.mrf.mxu0
    %v7379 = vpop.f32.mrf.mxu0
    %v7380 = vpop.f32.mrf.mxu0
    %7381 = vdwg.mxu0
    %7382 = vmatprep.subr.bf16.mxu0 0
    %7383 = vmatpush1.bf16.msra.mxu0 %v6193
    %7384 = vmatprep.subr.bf16.mxu0 0
    %7385 = vmatpush1.bf16.msra.mxu0 %v6186
    %7386 = vmatprep.subr.bf16.mxu0 0
    %7387 = vmatpush1.bf16.msra.mxu0 %v6179
    %7388 = vmatprep.subr.bf16.mxu0 0
    %7389 = vmatpush1.bf16.msra.mxu0 %v6172
    %7390 = vmatprep.subr.bf16.mxu0 0
    %7391 = vmatpush1.bf16.msra.mxu0 %v6165
    %7392 = vmatprep.subr.bf16.mxu0 0
    %7393 = vmatpush1.bf16.msra.mxu0 %v6158
    %7394 = vmatprep.subr.bf16.mxu0 0
    %7395 = vmatpush1.bf16.msra.mxu0 %v6151
    %7396 = vmatprep.subr.bf16.mxu0 0
    %7397 = vmatpush1.bf16.msra.mxu0 %v6144
    %7398 = vmatprep.subr.bf16.mxu0 0
    %7399 = vmatpush2.bf16.msra.mxu0 %v6249
    %7400 = vmatprep.subr.bf16.mxu0 0
    %7401 = vmatpush2.bf16.msra.mxu0 %v6242
    %7402 = vmatprep.subr.bf16.mxu0 0
    %7403 = vmatpush2.bf16.msra.mxu0 %v6235
    %7404 = vmatprep.subr.bf16.mxu0 0
    %7405 = vmatpush2.bf16.msra.mxu0 %v6228
    %7406 = vmatprep.subr.bf16.mxu0 0
    %7407 = vmatpush2.bf16.msra.mxu0 %v6221
    %7408 = vmatprep.subr.bf16.mxu0 0
    %7409 = vmatpush2.bf16.msra.mxu0 %v6214
    %7410 = vmatprep.subr.bf16.mxu0 0
    %7411 = vmatpush2.bf16.msra.mxu0 %v6207
    %7412 = vmatprep.subr.bf16.mxu0 0
    %7413 = vmatpush2.bf16.msra.mxu0 %v6200
    %7414 = vmatprep.mubr.bf16.mxu0 %v3954
    %7415 = vmatmul.mubr.bf16.gmra.mxu0 %v3953
    %v7416 = vpop.f32.mrf.mxu0
    %v7417 = vadd.f32 %v7377, %v7416
    %v7418 = vpop.f32.mrf.mxu0
    %v7419 = vpop.f32.mrf.mxu0
    %v7420 = vpop.f32.mrf.mxu0
    %7421 = vdwg.mxu0
    %7422 = vmatprep.subr.bf16.mxu0 0
    %7423 = vmatpush1.bf16.msra.mxu0 %v6305
    %7424 = vmatprep.subr.bf16.mxu0 0
    %7425 = vmatpush1.bf16.msra.mxu0 %v6298
    %7426 = vmatprep.subr.bf16.mxu0 0
    %7427 = vmatpush1.bf16.msra.mxu0 %v6291
    %7428 = vmatprep.subr.bf16.mxu0 0
    %7429 = vmatpush1.bf16.msra.mxu0 %v6284
    %7430 = vmatprep.subr.bf16.mxu0 0
    %7431 = vmatpush1.bf16.msra.mxu0 %v6277
    %7432 = vmatprep.subr.bf16.mxu0 0
    %7433 = vmatpush1.bf16.msra.mxu0 %v6270
    %7434 = vmatprep.subr.bf16.mxu0 0
    %7435 = vmatpush1.bf16.msra.mxu0 %v6263
    %7436 = vmatprep.subr.bf16.mxu0 0
    %7437 = vmatpush1.bf16.msra.mxu0 %v6256
    %7438 = vmatprep.subr.bf16.mxu0 0
    %7439 = vmatpush2.bf16.msra.mxu0 %v6361
    %7440 = vmatprep.subr.bf16.mxu0 0
    %7441 = vmatpush2.bf16.msra.mxu0 %v6354
    %7442 = vmatprep.subr.bf16.mxu0 0
    %7443 = vmatpush2.bf16.msra.mxu0 %v6347
    %7444 = vmatprep.subr.bf16.mxu0 0
    %7445 = vmatpush2.bf16.msra.mxu0 %v6340
    %7446 = vmatprep.subr.bf16.mxu0 0
    %7447 = vmatpush2.bf16.msra.mxu0 %v6333
    %7448 = vmatprep.subr.bf16.mxu0 0
    %7449 = vmatpush2.bf16.msra.mxu0 %v6326
    %7450 = vmatprep.subr.bf16.mxu0 0
    %7451 = vmatpush2.bf16.msra.mxu0 %v6319
    %7452 = vmatprep.subr.bf16.mxu0 0
    %7453 = vmatpush2.bf16.msra.mxu0 %v6312
    %7454 = vmatprep.mubr.bf16.mxu0 %v3956
    %7455 = vmatmul.mubr.bf16.gmra.mxu0 %v3955
    %v7456 = vpop.f32.mrf.mxu0
    %v7457 = vadd.f32 %v7417, %v7456
    %v7458 = vpop.f32.mrf.mxu0
    %v7459 = vpop.f32.mrf.mxu0
    %v7460 = vpop.f32.mrf.mxu0
    %7461 = vdwg.mxu0
    %v7462 = vxor.u32 %v6968, 2147483648
    %v7463 = vxor.u32 %v6970, 2147483648
    %v7464 = vxor.u32 %v7132, 2147483648
    %v7465 = vxor.u32 %v7134, 2147483648
    %v7466 = vxor.u32 %v7296, 2147483648
    %v7467 = vxor.u32 %v7298, 2147483648
    %v7468 = vxor.u32 %v7457, 2147483648
    %v7469 = vmul.f32 %v7462, 1.442695
    %v7470 = vpow.pop %v7469
    %v7471 = vmul.f32 %v7463, 1.442695
    %v7472 = vpow.pop %v7471
    %v7473 = vmul.f32 %v7464, 1.442695
    %v7474 = vpow.pop %v7473
    %v7475 = vmul.f32 %v7465, 1.442695
    %v7476 = vpow.pop %v7475
    %v7477 = vmul.f32 %v7466, 1.442695
    %v7478 = vpow.pop %v7477
    %v7479 = vmul.f32 %v7467, 1.442695
    %v7480 = vpow.pop %v7479
    %v7481 = vmul.f32 %v7468, 1.442695
    %v7482 = vpow.pop %v7481
    %v7483 = vadd.f32 %v7470, 1.0
    %v7484 = vadd.f32 %v7472, 1.0
    %v7485 = vadd.f32 %v7474, 1.0
    %v7486 = vadd.f32 %v7476, 1.0
    %v7487 = vadd.f32 %v7478, 1.0
    %v7488 = vadd.f32 %v7480, 1.0
    %v7489 = vadd.f32 %v7482, 1.0
    %v7490 = vrcp.pop %v7483
    %v7491 = vmul.f32 1.0, %v7490
    %v7492 = vrcp.pop %v7484
    %v7493 = vmul.f32 1.0, %v7492
    %v7494 = vrcp.pop %v7485
    %v7495 = vmul.f32 1.0, %v7494
    %v7496 = vrcp.pop %v7486
    %v7497 = vmul.f32 1.0, %v7496
    %v7498 = vrcp.pop %v7487
    %v7499 = vmul.f32 1.0, %v7498
    %v7500 = vrcp.pop %v7488
    %v7501 = vmul.f32 1.0, %v7500
    %v7502 = vrcp.pop %v7489
    %v7503 = vmul.f32 1.0, %v7502
    %7504 = vst [vmem:[#allocation29] sm:$0xff] %v7491
    %7505 = vst [vmem:[#allocation29 + $0x8] sm:$0xff] %v7493
    %7506 = vst [vmem:[#allocation29 + $0x10] sm:$0xff] %v7495
    %7507 = vst [vmem:[#allocation29 + $0x18] sm:$0xff] %v7497
    %7508 = vst [vmem:[#allocation29 + $0x20] sm:$0xff] %v7499
    %7509 = vst [vmem:[#allocation29 + $0x28] sm:$0xff] %v7501
    %7510 = vst [vmem:[#allocation29 + $0x30] sm:$0xff] %v7503
    // Predicated region
    $region146: #{generator_forward.1} parent=1 // pred_check
      _
    $region147: #{generator_forward.1} parent=1 // pred_check_branch
      %7512 = sbr.rel (0) target = $region149
    $region148: #{generator_forward.1} parent=1 // pred_region
      %s7514 = ssub.s32 896, 896
      %7515 = vsyncadd [#allocation4], %s7514
      %s7517 = sshll.u32 [#allocation29], 4
      %s7518 = int_to_ptr.vmem [resolvable:$true] %s7517
      %7520 = dma.vmem_to_hbm [thread:$0]  %s7518, 896, %s19, [#allocation4]
    $region149: #{generator_forward.1} parent=1 // pred_fallthru
      _
    // Predicated region
    $region150: #{generator_forward.1} parent=1 // pred_check
      _
    $region151: #{generator_forward.1} parent=1 // pred_check_branch
      %7522 = sbr.rel (0) target = $region153
    $region152: #{generator_forward.1} parent=1 // pred_region
      %7523 = dma.done [#allocation4], 896
    $region153: #{generator_forward.1} parent=1 // pred_fallthru
      _
    %7524 = vsyncpa [#allocation3], 1
    %7525 = vsyncpa [#allocation6], 1
    %7526 = vsyncpa [#allocation9], 1
    %7527 = vsyncpa [#allocation12], 1
    %7528 = vsyncpa [#allocation15], 1
    %7529 = vsyncpa [#allocation18], 1
    %7530 = vsyncpa [#allocation21], 1
    %7531 = vsyncpa [#allocation24], 1
    %7532 = vsyncpa [#allocation27], 1
    %7533 = vsyncpa [#allocation4], 1

</llo_original>
